<compile_context>
chip_gen: v6e
topology: v6e:2x2x1
jax: 0.10.0
libtpu: 0.0.40
codegen_flags: <defaults>
</compile_context>

<pallas_src>
import functools

import jax
import jax.numpy as jnp
import numpy as np
from jax.experimental import pallas as pl
from jax.experimental.pallas import tpu as pltpu


def _round_up(x, m):
    return ((x + m - 1) // m) * m


# ----------------------------- fused Pallas kernel ------------------------------

def _residual_block_kernel(x_ref, w1_ref, wsc_ref, bnA_ref, w2_ref, bnB_ref,
                           w1t_ref, b1_ref, cw2_ref, b2_ref, sp_ref,
                           o_ref,
                           xp_scr, h1p_scr, sc_scr, mask_scr,
                           pa_scr, pm_scr, sa_scr,
                           *, H, W, Cin, Cout, Wp, Wq, OFF, PR):
    """One image per grid step.  Row-flattened layout with row stride Wp (8-aligned);
    valid image data starts at 8-aligned row OFF; columns w >= W of each row are
    'junk' (always finite, masked everywhere it matters, stripped in the wrapper)."""
    f32 = jnp.float32
    HW2 = H * Wp
    base = OFF - Wp - 1          # tap slice origin (>= 0 by construction)

    # ---- 0. per-row validity mask (1.0 for w < W, 0.0 for junk columns) ----
    mask_scr[...] = jnp.zeros((HW2, 1), f32)
    for h in range(H):
        mask_scr[h * Wp:h * Wp + W, :] = jnp.ones((W, 1), f32)
    mask = mask_scr[...]                                   # (HW2, 1) f32

    # ---- 1. in-kernel relayout (Cin, H*W) -> (H*W, Cin) bf16 + zero halo buffer ----
    xp_scr[...] = jnp.zeros((PR, Cin), jnp.bfloat16)
    xr = x_ref[...].T.astype(jnp.bfloat16)                 # (H*W, Cin)
    for h in range(H):
        xp_scr[OFF + h * Wp:OFF + h * Wp + W, :] = xr[h * W:(h + 1) * W, :]

    # ---- 2. conv1 (3x3) + BN1 + ReLU and 1x1 shortcut conv + BN ----
    parts = []
    for kh in range(3):
        for kw in range(3):
            start = base + kh * Wp + kw
            parts.append(xp_scr[start:start + HW2, :])
    lhs1 = jnp.concatenate(parts, axis=1)                  # (HW2, 9*Cin) bf16
    acc1 = jnp.dot(lhs1, w1_ref[...], preferred_element_type=f32)
    h1 = jnp.maximum(acc1 * bnA_ref[0:1, :] + bnA_ref[1:2, :], 0.0) * mask

    sc = jnp.dot(parts[4], wsc_ref[...], preferred_element_type=f32)   # centre tap
    sc = sc * bnA_ref[2:3, :] + bnA_ref[3:4, :]
    sc_scr[...] = sc.T                                     # (Cout, HW2) lane-dense

    # zero only the halo head/tail of the padded h1 buffer (interior fully written)
    h1p_scr[0:OFF, :] = jnp.zeros((OFF, Cout), jnp.bfloat16)
    h1p_scr[OFF + HW2:PR, :] = jnp.zeros((PR - OFF - HW2, Cout), jnp.bfloat16)
    h1p_scr[OFF:OFF + HW2, :] = h1.astype(jnp.bfloat16)    # 8-aligned bulk store

    # ---- 3. conv2 (3x3) + BN2, one GEMM with K = 9*Cout ----
    parts2 = []
    for kh in range(3):
        for kw in range(3):
            start = base + kh * Wp + kw
            parts2.append(h1p_scr[start:start + HW2, :])
    lhs2 = jnp.concatenate(parts2, axis=1)                 # (HW2, 9*Cout) bf16
    h2 = jnp.dot(lhs2, w2_ref[...], preferred_element_type=f32)
    h2 = h2 * bnB_ref[0:1, :] + bnB_ref[1:2, :]            # (HW2, Cout) f32

    # ---- 4. channel attention: masked global avg/max + tiny MLP on the VPU ----
    avg_c = jnp.sum(h2 * mask, axis=0, keepdims=True) * (1.0 / (H * W))
    max_c = jnp.max(jnp.where(mask > 0.5, h2, -jnp.inf), axis=0, keepdims=True)

    def mlp(v):                                            # (1, Cout) -> (1, Cout)
        a = jnp.sum(v * w1t_ref[...], axis=1, keepdims=True) + b1_ref[...]
        a = jnp.maximum(a, 0.0)                            # (hidden, 1)
        return jnp.sum(a * cw2_ref[...], axis=0, keepdims=True) + b2_ref[...]

    att_c = jax.nn.sigmoid(mlp(avg_c) + mlp(max_c))        # (1, Cout)
    y_t = (h2 * att_c).T                                   # (Cout, HW2) lane-dense

    # ---- 5. spatial attention: 2D lane-dense maps + 7x7 conv (49x2 VPU MACs) ----
    avg_all = jnp.mean(y_t, axis=0, keepdims=True)         # (1, HW2)
    max_all = jnp.max(y_t, axis=0, keepdims=True)
    pa_scr[...] = jnp.zeros((H + 6, Wq), f32)
    pm_scr[...] = jnp.zeros((H + 6, Wq), f32)
    for h in range(H):
        pa_scr[3 + h:4 + h, 3:3 + W] = avg_all[:, h * Wp:h * Wp + W]
        pm_scr[3 + h:4 + h, 3:3 + W] = max_all[:, h * Wp:h * Wp + W]
    pa = pa_scr[...]
    pm = pm_scr[...]
    s = jnp.zeros((H, W), f32) + sp_ref[98]                # bias (SMEM scalar)
    for kh in range(7):
        for kw in range(7):
            t = kh * 7 + kw
            s = (s + pa[kh:kh + H, kw:kw + W] * sp_ref[t]
                   + pm[kh:kh + H, kw:kw + W] * sp_ref[49 + t])
    gate = jax.nn.sigmoid(s)                               # (H, W)

    sa_scr[...] = jnp.zeros((1, HW2), f32)
    for h in range(H):
        sa_scr[0:1, h * Wp:h * Wp + W] = gate[h:h + 1, :]

    # ---- 6. gate, add shortcut, final ReLU; single lane-dense (Cout, HW2) store ----
    o_ref[...] = jnp.maximum(sa_scr[...] * y_t + sc_scr[...], 0.0)


# --------------------------------- glue -------------------------------------

def _fold_bn(conv_bias, bn, eps=1e-5):
    gamma, beta, rmean, rvar = bn
    scale = gamma / jnp.sqrt(rvar + eps)
    shift = beta + (conv_bias - rmean) * scale
    return scale, shift


def residual_block_forward(x_nchw, p):
    """Pallas implementation of ResidualBlock.forward (stride=1, eval-mode BN)."""
    B, Cin, H, W = x_nchw.shape
    Cout = p['conv1_w'].shape[1]
    hidden = p['ca_w1'].shape[1]

    Wp = _round_up(W + 2, 8)            # conv row stride (8-aligned)
    Wq = _round_up(W + 6, 8)            # 7x7 padded-map row width
    OFF = _round_up(Wp + 1, 8)          # 8-aligned start row of valid data
    HW2 = H * Wp
    PR = OFF + HW2 + Wp + 8             # padded-buffer rows (multiple of 8)

    # no transpose / pad / cast passes in the wrapper: raw NCHW bytes, reshaped only.
    x_flat = x_nchw.astype(jnp.float32).reshape(B, Cin, H * W)

    s1, t1 = _fold_bn(p['conv1_b'], p['bn1'])
    ssc, tsc = _fold_bn(p['sc_b'], p['bn_sc'])
    bnA = jnp.stack([s1, t1, ssc, tsc]).astype(jnp.float32)          # (4, Cout)
    s2, t2 = _fold_bn(p['conv2_b'], p['bn2'])
    bnB = jnp.stack([s2, t2]).astype(jnp.float32)                    # (2, Cout)
    sp_vec = jnp.concatenate(
        [p['sp_w'][:, 0], p['sp_w'][:, 1], p['sp_b']]).astype(jnp.float32)   # (99,)

    kernel = functools.partial(
        _residual_block_kernel, H=H, W=W, Cin=Cin, Cout=Cout,
        Wp=Wp, Wq=Wq, OFF=OFF, PR=PR)

    out_p = pl.pallas_call(
        kernel,
        grid=(B,),
        in_specs=[
            pl.BlockSpec((None, Cin, H * W), lambda b: (b, 0, 0)),   # x (f32, NCHW-flat)
            pl.BlockSpec((9 * Cin, Cout), lambda b: (0, 0)),         # conv1 w (bf16)
            pl.BlockSpec((Cin, Cout), lambda b: (0, 0)),             # shortcut w (bf16)
            pl.BlockSpec((4, Cout), lambda b: (0, 0)),               # folded BN1 / BN_sc
            pl.BlockSpec((9 * Cout, Cout), lambda b: (0, 0)),        # conv2 w (bf16)
            pl.BlockSpec((2, Cout), lambda b: (0, 0)),               # folded BN2
            pl.BlockSpec((hidden, Cout), lambda b: (0, 0)),          # ca w1^T
            pl.BlockSpec((hidden, 1), lambda b: (0, 0)),             # ca b1
            pl.BlockSpec((hidden, Cout), lambda b: (0, 0)),          # ca w2
            pl.BlockSpec((1, Cout), lambda b: (0, 0)),               # ca b2
            pl.BlockSpec(memory_space=pltpu.MemorySpace.SMEM),       # 7x7 weights + bias
        ],
        out_specs=pl.BlockSpec((None, Cout, HW2), lambda b: (b, 0, 0)),
        out_shape=jax.ShapeDtypeStruct((B, Cout, HW2), jnp.float32),
        scratch_shapes=[
            pltpu.VMEM((PR, Cin), jnp.bfloat16),     # zero-padded x (halo buffer)
            pltpu.VMEM((PR, Cout), jnp.bfloat16),    # zero-padded h1
            pltpu.VMEM((Cout, HW2), jnp.float32),    # shortcut branch (transposed)
            pltpu.VMEM((HW2, 1), jnp.float32),       # per-row valid-column mask
            pltpu.VMEM((H + 6, Wq), jnp.float32),    # padded channel-mean map (2D)
            pltpu.VMEM((H + 6, Wq), jnp.float32),    # padded channel-max map (2D)
            pltpu.VMEM((1, HW2), jnp.float32),       # spatial gate, flat layout
        ],
        compiler_params=pltpu.CompilerParams(
            dimension_semantics=("parallel",),
            vmem_limit_bytes=32 * 1024 * 1024),
    )(x_flat,
      p['conv1_w'].astype(jnp.bfloat16),
      p['sc_w'].astype(jnp.bfloat16),
      bnA,
      p['conv2_w'].astype(jnp.bfloat16),
      bnB,
      jnp.transpose(p['ca_w1']),
      p['ca_b1'].reshape(hidden, 1),
      p['ca_w2'],
      p['ca_b2'].reshape(1, Cout),
      sp_vec)

    # strip the junk columns (w >= W); result is already NCHW (no transpose pass).
    return out_p.reshape(B, Cout, H, Wp)[:, :, :, :W]


# ------------------------- deterministic parameters -------------------------

def init_params(key, in_channels, out_channels, reduction=16):
    ks = jax.random.split(key, 16)
    hidden = out_channels // reduction

    def norm(k, shape, scale):
        return scale * jax.random.normal(k, shape, jnp.float32)

    def bn(k):
        k1, k2, k3, k4 = jax.random.split(k, 4)
        gamma = 1.0 + 0.1 * jax.random.normal(k1, (out_channels,), jnp.float32)
        beta = 0.1 * jax.random.normal(k2, (out_channels,), jnp.float32)
        rmean = 0.1 * jax.random.normal(k3, (out_channels,), jnp.float32)
        rvar = 1.0 + 0.1 * jax.random.uniform(k4, (out_channels,), jnp.float32)
        return (gamma, beta, rmean, rvar)

    return {
        # conv weights stored pre-flattened: ((kh*3+kw)*Cin + ci, Cout)
        'conv1_w': norm(ks[0], (9 * in_channels, out_channels), (9 * in_channels) ** -0.5),
        'conv1_b': norm(ks[1], (out_channels,), 0.1),
        'bn1': bn(ks[2]),
        'conv2_w': norm(ks[3], (9 * out_channels, out_channels), (9 * out_channels) ** -0.5),
        'conv2_b': norm(ks[4], (out_channels,), 0.1),
        'bn2': bn(ks[5]),
        'ca_w1': norm(ks[6], (out_channels, hidden), out_channels ** -0.5),
        'ca_b1': norm(ks[7], (hidden,), 0.1),
        'ca_w2': norm(ks[8], (hidden, out_channels), hidden ** -0.5),
        'ca_b2': norm(ks[9], (out_channels,), 0.1),
        'sp_w': norm(ks[10], (49, 2), (49 * 2) ** -0.5),   # [tap, {avg, max}]
        'sp_b': norm(ks[11], (1,), 0.1),
        'sc_w': norm(ks[12], (in_channels, out_channels), in_channels ** -0.5),
        'sc_b': norm(ks[13], (out_channels,), 0.1),
        'bn_sc': bn(ks[14]),
    }


# ------------------------------ pure-JAX reference ---------------------------

def _conv_ref(x, w_flat, b, k, pad):
    cin = x.shape[-1]
    cout = w_flat.shape[-1]
    w = w_flat.reshape(k, k, cin, cout)
    y = jax.lax.conv_general_dilated(
        x, w, window_strides=(1, 1), padding=[(pad, pad), (pad, pad)],
        dimension_numbers=('NHWC', 'HWIO', 'NHWC'),
        precision=jax.lax.Precision.HIGHEST)
    return y + b


def _bn_ref(x, bn, eps=1e-5):
    gamma, beta, rmean, rvar = bn
    return (x - rmean) / jnp.sqrt(rvar + eps) * gamma + beta


def reference_forward(x_nchw, p):
    x = jnp.transpose(x_nchw, (0, 2, 3, 1)).astype(jnp.float32)
    h1 = jax.nn.relu(_bn_ref(_conv_ref(x, p['conv1_w'], p['conv1_b'], 3, 1), p['bn1']))
    h2 = _bn_ref(_conv_ref(h1, p['conv2_w'], p['conv2_b'], 3, 1), p['bn2'])

    avg = jnp.mean(h2, axis=(1, 2))
    mx = jnp.max(h2, axis=(1, 2))

    def mlp(v):
        return jax.nn.relu(v @ p['ca_w1'] + p['ca_b1']) @ p['ca_w2'] + p['ca_b2']

    att = jax.nn.sigmoid(mlp(avg) + mlp(mx))
    y = h2 * att[:, None, None, :]

    pm = jnp.stack([jnp.mean(y, -1), jnp.max(y, -1)], -1)
    sa = jax.nn.sigmoid(_conv_ref(pm, p['sp_w'].reshape(49 * 2, 1), p['sp_b'], 7, 3))
    y = sa * y

    sc = _bn_ref(_conv_ref(x, p['sc_w'], p['sc_b'], 1, 0), p['bn_sc'])
    return jnp.transpose(jax.nn.relu(y + sc), (0, 3, 1, 2))


# ----------------------------------- main ------------------------------------

if __name__ == "__main__":
    B, Cin, Cout, H, W = 2, 16, 32, 16, 16
    key = jax.random.PRNGKey(0)
    kx, kp = jax.random.split(key)
    x = jax.random.normal(kx, (B, Cin, H, W), jnp.float32)   # NCHW, like PyTorch
    params = init_params(kp, Cin, Cout, reduction=16)

    out = jax.jit(residual_block_forward)(x, params)
    out = jax.block_until_ready(out)
    assert out.shape == (B, Cout, H, W)

    ref = reference_forward(x, params)
    # bf16 GEMM operands (f32 accumulation / epilogues) -> 2e-2 tolerance.
    np.testing.assert_allclose(np.asarray(out), np.asarray(ref), rtol=2e-2, atol=2e-2)

    print("KERNEL_OK")
</pallas_src>

<mosaic_0001>
module attributes {stable_mosaic.version = 11 : i64} {
  func.func @_residual_block_kernel(%arg0: i32, %arg1: memref<1x16x256xf32, #tpu.memory_space<vmem>>, %arg2: memref<144x32xbf16, #tpu.memory_space<vmem>>, %arg3: memref<16x32xbf16, #tpu.memory_space<vmem>>, %arg4: memref<4x32xf32, #tpu.memory_space<vmem>>, %arg5: memref<288x32xbf16, #tpu.memory_space<vmem>>, %arg6: memref<2x32xf32, #tpu.memory_space<vmem>>, %arg7: memref<2x32xf32, #tpu.memory_space<vmem>>, %arg8: memref<2x1xf32, #tpu.memory_space<vmem>>, %arg9: memref<2x32xf32, #tpu.memory_space<vmem>>, %arg10: memref<1x32xf32, #tpu.memory_space<vmem>>, %arg11: memref<99xf32, #tpu.memory_space<smem>>, %arg12: memref<1x32x384xf32, #tpu.memory_space<vmem>>, %arg13: memref<448x16xbf16, #tpu.memory_space<vmem>>, %arg14: memref<448x32xbf16, #tpu.memory_space<vmem>>, %arg15: memref<32x384xf32, #tpu.memory_space<vmem>>, %arg16: memref<384x1xf32, #tpu.memory_space<vmem>>, %arg17: memref<22x24xf32, #tpu.memory_space<vmem>>, %arg18: memref<22x24xf32, #tpu.memory_space<vmem>>, %arg19: memref<1x384xf32, #tpu.memory_space<vmem>>) attributes {dimension_semantics = [#tpu.dimension_semantics<parallel>], iteration_bounds = array<i64: 2>, scalar_prefetch = 0 : i64, scratch_operands = 7 : i64, tpu.core_type = #tpu.core_type<tc>, window_params = [{transform_indices = @transform_0, window_bounds = array<i64: 1, 16, 256>}, {pipeline_mode = #tpu.pipeline_mode<synchronous>, transform_indices = @transform_1, window_bounds = array<i64: 144, 32>}, {pipeline_mode = #tpu.pipeline_mode<synchronous>, transform_indices = @transform_2, window_bounds = array<i64: 16, 32>}, {pipeline_mode = #tpu.pipeline_mode<synchronous>, transform_indices = @transform_3, window_bounds = array<i64: 4, 32>}, {pipeline_mode = #tpu.pipeline_mode<synchronous>, transform_indices = @transform_4, window_bounds = array<i64: 288, 32>}, {pipeline_mode = #tpu.pipeline_mode<synchronous>, transform_indices = @transform_5, window_bounds = array<i64: 2, 32>}, {pipeline_mode = #tpu.pipeline_mode<synchronous>, transform_indices = @transform_6, window_bounds = array<i64: 2, 32>}, {pipeline_mode = #tpu.pipeline_mode<synchronous>, transform_indices = @transform_7, window_bounds = array<i64: 2, 1>}, {pipeline_mode = #tpu.pipeline_mode<synchronous>, transform_indices = @transform_8, window_bounds = array<i64: 2, 32>}, {pipeline_mode = #tpu.pipeline_mode<synchronous>, transform_indices = @transform_9, window_bounds = array<i64: 1, 32>}, {transform_indices = @transform_10, window_bounds = array<i64: 99>}, {transform_indices = @transform_11, window_bounds = array<i64: 1, 32, 384>}]} {
    %cst = arith.constant 0.000000e+00 : f32
    %0 = vector.broadcast %cst : f32 to vector<384x1xf32>
    %c0 = arith.constant 0 : index
    %c0_0 = arith.constant 0 : index
    %1 = vector.load %arg16[%c0, %c0_0] : memref<384x1xf32, #tpu.memory_space<vmem>>, vector<384x1xf32>
    tpu.vector_store %arg16[%c0, %c0_0], %0 {strides = array<i32>} : memref<384x1xf32, #tpu.memory_space<vmem>>, vector<384x1xf32>,
    %cst_1 = arith.constant 1.000000e+00 : f32
    %2 = vector.broadcast %cst_1 : f32 to vector<16x1xf32>
    %c0_2 = arith.constant 0 : index
    %c0_3 = arith.constant 0 : index
    %3 = vector.load %arg16[%c0_2, %c0_3] : memref<384x1xf32, #tpu.memory_space<vmem>>, vector<16x1xf32>
    tpu.vector_store %arg16[%c0_2, %c0_3], %2 {strides = array<i32>} : memref<384x1xf32, #tpu.memory_space<vmem>>, vector<16x1xf32>,
    %cst_4 = arith.constant 1.000000e+00 : f32
    %4 = vector.broadcast %cst_4 : f32 to vector<16x1xf32>
    %c24 = arith.constant 24 : index
    %c0_5 = arith.constant 0 : index
    %5 = vector.load %arg16[%c24, %c0_5] : memref<384x1xf32, #tpu.memory_space<vmem>>, vector<16x1xf32>
    tpu.vector_store %arg16[%c24, %c0_5], %4 {strides = array<i32>} : memref<384x1xf32, #tpu.memory_space<vmem>>, vector<16x1xf32>,
    %cst_6 = arith.constant 1.000000e+00 : f32
    %6 = vector.broadcast %cst_6 : f32 to vector<16x1xf32>
    %c48 = arith.constant 48 : index
    %c0_7 = arith.constant 0 : index
    %7 = vector.load %arg16[%c48, %c0_7] : memref<384x1xf32, #tpu.memory_space<vmem>>, vector<16x1xf32>
    tpu.vector_store %arg16[%c48, %c0_7], %6 {strides = array<i32>} : memref<384x1xf32, #tpu.memory_space<vmem>>, vector<16x1xf32>,
    %cst_8 = arith.constant 1.000000e+00 : f32
    %8 = vector.broadcast %cst_8 : f32 to vector<16x1xf32>
    %c72 = arith.constant 72 : index
    %c0_9 = arith.constant 0 : index
    %9 = vector.load %arg16[%c72, %c0_9] : memref<384x1xf32, #tpu.memory_space<vmem>>, vector<16x1xf32>
    tpu.vector_store %arg16[%c72, %c0_9], %8 {strides = array<i32>} : memref<384x1xf32, #tpu.memory_space<vmem>>, vector<16x1xf32>,
    %cst_10 = arith.constant 1.000000e+00 : f32
    %10 = vector.broadcast %cst_10 : f32 to vector<16x1xf32>
    %c96 = arith.constant 96 : index
    %c0_11 = arith.constant 0 : index
    %11 = vector.load %arg16[%c96, %c0_11] : memref<384x1xf32, #tpu.memory_space<vmem>>, vector<16x1xf32>
    tpu.vector_store %arg16[%c96, %c0_11], %10 {strides = array<i32>} : memref<384x1xf32, #tpu.memory_space<vmem>>, vector<16x1xf32>,
    %cst_12 = arith.constant 1.000000e+00 : f32
    %12 = vector.broadcast %cst_12 : f32 to vector<16x1xf32>
    %c120 = arith.constant 120 : index
    %c0_13 = arith.constant 0 : index
    %13 = vector.load %arg16[%c120, %c0_13] : memref<384x1xf32, #tpu.memory_space<vmem>>, vector<16x1xf32>
    tpu.vector_store %arg16[%c120, %c0_13], %12 {strides = array<i32>} : memref<384x1xf32, #tpu.memory_space<vmem>>, vector<16x1xf32>,
    %cst_14 = arith.constant 1.000000e+00 : f32
    %14 = vector.broadcast %cst_14 : f32 to vector<16x1xf32>
    %c144 = arith.constant 144 : index
    %c0_15 = arith.constant 0 : index
    %15 = vector.load %arg16[%c144, %c0_15] : memref<384x1xf32, #tpu.memory_space<vmem>>, vector<16x1xf32>
    tpu.vector_store %arg16[%c144, %c0_15], %14 {strides = array<i32>} : memref<384x1xf32, #tpu.memory_space<vmem>>, vector<16x1xf32>,
    %cst_16 = arith.constant 1.000000e+00 : f32
    %16 = vector.broadcast %cst_16 : f32 to vector<16x1xf32>
    %c168 = arith.constant 168 : index
    %c0_17 = arith.constant 0 : index
    %17 = vector.load %arg16[%c168, %c0_17] : memref<384x1xf32, #tpu.memory_space<vmem>>, vector<16x1xf32>
    tpu.vector_store %arg16[%c168, %c0_17], %16 {strides = array<i32>} : memref<384x1xf32, #tpu.memory_space<vmem>>, vector<16x1xf32>,
    %cst_18 = arith.constant 1.000000e+00 : f32
    %18 = vector.broadcast %cst_18 : f32 to vector<16x1xf32>
    %c192 = arith.constant 192 : index
    %c0_19 = arith.constant 0 : index
    %19 = vector.load %arg16[%c192, %c0_19] : memref<384x1xf32, #tpu.memory_space<vmem>>, vector<16x1xf32>
    tpu.vector_store %arg16[%c192, %c0_19], %18 {strides = array<i32>} : memref<384x1xf32, #tpu.memory_space<vmem>>, vector<16x1xf32>,
    %cst_20 = arith.constant 1.000000e+00 : f32
    %20 = vector.broadcast %cst_20 : f32 to vector<16x1xf32>
    %c216 = arith.constant 216 : index
    %c0_21 = arith.constant 0 : index
    %21 = vector.load %arg16[%c216, %c0_21] : memref<384x1xf32, #tpu.memory_space<vmem>>, vector<16x1xf32>
    tpu.vector_store %arg16[%c216, %c0_21], %20 {strides = array<i32>} : memref<384x1xf32, #tpu.memory_space<vmem>>, vector<16x1xf32>,
    %cst_22 = arith.constant 1.000000e+00 : f32
    %22 = vector.broadcast %cst_22 : f32 to vector<16x1xf32>
    %c240 = arith.constant 240 : index
    %c0_23 = arith.constant 0 : index
    %23 = vector.load %arg16[%c240, %c0_23] : memref<384x1xf32, #tpu.memory_space<vmem>>, vector<16x1xf32>
    tpu.vector_store %arg16[%c240, %c0_23], %22 {strides = array<i32>} : memref<384x1xf32, #tpu.memory_space<vmem>>, vector<16x1xf32>,
    %cst_24 = arith.constant 1.000000e+00 : f32
    %24 = vector.broadcast %cst_24 : f32 to vector<16x1xf32>
    %c264 = arith.constant 264 : index
    %c0_25 = arith.constant 0 : index
    %25 = vector.load %arg16[%c264, %c0_25] : memref<384x1xf32, #tpu.memory_space<vmem>>, vector<16x1xf32>
    tpu.vector_store %arg16[%c264, %c0_25], %24 {strides = array<i32>} : memref<384x1xf32, #tpu.memory_space<vmem>>, vector<16x1xf32>,
    %cst_26 = arith.constant 1.000000e+00 : f32
    %26 = vector.broadcast %cst_26 : f32 to vector<16x1xf32>
    %c288 = arith.constant 288 : index
    %c0_27 = arith.constant 0 : index
    %27 = vector.load %arg16[%c288, %c0_27] : memref<384x1xf32, #tpu.memory_space<vmem>>, vector<16x1xf32>
    tpu.vector_store %arg16[%c288, %c0_27], %26 {strides = array<i32>} : memref<384x1xf32, #tpu.memory_space<vmem>>, vector<16x1xf32>,
    %cst_28 = arith.constant 1.000000e+00 : f32
    %28 = vector.broadcast %cst_28 : f32 to vector<16x1xf32>
    %c312 = arith.constant 312 : index
    %c0_29 = arith.constant 0 : index
    %29 = vector.load %arg16[%c312, %c0_29] : memref<384x1xf32, #tpu.memory_space<vmem>>, vector<16x1xf32>
    tpu.vector_store %arg16[%c312, %c0_29], %28 {strides = array<i32>} : memref<384x1xf32, #tpu.memory_space<vmem>>, vector<16x1xf32>,
    %cst_30 = arith.constant 1.000000e+00 : f32
    %30 = vector.broadcast %cst_30 : f32 to vector<16x1xf32>
    %c336 = arith.constant 336 : index
    %c0_31 = arith.constant 0 : index
    %31 = vector.load %arg16[%c336, %c0_31] : memref<384x1xf32, #tpu.memory_space<vmem>>, vector<16x1xf32>
    tpu.vector_store %arg16[%c336, %c0_31], %30 {strides = array<i32>} : memref<384x1xf32, #tpu.memory_space<vmem>>, vector<16x1xf32>,
    %cst_32 = arith.constant 1.000000e+00 : f32
    %32 = vector.broadcast %cst_32 : f32 to vector<16x1xf32>
    %c360 = arith.constant 360 : index
    %c0_33 = arith.constant 0 : index
    %33 = vector.load %arg16[%c360, %c0_33] : memref<384x1xf32, #tpu.memory_space<vmem>>, vector<16x1xf32>
    tpu.vector_store %arg16[%c360, %c0_33], %32 {strides = array<i32>} : memref<384x1xf32, #tpu.memory_space<vmem>>, vector<16x1xf32>,
    %c0_34 = arith.constant 0 : index
    %c0_35 = arith.constant 0 : index
    %34 = vector.load %arg16[%c0_34, %c0_35] : memref<384x1xf32, #tpu.memory_space<vmem>>, vector<384x1xf32>
    %cst_36 = arith.constant 0.000000e+00 : bf16
    %35 = vector.broadcast %cst_36 : bf16 to vector<448x16xbf16>
    %c0_37 = arith.constant 0 : index
    %c0_38 = arith.constant 0 : index
    %36 = vector.load %arg13[%c0_37, %c0_38] : memref<448x16xbf16, #tpu.memory_space<vmem>>, vector<448x16xbf16>
    tpu.vector_store %arg13[%c0_37, %c0_38], %35 {strides = array<i32>} : memref<448x16xbf16, #tpu.memory_space<vmem>>, vector<448x16xbf16>,
    %c0_39 = arith.constant 0 : index
    %c0_40 = arith.constant 0 : index
    %c0_41 = arith.constant 0 : index
    %37 = vector.load %arg1[%c0_39, %c0_40, %c0_41] : memref<1x16x256xf32, #tpu.memory_space<vmem>>, vector<1x16x256xf32>
    %38 = vector.shape_cast %37 : vector<1x16x256xf32> to vector<16x256xf32>
    %39 = tpu.transpose %38, [1, 0] : vector<16x256xf32> -> vector<256x16xf32>
    %40 = arith.truncf %39 : vector<256x16xf32> to vector<256x16xbf16>
    %41 = vector.extract_strided_slice %40 {offsets = [0, 0], sizes = [16, 16], strides = [1, 1]} : vector<256x16xbf16> to vector<16x16xbf16>
    %c32 = arith.constant 32 : index
    %c0_42 = arith.constant 0 : index
    %42 = vector.load %arg13[%c32, %c0_42] : memref<448x16xbf16, #tpu.memory_space<vmem>>, vector<16x16xbf16>
    tpu.vector_store %arg13[%c32, %c0_42], %41 {strides = array<i32>} : memref<448x16xbf16, #tpu.memory_space<vmem>>, vector<16x16xbf16>,
    %43 = vector.extract_strided_slice %40 {offsets = [16, 0], sizes = [16, 16], strides = [1, 1]} : vector<256x16xbf16> to vector<16x16xbf16>
    %c56 = arith.constant 56 : index
    %c0_43 = arith.constant 0 : index
    %44 = vector.load %arg13[%c56, %c0_43] : memref<448x16xbf16, #tpu.memory_space<vmem>>, vector<16x16xbf16>
    tpu.vector_store %arg13[%c56, %c0_43], %43 {strides = array<i32>} : memref<448x16xbf16, #tpu.memory_space<vmem>>, vector<16x16xbf16>,
    %45 = vector.extract_strided_slice %40 {offsets = [32, 0], sizes = [16, 16], strides = [1, 1]} : vector<256x16xbf16> to vector<16x16xbf16>
    %c80 = arith.constant 80 : index
    %c0_44 = arith.constant 0 : index
    %46 = vector.load %arg13[%c80, %c0_44] : memref<448x16xbf16, #tpu.memory_space<vmem>>, vector<16x16xbf16>
    tpu.vector_store %arg13[%c80, %c0_44], %45 {strides = array<i32>} : memref<448x16xbf16, #tpu.memory_space<vmem>>, vector<16x16xbf16>,
    %47 = vector.extract_strided_slice %40 {offsets = [48, 0], sizes = [16, 16], strides = [1, 1]} : vector<256x16xbf16> to vector<16x16xbf16>
    %c104 = arith.constant 104 : index
    %c0_45 = arith.constant 0 : index
    %48 = vector.load %arg13[%c104, %c0_45] : memref<448x16xbf16, #tpu.memory_space<vmem>>, vector<16x16xbf16>
    tpu.vector_store %arg13[%c104, %c0_45], %47 {strides = array<i32>} : memref<448x16xbf16, #tpu.memory_space<vmem>>, vector<16x16xbf16>,
    %49 = vector.extract_strided_slice %40 {offsets = [64, 0], sizes = [16, 16], strides = [1, 1]} : vector<256x16xbf16> to vector<16x16xbf16>
    %c128 = arith.constant 128 : index
    %c0_46 = arith.constant 0 : index
    %50 = vector.load %arg13[%c128, %c0_46] : memref<448x16xbf16, #tpu.memory_space<vmem>>, vector<16x16xbf16>
    tpu.vector_store %arg13[%c128, %c0_46], %49 {strides = array<i32>} : memref<448x16xbf16, #tpu.memory_space<vmem>>, vector<16x16xbf16>,
    %51 = vector.extract_strided_slice %40 {offsets = [80, 0], sizes = [16, 16], strides = [1, 1]} : vector<256x16xbf16> to vector<16x16xbf16>
    %c152 = arith.constant 152 : index
    %c0_47 = arith.constant 0 : index
    %52 = vector.load %arg13[%c152, %c0_47] : memref<448x16xbf16, #tpu.memory_space<vmem>>, vector<16x16xbf16>
    tpu.vector_store %arg13[%c152, %c0_47], %51 {strides = array<i32>} : memref<448x16xbf16, #tpu.memory_space<vmem>>, vector<16x16xbf16>,
    %53 = vector.extract_strided_slice %40 {offsets = [96, 0], sizes = [16, 16], strides = [1, 1]} : vector<256x16xbf16> to vector<16x16xbf16>
    %c176 = arith.constant 176 : index
    %c0_48 = arith.constant 0 : index
    %54 = vector.load %arg13[%c176, %c0_48] : memref<448x16xbf16, #tpu.memory_space<vmem>>, vector<16x16xbf16>
    tpu.vector_store %arg13[%c176, %c0_48], %53 {strides = array<i32>} : memref<448x16xbf16, #tpu.memory_space<vmem>>, vector<16x16xbf16>,
    %55 = vector.extract_strided_slice %40 {offsets = [112, 0], sizes = [16, 16], strides = [1, 1]} : vector<256x16xbf16> to vector<16x16xbf16>
    %c200 = arith.constant 200 : index
    %c0_49 = arith.constant 0 : index
    %56 = vector.load %arg13[%c200, %c0_49] : memref<448x16xbf16, #tpu.memory_space<vmem>>, vector<16x16xbf16>
    tpu.vector_store %arg13[%c200, %c0_49], %55 {strides = array<i32>} : memref<448x16xbf16, #tpu.memory_space<vmem>>, vector<16x16xbf16>,
    %57 = vector.extract_strided_slice %40 {offsets = [128, 0], sizes = [16, 16], strides = [1, 1]} : vector<256x16xbf16> to vector<16x16xbf16>
    %c224 = arith.constant 224 : index
    %c0_50 = arith.constant 0 : index
    %58 = vector.load %arg13[%c224, %c0_50] : memref<448x16xbf16, #tpu.memory_space<vmem>>, vector<16x16xbf16>
    tpu.vector_store %arg13[%c224, %c0_50], %57 {strides = array<i32>} : memref<448x16xbf16, #tpu.memory_space<vmem>>, vector<16x16xbf16>,
    %59 = vector.extract_strided_slice %40 {offsets = [144, 0], sizes = [16, 16], strides = [1, 1]} : vector<256x16xbf16> to vector<16x16xbf16>
    %c248 = arith.constant 248 : index
    %c0_51 = arith.constant 0 : index
    %60 = vector.load %arg13[%c248, %c0_51] : memref<448x16xbf16, #tpu.memory_space<vmem>>, vector<16x16xbf16>
    tpu.vector_store %arg13[%c248, %c0_51], %59 {strides = array<i32>} : memref<448x16xbf16, #tpu.memory_space<vmem>>, vector<16x16xbf16>,
    %61 = vector.extract_strided_slice %40 {offsets = [160, 0], sizes = [16, 16], strides = [1, 1]} : vector<256x16xbf16> to vector<16x16xbf16>
    %c272 = arith.constant 272 : index
    %c0_52 = arith.constant 0 : index
    %62 = vector.load %arg13[%c272, %c0_52] : memref<448x16xbf16, #tpu.memory_space<vmem>>, vector<16x16xbf16>
    tpu.vector_store %arg13[%c272, %c0_52], %61 {strides = array<i32>} : memref<448x16xbf16, #tpu.memory_space<vmem>>, vector<16x16xbf16>,
    %63 = vector.extract_strided_slice %40 {offsets = [176, 0], sizes = [16, 16], strides = [1, 1]} : vector<256x16xbf16> to vector<16x16xbf16>
    %c296 = arith.constant 296 : index
    %c0_53 = arith.constant 0 : index
    %64 = vector.load %arg13[%c296, %c0_53] : memref<448x16xbf16, #tpu.memory_space<vmem>>, vector<16x16xbf16>
    tpu.vector_store %arg13[%c296, %c0_53], %63 {strides = array<i32>} : memref<448x16xbf16, #tpu.memory_space<vmem>>, vector<16x16xbf16>,
    %65 = vector.extract_strided_slice %40 {offsets = [192, 0], sizes = [16, 16], strides = [1, 1]} : vector<256x16xbf16> to vector<16x16xbf16>
    %c320 = arith.constant 320 : index
    %c0_54 = arith.constant 0 : index
    %66 = vector.load %arg13[%c320, %c0_54] : memref<448x16xbf16, #tpu.memory_space<vmem>>, vector<16x16xbf16>
    tpu.vector_store %arg13[%c320, %c0_54], %65 {strides = array<i32>} : memref<448x16xbf16, #tpu.memory_space<vmem>>, vector<16x16xbf16>,
    %67 = vector.extract_strided_slice %40 {offsets = [208, 0], sizes = [16, 16], strides = [1, 1]} : vector<256x16xbf16> to vector<16x16xbf16>
    %c344 = arith.constant 344 : index
    %c0_55 = arith.constant 0 : index
    %68 = vector.load %arg13[%c344, %c0_55] : memref<448x16xbf16, #tpu.memory_space<vmem>>, vector<16x16xbf16>
    tpu.vector_store %arg13[%c344, %c0_55], %67 {strides = array<i32>} : memref<448x16xbf16, #tpu.memory_space<vmem>>, vector<16x16xbf16>,
    %69 = vector.extract_strided_slice %40 {offsets = [224, 0], sizes = [16, 16], strides = [1, 1]} : vector<256x16xbf16> to vector<16x16xbf16>
    %c368 = arith.constant 368 : index
    %c0_56 = arith.constant 0 : index
    %70 = vector.load %arg13[%c368, %c0_56] : memref<448x16xbf16, #tpu.memory_space<vmem>>, vector<16x16xbf16>
    tpu.vector_store %arg13[%c368, %c0_56], %69 {strides = array<i32>} : memref<448x16xbf16, #tpu.memory_space<vmem>>, vector<16x16xbf16>,
    %71 = vector.extract_strided_slice %40 {offsets = [240, 0], sizes = [16, 16], strides = [1, 1]} : vector<256x16xbf16> to vector<16x16xbf16>
    %c392 = arith.constant 392 : index
    %c0_57 = arith.constant 0 : index
    %72 = vector.load %arg13[%c392, %c0_57] : memref<448x16xbf16, #tpu.memory_space<vmem>>, vector<16x16xbf16>
    tpu.vector_store %arg13[%c392, %c0_57], %71 {strides = array<i32>} : memref<448x16xbf16, #tpu.memory_space<vmem>>, vector<16x16xbf16>,
    %c7 = arith.constant 7 : index
    %c0_58 = arith.constant 0 : index
    %73 = vector.load %arg13[%c7, %c0_58] : memref<448x16xbf16, #tpu.memory_space<vmem>>, vector<384x16xbf16>
    %c8 = arith.constant 8 : index
    %c0_59 = arith.constant 0 : index
    %74 = vector.load %arg13[%c8, %c0_59] : memref<448x16xbf16, #tpu.memory_space<vmem>>, vector<384x16xbf16>
    %c9 = arith.constant 9 : index
    %c0_60 = arith.constant 0 : index
    %75 = vector.load %arg13[%c9, %c0_60] : memref<448x16xbf16, #tpu.memory_space<vmem>>, vector<384x16xbf16>
    %c31 = arith.constant 31 : index
    %c0_61 = arith.constant 0 : index
    %76 = vector.load %arg13[%c31, %c0_61] : memref<448x16xbf16, #tpu.memory_space<vmem>>, vector<384x16xbf16>
    %c32_62 = arith.constant 32 : index
    %c0_63 = arith.constant 0 : index
    %77 = vector.load %arg13[%c32_62, %c0_63] : memref<448x16xbf16, #tpu.memory_space<vmem>>, vector<384x16xbf16>
    %c33 = arith.constant 33 : index
    %c0_64 = arith.constant 0 : index
    %78 = vector.load %arg13[%c33, %c0_64] : memref<448x16xbf16, #tpu.memory_space<vmem>>, vector<384x16xbf16>
    %c55 = arith.constant 55 : index
    %c0_65 = arith.constant 0 : index
    %79 = vector.load %arg13[%c55, %c0_65] : memref<448x16xbf16, #tpu.memory_space<vmem>>, vector<384x16xbf16>
    %c56_66 = arith.constant 56 : index
    %c0_67 = arith.constant 0 : index
    %80 = vector.load %arg13[%c56_66, %c0_67] : memref<448x16xbf16, #tpu.memory_space<vmem>>, vector<384x16xbf16>
    %c57 = arith.constant 57 : index
    %c0_68 = arith.constant 0 : index
    %81 = vector.load %arg13[%c57, %c0_68] : memref<448x16xbf16, #tpu.memory_space<vmem>>, vector<384x16xbf16>
    %82 = tpu.concatenate %73, %74, %75, %76, %77, %78, %79, %80, %81 in 1 : vector<384x16xbf16>, vector<384x16xbf16>, vector<384x16xbf16>, vector<384x16xbf16>, vector<384x16xbf16>, vector<384x16xbf16>, vector<384x16xbf16>, vector<384x16xbf16>, vector<384x16xbf16> -> vector<384x144xbf16>
    %c0_69 = arith.constant 0 : index
    %c0_70 = arith.constant 0 : index
    %83 = vector.load %arg2[%c0_69, %c0_70] : memref<144x32xbf16, #tpu.memory_space<vmem>>, vector<144x32xbf16>
    %cst_71 = arith.constant dense<0.000000e+00> : vector<384x32xf32>
    %84 = tpu.matmul %82, %83, %cst_71 {dimension_numbers = #tpu.dot_dimension_numbers<[1], [0], [0], [1], [0, 0, 1, 1], [], []>} : vector<384x144xbf16>, vector<144x32xbf16>, vector<384x32xf32> -> vector<384x32xf32>
    %c0_72 = arith.constant 0 : index
    %c0_73 = arith.constant 0 : index
    %85 = vector.load %arg4[%c0_72, %c0_73] : memref<4x32xf32, #tpu.memory_space<vmem>>, vector<1x32xf32>
    %86 = vector.broadcast %85 : vector<1x32xf32> to vector<384x32xf32>
    %87 = arith.mulf %84, %86 : vector<384x32xf32>
    %c1 = arith.constant 1 : index
    %c0_74 = arith.constant 0 : index
    %88 = vector.load %arg4[%c1, %c0_74] : memref<4x32xf32, #tpu.memory_space<vmem>>, vector<1x32xf32>
    %89 = vector.broadcast %88 : vector<1x32xf32> to vector<384x32xf32>
    %90 = arith.addf %87, %89 : vector<384x32xf32>
    %cst_75 = arith.constant 0.000000e+00 : f32
    %91 = vector.broadcast %cst_75 : f32 to vector<384x32xf32>
    %92 = arith.maximumf %90, %91 : vector<384x32xf32>
    %93 = vector.broadcast %34 : vector<384x1xf32> to vector<384x32xf32>
    %94 = arith.mulf %92, %93 : vector<384x32xf32>
    %c0_76 = arith.constant 0 : index
    %c0_77 = arith.constant 0 : index
    %95 = vector.load %arg3[%c0_76, %c0_77] : memref<16x32xbf16, #tpu.memory_space<vmem>>, vector<16x32xbf16>
    %cst_78 = arith.constant dense<0.000000e+00> : vector<384x32xf32>
    %96 = tpu.matmul %77, %95, %cst_78 {dimension_numbers = #tpu.dot_dimension_numbers<[1], [0], [0], [1], [0, 0, 1, 1], [], []>} : vector<384x16xbf16>, vector<16x32xbf16>, vector<384x32xf32> -> vector<384x32xf32>
    %c2 = arith.constant 2 : index
    %c0_79 = arith.constant 0 : index
    %97 = vector.load %arg4[%c2, %c0_79] : memref<4x32xf32, #tpu.memory_space<vmem>>, vector<1x32xf32>
    %98 = vector.broadcast %97 : vector<1x32xf32> to vector<384x32xf32>
    %99 = arith.mulf %96, %98 : vector<384x32xf32>
    %c3 = arith.constant 3 : index
    %c0_80 = arith.constant 0 : index
    %100 = vector.load %arg4[%c3, %c0_80] : memref<4x32xf32, #tpu.memory_space<vmem>>, vector<1x32xf32>
    %101 = vector.broadcast %100 : vector<1x32xf32> to vector<384x32xf32>
    %102 = arith.addf %99, %101 : vector<384x32xf32>
    %103 = tpu.transpose %102, [1, 0] : vector<384x32xf32> -> vector<32x384xf32>
    %c0_81 = arith.constant 0 : index
    %c0_82 = arith.constant 0 : index
    %104 = vector.load %arg15[%c0_81, %c0_82] : memref<32x384xf32, #tpu.memory_space<vmem>>, vector<32x384xf32>
    tpu.vector_store %arg15[%c0_81, %c0_82], %103 {strides = array<i32>} : memref<32x384xf32, #tpu.memory_space<vmem>>, vector<32x384xf32>,
    %cst_83 = arith.constant 0.000000e+00 : bf16
    %105 = vector.broadcast %cst_83 : bf16 to vector<32x32xbf16>
    %c0_84 = arith.constant 0 : index
    %c0_85 = arith.constant 0 : index
    %106 = vector.load %arg14[%c0_84, %c0_85] : memref<448x32xbf16, #tpu.memory_space<vmem>>, vector<32x32xbf16>
    tpu.vector_store %arg14[%c0_84, %c0_85], %105 {strides = array<i32>} : memref<448x32xbf16, #tpu.memory_space<vmem>>, vector<32x32xbf16>,
    %cst_86 = arith.constant 0.000000e+00 : bf16
    %107 = vector.broadcast %cst_86 : bf16 to vector<32x32xbf16>
    %c416 = arith.constant 416 : index
    %c0_87 = arith.constant 0 : index
    %108 = vector.load %arg14[%c416, %c0_87] : memref<448x32xbf16, #tpu.memory_space<vmem>>, vector<32x32xbf16>
    tpu.vector_store %arg14[%c416, %c0_87], %107 {strides = array<i32>} : memref<448x32xbf16, #tpu.memory_space<vmem>>, vector<32x32xbf16>,
    %109 = arith.truncf %94 : vector<384x32xf32> to vector<384x32xbf16>
    %c32_88 = arith.constant 32 : index
    %c0_89 = arith.constant 0 : index
    %110 = vector.load %arg14[%c32_88, %c0_89] : memref<448x32xbf16, #tpu.memory_space<vmem>>, vector<384x32xbf16>
    tpu.vector_store %arg14[%c32_88, %c0_89], %109 {strides = array<i32>} : memref<448x32xbf16, #tpu.memory_space<vmem>>, vector<384x32xbf16>,
    %c7_90 = arith.constant 7 : index
    %c0_91 = arith.constant 0 : index
    %111 = vector.load %arg14[%c7_90, %c0_91] : memref<448x32xbf16, #tpu.memory_space<vmem>>, vector<384x32xbf16>
    %c8_92 = arith.constant 8 : index
    %c0_93 = arith.constant 0 : index
    %112 = vector.load %arg14[%c8_92, %c0_93] : memref<448x32xbf16, #tpu.memory_space<vmem>>, vector<384x32xbf16>
    %c9_94 = arith.constant 9 : index
    %c0_95 = arith.constant 0 : index
    %113 = vector.load %arg14[%c9_94, %c0_95] : memref<448x32xbf16, #tpu.memory_space<vmem>>, vector<384x32xbf16>
    %c31_96 = arith.constant 31 : index
    %c0_97 = arith.constant 0 : index
    %114 = vector.load %arg14[%c31_96, %c0_97] : memref<448x32xbf16, #tpu.memory_space<vmem>>, vector<384x32xbf16>
    %c32_98 = arith.constant 32 : index
    %c0_99 = arith.constant 0 : index
    %115 = vector.load %arg14[%c32_98, %c0_99] : memref<448x32xbf16, #tpu.memory_space<vmem>>, vector<384x32xbf16>
    %c33_100 = arith.constant 33 : index
    %c0_101 = arith.constant 0 : index
    %116 = vector.load %arg14[%c33_100, %c0_101] : memref<448x32xbf16, #tpu.memory_space<vmem>>, vector<384x32xbf16>
    %c55_102 = arith.constant 55 : index
    %c0_103 = arith.constant 0 : index
    %117 = vector.load %arg14[%c55_102, %c0_103] : memref<448x32xbf16, #tpu.memory_space<vmem>>, vector<384x32xbf16>
    %c56_104 = arith.constant 56 : index
    %c0_105 = arith.constant 0 : index
    %118 = vector.load %arg14[%c56_104, %c0_105] : memref<448x32xbf16, #tpu.memory_space<vmem>>, vector<384x32xbf16>
    %c57_106 = arith.constant 57 : index
    %c0_107 = arith.constant 0 : index
    %119 = vector.load %arg14[%c57_106, %c0_107] : memref<448x32xbf16, #tpu.memory_space<vmem>>, vector<384x32xbf16>
    %120 = tpu.concatenate %111, %112, %113, %114, %115, %116, %117, %118, %119 in 1 : vector<384x32xbf16>, vector<384x32xbf16>, vector<384x32xbf16>, vector<384x32xbf16>, vector<384x32xbf16>, vector<384x32xbf16>, vector<384x32xbf16>, vector<384x32xbf16>, vector<384x32xbf16> -> vector<384x288xbf16>
    %c0_108 = arith.constant 0 : index
    %c0_109 = arith.constant 0 : index
    %121 = vector.load %arg5[%c0_108, %c0_109] : memref<288x32xbf16, #tpu.memory_space<vmem>>, vector<288x32xbf16>
    %cst_110 = arith.constant dense<0.000000e+00> : vector<384x32xf32>
    %122 = tpu.matmul %120, %121, %cst_110 {dimension_numbers = #tpu.dot_dimension_numbers<[1], [0], [0], [1], [0, 0, 1, 1], [], []>} : vector<384x288xbf16>, vector<288x32xbf16>, vector<384x32xf32> -> vector<384x32xf32>
    %c0_111 = arith.constant 0 : index
    %c0_112 = arith.constant 0 : index
    %123 = vector.load %arg6[%c0_111, %c0_112] : memref<2x32xf32, #tpu.memory_space<vmem>>, vector<1x32xf32>
    %124 = vector.broadcast %123 : vector<1x32xf32> to vector<384x32xf32>
    %125 = arith.mulf %122, %124 : vector<384x32xf32>
    %c1_113 = arith.constant 1 : index
    %c0_114 = arith.constant 0 : index
    %126 = vector.load %arg6[%c1_113, %c0_114] : memref<2x32xf32, #tpu.memory_space<vmem>>, vector<1x32xf32>
    %127 = vector.broadcast %126 : vector<1x32xf32> to vector<384x32xf32>
    %128 = arith.addf %125, %127 : vector<384x32xf32>
    %129 = vector.broadcast %34 : vector<384x1xf32> to vector<384x32xf32>
    %130 = arith.mulf %128, %129 : vector<384x32xf32>
    %cst_115 = arith.constant dense<0.000000e+00> : vector<32xf32>
    %131 = vector.multi_reduction <add>, %130, %cst_115 [0] : vector<384x32xf32> to vector<32xf32>
    %132 = vector.shape_cast %131 : vector<32xf32> to vector<1x32xf32>
    %cst_116 = arith.constant 3.906250e-03 : f32
    %133 = vector.broadcast %cst_116 : f32 to vector<1x32xf32>
    %134 = arith.mulf %132, %133 : vector<1x32xf32>
    %cst_117 = arith.constant 5.000000e-01 : f32
    %135 = vector.broadcast %cst_117 : f32 to vector<384x1xf32>
    %136 = arith.cmpf ogt, %34, %135 : vector<384x1xf32>
    %cst_118 = arith.constant 0xFF800000 : f32
    %137 = vector.shape_cast %136 : vector<384x1xi1> to vector<384x1xi1>
    %138 = vector.broadcast %137 : vector<384x1xi1> to vector<384x32xi1>
    %139 = vector.broadcast %cst_118 : f32 to vector<384x32xf32>
    %140 = arith.select %138, %128, %139 : vector<384x32xi1>, vector<384x32xf32>
    %cst_119 = arith.constant dense<0xFF800000> : vector<32xf32>
    %141 = vector.multi_reduction <maximumf>, %140, %cst_119 [0] : vector<384x32xf32> to vector<32xf32>
    %142 = vector.shape_cast %141 : vector<32xf32> to vector<1x32xf32>
    %c0_120 = arith.constant 0 : index
    %c0_121 = arith.constant 0 : index
    %143 = vector.load %arg7[%c0_120, %c0_121] : memref<2x32xf32, #tpu.memory_space<vmem>>, vector<2x32xf32>
    %144 = vector.broadcast %134 : vector<1x32xf32> to vector<2x32xf32>
    %145 = arith.mulf %144, %143 : vector<2x32xf32>
    %cst_122 = arith.constant dense<0.000000e+00> : vector<2xf32>
    %146 = vector.multi_reduction <add>, %145, %cst_122 [1] : vector<2x32xf32> to vector<2xf32>
    %147 = vector.shape_cast %146 : vector<2xf32> to vector<2x1xf32>
    %c0_123 = arith.constant 0 : index
    %c0_124 = arith.constant 0 : index
    %148 = vector.load %arg8[%c0_123, %c0_124] : memref<2x1xf32, #tpu.memory_space<vmem>>, vector<2x1xf32>
    %149 = arith.addf %147, %148 : vector<2x1xf32>
    %cst_125 = arith.constant 0.000000e+00 : f32
    %150 = vector.broadcast %cst_125 : f32 to vector<2x1xf32>
    %151 = arith.maximumf %149, %150 : vector<2x1xf32>
    %c0_126 = arith.constant 0 : index
    %c0_127 = arith.constant 0 : index
    %152 = vector.load %arg9[%c0_126, %c0_127] : memref<2x32xf32, #tpu.memory_space<vmem>>, vector<2x32xf32>
    %153 = vector.broadcast %151 : vector<2x1xf32> to vector<2x32xf32>
    %154 = arith.mulf %153, %152 : vector<2x32xf32>
    %cst_128 = arith.constant dense<0.000000e+00> : vector<32xf32>
    %155 = vector.multi_reduction <add>, %154, %cst_128 [0] : vector<2x32xf32> to vector<32xf32>
    %156 = vector.shape_cast %155 : vector<32xf32> to vector<1x32xf32>
    %c0_129 = arith.constant 0 : index
    %c0_130 = arith.constant 0 : index
    %157 = vector.load %arg10[%c0_129, %c0_130] : memref<1x32xf32, #tpu.memory_space<vmem>>, vector<1x32xf32>
    %158 = arith.addf %156, %157 : vector<1x32xf32>
    %c0_131 = arith.constant 0 : index
    %c0_132 = arith.constant 0 : index
    %159 = vector.load %arg7[%c0_131, %c0_132] : memref<2x32xf32, #tpu.memory_space<vmem>>, vector<2x32xf32>
    %160 = vector.broadcast %142 : vector<1x32xf32> to vector<2x32xf32>
    %161 = arith.mulf %160, %159 : vector<2x32xf32>
    %cst_133 = arith.constant dense<0.000000e+00> : vector<2xf32>
    %162 = vector.multi_reduction <add>, %161, %cst_133 [1] : vector<2x32xf32> to vector<2xf32>
    %163 = vector.shape_cast %162 : vector<2xf32> to vector<2x1xf32>
    %c0_134 = arith.constant 0 : index
    %c0_135 = arith.constant 0 : index
    %164 = vector.load %arg8[%c0_134, %c0_135] : memref<2x1xf32, #tpu.memory_space<vmem>>, vector<2x1xf32>
    %165 = arith.addf %163, %164 : vector<2x1xf32>
    %cst_136 = arith.constant 0.000000e+00 : f32
    %166 = vector.broadcast %cst_136 : f32 to vector<2x1xf32>
    %167 = arith.maximumf %165, %166 : vector<2x1xf32>
    %c0_137 = arith.constant 0 : index
    %c0_138 = arith.constant 0 : index
    %168 = vector.load %arg9[%c0_137, %c0_138] : memref<2x32xf32, #tpu.memory_space<vmem>>, vector<2x32xf32>
    %169 = vector.broadcast %167 : vector<2x1xf32> to vector<2x32xf32>
    %170 = arith.mulf %169, %168 : vector<2x32xf32>
    %cst_139 = arith.constant dense<0.000000e+00> : vector<32xf32>
    %171 = vector.multi_reduction <add>, %170, %cst_139 [0] : vector<2x32xf32> to vector<32xf32>
    %172 = vector.shape_cast %171 : vector<32xf32> to vector<1x32xf32>
    %c0_140 = arith.constant 0 : index
    %c0_141 = arith.constant 0 : index
    %173 = vector.load %arg10[%c0_140, %c0_141] : memref<1x32xf32, #tpu.memory_space<vmem>>, vector<1x32xf32>
    %174 = arith.addf %172, %173 : vector<1x32xf32>
    %175 = arith.addf %158, %174 : vector<1x32xf32>
    %176 = arith.negf %175 : vector<1x32xf32>
    %177 = math.exp %176 : vector<1x32xf32>
    %cst_142 = arith.constant 1.000000e+00 : f32
    %178 = vector.broadcast %cst_142 : f32 to vector<1x32xf32>
    %179 = arith.addf %178, %177 : vector<1x32xf32>
    %180 = arith.divf %178, %179 : vector<1x32xf32>
    %181 = vector.broadcast %180 : vector<1x32xf32> to vector<384x32xf32>
    %182 = arith.mulf %128, %181 : vector<384x32xf32>
    %183 = tpu.transpose %182, [1, 0] : vector<384x32xf32> -> vector<32x384xf32>
    %cst_143 = arith.constant dense<0.000000e+00> : vector<384xf32>
    %184 = vector.multi_reduction <add>, %183, %cst_143 [0] : vector<32x384xf32> to vector<384xf32>
    %185 = vector.shape_cast %184 : vector<384xf32> to vector<1x384xf32>
    %cst_144 = arith.constant 3.200000e+01 : f32
    %186 = vector.broadcast %cst_144 : f32 to vector<1x384xf32>
    %187 = arith.divf %185, %186 : vector<1x384xf32>
    %cst_145 = arith.constant dense<0xFF800000> : vector<384xf32>
    %188 = vector.multi_reduction <maximumf>, %183, %cst_145 [0] : vector<32x384xf32> to vector<384xf32>
    %189 = vector.shape_cast %188 : vector<384xf32> to vector<1x384xf32>
    %cst_146 = arith.constant 0.000000e+00 : f32
    %190 = vector.broadcast %cst_146 : f32 to vector<22x24xf32>
    %c0_147 = arith.constant 0 : index
    %c0_148 = arith.constant 0 : index
    %191 = vector.load %arg17[%c0_147, %c0_148] : memref<22x24xf32, #tpu.memory_space<vmem>>, vector<22x24xf32>
    tpu.vector_store %arg17[%c0_147, %c0_148], %190 {strides = array<i32>} : memref<22x24xf32, #tpu.memory_space<vmem>>, vector<22x24xf32>,
    %cst_149 = arith.constant 0.000000e+00 : f32
    %192 = vector.broadcast %cst_149 : f32 to vector<22x24xf32>
    %c0_150 = arith.constant 0 : index
    %c0_151 = arith.constant 0 : index
    %193 = vector.load %arg18[%c0_150, %c0_151] : memref<22x24xf32, #tpu.memory_space<vmem>>, vector<22x24xf32>
    tpu.vector_store %arg18[%c0_150, %c0_151], %192 {strides = array<i32>} : memref<22x24xf32, #tpu.memory_space<vmem>>, vector<22x24xf32>,
    %194 = vector.extract_strided_slice %187 {offsets = [0, 0], sizes = [1, 16], strides = [1, 1]} : vector<1x384xf32> to vector<1x16xf32>
    %c3_152 = arith.constant 3 : index
    %c3_153 = arith.constant 3 : index
    %195 = vector.load %arg17[%c3_152, %c3_153] : memref<22x24xf32, #tpu.memory_space<vmem>>, vector<1x16xf32>
    tpu.vector_store %arg17[%c3_152, %c3_153], %194 {strides = array<i32>} : memref<22x24xf32, #tpu.memory_space<vmem>>, vector<1x16xf32>,
    %196 = vector.extract_strided_slice %189 {offsets = [0, 0], sizes = [1, 16], strides = [1, 1]} : vector<1x384xf32> to vector<1x16xf32>
    %c3_154 = arith.constant 3 : index
    %c3_155 = arith.constant 3 : index
    %197 = vector.load %arg18[%c3_154, %c3_155] : memref<22x24xf32, #tpu.memory_space<vmem>>, vector<1x16xf32>
    tpu.vector_store %arg18[%c3_154, %c3_155], %196 {strides = array<i32>} : memref<22x24xf32, #tpu.memory_space<vmem>>, vector<1x16xf32>,
    %198 = vector.extract_strided_slice %187 {offsets = [0, 24], sizes = [1, 16], strides = [1, 1]} : vector<1x384xf32> to vector<1x16xf32>
    %c4 = arith.constant 4 : index
    %c3_156 = arith.constant 3 : index
    %199 = vector.load %arg17[%c4, %c3_156] : memref<22x24xf32, #tpu.memory_space<vmem>>, vector<1x16xf32>
    tpu.vector_store %arg17[%c4, %c3_156], %198 {strides = array<i32>} : memref<22x24xf32, #tpu.memory_space<vmem>>, vector<1x16xf32>,
    %200 = vector.extract_strided_slice %189 {offsets = [0, 24], sizes = [1, 16], strides = [1, 1]} : vector<1x384xf32> to vector<1x16xf32>
    %c4_157 = arith.constant 4 : index
    %c3_158 = arith.constant 3 : index
    %201 = vector.load %arg18[%c4_157, %c3_158] : memref<22x24xf32, #tpu.memory_space<vmem>>, vector<1x16xf32>
    tpu.vector_store %arg18[%c4_157, %c3_158], %200 {strides = array<i32>} : memref<22x24xf32, #tpu.memory_space<vmem>>, vector<1x16xf32>,
    %202 = vector.extract_strided_slice %187 {offsets = [0, 48], sizes = [1, 16], strides = [1, 1]} : vector<1x384xf32> to vector<1x16xf32>
    %c5 = arith.constant 5 : index
    %c3_159 = arith.constant 3 : index
    %203 = vector.load %arg17[%c5, %c3_159] : memref<22x24xf32, #tpu.memory_space<vmem>>, vector<1x16xf32>
    tpu.vector_store %arg17[%c5, %c3_159], %202 {strides = array<i32>} : memref<22x24xf32, #tpu.memory_space<vmem>>, vector<1x16xf32>,
    %204 = vector.extract_strided_slice %189 {offsets = [0, 48], sizes = [1, 16], strides = [1, 1]} : vector<1x384xf32> to vector<1x16xf32>
    %c5_160 = arith.constant 5 : index
    %c3_161 = arith.constant 3 : index
    %205 = vector.load %arg18[%c5_160, %c3_161] : memref<22x24xf32, #tpu.memory_space<vmem>>, vector<1x16xf32>
    tpu.vector_store %arg18[%c5_160, %c3_161], %204 {strides = array<i32>} : memref<22x24xf32, #tpu.memory_space<vmem>>, vector<1x16xf32>,
    %206 = vector.extract_strided_slice %187 {offsets = [0, 72], sizes = [1, 16], strides = [1, 1]} : vector<1x384xf32> to vector<1x16xf32>
    %c6 = arith.constant 6 : index
    %c3_162 = arith.constant 3 : index
    %207 = vector.load %arg17[%c6, %c3_162] : memref<22x24xf32, #tpu.memory_space<vmem>>, vector<1x16xf32>
    tpu.vector_store %arg17[%c6, %c3_162], %206 {strides = array<i32>} : memref<22x24xf32, #tpu.memory_space<vmem>>, vector<1x16xf32>,
    %208 = vector.extract_strided_slice %189 {offsets = [0, 72], sizes = [1, 16], strides = [1, 1]} : vector<1x384xf32> to vector<1x16xf32>
    %c6_163 = arith.constant 6 : index
    %c3_164 = arith.constant 3 : index
    %209 = vector.load %arg18[%c6_163, %c3_164] : memref<22x24xf32, #tpu.memory_space<vmem>>, vector<1x16xf32>
    tpu.vector_store %arg18[%c6_163, %c3_164], %208 {strides = array<i32>} : memref<22x24xf32, #tpu.memory_space<vmem>>, vector<1x16xf32>,
    %210 = vector.extract_strided_slice %187 {offsets = [0, 96], sizes = [1, 16], strides = [1, 1]} : vector<1x384xf32> to vector<1x16xf32>
    %c7_165 = arith.constant 7 : index
    %c3_166 = arith.constant 3 : index
    %211 = vector.load %arg17[%c7_165, %c3_166] : memref<22x24xf32, #tpu.memory_space<vmem>>, vector<1x16xf32>
    tpu.vector_store %arg17[%c7_165, %c3_166], %210 {strides = array<i32>} : memref<22x24xf32, #tpu.memory_space<vmem>>, vector<1x16xf32>,
    %212 = vector.extract_strided_slice %189 {offsets = [0, 96], sizes = [1, 16], strides = [1, 1]} : vector<1x384xf32> to vector<1x16xf32>
    %c7_167 = arith.constant 7 : index
    %c3_168 = arith.constant 3 : index
    %213 = vector.load %arg18[%c7_167, %c3_168] : memref<22x24xf32, #tpu.memory_space<vmem>>, vector<1x16xf32>
    tpu.vector_store %arg18[%c7_167, %c3_168], %212 {strides = array<i32>} : memref<22x24xf32, #tpu.memory_space<vmem>>, vector<1x16xf32>,
    %214 = vector.extract_strided_slice %187 {offsets = [0, 120], sizes = [1, 16], strides = [1, 1]} : vector<1x384xf32> to vector<1x16xf32>
    %c8_169 = arith.constant 8 : index
    %c3_170 = arith.constant 3 : index
    %215 = vector.load %arg17[%c8_169, %c3_170] : memref<22x24xf32, #tpu.memory_space<vmem>>, vector<1x16xf32>
    tpu.vector_store %arg17[%c8_169, %c3_170], %214 {strides = array<i32>} : memref<22x24xf32, #tpu.memory_space<vmem>>, vector<1x16xf32>,
    %216 = vector.extract_strided_slice %189 {offsets = [0, 120], sizes = [1, 16], strides = [1, 1]} : vector<1x384xf32> to vector<1x16xf32>
    %c8_171 = arith.constant 8 : index
    %c3_172 = arith.constant 3 : index
    %217 = vector.load %arg18[%c8_171, %c3_172] : memref<22x24xf32, #tpu.memory_space<vmem>>, vector<1x16xf32>
    tpu.vector_store %arg18[%c8_171, %c3_172], %216 {strides = array<i32>} : memref<22x24xf32, #tpu.memory_space<vmem>>, vector<1x16xf32>,
    %218 = vector.extract_strided_slice %187 {offsets = [0, 144], sizes = [1, 16], strides = [1, 1]} : vector<1x384xf32> to vector<1x16xf32>
    %c9_173 = arith.constant 9 : index
    %c3_174 = arith.constant 3 : index
    %219 = vector.load %arg17[%c9_173, %c3_174] : memref<22x24xf32, #tpu.memory_space<vmem>>, vector<1x16xf32>
    tpu.vector_store %arg17[%c9_173, %c3_174], %218 {strides = array<i32>} : memref<22x24xf32, #tpu.memory_space<vmem>>, vector<1x16xf32>,
    %220 = vector.extract_strided_slice %189 {offsets = [0, 144], sizes = [1, 16], strides = [1, 1]} : vector<1x384xf32> to vector<1x16xf32>
    %c9_175 = arith.constant 9 : index
    %c3_176 = arith.constant 3 : index
    %221 = vector.load %arg18[%c9_175, %c3_176] : memref<22x24xf32, #tpu.memory_space<vmem>>, vector<1x16xf32>
    tpu.vector_store %arg18[%c9_175, %c3_176], %220 {strides = array<i32>} : memref<22x24xf32, #tpu.memory_space<vmem>>, vector<1x16xf32>,
    %222 = vector.extract_strided_slice %187 {offsets = [0, 168], sizes = [1, 16], strides = [1, 1]} : vector<1x384xf32> to vector<1x16xf32>
    %c10 = arith.constant 10 : index
    %c3_177 = arith.constant 3 : index
    %223 = vector.load %arg17[%c10, %c3_177] : memref<22x24xf32, #tpu.memory_space<vmem>>, vector<1x16xf32>
    tpu.vector_store %arg17[%c10, %c3_177], %222 {strides = array<i32>} : memref<22x24xf32, #tpu.memory_space<vmem>>, vector<1x16xf32>,
    %224 = vector.extract_strided_slice %189 {offsets = [0, 168], sizes = [1, 16], strides = [1, 1]} : vector<1x384xf32> to vector<1x16xf32>
    %c10_178 = arith.constant 10 : index
    %c3_179 = arith.constant 3 : index
    %225 = vector.load %arg18[%c10_178, %c3_179] : memref<22x24xf32, #tpu.memory_space<vmem>>, vector<1x16xf32>
    tpu.vector_store %arg18[%c10_178, %c3_179], %224 {strides = array<i32>} : memref<22x24xf32, #tpu.memory_space<vmem>>, vector<1x16xf32>,
    %226 = vector.extract_strided_slice %187 {offsets = [0, 192], sizes = [1, 16], strides = [1, 1]} : vector<1x384xf32> to vector<1x16xf32>
    %c11 = arith.constant 11 : index
    %c3_180 = arith.constant 3 : index
    %227 = vector.load %arg17[%c11, %c3_180] : memref<22x24xf32, #tpu.memory_space<vmem>>, vector<1x16xf32>
    tpu.vector_store %arg17[%c11, %c3_180], %226 {strides = array<i32>} : memref<22x24xf32, #tpu.memory_space<vmem>>, vector<1x16xf32>,
    %228 = vector.extract_strided_slice %189 {offsets = [0, 192], sizes = [1, 16], strides = [1, 1]} : vector<1x384xf32> to vector<1x16xf32>
    %c11_181 = arith.constant 11 : index
    %c3_182 = arith.constant 3 : index
    %229 = vector.load %arg18[%c11_181, %c3_182] : memref<22x24xf32, #tpu.memory_space<vmem>>, vector<1x16xf32>
    tpu.vector_store %arg18[%c11_181, %c3_182], %228 {strides = array<i32>} : memref<22x24xf32, #tpu.memory_space<vmem>>, vector<1x16xf32>,
    %230 = vector.extract_strided_slice %187 {offsets = [0, 216], sizes = [1, 16], strides = [1, 1]} : vector<1x384xf32> to vector<1x16xf32>
    %c12 = arith.constant 12 : index
    %c3_183 = arith.constant 3 : index
    %231 = vector.load %arg17[%c12, %c3_183] : memref<22x24xf32, #tpu.memory_space<vmem>>, vector<1x16xf32>
    tpu.vector_store %arg17[%c12, %c3_183], %230 {strides = array<i32>} : memref<22x24xf32, #tpu.memory_space<vmem>>, vector<1x16xf32>,
    %232 = vector.extract_strided_slice %189 {offsets = [0, 216], sizes = [1, 16], strides = [1, 1]} : vector<1x384xf32> to vector<1x16xf32>
    %c12_184 = arith.constant 12 : index
    %c3_185 = arith.constant 3 : index
    %233 = vector.load %arg18[%c12_184, %c3_185] : memref<22x24xf32, #tpu.memory_space<vmem>>, vector<1x16xf32>
    tpu.vector_store %arg18[%c12_184, %c3_185], %232 {strides = array<i32>} : memref<22x24xf32, #tpu.memory_space<vmem>>, vector<1x16xf32>,
    %234 = vector.extract_strided_slice %187 {offsets = [0, 240], sizes = [1, 16], strides = [1, 1]} : vector<1x384xf32> to vector<1x16xf32>
    %c13 = arith.constant 13 : index
    %c3_186 = arith.constant 3 : index
    %235 = vector.load %arg17[%c13, %c3_186] : memref<22x24xf32, #tpu.memory_space<vmem>>, vector<1x16xf32>
    tpu.vector_store %arg17[%c13, %c3_186], %234 {strides = array<i32>} : memref<22x24xf32, #tpu.memory_space<vmem>>, vector<1x16xf32>,
    %236 = vector.extract_strided_slice %189 {offsets = [0, 240], sizes = [1, 16], strides = [1, 1]} : vector<1x384xf32> to vector<1x16xf32>
    %c13_187 = arith.constant 13 : index
    %c3_188 = arith.constant 3 : index
    %237 = vector.load %arg18[%c13_187, %c3_188] : memref<22x24xf32, #tpu.memory_space<vmem>>, vector<1x16xf32>
    tpu.vector_store %arg18[%c13_187, %c3_188], %236 {strides = array<i32>} : memref<22x24xf32, #tpu.memory_space<vmem>>, vector<1x16xf32>,
    %238 = vector.extract_strided_slice %187 {offsets = [0, 264], sizes = [1, 16], strides = [1, 1]} : vector<1x384xf32> to vector<1x16xf32>
    %c14 = arith.constant 14 : index
    %c3_189 = arith.constant 3 : index
    %239 = vector.load %arg17[%c14, %c3_189] : memref<22x24xf32, #tpu.memory_space<vmem>>, vector<1x16xf32>
    tpu.vector_store %arg17[%c14, %c3_189], %238 {strides = array<i32>} : memref<22x24xf32, #tpu.memory_space<vmem>>, vector<1x16xf32>,
    %240 = vector.extract_strided_slice %189 {offsets = [0, 264], sizes = [1, 16], strides = [1, 1]} : vector<1x384xf32> to vector<1x16xf32>
    %c14_190 = arith.constant 14 : index
    %c3_191 = arith.constant 3 : index
    %241 = vector.load %arg18[%c14_190, %c3_191] : memref<22x24xf32, #tpu.memory_space<vmem>>, vector<1x16xf32>
    tpu.vector_store %arg18[%c14_190, %c3_191], %240 {strides = array<i32>} : memref<22x24xf32, #tpu.memory_space<vmem>>, vector<1x16xf32>,
    %242 = vector.extract_strided_slice %187 {offsets = [0, 288], sizes = [1, 16], strides = [1, 1]} : vector<1x384xf32> to vector<1x16xf32>
    %c15 = arith.constant 15 : index
    %c3_192 = arith.constant 3 : index
    %243 = vector.load %arg17[%c15, %c3_192] : memref<22x24xf32, #tpu.memory_space<vmem>>, vector<1x16xf32>
    tpu.vector_store %arg17[%c15, %c3_192], %242 {strides = array<i32>} : memref<22x24xf32, #tpu.memory_space<vmem>>, vector<1x16xf32>,
    %244 = vector.extract_strided_slice %189 {offsets = [0, 288], sizes = [1, 16], strides = [1, 1]} : vector<1x384xf32> to vector<1x16xf32>
    %c15_193 = arith.constant 15 : index
    %c3_194 = arith.constant 3 : index
    %245 = vector.load %arg18[%c15_193, %c3_194] : memref<22x24xf32, #tpu.memory_space<vmem>>, vector<1x16xf32>
    tpu.vector_store %arg18[%c15_193, %c3_194], %244 {strides = array<i32>} : memref<22x24xf32, #tpu.memory_space<vmem>>, vector<1x16xf32>,
    %246 = vector.extract_strided_slice %187 {offsets = [0, 312], sizes = [1, 16], strides = [1, 1]} : vector<1x384xf32> to vector<1x16xf32>
    %c16 = arith.constant 16 : index
    %c3_195 = arith.constant 3 : index
    %247 = vector.load %arg17[%c16, %c3_195] : memref<22x24xf32, #tpu.memory_space<vmem>>, vector<1x16xf32>
    tpu.vector_store %arg17[%c16, %c3_195], %246 {strides = array<i32>} : memref<22x24xf32, #tpu.memory_space<vmem>>, vector<1x16xf32>,
    %248 = vector.extract_strided_slice %189 {offsets = [0, 312], sizes = [1, 16], strides = [1, 1]} : vector<1x384xf32> to vector<1x16xf32>
    %c16_196 = arith.constant 16 : index
    %c3_197 = arith.constant 3 : index
    %249 = vector.load %arg18[%c16_196, %c3_197] : memref<22x24xf32, #tpu.memory_space<vmem>>, vector<1x16xf32>
    tpu.vector_store %arg18[%c16_196, %c3_197], %248 {strides = array<i32>} : memref<22x24xf32, #tpu.memory_space<vmem>>, vector<1x16xf32>,
    %250 = vector.extract_strided_slice %187 {offsets = [0, 336], sizes = [1, 16], strides = [1, 1]} : vector<1x384xf32> to vector<1x16xf32>
    %c17 = arith.constant 17 : index
    %c3_198 = arith.constant 3 : index
    %251 = vector.load %arg17[%c17, %c3_198] : memref<22x24xf32, #tpu.memory_space<vmem>>, vector<1x16xf32>
    tpu.vector_store %arg17[%c17, %c3_198], %250 {strides = array<i32>} : memref<22x24xf32, #tpu.memory_space<vmem>>, vector<1x16xf32>,
    %252 = vector.extract_strided_slice %189 {offsets = [0, 336], sizes = [1, 16], strides = [1, 1]} : vector<1x384xf32> to vector<1x16xf32>
    %c17_199 = arith.constant 17 : index
    %c3_200 = arith.constant 3 : index
    %253 = vector.load %arg18[%c17_199, %c3_200] : memref<22x24xf32, #tpu.memory_space<vmem>>, vector<1x16xf32>
    tpu.vector_store %arg18[%c17_199, %c3_200], %252 {strides = array<i32>} : memref<22x24xf32, #tpu.memory_space<vmem>>, vector<1x16xf32>,
    %254 = vector.extract_strided_slice %187 {offsets = [0, 360], sizes = [1, 16], strides = [1, 1]} : vector<1x384xf32> to vector<1x16xf32>
    %c18 = arith.constant 18 : index
    %c3_201 = arith.constant 3 : index
    %255 = vector.load %arg17[%c18, %c3_201] : memref<22x24xf32, #tpu.memory_space<vmem>>, vector<1x16xf32>
    tpu.vector_store %arg17[%c18, %c3_201], %254 {strides = array<i32>} : memref<22x24xf32, #tpu.memory_space<vmem>>, vector<1x16xf32>,
    %256 = vector.extract_strided_slice %189 {offsets = [0, 360], sizes = [1, 16], strides = [1, 1]} : vector<1x384xf32> to vector<1x16xf32>
    %c18_202 = arith.constant 18 : index
    %c3_203 = arith.constant 3 : index
    %257 = vector.load %arg18[%c18_202, %c3_203] : memref<22x24xf32, #tpu.memory_space<vmem>>, vector<1x16xf32>
    tpu.vector_store %arg18[%c18_202, %c3_203], %256 {strides = array<i32>} : memref<22x24xf32, #tpu.memory_space<vmem>>, vector<1x16xf32>,
    %c0_204 = arith.constant 0 : index
    %c0_205 = arith.constant 0 : index
    %258 = vector.load %arg17[%c0_204, %c0_205] : memref<22x24xf32, #tpu.memory_space<vmem>>, vector<22x24xf32>
    %c0_206 = arith.constant 0 : index
    %c0_207 = arith.constant 0 : index
    %259 = vector.load %arg18[%c0_206, %c0_207] : memref<22x24xf32, #tpu.memory_space<vmem>>, vector<22x24xf32>
    %cst_208 = arith.constant 0.000000e+00 : f32
    %260 = vector.broadcast %cst_208 : f32 to vector<16x16xf32>
    %c98 = arith.constant 98 : index
    %261 = memref.load %arg11[%c98] : memref<99xf32, #tpu.memory_space<smem>>
    %262 = vector.broadcast %261 : f32 to vector<16x16xf32>
    %263 = arith.addf %260, %262 : vector<16x16xf32>
    %264 = vector.extract_strided_slice %258 {offsets = [0, 0], sizes = [16, 16], strides = [1, 1]} : vector<22x24xf32> to vector<16x16xf32>
    %c0_209 = arith.constant 0 : index
    %265 = memref.load %arg11[%c0_209] : memref<99xf32, #tpu.memory_space<smem>>
    %266 = vector.broadcast %265 : f32 to vector<16x16xf32>
    %267 = arith.mulf %264, %266 : vector<16x16xf32>
    %268 = arith.addf %263, %267 : vector<16x16xf32>
    %269 = vector.extract_strided_slice %259 {offsets = [0, 0], sizes = [16, 16], strides = [1, 1]} : vector<22x24xf32> to vector<16x16xf32>
    %c49 = arith.constant 49 : index
    %270 = memref.load %arg11[%c49] : memref<99xf32, #tpu.memory_space<smem>>
    %271 = vector.broadcast %270 : f32 to vector<16x16xf32>
    %272 = arith.mulf %269, %271 : vector<16x16xf32>
    %273 = arith.addf %268, %272 : vector<16x16xf32>
    %274 = vector.extract_strided_slice %258 {offsets = [0, 1], sizes = [16, 16], strides = [1, 1]} : vector<22x24xf32> to vector<16x16xf32>
    %c1_210 = arith.constant 1 : index
    %275 = memref.load %arg11[%c1_210] : memref<99xf32, #tpu.memory_space<smem>>
    %276 = vector.broadcast %275 : f32 to vector<16x16xf32>
    %277 = arith.mulf %274, %276 : vector<16x16xf32>
    %278 = arith.addf %273, %277 : vector<16x16xf32>
    %279 = vector.extract_strided_slice %259 {offsets = [0, 1], sizes = [16, 16], strides = [1, 1]} : vector<22x24xf32> to vector<16x16xf32>
    %c50 = arith.constant 50 : index
    %280 = memref.load %arg11[%c50] : memref<99xf32, #tpu.memory_space<smem>>
    %281 = vector.broadcast %280 : f32 to vector<16x16xf32>
    %282 = arith.mulf %279, %281 : vector<16x16xf32>
    %283 = arith.addf %278, %282 : vector<16x16xf32>
    %284 = vector.extract_strided_slice %258 {offsets = [0, 2], sizes = [16, 16], strides = [1, 1]} : vector<22x24xf32> to vector<16x16xf32>
    %c2_211 = arith.constant 2 : index
    %285 = memref.load %arg11[%c2_211] : memref<99xf32, #tpu.memory_space<smem>>
    %286 = vector.broadcast %285 : f32 to vector<16x16xf32>
    %287 = arith.mulf %284, %286 : vector<16x16xf32>
    %288 = arith.addf %283, %287 : vector<16x16xf32>
    %289 = vector.extract_strided_slice %259 {offsets = [0, 2], sizes = [16, 16], strides = [1, 1]} : vector<22x24xf32> to vector<16x16xf32>
    %c51 = arith.constant 51 : index
    %290 = memref.load %arg11[%c51] : memref<99xf32, #tpu.memory_space<smem>>
    %291 = vector.broadcast %290 : f32 to vector<16x16xf32>
    %292 = arith.mulf %289, %291 : vector<16x16xf32>
    %293 = arith.addf %288, %292 : vector<16x16xf32>
    %294 = vector.extract_strided_slice %258 {offsets = [0, 3], sizes = [16, 16], strides = [1, 1]} : vector<22x24xf32> to vector<16x16xf32>
    %c3_212 = arith.constant 3 : index
    %295 = memref.load %arg11[%c3_212] : memref<99xf32, #tpu.memory_space<smem>>
    %296 = vector.broadcast %295 : f32 to vector<16x16xf32>
    %297 = arith.mulf %294, %296 : vector<16x16xf32>
    %298 = arith.addf %293, %297 : vector<16x16xf32>
    %299 = vector.extract_strided_slice %259 {offsets = [0, 3], sizes = [16, 16], strides = [1, 1]} : vector<22x24xf32> to vector<16x16xf32>
    %c52 = arith.constant 52 : index
    %300 = memref.load %arg11[%c52] : memref<99xf32, #tpu.memory_space<smem>>
    %301 = vector.broadcast %300 : f32 to vector<16x16xf32>
    %302 = arith.mulf %299, %301 : vector<16x16xf32>
    %303 = arith.addf %298, %302 : vector<16x16xf32>
    %304 = vector.extract_strided_slice %258 {offsets = [0, 4], sizes = [16, 16], strides = [1, 1]} : vector<22x24xf32> to vector<16x16xf32>
    %c4_213 = arith.constant 4 : index
    %305 = memref.load %arg11[%c4_213] : memref<99xf32, #tpu.memory_space<smem>>
    %306 = vector.broadcast %305 : f32 to vector<16x16xf32>
    %307 = arith.mulf %304, %306 : vector<16x16xf32>
    %308 = arith.addf %303, %307 : vector<16x16xf32>
    %309 = vector.extract_strided_slice %259 {offsets = [0, 4], sizes = [16, 16], strides = [1, 1]} : vector<22x24xf32> to vector<16x16xf32>
    %c53 = arith.constant 53 : index
    %310 = memref.load %arg11[%c53] : memref<99xf32, #tpu.memory_space<smem>>
    %311 = vector.broadcast %310 : f32 to vector<16x16xf32>
    %312 = arith.mulf %309, %311 : vector<16x16xf32>
    %313 = arith.addf %308, %312 : vector<16x16xf32>
    %314 = vector.extract_strided_slice %258 {offsets = [0, 5], sizes = [16, 16], strides = [1, 1]} : vector<22x24xf32> to vector<16x16xf32>
    %c5_214 = arith.constant 5 : index
    %315 = memref.load %arg11[%c5_214] : memref<99xf32, #tpu.memory_space<smem>>
    %316 = vector.broadcast %315 : f32 to vector<16x16xf32>
    %317 = arith.mulf %314, %316 : vector<16x16xf32>
    %318 = arith.addf %313, %317 : vector<16x16xf32>
    %319 = vector.extract_strided_slice %259 {offsets = [0, 5], sizes = [16, 16], strides = [1, 1]} : vector<22x24xf32> to vector<16x16xf32>
    %c54 = arith.constant 54 : index
    %320 = memref.load %arg11[%c54] : memref<99xf32, #tpu.memory_space<smem>>
    %321 = vector.broadcast %320 : f32 to vector<16x16xf32>
    %322 = arith.mulf %319, %321 : vector<16x16xf32>
    %323 = arith.addf %318, %322 : vector<16x16xf32>
    %324 = vector.extract_strided_slice %258 {offsets = [0, 6], sizes = [16, 16], strides = [1, 1]} : vector<22x24xf32> to vector<16x16xf32>
    %c6_215 = arith.constant 6 : index
    %325 = memref.load %arg11[%c6_215] : memref<99xf32, #tpu.memory_space<smem>>
    %326 = vector.broadcast %325 : f32 to vector<16x16xf32>
    %327 = arith.mulf %324, %326 : vector<16x16xf32>
    %328 = arith.addf %323, %327 : vector<16x16xf32>
    %329 = vector.extract_strided_slice %259 {offsets = [0, 6], sizes = [16, 16], strides = [1, 1]} : vector<22x24xf32> to vector<16x16xf32>
    %c55_216 = arith.constant 55 : index
    %330 = memref.load %arg11[%c55_216] : memref<99xf32, #tpu.memory_space<smem>>
    %331 = vector.broadcast %330 : f32 to vector<16x16xf32>
    %332 = arith.mulf %329, %331 : vector<16x16xf32>
    %333 = arith.addf %328, %332 : vector<16x16xf32>
    %334 = vector.extract_strided_slice %258 {offsets = [1, 0], sizes = [16, 16], strides = [1, 1]} : vector<22x24xf32> to vector<16x16xf32>
    %c7_217 = arith.constant 7 : index
    %335 = memref.load %arg11[%c7_217] : memref<99xf32, #tpu.memory_space<smem>>
    %336 = vector.broadcast %335 : f32 to vector<16x16xf32>
    %337 = arith.mulf %334, %336 : vector<16x16xf32>
    %338 = arith.addf %333, %337 : vector<16x16xf32>
    %339 = vector.extract_strided_slice %259 {offsets = [1, 0], sizes = [16, 16], strides = [1, 1]} : vector<22x24xf32> to vector<16x16xf32>
    %c56_218 = arith.constant 56 : index
    %340 = memref.load %arg11[%c56_218] : memref<99xf32, #tpu.memory_space<smem>>
    %341 = vector.broadcast %340 : f32 to vector<16x16xf32>
    %342 = arith.mulf %339, %341 : vector<16x16xf32>
    %343 = arith.addf %338, %342 : vector<16x16xf32>
    %344 = vector.extract_strided_slice %258 {offsets = [1, 1], sizes = [16, 16], strides = [1, 1]} : vector<22x24xf32> to vector<16x16xf32>
    %c8_219 = arith.constant 8 : index
    %345 = memref.load %arg11[%c8_219] : memref<99xf32, #tpu.memory_space<smem>>
    %346 = vector.broadcast %345 : f32 to vector<16x16xf32>
    %347 = arith.mulf %344, %346 : vector<16x16xf32>
    %348 = arith.addf %343, %347 : vector<16x16xf32>
    %349 = vector.extract_strided_slice %259 {offsets = [1, 1], sizes = [16, 16], strides = [1, 1]} : vector<22x24xf32> to vector<16x16xf32>
    %c57_220 = arith.constant 57 : index
    %350 = memref.load %arg11[%c57_220] : memref<99xf32, #tpu.memory_space<smem>>
    %351 = vector.broadcast %350 : f32 to vector<16x16xf32>
    %352 = arith.mulf %349, %351 : vector<16x16xf32>
    %353 = arith.addf %348, %352 : vector<16x16xf32>
    %354 = vector.extract_strided_slice %258 {offsets = [1, 2], sizes = [16, 16], strides = [1, 1]} : vector<22x24xf32> to vector<16x16xf32>
    %c9_221 = arith.constant 9 : index
    %355 = memref.load %arg11[%c9_221] : memref<99xf32, #tpu.memory_space<smem>>
    %356 = vector.broadcast %355 : f32 to vector<16x16xf32>
    %357 = arith.mulf %354, %356 : vector<16x16xf32>
    %358 = arith.addf %353, %357 : vector<16x16xf32>
    %359 = vector.extract_strided_slice %259 {offsets = [1, 2], sizes = [16, 16], strides = [1, 1]} : vector<22x24xf32> to vector<16x16xf32>
    %c58 = arith.constant 58 : index
    %360 = memref.load %arg11[%c58] : memref<99xf32, #tpu.memory_space<smem>>
    %361 = vector.broadcast %360 : f32 to vector<16x16xf32>
    %362 = arith.mulf %359, %361 : vector<16x16xf32>
    %363 = arith.addf %358, %362 : vector<16x16xf32>
    %364 = vector.extract_strided_slice %258 {offsets = [1, 3], sizes = [16, 16], strides = [1, 1]} : vector<22x24xf32> to vector<16x16xf32>
    %c10_222 = arith.constant 10 : index
    %365 = memref.load %arg11[%c10_222] : memref<99xf32, #tpu.memory_space<smem>>
    %366 = vector.broadcast %365 : f32 to vector<16x16xf32>
    %367 = arith.mulf %364, %366 : vector<16x16xf32>
    %368 = arith.addf %363, %367 : vector<16x16xf32>
    %369 = vector.extract_strided_slice %259 {offsets = [1, 3], sizes = [16, 16], strides = [1, 1]} : vector<22x24xf32> to vector<16x16xf32>
    %c59 = arith.constant 59 : index
    %370 = memref.load %arg11[%c59] : memref<99xf32, #tpu.memory_space<smem>>
    %371 = vector.broadcast %370 : f32 to vector<16x16xf32>
    %372 = arith.mulf %369, %371 : vector<16x16xf32>
    %373 = arith.addf %368, %372 : vector<16x16xf32>
    %374 = vector.extract_strided_slice %258 {offsets = [1, 4], sizes = [16, 16], strides = [1, 1]} : vector<22x24xf32> to vector<16x16xf32>
    %c11_223 = arith.constant 11 : index
    %375 = memref.load %arg11[%c11_223] : memref<99xf32, #tpu.memory_space<smem>>
    %376 = vector.broadcast %375 : f32 to vector<16x16xf32>
    %377 = arith.mulf %374, %376 : vector<16x16xf32>
    %378 = arith.addf %373, %377 : vector<16x16xf32>
    %379 = vector.extract_strided_slice %259 {offsets = [1, 4], sizes = [16, 16], strides = [1, 1]} : vector<22x24xf32> to vector<16x16xf32>
    %c60 = arith.constant 60 : index
    %380 = memref.load %arg11[%c60] : memref<99xf32, #tpu.memory_space<smem>>
    %381 = vector.broadcast %380 : f32 to vector<16x16xf32>
    %382 = arith.mulf %379, %381 : vector<16x16xf32>
    %383 = arith.addf %378, %382 : vector<16x16xf32>
    %384 = vector.extract_strided_slice %258 {offsets = [1, 5], sizes = [16, 16], strides = [1, 1]} : vector<22x24xf32> to vector<16x16xf32>
    %c12_224 = arith.constant 12 : index
    %385 = memref.load %arg11[%c12_224] : memref<99xf32, #tpu.memory_space<smem>>
    %386 = vector.broadcast %385 : f32 to vector<16x16xf32>
    %387 = arith.mulf %384, %386 : vector<16x16xf32>
    %388 = arith.addf %383, %387 : vector<16x16xf32>
    %389 = vector.extract_strided_slice %259 {offsets = [1, 5], sizes = [16, 16], strides = [1, 1]} : vector<22x24xf32> to vector<16x16xf32>
    %c61 = arith.constant 61 : index
    %390 = memref.load %arg11[%c61] : memref<99xf32, #tpu.memory_space<smem>>
    %391 = vector.broadcast %390 : f32 to vector<16x16xf32>
    %392 = arith.mulf %389, %391 : vector<16x16xf32>
    %393 = arith.addf %388, %392 : vector<16x16xf32>
    %394 = vector.extract_strided_slice %258 {offsets = [1, 6], sizes = [16, 16], strides = [1, 1]} : vector<22x24xf32> to vector<16x16xf32>
    %c13_225 = arith.constant 13 : index
    %395 = memref.load %arg11[%c13_225] : memref<99xf32, #tpu.memory_space<smem>>
    %396 = vector.broadcast %395 : f32 to vector<16x16xf32>
    %397 = arith.mulf %394, %396 : vector<16x16xf32>
    %398 = arith.addf %393, %397 : vector<16x16xf32>
    %399 = vector.extract_strided_slice %259 {offsets = [1, 6], sizes = [16, 16], strides = [1, 1]} : vector<22x24xf32> to vector<16x16xf32>
    %c62 = arith.constant 62 : index
    %400 = memref.load %arg11[%c62] : memref<99xf32, #tpu.memory_space<smem>>
    %401 = vector.broadcast %400 : f32 to vector<16x16xf32>
    %402 = arith.mulf %399, %401 : vector<16x16xf32>
    %403 = arith.addf %398, %402 : vector<16x16xf32>
    %404 = vector.extract_strided_slice %258 {offsets = [2, 0], sizes = [16, 16], strides = [1, 1]} : vector<22x24xf32> to vector<16x16xf32>
    %c14_226 = arith.constant 14 : index
    %405 = memref.load %arg11[%c14_226] : memref<99xf32, #tpu.memory_space<smem>>
    %406 = vector.broadcast %405 : f32 to vector<16x16xf32>
    %407 = arith.mulf %404, %406 : vector<16x16xf32>
    %408 = arith.addf %403, %407 : vector<16x16xf32>
    %409 = vector.extract_strided_slice %259 {offsets = [2, 0], sizes = [16, 16], strides = [1, 1]} : vector<22x24xf32> to vector<16x16xf32>
    %c63 = arith.constant 63 : index
    %410 = memref.load %arg11[%c63] : memref<99xf32, #tpu.memory_space<smem>>
    %411 = vector.broadcast %410 : f32 to vector<16x16xf32>
    %412 = arith.mulf %409, %411 : vector<16x16xf32>
    %413 = arith.addf %408, %412 : vector<16x16xf32>
    %414 = vector.extract_strided_slice %258 {offsets = [2, 1], sizes = [16, 16], strides = [1, 1]} : vector<22x24xf32> to vector<16x16xf32>
    %c15_227 = arith.constant 15 : index
    %415 = memref.load %arg11[%c15_227] : memref<99xf32, #tpu.memory_space<smem>>
    %416 = vector.broadcast %415 : f32 to vector<16x16xf32>
    %417 = arith.mulf %414, %416 : vector<16x16xf32>
    %418 = arith.addf %413, %417 : vector<16x16xf32>
    %419 = vector.extract_strided_slice %259 {offsets = [2, 1], sizes = [16, 16], strides = [1, 1]} : vector<22x24xf32> to vector<16x16xf32>
    %c64 = arith.constant 64 : index
    %420 = memref.load %arg11[%c64] : memref<99xf32, #tpu.memory_space<smem>>
    %421 = vector.broadcast %420 : f32 to vector<16x16xf32>
    %422 = arith.mulf %419, %421 : vector<16x16xf32>
    %423 = arith.addf %418, %422 : vector<16x16xf32>
    %424 = vector.extract_strided_slice %258 {offsets = [2, 2], sizes = [16, 16], strides = [1, 1]} : vector<22x24xf32> to vector<16x16xf32>
    %c16_228 = arith.constant 16 : index
    %425 = memref.load %arg11[%c16_228] : memref<99xf32, #tpu.memory_space<smem>>
    %426 = vector.broadcast %425 : f32 to vector<16x16xf32>
    %427 = arith.mulf %424, %426 : vector<16x16xf32>
    %428 = arith.addf %423, %427 : vector<16x16xf32>
    %429 = vector.extract_strided_slice %259 {offsets = [2, 2], sizes = [16, 16], strides = [1, 1]} : vector<22x24xf32> to vector<16x16xf32>
    %c65 = arith.constant 65 : index
    %430 = memref.load %arg11[%c65] : memref<99xf32, #tpu.memory_space<smem>>
    %431 = vector.broadcast %430 : f32 to vector<16x16xf32>
    %432 = arith.mulf %429, %431 : vector<16x16xf32>
    %433 = arith.addf %428, %432 : vector<16x16xf32>
    %434 = vector.extract_strided_slice %258 {offsets = [2, 3], sizes = [16, 16], strides = [1, 1]} : vector<22x24xf32> to vector<16x16xf32>
    %c17_229 = arith.constant 17 : index
    %435 = memref.load %arg11[%c17_229] : memref<99xf32, #tpu.memory_space<smem>>
    %436 = vector.broadcast %435 : f32 to vector<16x16xf32>
    %437 = arith.mulf %434, %436 : vector<16x16xf32>
    %438 = arith.addf %433, %437 : vector<16x16xf32>
    %439 = vector.extract_strided_slice %259 {offsets = [2, 3], sizes = [16, 16], strides = [1, 1]} : vector<22x24xf32> to vector<16x16xf32>
    %c66 = arith.constant 66 : index
    %440 = memref.load %arg11[%c66] : memref<99xf32, #tpu.memory_space<smem>>
    %441 = vector.broadcast %440 : f32 to vector<16x16xf32>
    %442 = arith.mulf %439, %441 : vector<16x16xf32>
    %443 = arith.addf %438, %442 : vector<16x16xf32>
    %444 = vector.extract_strided_slice %258 {offsets = [2, 4], sizes = [16, 16], strides = [1, 1]} : vector<22x24xf32> to vector<16x16xf32>
    %c18_230 = arith.constant 18 : index
    %445 = memref.load %arg11[%c18_230] : memref<99xf32, #tpu.memory_space<smem>>
    %446 = vector.broadcast %445 : f32 to vector<16x16xf32>
    %447 = arith.mulf %444, %446 : vector<16x16xf32>
    %448 = arith.addf %443, %447 : vector<16x16xf32>
    %449 = vector.extract_strided_slice %259 {offsets = [2, 4], sizes = [16, 16], strides = [1, 1]} : vector<22x24xf32> to vector<16x16xf32>
    %c67 = arith.constant 67 : index
    %450 = memref.load %arg11[%c67] : memref<99xf32, #tpu.memory_space<smem>>
    %451 = vector.broadcast %450 : f32 to vector<16x16xf32>
    %452 = arith.mulf %449, %451 : vector<16x16xf32>
    %453 = arith.addf %448, %452 : vector<16x16xf32>
    %454 = vector.extract_strided_slice %258 {offsets = [2, 5], sizes = [16, 16], strides = [1, 1]} : vector<22x24xf32> to vector<16x16xf32>
    %c19 = arith.constant 19 : index
    %455 = memref.load %arg11[%c19] : memref<99xf32, #tpu.memory_space<smem>>
    %456 = vector.broadcast %455 : f32 to vector<16x16xf32>
    %457 = arith.mulf %454, %456 : vector<16x16xf32>
    %458 = arith.addf %453, %457 : vector<16x16xf32>
    %459 = vector.extract_strided_slice %259 {offsets = [2, 5], sizes = [16, 16], strides = [1, 1]} : vector<22x24xf32> to vector<16x16xf32>
    %c68 = arith.constant 68 : index
    %460 = memref.load %arg11[%c68] : memref<99xf32, #tpu.memory_space<smem>>
    %461 = vector.broadcast %460 : f32 to vector<16x16xf32>
    %462 = arith.mulf %459, %461 : vector<16x16xf32>
    %463 = arith.addf %458, %462 : vector<16x16xf32>
    %464 = vector.extract_strided_slice %258 {offsets = [2, 6], sizes = [16, 16], strides = [1, 1]} : vector<22x24xf32> to vector<16x16xf32>
    %c20 = arith.constant 20 : index
    %465 = memref.load %arg11[%c20] : memref<99xf32, #tpu.memory_space<smem>>
    %466 = vector.broadcast %465 : f32 to vector<16x16xf32>
    %467 = arith.mulf %464, %466 : vector<16x16xf32>
    %468 = arith.addf %463, %467 : vector<16x16xf32>
    %469 = vector.extract_strided_slice %259 {offsets = [2, 6], sizes = [16, 16], strides = [1, 1]} : vector<22x24xf32> to vector<16x16xf32>
    %c69 = arith.constant 69 : index
    %470 = memref.load %arg11[%c69] : memref<99xf32, #tpu.memory_space<smem>>
    %471 = vector.broadcast %470 : f32 to vector<16x16xf32>
    %472 = arith.mulf %469, %471 : vector<16x16xf32>
    %473 = arith.addf %468, %472 : vector<16x16xf32>
    %474 = vector.extract_strided_slice %258 {offsets = [3, 0], sizes = [16, 16], strides = [1, 1]} : vector<22x24xf32> to vector<16x16xf32>
    %c21 = arith.constant 21 : index
    %475 = memref.load %arg11[%c21] : memref<99xf32, #tpu.memory_space<smem>>
    %476 = vector.broadcast %475 : f32 to vector<16x16xf32>
    %477 = arith.mulf %474, %476 : vector<16x16xf32>
    %478 = arith.addf %473, %477 : vector<16x16xf32>
    %479 = vector.extract_strided_slice %259 {offsets = [3, 0], sizes = [16, 16], strides = [1, 1]} : vector<22x24xf32> to vector<16x16xf32>
    %c70 = arith.constant 70 : index
    %480 = memref.load %arg11[%c70] : memref<99xf32, #tpu.memory_space<smem>>
    %481 = vector.broadcast %480 : f32 to vector<16x16xf32>
    %482 = arith.mulf %479, %481 : vector<16x16xf32>
    %483 = arith.addf %478, %482 : vector<16x16xf32>
    %484 = vector.extract_strided_slice %258 {offsets = [3, 1], sizes = [16, 16], strides = [1, 1]} : vector<22x24xf32> to vector<16x16xf32>
    %c22 = arith.constant 22 : index
    %485 = memref.load %arg11[%c22] : memref<99xf32, #tpu.memory_space<smem>>
    %486 = vector.broadcast %485 : f32 to vector<16x16xf32>
    %487 = arith.mulf %484, %486 : vector<16x16xf32>
    %488 = arith.addf %483, %487 : vector<16x16xf32>
    %489 = vector.extract_strided_slice %259 {offsets = [3, 1], sizes = [16, 16], strides = [1, 1]} : vector<22x24xf32> to vector<16x16xf32>
    %c71 = arith.constant 71 : index
    %490 = memref.load %arg11[%c71] : memref<99xf32, #tpu.memory_space<smem>>
    %491 = vector.broadcast %490 : f32 to vector<16x16xf32>
    %492 = arith.mulf %489, %491 : vector<16x16xf32>
    %493 = arith.addf %488, %492 : vector<16x16xf32>
    %494 = vector.extract_strided_slice %258 {offsets = [3, 2], sizes = [16, 16], strides = [1, 1]} : vector<22x24xf32> to vector<16x16xf32>
    %c23 = arith.constant 23 : index
    %495 = memref.load %arg11[%c23] : memref<99xf32, #tpu.memory_space<smem>>
    %496 = vector.broadcast %495 : f32 to vector<16x16xf32>
    %497 = arith.mulf %494, %496 : vector<16x16xf32>
    %498 = arith.addf %493, %497 : vector<16x16xf32>
    %499 = vector.extract_strided_slice %259 {offsets = [3, 2], sizes = [16, 16], strides = [1, 1]} : vector<22x24xf32> to vector<16x16xf32>
    %c72_231 = arith.constant 72 : index
    %500 = memref.load %arg11[%c72_231] : memref<99xf32, #tpu.memory_space<smem>>
    %501 = vector.broadcast %500 : f32 to vector<16x16xf32>
    %502 = arith.mulf %499, %501 : vector<16x16xf32>
    %503 = arith.addf %498, %502 : vector<16x16xf32>
    %504 = vector.extract_strided_slice %258 {offsets = [3, 3], sizes = [16, 16], strides = [1, 1]} : vector<22x24xf32> to vector<16x16xf32>
    %c24_232 = arith.constant 24 : index
    %505 = memref.load %arg11[%c24_232] : memref<99xf32, #tpu.memory_space<smem>>
    %506 = vector.broadcast %505 : f32 to vector<16x16xf32>
    %507 = arith.mulf %504, %506 : vector<16x16xf32>
    %508 = arith.addf %503, %507 : vector<16x16xf32>
    %509 = vector.extract_strided_slice %259 {offsets = [3, 3], sizes = [16, 16], strides = [1, 1]} : vector<22x24xf32> to vector<16x16xf32>
    %c73 = arith.constant 73 : index
    %510 = memref.load %arg11[%c73] : memref<99xf32, #tpu.memory_space<smem>>
    %511 = vector.broadcast %510 : f32 to vector<16x16xf32>
    %512 = arith.mulf %509, %511 : vector<16x16xf32>
    %513 = arith.addf %508, %512 : vector<16x16xf32>
    %514 = vector.extract_strided_slice %258 {offsets = [3, 4], sizes = [16, 16], strides = [1, 1]} : vector<22x24xf32> to vector<16x16xf32>
    %c25 = arith.constant 25 : index
    %515 = memref.load %arg11[%c25] : memref<99xf32, #tpu.memory_space<smem>>
    %516 = vector.broadcast %515 : f32 to vector<16x16xf32>
    %517 = arith.mulf %514, %516 : vector<16x16xf32>
    %518 = arith.addf %513, %517 : vector<16x16xf32>
    %519 = vector.extract_strided_slice %259 {offsets = [3, 4], sizes = [16, 16], strides = [1, 1]} : vector<22x24xf32> to vector<16x16xf32>
    %c74 = arith.constant 74 : index
    %520 = memref.load %arg11[%c74] : memref<99xf32, #tpu.memory_space<smem>>
    %521 = vector.broadcast %520 : f32 to vector<16x16xf32>
    %522 = arith.mulf %519, %521 : vector<16x16xf32>
    %523 = arith.addf %518, %522 : vector<16x16xf32>
    %524 = vector.extract_strided_slice %258 {offsets = [3, 5], sizes = [16, 16], strides = [1, 1]} : vector<22x24xf32> to vector<16x16xf32>
    %c26 = arith.constant 26 : index
    %525 = memref.load %arg11[%c26] : memref<99xf32, #tpu.memory_space<smem>>
    %526 = vector.broadcast %525 : f32 to vector<16x16xf32>
    %527 = arith.mulf %524, %526 : vector<16x16xf32>
    %528 = arith.addf %523, %527 : vector<16x16xf32>
    %529 = vector.extract_strided_slice %259 {offsets = [3, 5], sizes = [16, 16], strides = [1, 1]} : vector<22x24xf32> to vector<16x16xf32>
    %c75 = arith.constant 75 : index
    %530 = memref.load %arg11[%c75] : memref<99xf32, #tpu.memory_space<smem>>
    %531 = vector.broadcast %530 : f32 to vector<16x16xf32>
    %532 = arith.mulf %529, %531 : vector<16x16xf32>
    %533 = arith.addf %528, %532 : vector<16x16xf32>
    %534 = vector.extract_strided_slice %258 {offsets = [3, 6], sizes = [16, 16], strides = [1, 1]} : vector<22x24xf32> to vector<16x16xf32>
    %c27 = arith.constant 27 : index
    %535 = memref.load %arg11[%c27] : memref<99xf32, #tpu.memory_space<smem>>
    %536 = vector.broadcast %535 : f32 to vector<16x16xf32>
    %537 = arith.mulf %534, %536 : vector<16x16xf32>
    %538 = arith.addf %533, %537 : vector<16x16xf32>
    %539 = vector.extract_strided_slice %259 {offsets = [3, 6], sizes = [16, 16], strides = [1, 1]} : vector<22x24xf32> to vector<16x16xf32>
    %c76 = arith.constant 76 : index
    %540 = memref.load %arg11[%c76] : memref<99xf32, #tpu.memory_space<smem>>
    %541 = vector.broadcast %540 : f32 to vector<16x16xf32>
    %542 = arith.mulf %539, %541 : vector<16x16xf32>
    %543 = arith.addf %538, %542 : vector<16x16xf32>
    %544 = vector.extract_strided_slice %258 {offsets = [4, 0], sizes = [16, 16], strides = [1, 1]} : vector<22x24xf32> to vector<16x16xf32>
    %c28 = arith.constant 28 : index
    %545 = memref.load %arg11[%c28] : memref<99xf32, #tpu.memory_space<smem>>
    %546 = vector.broadcast %545 : f32 to vector<16x16xf32>
    %547 = arith.mulf %544, %546 : vector<16x16xf32>
    %548 = arith.addf %543, %547 : vector<16x16xf32>
    %549 = vector.extract_strided_slice %259 {offsets = [4, 0], sizes = [16, 16], strides = [1, 1]} : vector<22x24xf32> to vector<16x16xf32>
    %c77 = arith.constant 77 : index
    %550 = memref.load %arg11[%c77] : memref<99xf32, #tpu.memory_space<smem>>
    %551 = vector.broadcast %550 : f32 to vector<16x16xf32>
    %552 = arith.mulf %549, %551 : vector<16x16xf32>
    %553 = arith.addf %548, %552 : vector<16x16xf32>
    %554 = vector.extract_strided_slice %258 {offsets = [4, 1], sizes = [16, 16], strides = [1, 1]} : vector<22x24xf32> to vector<16x16xf32>
    %c29 = arith.constant 29 : index
    %555 = memref.load %arg11[%c29] : memref<99xf32, #tpu.memory_space<smem>>
    %556 = vector.broadcast %555 : f32 to vector<16x16xf32>
    %557 = arith.mulf %554, %556 : vector<16x16xf32>
    %558 = arith.addf %553, %557 : vector<16x16xf32>
    %559 = vector.extract_strided_slice %259 {offsets = [4, 1], sizes = [16, 16], strides = [1, 1]} : vector<22x24xf32> to vector<16x16xf32>
    %c78 = arith.constant 78 : index
    %560 = memref.load %arg11[%c78] : memref<99xf32, #tpu.memory_space<smem>>
    %561 = vector.broadcast %560 : f32 to vector<16x16xf32>
    %562 = arith.mulf %559, %561 : vector<16x16xf32>
    %563 = arith.addf %558, %562 : vector<16x16xf32>
    %564 = vector.extract_strided_slice %258 {offsets = [4, 2], sizes = [16, 16], strides = [1, 1]} : vector<22x24xf32> to vector<16x16xf32>
    %c30 = arith.constant 30 : index
    %565 = memref.load %arg11[%c30] : memref<99xf32, #tpu.memory_space<smem>>
    %566 = vector.broadcast %565 : f32 to vector<16x16xf32>
    %567 = arith.mulf %564, %566 : vector<16x16xf32>
    %568 = arith.addf %563, %567 : vector<16x16xf32>
    %569 = vector.extract_strided_slice %259 {offsets = [4, 2], sizes = [16, 16], strides = [1, 1]} : vector<22x24xf32> to vector<16x16xf32>
    %c79 = arith.constant 79 : index
    %570 = memref.load %arg11[%c79] : memref<99xf32, #tpu.memory_space<smem>>
    %571 = vector.broadcast %570 : f32 to vector<16x16xf32>
    %572 = arith.mulf %569, %571 : vector<16x16xf32>
    %573 = arith.addf %568, %572 : vector<16x16xf32>
    %574 = vector.extract_strided_slice %258 {offsets = [4, 3], sizes = [16, 16], strides = [1, 1]} : vector<22x24xf32> to vector<16x16xf32>
    %c31_233 = arith.constant 31 : index
    %575 = memref.load %arg11[%c31_233] : memref<99xf32, #tpu.memory_space<smem>>
    %576 = vector.broadcast %575 : f32 to vector<16x16xf32>
    %577 = arith.mulf %574, %576 : vector<16x16xf32>
    %578 = arith.addf %573, %577 : vector<16x16xf32>
    %579 = vector.extract_strided_slice %259 {offsets = [4, 3], sizes = [16, 16], strides = [1, 1]} : vector<22x24xf32> to vector<16x16xf32>
    %c80_234 = arith.constant 80 : index
    %580 = memref.load %arg11[%c80_234] : memref<99xf32, #tpu.memory_space<smem>>
    %581 = vector.broadcast %580 : f32 to vector<16x16xf32>
    %582 = arith.mulf %579, %581 : vector<16x16xf32>
    %583 = arith.addf %578, %582 : vector<16x16xf32>
    %584 = vector.extract_strided_slice %258 {offsets = [4, 4], sizes = [16, 16], strides = [1, 1]} : vector<22x24xf32> to vector<16x16xf32>
    %c32_235 = arith.constant 32 : index
    %585 = memref.load %arg11[%c32_235] : memref<99xf32, #tpu.memory_space<smem>>
    %586 = vector.broadcast %585 : f32 to vector<16x16xf32>
    %587 = arith.mulf %584, %586 : vector<16x16xf32>
    %588 = arith.addf %583, %587 : vector<16x16xf32>
    %589 = vector.extract_strided_slice %259 {offsets = [4, 4], sizes = [16, 16], strides = [1, 1]} : vector<22x24xf32> to vector<16x16xf32>
    %c81 = arith.constant 81 : index
    %590 = memref.load %arg11[%c81] : memref<99xf32, #tpu.memory_space<smem>>
    %591 = vector.broadcast %590 : f32 to vector<16x16xf32>
    %592 = arith.mulf %589, %591 : vector<16x16xf32>
    %593 = arith.addf %588, %592 : vector<16x16xf32>
    %594 = vector.extract_strided_slice %258 {offsets = [4, 5], sizes = [16, 16], strides = [1, 1]} : vector<22x24xf32> to vector<16x16xf32>
    %c33_236 = arith.constant 33 : index
    %595 = memref.load %arg11[%c33_236] : memref<99xf32, #tpu.memory_space<smem>>
    %596 = vector.broadcast %595 : f32 to vector<16x16xf32>
    %597 = arith.mulf %594, %596 : vector<16x16xf32>
    %598 = arith.addf %593, %597 : vector<16x16xf32>
    %599 = vector.extract_strided_slice %259 {offsets = [4, 5], sizes = [16, 16], strides = [1, 1]} : vector<22x24xf32> to vector<16x16xf32>
    %c82 = arith.constant 82 : index
    %600 = memref.load %arg11[%c82] : memref<99xf32, #tpu.memory_space<smem>>
    %601 = vector.broadcast %600 : f32 to vector<16x16xf32>
    %602 = arith.mulf %599, %601 : vector<16x16xf32>
    %603 = arith.addf %598, %602 : vector<16x16xf32>
    %604 = vector.extract_strided_slice %258 {offsets = [4, 6], sizes = [16, 16], strides = [1, 1]} : vector<22x24xf32> to vector<16x16xf32>
    %c34 = arith.constant 34 : index
    %605 = memref.load %arg11[%c34] : memref<99xf32, #tpu.memory_space<smem>>
    %606 = vector.broadcast %605 : f32 to vector<16x16xf32>
    %607 = arith.mulf %604, %606 : vector<16x16xf32>
    %608 = arith.addf %603, %607 : vector<16x16xf32>
    %609 = vector.extract_strided_slice %259 {offsets = [4, 6], sizes = [16, 16], strides = [1, 1]} : vector<22x24xf32> to vector<16x16xf32>
    %c83 = arith.constant 83 : index
    %610 = memref.load %arg11[%c83] : memref<99xf32, #tpu.memory_space<smem>>
    %611 = vector.broadcast %610 : f32 to vector<16x16xf32>
    %612 = arith.mulf %609, %611 : vector<16x16xf32>
    %613 = arith.addf %608, %612 : vector<16x16xf32>
    %614 = vector.extract_strided_slice %258 {offsets = [5, 0], sizes = [16, 16], strides = [1, 1]} : vector<22x24xf32> to vector<16x16xf32>
    %c35 = arith.constant 35 : index
    %615 = memref.load %arg11[%c35] : memref<99xf32, #tpu.memory_space<smem>>
    %616 = vector.broadcast %615 : f32 to vector<16x16xf32>
    %617 = arith.mulf %614, %616 : vector<16x16xf32>
    %618 = arith.addf %613, %617 : vector<16x16xf32>
    %619 = vector.extract_strided_slice %259 {offsets = [5, 0], sizes = [16, 16], strides = [1, 1]} : vector<22x24xf32> to vector<16x16xf32>
    %c84 = arith.constant 84 : index
    %620 = memref.load %arg11[%c84] : memref<99xf32, #tpu.memory_space<smem>>
    %621 = vector.broadcast %620 : f32 to vector<16x16xf32>
    %622 = arith.mulf %619, %621 : vector<16x16xf32>
    %623 = arith.addf %618, %622 : vector<16x16xf32>
    %624 = vector.extract_strided_slice %258 {offsets = [5, 1], sizes = [16, 16], strides = [1, 1]} : vector<22x24xf32> to vector<16x16xf32>
    %c36 = arith.constant 36 : index
    %625 = memref.load %arg11[%c36] : memref<99xf32, #tpu.memory_space<smem>>
    %626 = vector.broadcast %625 : f32 to vector<16x16xf32>
    %627 = arith.mulf %624, %626 : vector<16x16xf32>
    %628 = arith.addf %623, %627 : vector<16x16xf32>
    %629 = vector.extract_strided_slice %259 {offsets = [5, 1], sizes = [16, 16], strides = [1, 1]} : vector<22x24xf32> to vector<16x16xf32>
    %c85 = arith.constant 85 : index
    %630 = memref.load %arg11[%c85] : memref<99xf32, #tpu.memory_space<smem>>
    %631 = vector.broadcast %630 : f32 to vector<16x16xf32>
    %632 = arith.mulf %629, %631 : vector<16x16xf32>
    %633 = arith.addf %628, %632 : vector<16x16xf32>
    %634 = vector.extract_strided_slice %258 {offsets = [5, 2], sizes = [16, 16], strides = [1, 1]} : vector<22x24xf32> to vector<16x16xf32>
    %c37 = arith.constant 37 : index
    %635 = memref.load %arg11[%c37] : memref<99xf32, #tpu.memory_space<smem>>
    %636 = vector.broadcast %635 : f32 to vector<16x16xf32>
    %637 = arith.mulf %634, %636 : vector<16x16xf32>
    %638 = arith.addf %633, %637 : vector<16x16xf32>
    %639 = vector.extract_strided_slice %259 {offsets = [5, 2], sizes = [16, 16], strides = [1, 1]} : vector<22x24xf32> to vector<16x16xf32>
    %c86 = arith.constant 86 : index
    %640 = memref.load %arg11[%c86] : memref<99xf32, #tpu.memory_space<smem>>
    %641 = vector.broadcast %640 : f32 to vector<16x16xf32>
    %642 = arith.mulf %639, %641 : vector<16x16xf32>
    %643 = arith.addf %638, %642 : vector<16x16xf32>
    %644 = vector.extract_strided_slice %258 {offsets = [5, 3], sizes = [16, 16], strides = [1, 1]} : vector<22x24xf32> to vector<16x16xf32>
    %c38 = arith.constant 38 : index
    %645 = memref.load %arg11[%c38] : memref<99xf32, #tpu.memory_space<smem>>
    %646 = vector.broadcast %645 : f32 to vector<16x16xf32>
    %647 = arith.mulf %644, %646 : vector<16x16xf32>
    %648 = arith.addf %643, %647 : vector<16x16xf32>
    %649 = vector.extract_strided_slice %259 {offsets = [5, 3], sizes = [16, 16], strides = [1, 1]} : vector<22x24xf32> to vector<16x16xf32>
    %c87 = arith.constant 87 : index
    %650 = memref.load %arg11[%c87] : memref<99xf32, #tpu.memory_space<smem>>
    %651 = vector.broadcast %650 : f32 to vector<16x16xf32>
    %652 = arith.mulf %649, %651 : vector<16x16xf32>
    %653 = arith.addf %648, %652 : vector<16x16xf32>
    %654 = vector.extract_strided_slice %258 {offsets = [5, 4], sizes = [16, 16], strides = [1, 1]} : vector<22x24xf32> to vector<16x16xf32>
    %c39 = arith.constant 39 : index
    %655 = memref.load %arg11[%c39] : memref<99xf32, #tpu.memory_space<smem>>
    %656 = vector.broadcast %655 : f32 to vector<16x16xf32>
    %657 = arith.mulf %654, %656 : vector<16x16xf32>
    %658 = arith.addf %653, %657 : vector<16x16xf32>
    %659 = vector.extract_strided_slice %259 {offsets = [5, 4], sizes = [16, 16], strides = [1, 1]} : vector<22x24xf32> to vector<16x16xf32>
    %c88 = arith.constant 88 : index
    %660 = memref.load %arg11[%c88] : memref<99xf32, #tpu.memory_space<smem>>
    %661 = vector.broadcast %660 : f32 to vector<16x16xf32>
    %662 = arith.mulf %659, %661 : vector<16x16xf32>
    %663 = arith.addf %658, %662 : vector<16x16xf32>
    %664 = vector.extract_strided_slice %258 {offsets = [5, 5], sizes = [16, 16], strides = [1, 1]} : vector<22x24xf32> to vector<16x16xf32>
    %c40 = arith.constant 40 : index
    %665 = memref.load %arg11[%c40] : memref<99xf32, #tpu.memory_space<smem>>
    %666 = vector.broadcast %665 : f32 to vector<16x16xf32>
    %667 = arith.mulf %664, %666 : vector<16x16xf32>
    %668 = arith.addf %663, %667 : vector<16x16xf32>
    %669 = vector.extract_strided_slice %259 {offsets = [5, 5], sizes = [16, 16], strides = [1, 1]} : vector<22x24xf32> to vector<16x16xf32>
    %c89 = arith.constant 89 : index
    %670 = memref.load %arg11[%c89] : memref<99xf32, #tpu.memory_space<smem>>
    %671 = vector.broadcast %670 : f32 to vector<16x16xf32>
    %672 = arith.mulf %669, %671 : vector<16x16xf32>
    %673 = arith.addf %668, %672 : vector<16x16xf32>
    %674 = vector.extract_strided_slice %258 {offsets = [5, 6], sizes = [16, 16], strides = [1, 1]} : vector<22x24xf32> to vector<16x16xf32>
    %c41 = arith.constant 41 : index
    %675 = memref.load %arg11[%c41] : memref<99xf32, #tpu.memory_space<smem>>
    %676 = vector.broadcast %675 : f32 to vector<16x16xf32>
    %677 = arith.mulf %674, %676 : vector<16x16xf32>
    %678 = arith.addf %673, %677 : vector<16x16xf32>
    %679 = vector.extract_strided_slice %259 {offsets = [5, 6], sizes = [16, 16], strides = [1, 1]} : vector<22x24xf32> to vector<16x16xf32>
    %c90 = arith.constant 90 : index
    %680 = memref.load %arg11[%c90] : memref<99xf32, #tpu.memory_space<smem>>
    %681 = vector.broadcast %680 : f32 to vector<16x16xf32>
    %682 = arith.mulf %679, %681 : vector<16x16xf32>
    %683 = arith.addf %678, %682 : vector<16x16xf32>
    %684 = vector.extract_strided_slice %258 {offsets = [6, 0], sizes = [16, 16], strides = [1, 1]} : vector<22x24xf32> to vector<16x16xf32>
    %c42 = arith.constant 42 : index
    %685 = memref.load %arg11[%c42] : memref<99xf32, #tpu.memory_space<smem>>
    %686 = vector.broadcast %685 : f32 to vector<16x16xf32>
    %687 = arith.mulf %684, %686 : vector<16x16xf32>
    %688 = arith.addf %683, %687 : vector<16x16xf32>
    %689 = vector.extract_strided_slice %259 {offsets = [6, 0], sizes = [16, 16], strides = [1, 1]} : vector<22x24xf32> to vector<16x16xf32>
    %c91 = arith.constant 91 : index
    %690 = memref.load %arg11[%c91] : memref<99xf32, #tpu.memory_space<smem>>
    %691 = vector.broadcast %690 : f32 to vector<16x16xf32>
    %692 = arith.mulf %689, %691 : vector<16x16xf32>
    %693 = arith.addf %688, %692 : vector<16x16xf32>
    %694 = vector.extract_strided_slice %258 {offsets = [6, 1], sizes = [16, 16], strides = [1, 1]} : vector<22x24xf32> to vector<16x16xf32>
    %c43 = arith.constant 43 : index
    %695 = memref.load %arg11[%c43] : memref<99xf32, #tpu.memory_space<smem>>
    %696 = vector.broadcast %695 : f32 to vector<16x16xf32>
    %697 = arith.mulf %694, %696 : vector<16x16xf32>
    %698 = arith.addf %693, %697 : vector<16x16xf32>
    %699 = vector.extract_strided_slice %259 {offsets = [6, 1], sizes = [16, 16], strides = [1, 1]} : vector<22x24xf32> to vector<16x16xf32>
    %c92 = arith.constant 92 : index
    %700 = memref.load %arg11[%c92] : memref<99xf32, #tpu.memory_space<smem>>
    %701 = vector.broadcast %700 : f32 to vector<16x16xf32>
    %702 = arith.mulf %699, %701 : vector<16x16xf32>
    %703 = arith.addf %698, %702 : vector<16x16xf32>
    %704 = vector.extract_strided_slice %258 {offsets = [6, 2], sizes = [16, 16], strides = [1, 1]} : vector<22x24xf32> to vector<16x16xf32>
    %c44 = arith.constant 44 : index
    %705 = memref.load %arg11[%c44] : memref<99xf32, #tpu.memory_space<smem>>
    %706 = vector.broadcast %705 : f32 to vector<16x16xf32>
    %707 = arith.mulf %704, %706 : vector<16x16xf32>
    %708 = arith.addf %703, %707 : vector<16x16xf32>
    %709 = vector.extract_strided_slice %259 {offsets = [6, 2], sizes = [16, 16], strides = [1, 1]} : vector<22x24xf32> to vector<16x16xf32>
    %c93 = arith.constant 93 : index
    %710 = memref.load %arg11[%c93] : memref<99xf32, #tpu.memory_space<smem>>
    %711 = vector.broadcast %710 : f32 to vector<16x16xf32>
    %712 = arith.mulf %709, %711 : vector<16x16xf32>
    %713 = arith.addf %708, %712 : vector<16x16xf32>
    %714 = vector.extract_strided_slice %258 {offsets = [6, 3], sizes = [16, 16], strides = [1, 1]} : vector<22x24xf32> to vector<16x16xf32>
    %c45 = arith.constant 45 : index
    %715 = memref.load %arg11[%c45] : memref<99xf32, #tpu.memory_space<smem>>
    %716 = vector.broadcast %715 : f32 to vector<16x16xf32>
    %717 = arith.mulf %714, %716 : vector<16x16xf32>
    %718 = arith.addf %713, %717 : vector<16x16xf32>
    %719 = vector.extract_strided_slice %259 {offsets = [6, 3], sizes = [16, 16], strides = [1, 1]} : vector<22x24xf32> to vector<16x16xf32>
    %c94 = arith.constant 94 : index
    %720 = memref.load %arg11[%c94] : memref<99xf32, #tpu.memory_space<smem>>
    %721 = vector.broadcast %720 : f32 to vector<16x16xf32>
    %722 = arith.mulf %719, %721 : vector<16x16xf32>
    %723 = arith.addf %718, %722 : vector<16x16xf32>
    %724 = vector.extract_strided_slice %258 {offsets = [6, 4], sizes = [16, 16], strides = [1, 1]} : vector<22x24xf32> to vector<16x16xf32>
    %c46 = arith.constant 46 : index
    %725 = memref.load %arg11[%c46] : memref<99xf32, #tpu.memory_space<smem>>
    %726 = vector.broadcast %725 : f32 to vector<16x16xf32>
    %727 = arith.mulf %724, %726 : vector<16x16xf32>
    %728 = arith.addf %723, %727 : vector<16x16xf32>
    %729 = vector.extract_strided_slice %259 {offsets = [6, 4], sizes = [16, 16], strides = [1, 1]} : vector<22x24xf32> to vector<16x16xf32>
    %c95 = arith.constant 95 : index
    %730 = memref.load %arg11[%c95] : memref<99xf32, #tpu.memory_space<smem>>
    %731 = vector.broadcast %730 : f32 to vector<16x16xf32>
    %732 = arith.mulf %729, %731 : vector<16x16xf32>
    %733 = arith.addf %728, %732 : vector<16x16xf32>
    %734 = vector.extract_strided_slice %258 {offsets = [6, 5], sizes = [16, 16], strides = [1, 1]} : vector<22x24xf32> to vector<16x16xf32>
    %c47 = arith.constant 47 : index
    %735 = memref.load %arg11[%c47] : memref<99xf32, #tpu.memory_space<smem>>
    %736 = vector.broadcast %735 : f32 to vector<16x16xf32>
    %737 = arith.mulf %734, %736 : vector<16x16xf32>
    %738 = arith.addf %733, %737 : vector<16x16xf32>
    %739 = vector.extract_strided_slice %259 {offsets = [6, 5], sizes = [16, 16], strides = [1, 1]} : vector<22x24xf32> to vector<16x16xf32>
    %c96_237 = arith.constant 96 : index
    %740 = memref.load %arg11[%c96_237] : memref<99xf32, #tpu.memory_space<smem>>
    %741 = vector.broadcast %740 : f32 to vector<16x16xf32>
    %742 = arith.mulf %739, %741 : vector<16x16xf32>
    %743 = arith.addf %738, %742 : vector<16x16xf32>
    %744 = vector.extract_strided_slice %258 {offsets = [6, 6], sizes = [16, 16], strides = [1, 1]} : vector<22x24xf32> to vector<16x16xf32>
    %c48_238 = arith.constant 48 : index
    %745 = memref.load %arg11[%c48_238] : memref<99xf32, #tpu.memory_space<smem>>
    %746 = vector.broadcast %745 : f32 to vector<16x16xf32>
    %747 = arith.mulf %744, %746 : vector<16x16xf32>
    %748 = arith.addf %743, %747 : vector<16x16xf32>
    %749 = vector.extract_strided_slice %259 {offsets = [6, 6], sizes = [16, 16], strides = [1, 1]} : vector<22x24xf32> to vector<16x16xf32>
    %c97 = arith.constant 97 : index
    %750 = memref.load %arg11[%c97] : memref<99xf32, #tpu.memory_space<smem>>
    %751 = vector.broadcast %750 : f32 to vector<16x16xf32>
    %752 = arith.mulf %749, %751 : vector<16x16xf32>
    %753 = arith.addf %748, %752 : vector<16x16xf32>
    %754 = arith.negf %753 : vector<16x16xf32>
    %755 = math.exp %754 : vector<16x16xf32>
    %cst_239 = arith.constant 1.000000e+00 : f32
    %756 = vector.broadcast %cst_239 : f32 to vector<16x16xf32>
    %757 = arith.addf %756, %755 : vector<16x16xf32>
    %758 = arith.divf %756, %757 : vector<16x16xf32>
    %cst_240 = arith.constant 0.000000e+00 : f32
    %759 = vector.broadcast %cst_240 : f32 to vector<1x384xf32>
    %c0_241 = arith.constant 0 : index
    %c0_242 = arith.constant 0 : index
    %760 = vector.load %arg19[%c0_241, %c0_242] : memref<1x384xf32, #tpu.memory_space<vmem>>, vector<1x384xf32>
    tpu.vector_store %arg19[%c0_241, %c0_242], %759 {strides = array<i32>} : memref<1x384xf32, #tpu.memory_space<vmem>>, vector<1x384xf32>,
    %761 = vector.extract_strided_slice %758 {offsets = [0, 0], sizes = [1, 16], strides = [1, 1]} : vector<16x16xf32> to vector<1x16xf32>
    %c0_243 = arith.constant 0 : index
    %c0_244 = arith.constant 0 : index
    %762 = vector.load %arg19[%c0_243, %c0_244] : memref<1x384xf32, #tpu.memory_space<vmem>>, vector<1x16xf32>
    tpu.vector_store %arg19[%c0_243, %c0_244], %761 {strides = array<i32>} : memref<1x384xf32, #tpu.memory_space<vmem>>, vector<1x16xf32>,
    %763 = vector.extract_strided_slice %758 {offsets = [1, 0], sizes = [1, 16], strides = [1, 1]} : vector<16x16xf32> to vector<1x16xf32>
    %c0_245 = arith.constant 0 : index
    %c24_246 = arith.constant 24 : index
    %764 = vector.load %arg19[%c0_245, %c24_246] : memref<1x384xf32, #tpu.memory_space<vmem>>, vector<1x16xf32>
    tpu.vector_store %arg19[%c0_245, %c24_246], %763 {strides = array<i32>} : memref<1x384xf32, #tpu.memory_space<vmem>>, vector<1x16xf32>,
    %765 = vector.extract_strided_slice %758 {offsets = [2, 0], sizes = [1, 16], strides = [1, 1]} : vector<16x16xf32> to vector<1x16xf32>
    %c0_247 = arith.constant 0 : index
    %c48_248 = arith.constant 48 : index
    %766 = vector.load %arg19[%c0_247, %c48_248] : memref<1x384xf32, #tpu.memory_space<vmem>>, vector<1x16xf32>
    tpu.vector_store %arg19[%c0_247, %c48_248], %765 {strides = array<i32>} : memref<1x384xf32, #tpu.memory_space<vmem>>, vector<1x16xf32>,
    %767 = vector.extract_strided_slice %758 {offsets = [3, 0], sizes = [1, 16], strides = [1, 1]} : vector<16x16xf32> to vector<1x16xf32>
    %c0_249 = arith.constant 0 : index
    %c72_250 = arith.constant 72 : index
    %768 = vector.load %arg19[%c0_249, %c72_250] : memref<1x384xf32, #tpu.memory_space<vmem>>, vector<1x16xf32>
    tpu.vector_store %arg19[%c0_249, %c72_250], %767 {strides = array<i32>} : memref<1x384xf32, #tpu.memory_space<vmem>>, vector<1x16xf32>,
    %769 = vector.extract_strided_slice %758 {offsets = [4, 0], sizes = [1, 16], strides = [1, 1]} : vector<16x16xf32> to vector<1x16xf32>
    %c0_251 = arith.constant 0 : index
    %c96_252 = arith.constant 96 : index
    %770 = vector.load %arg19[%c0_251, %c96_252] : memref<1x384xf32, #tpu.memory_space<vmem>>, vector<1x16xf32>
    tpu.vector_store %arg19[%c0_251, %c96_252], %769 {strides = array<i32>} : memref<1x384xf32, #tpu.memory_space<vmem>>, vector<1x16xf32>,
    %771 = vector.extract_strided_slice %758 {offsets = [5, 0], sizes = [1, 16], strides = [1, 1]} : vector<16x16xf32> to vector<1x16xf32>
    %c0_253 = arith.constant 0 : index
    %c120_254 = arith.constant 120 : index
    %772 = vector.load %arg19[%c0_253, %c120_254] : memref<1x384xf32, #tpu.memory_space<vmem>>, vector<1x16xf32>
    tpu.vector_store %arg19[%c0_253, %c120_254], %771 {strides = array<i32>} : memref<1x384xf32, #tpu.memory_space<vmem>>, vector<1x16xf32>,
    %773 = vector.extract_strided_slice %758 {offsets = [6, 0], sizes = [1, 16], strides = [1, 1]} : vector<16x16xf32> to vector<1x16xf32>
    %c0_255 = arith.constant 0 : index
    %c144_256 = arith.constant 144 : index
    %774 = vector.load %arg19[%c0_255, %c144_256] : memref<1x384xf32, #tpu.memory_space<vmem>>, vector<1x16xf32>
    tpu.vector_store %arg19[%c0_255, %c144_256], %773 {strides = array<i32>} : memref<1x384xf32, #tpu.memory_space<vmem>>, vector<1x16xf32>,
    %775 = vector.extract_strided_slice %758 {offsets = [7, 0], sizes = [1, 16], strides = [1, 1]} : vector<16x16xf32> to vector<1x16xf32>
    %c0_257 = arith.constant 0 : index
    %c168_258 = arith.constant 168 : index
    %776 = vector.load %arg19[%c0_257, %c168_258] : memref<1x384xf32, #tpu.memory_space<vmem>>, vector<1x16xf32>
    tpu.vector_store %arg19[%c0_257, %c168_258], %775 {strides = array<i32>} : memref<1x384xf32, #tpu.memory_space<vmem>>, vector<1x16xf32>,
    %777 = vector.extract_strided_slice %758 {offsets = [8, 0], sizes = [1, 16], strides = [1, 1]} : vector<16x16xf32> to vector<1x16xf32>
    %c0_259 = arith.constant 0 : index
    %c192_260 = arith.constant 192 : index
    %778 = vector.load %arg19[%c0_259, %c192_260] : memref<1x384xf32, #tpu.memory_space<vmem>>, vector<1x16xf32>
    tpu.vector_store %arg19[%c0_259, %c192_260], %777 {strides = array<i32>} : memref<1x384xf32, #tpu.memory_space<vmem>>, vector<1x16xf32>,
    %779 = vector.extract_strided_slice %758 {offsets = [9, 0], sizes = [1, 16], strides = [1, 1]} : vector<16x16xf32> to vector<1x16xf32>
    %c0_261 = arith.constant 0 : index
    %c216_262 = arith.constant 216 : index
    %780 = vector.load %arg19[%c0_261, %c216_262] : memref<1x384xf32, #tpu.memory_space<vmem>>, vector<1x16xf32>
    tpu.vector_store %arg19[%c0_261, %c216_262], %779 {strides = array<i32>} : memref<1x384xf32, #tpu.memory_space<vmem>>, vector<1x16xf32>,
    %781 = vector.extract_strided_slice %758 {offsets = [10, 0], sizes = [1, 16], strides = [1, 1]} : vector<16x16xf32> to vector<1x16xf32>
    %c0_263 = arith.constant 0 : index
    %c240_264 = arith.constant 240 : index
    %782 = vector.load %arg19[%c0_263, %c240_264] : memref<1x384xf32, #tpu.memory_space<vmem>>, vector<1x16xf32>
    tpu.vector_store %arg19[%c0_263, %c240_264], %781 {strides = array<i32>} : memref<1x384xf32, #tpu.memory_space<vmem>>, vector<1x16xf32>,
    %783 = vector.extract_strided_slice %758 {offsets = [11, 0], sizes = [1, 16], strides = [1, 1]} : vector<16x16xf32> to vector<1x16xf32>
    %c0_265 = arith.constant 0 : index
    %c264_266 = arith.constant 264 : index
    %784 = vector.load %arg19[%c0_265, %c264_266] : memref<1x384xf32, #tpu.memory_space<vmem>>, vector<1x16xf32>
    tpu.vector_store %arg19[%c0_265, %c264_266], %783 {strides = array<i32>} : memref<1x384xf32, #tpu.memory_space<vmem>>, vector<1x16xf32>,
    %785 = vector.extract_strided_slice %758 {offsets = [12, 0], sizes = [1, 16], strides = [1, 1]} : vector<16x16xf32> to vector<1x16xf32>
    %c0_267 = arith.constant 0 : index
    %c288_268 = arith.constant 288 : index
    %786 = vector.load %arg19[%c0_267, %c288_268] : memref<1x384xf32, #tpu.memory_space<vmem>>, vector<1x16xf32>
    tpu.vector_store %arg19[%c0_267, %c288_268], %785 {strides = array<i32>} : memref<1x384xf32, #tpu.memory_space<vmem>>, vector<1x16xf32>,
    %787 = vector.extract_strided_slice %758 {offsets = [13, 0], sizes = [1, 16], strides = [1, 1]} : vector<16x16xf32> to vector<1x16xf32>
    %c0_269 = arith.constant 0 : index
    %c312_270 = arith.constant 312 : index
    %788 = vector.load %arg19[%c0_269, %c312_270] : memref<1x384xf32, #tpu.memory_space<vmem>>, vector<1x16xf32>
    tpu.vector_store %arg19[%c0_269, %c312_270], %787 {strides = array<i32>} : memref<1x384xf32, #tpu.memory_space<vmem>>, vector<1x16xf32>,
    %789 = vector.extract_strided_slice %758 {offsets = [14, 0], sizes = [1, 16], strides = [1, 1]} : vector<16x16xf32> to vector<1x16xf32>
    %c0_271 = arith.constant 0 : index
    %c336_272 = arith.constant 336 : index
    %790 = vector.load %arg19[%c0_271, %c336_272] : memref<1x384xf32, #tpu.memory_space<vmem>>, vector<1x16xf32>
    tpu.vector_store %arg19[%c0_271, %c336_272], %789 {strides = array<i32>} : memref<1x384xf32, #tpu.memory_space<vmem>>, vector<1x16xf32>,
    %791 = vector.extract_strided_slice %758 {offsets = [15, 0], sizes = [1, 16], strides = [1, 1]} : vector<16x16xf32> to vector<1x16xf32>
    %c0_273 = arith.constant 0 : index
    %c360_274 = arith.constant 360 : index
    %792 = vector.load %arg19[%c0_273, %c360_274] : memref<1x384xf32, #tpu.memory_space<vmem>>, vector<1x16xf32>
    tpu.vector_store %arg19[%c0_273, %c360_274], %791 {strides = array<i32>} : memref<1x384xf32, #tpu.memory_space<vmem>>, vector<1x16xf32>,
    %c0_275 = arith.constant 0 : index
    %c0_276 = arith.constant 0 : index
    %793 = vector.load %arg19[%c0_275, %c0_276] : memref<1x384xf32, #tpu.memory_space<vmem>>, vector<1x384xf32>
    %794 = vector.broadcast %793 : vector<1x384xf32> to vector<32x384xf32>
    %795 = arith.mulf %794, %183 : vector<32x384xf32>
    %c0_277 = arith.constant 0 : index
    %c0_278 = arith.constant 0 : index
    %796 = vector.load %arg15[%c0_277, %c0_278] : memref<32x384xf32, #tpu.memory_space<vmem>>, vector<32x384xf32>
    %797 = arith.addf %795, %796 : vector<32x384xf32>
    %cst_279 = arith.constant 0.000000e+00 : f32
    %798 = vector.broadcast %cst_279 : f32 to vector<32x384xf32>
    %799 = arith.maximumf %797, %798 : vector<32x384xf32>
    %c0_280 = arith.constant 0 : index
    %c0_281 = arith.constant 0 : index
    %c0_282 = arith.constant 0 : index
    %800 = vector.load %arg12[%c0_280, %c0_281, %c0_282] : memref<1x32x384xf32, #tpu.memory_space<vmem>>, vector<1x32x384xf32>
    %801 = vector.shape_cast %800 : vector<1x32x384xf32> to vector<32x384xf32>
    %802 = vector.shape_cast %799 : vector<32x384xf32> to vector<1x32x384xf32>
    tpu.vector_store %arg12[%c0_280, %c0_281, %c0_282], %802 {strides = array<i32>} : memref<1x32x384xf32, #tpu.memory_space<vmem>>, vector<1x32x384xf32>,
    return
  }
  func.func @transform_0(%arg0: i32) -> (i32, i32, i32) {
    %c0_i32 = arith.constant 0 : i32
    %c0_i32_0 = arith.constant 0 : i32
    %c0_i32_1 = arith.constant 0 : i32
    return %arg0, %c0_i32, %c0_i32_0 : i32, i32, i32
  }
  func.func @transform_1(%arg0: i32) -> (i32, i32) {
    %c0_i32 = arith.constant 0 : i32
    %c0_i32_0 = arith.constant 0 : i32
    %c0_i32_1 = arith.constant 0 : i32
    return %c0_i32, %c0_i32_0 : i32, i32
  }
  func.func @transform_2(%arg0: i32) -> (i32, i32) {
    %c0_i32 = arith.constant 0 : i32
    %c0_i32_0 = arith.constant 0 : i32
    %c0_i32_1 = arith.constant 0 : i32
    return %c0_i32, %c0_i32_0 : i32, i32
  }
  func.func @transform_3(%arg0: i32) -> (i32, i32) {
    %c0_i32 = arith.constant 0 : i32
    %c0_i32_0 = arith.constant 0 : i32
    %c0_i32_1 = arith.constant 0 : i32
    return %c0_i32, %c0_i32_0 : i32, i32
  }
  func.func @transform_4(%arg0: i32) -> (i32, i32) {
    %c0_i32 = arith.constant 0 : i32
    %c0_i32_0 = arith.constant 0 : i32
    %c0_i32_1 = arith.constant 0 : i32
    return %c0_i32, %c0_i32_0 : i32, i32
  }
  func.func @transform_5(%arg0: i32) -> (i32, i32) {
    %c0_i32 = arith.constant 0 : i32
    %c0_i32_0 = arith.constant 0 : i32
    %c0_i32_1 = arith.constant 0 : i32
    return %c0_i32, %c0_i32_0 : i32, i32
  }
  func.func @transform_6(%arg0: i32) -> (i32, i32) {
    %c0_i32 = arith.constant 0 : i32
    %c0_i32_0 = arith.constant 0 : i32
    %c0_i32_1 = arith.constant 0 : i32
    return %c0_i32, %c0_i32_0 : i32, i32
  }
  func.func @transform_7(%arg0: i32) -> (i32, i32) {
    %c0_i32 = arith.constant 0 : i32
    %c0_i32_0 = arith.constant 0 : i32
    %c0_i32_1 = arith.constant 0 : i32
    return %c0_i32, %c0_i32_0 : i32, i32
  }
  func.func @transform_8(%arg0: i32) -> (i32, i32) {
    %c0_i32 = arith.constant 0 : i32
    %c0_i32_0 = arith.constant 0 : i32
    %c0_i32_1 = arith.constant 0 : i32
    return %c0_i32, %c0_i32_0 : i32, i32
  }
  func.func @transform_9(%arg0: i32) -> (i32, i32) {
    %c0_i32 = arith.constant 0 : i32
    %c0_i32_0 = arith.constant 0 : i32
    %c0_i32_1 = arith.constant 0 : i32
    return %c0_i32, %c0_i32_0 : i32, i32
  }
  func.func @transform_10(%arg0: i32) -> i32 {
    %c0_i32 = arith.constant 0 : i32
    %c0_i32_0 = arith.constant 0 : i32
    return %c0_i32 : i32
  }
  func.func @transform_11(%arg0: i32) -> (i32, i32, i32) {
    %c0_i32 = arith.constant 0 : i32
    %c0_i32_0 = arith.constant 0 : i32
    %c0_i32_1 = arith.constant 0 : i32
    return %arg0, %c0_i32, %c0_i32_0 : i32, i32, i32
  }
}

</mosaic_0001>

<llo_original>
// kernel: residual_block_forward.1
$region0: #{residual_block_forward.1}
  #allocation0 [shape = 'u32[]', space=smem, size = 0x4, offset = 0x4, fixed_abs, tag = 'smem constant byte address 0x4 - core index']
  #allocation1 [shape = 'u32[144,128]{1,0:T(1,128)}', space=vmem, size = 0x12000, scoped, tag = 'internal scratch']
  #allocation2 [shape = 'bf16[448,16]{1,0:T(8,128)(2,1)}', space=vmem, size = 0x1c000, scoped, tag = 'scratch operand']
  #allocation3 [shape = 'bf16[448,32]{1,0:T(8,128)(2,1)}', space=vmem, size = 0x1c000, scoped, tag = 'scratch operand']
  #allocation4 [shape = 'f32[32,384]{1,0:T(8,128)}', space=vmem, size = 0xc000, scoped, tag = 'scratch operand']
  #allocation5 [shape = 'f32[384,1]{1,0:T(8,128)}', space=vmem, size = 0x30000, scoped, tag = 'scratch operand']
  #allocation6 [shape = 'f32[22,24]{1,0:T(8,128)}', space=vmem, size = 0x3000, scoped, tag = 'scratch operand']
  #allocation7 [shape = 'f32[22,24]{1,0:T(8,128)}', space=vmem, size = 0x3000, scoped, tag = 'scratch operand']
  #allocation8 [shape = 'f32[1,384]{1,0:T(1,128)}', space=vmem, size = 0x600, scoped, tag = 'scratch operand']
  %s0 = inlined_call_operand.vmem [shape: f32[2,16,256], index: 0, kind: input, shape index: {}]
  %s1 = inlined_call_operand.vmem [shape: bf16[144,32], index: 1, kind: input, shape index: {}]
  %s2 = inlined_call_operand.vmem [shape: bf16[16,32], index: 2, kind: input, shape index: {}]
  %s3 = inlined_call_operand.vmem [shape: f32[4,32], index: 3, kind: input, shape index: {}]
  %s4 = inlined_call_operand.vmem [shape: bf16[288,32], index: 4, kind: input, shape index: {}]
  %s5 = inlined_call_operand.vmem [shape: f32[2,32], index: 5, kind: input, shape index: {}]
  %s6 = inlined_call_operand.vmem [shape: f32[2,32], index: 6, kind: input, shape index: {}]
  %s7 = inlined_call_operand.vmem [shape: f32[2,1], index: 7, kind: input, shape index: {}]
  %s8 = inlined_call_operand.vmem [shape: f32[2,32], index: 8, kind: input, shape index: {}]
  %s9 = inlined_call_operand.vmem [shape: f32[1,32], index: 9, kind: input, shape index: {}]
  %s10 = inlined_call_operand.vmem [shape: f32[99], index: 10, kind: input, shape index: {}]
  %s11 = inlined_call_operand.vmem [shape: f32[2,32,384], index: 11, kind: output, shape index: {}]
  %s12 = sld [smem:[#allocation0]]
  $region81: #{residual_block_forward.1} parent=0
    _
  %s14 = ssub.s32 1, %s12
  %s15 = scalar_select 0, %s14, %s12
  $region1: #{residual_block_forward.1} parent=0
    #allocation9 [shape = 'u8[512]{0}', space=smem, size = 0x200, scoped, tag = 'input window, operand 10, single buffered']
    #allocation10 [shape = 's32[2]{0}', space=sflag, size = 0x8, scoped, tag = 'scoped memory for residual_block_forward.1']
    %16 = vsyncpa [#allocation10], 0
    loop: start=0, step=1, limit=4
    $region2: #{residual_block_forward.1} parent=1 // loop_pre_header
      _
    $region3: #{residual_block_forward.1} parent=1 // loop_header
      %s18 = sphi 0, %s22
      %p19 = scmp.ge.s32.totalorder %s18, 4
      %s28 = sphi 0, %s30
      %s31 = sphi 0, %s28
      %s32 = sphi 0, %s31
      %s48 = sphi 0, %s32
      %s52 = sphi 0, %s52
      %s54 = sphi 0, %s52
      %s55 = sphi 0, %s54
      %s69 = sphi 0, %s55
      %s73 = sphi 0, %s73
      %s75 = sphi 0, %s73
      %s76 = sphi 0, %s75
      %s90 = sphi 0, %s76
      %s94 = sphi 0, %s94
      %s96 = sphi 0, %s94
      %s97 = sphi 0, %s96
      %s111 = sphi 0, %s97
      %s115 = sphi 0, %s115
      %s117 = sphi 0, %s115
      %s118 = sphi 0, %s117
      %s132 = sphi 0, %s118
      %s136 = sphi 0, %s136
      %s138 = sphi 0, %s136
      %s139 = sphi 0, %s138
      %s153 = sphi 0, %s139
      %s157 = sphi 0, %s157
      %s159 = sphi 0, %s157
      %s160 = sphi 0, %s159
      %s174 = sphi 0, %s160
      %s178 = sphi 0, %s178
      %s180 = sphi 0, %s178
      %s181 = sphi 0, %s180
      %s195 = sphi 0, %s181
      %s199 = sphi 0, %s199
      %s201 = sphi 0, %s199
      %s202 = sphi 0, %s201
      %s216 = sphi 0, %s202
      %s220 = sphi 0, %s220
      %s222 = sphi 0, %s220
      %s223 = sphi 0, %s222
      %s237 = sphi 0, %s223
      %s241 = sphi 0, %s241
      %s243 = sphi 0, %s241
      %s244 = sphi 0, %s243
      %s258 = sphi 0, %s244
      %s264 = sphi 0, %s266
      %s267 = sphi 0, %s264
      %s268 = sphi 0, %s267
      %s284 = sphi 0, %s268
    $region4: #{residual_block_forward.1} parent=1 // loop_header_branch
      %21 = sbr.rel (%p19) target = $region8
    $region5: #{residual_block_forward.1} parent=1 // loop_body
      %s23 = ssub.s32 %s18, 1
      %s24 = ssub.s32 %s18, 2
      %s25 = sadd.s32 %s18, 1
      %s26 = ssub.s32 %s18, %s25
      %p27 = scmp.eq.s32.totalorder %s26, 0
      %s29 = sadd.s32 %s28, 1
      %s30 = scalar_select %p27, %s28, %s29
      %p33 = pneg %p27
      %p34 = scmp.eq.s32.totalorder %s18, 1
      %p35 = por %p33, %p34
      %p36 = scmp.ne.s32.totalorder %s28, %s31
      %p37 = scmp.eq.s32.totalorder %s18, 0
      %p38 = por %p36, %p37
      %p39 = scmp.ne.s32.totalorder %s28, %s31
      %p40 = scmp.eq.s32.totalorder %s23, 1
      %p41 = por %p39, %p40
      %p42 = scmp.ne.s32.totalorder %s31, %s32
      %p43 = scmp.eq.s32.totalorder %s23, 0
      %p44 = por %p42, %p43
      %p45 = scmp.ne.s32.totalorder %s31, %s32
      %p46 = scmp.eq.s32.totalorder %s24, 1
      %p47 = por %p45, %p46
      %p49 = scmp.ne.s32.totalorder %s32, %s48
      %p50 = scmp.eq.s32.totalorder %s24, 0
      %p51 = por %p49, %p50
      %s53 = sadd.s32 %s52, 1
      %p56 = scmp.eq.s32.totalorder %s18, 1
      %p57 = scmp.ne.s32.totalorder %s52, %s54
      %p58 = scmp.eq.s32.totalorder %s18, 0
      %p59 = por %p57, %p58
      %p60 = scmp.ne.s32.totalorder %s52, %s54
      %p61 = scmp.eq.s32.totalorder %s23, 1
      %p62 = por %p60, %p61
      %p63 = scmp.ne.s32.totalorder %s54, %s55
      %p64 = scmp.eq.s32.totalorder %s23, 0
      %p65 = por %p63, %p64
      %p66 = scmp.ne.s32.totalorder %s54, %s55
      %p67 = scmp.eq.s32.totalorder %s24, 1
      %p68 = por %p66, %p67
      %p70 = scmp.ne.s32.totalorder %s55, %s69
      %p71 = scmp.eq.s32.totalorder %s24, 0
      %p72 = por %p70, %p71
      %s74 = sadd.s32 %s73, 1
      %p77 = scmp.eq.s32.totalorder %s18, 1
      %p78 = scmp.ne.s32.totalorder %s73, %s75
      %p79 = scmp.eq.s32.totalorder %s18, 0
      %p80 = por %p78, %p79
      %p81 = scmp.ne.s32.totalorder %s73, %s75
      %p82 = scmp.eq.s32.totalorder %s23, 1
      %p83 = por %p81, %p82
      %p84 = scmp.ne.s32.totalorder %s75, %s76
      %p85 = scmp.eq.s32.totalorder %s23, 0
      %p86 = por %p84, %p85
      %p87 = scmp.ne.s32.totalorder %s75, %s76
      %p88 = scmp.eq.s32.totalorder %s24, 1
      %p89 = por %p87, %p88
      %p91 = scmp.ne.s32.totalorder %s76, %s90
      %p92 = scmp.eq.s32.totalorder %s24, 0
      %p93 = por %p91, %p92
      %s95 = sadd.s32 %s94, 1
      %p98 = scmp.eq.s32.totalorder %s18, 1
      %p99 = scmp.ne.s32.totalorder %s94, %s96
      %p100 = scmp.eq.s32.totalorder %s18, 0
      %p101 = por %p99, %p100
      %p102 = scmp.ne.s32.totalorder %s94, %s96
      %p103 = scmp.eq.s32.totalorder %s23, 1
      %p104 = por %p102, %p103
      %p105 = scmp.ne.s32.totalorder %s96, %s97
      %p106 = scmp.eq.s32.totalorder %s23, 0
      %p107 = por %p105, %p106
      %p108 = scmp.ne.s32.totalorder %s96, %s97
      %p109 = scmp.eq.s32.totalorder %s24, 1
      %p110 = por %p108, %p109
      %p112 = scmp.ne.s32.totalorder %s97, %s111
      %p113 = scmp.eq.s32.totalorder %s24, 0
      %p114 = por %p112, %p113
      %s116 = sadd.s32 %s115, 1
      %p119 = scmp.eq.s32.totalorder %s18, 1
      %p120 = scmp.ne.s32.totalorder %s115, %s117
      %p121 = scmp.eq.s32.totalorder %s18, 0
      %p122 = por %p120, %p121
      %p123 = scmp.ne.s32.totalorder %s115, %s117
      %p124 = scmp.eq.s32.totalorder %s23, 1
      %p125 = por %p123, %p124
      %p126 = scmp.ne.s32.totalorder %s117, %s118
      %p127 = scmp.eq.s32.totalorder %s23, 0
      %p128 = por %p126, %p127
      %p129 = scmp.ne.s32.totalorder %s117, %s118
      %p130 = scmp.eq.s32.totalorder %s24, 1
      %p131 = por %p129, %p130
      %p133 = scmp.ne.s32.totalorder %s118, %s132
      %p134 = scmp.eq.s32.totalorder %s24, 0
      %p135 = por %p133, %p134
      %s137 = sadd.s32 %s136, 1
      %p140 = scmp.eq.s32.totalorder %s18, 1
      %p141 = scmp.ne.s32.totalorder %s136, %s138
      %p142 = scmp.eq.s32.totalorder %s18, 0
      %p143 = por %p141, %p142
      %p144 = scmp.ne.s32.totalorder %s136, %s138
      %p145 = scmp.eq.s32.totalorder %s23, 1
      %p146 = por %p144, %p145
      %p147 = scmp.ne.s32.totalorder %s138, %s139
      %p148 = scmp.eq.s32.totalorder %s23, 0
      %p149 = por %p147, %p148
      %p150 = scmp.ne.s32.totalorder %s138, %s139
      %p151 = scmp.eq.s32.totalorder %s24, 1
      %p152 = por %p150, %p151
      %p154 = scmp.ne.s32.totalorder %s139, %s153
      %p155 = scmp.eq.s32.totalorder %s24, 0
      %p156 = por %p154, %p155
      %s158 = sadd.s32 %s157, 1
      %p161 = scmp.eq.s32.totalorder %s18, 1
      %p162 = scmp.ne.s32.totalorder %s157, %s159
      %p163 = scmp.eq.s32.totalorder %s18, 0
      %p164 = por %p162, %p163
      %p165 = scmp.ne.s32.totalorder %s157, %s159
      %p166 = scmp.eq.s32.totalorder %s23, 1
      %p167 = por %p165, %p166
      %p168 = scmp.ne.s32.totalorder %s159, %s160
      %p169 = scmp.eq.s32.totalorder %s23, 0
      %p170 = por %p168, %p169
      %p171 = scmp.ne.s32.totalorder %s159, %s160
      %p172 = scmp.eq.s32.totalorder %s24, 1
      %p173 = por %p171, %p172
      %p175 = scmp.ne.s32.totalorder %s160, %s174
      %p176 = scmp.eq.s32.totalorder %s24, 0
      %p177 = por %p175, %p176
      %s179 = sadd.s32 %s178, 1
      %p182 = scmp.eq.s32.totalorder %s18, 1
      %p183 = scmp.ne.s32.totalorder %s178, %s180
      %p184 = scmp.eq.s32.totalorder %s18, 0
      %p185 = por %p183, %p184
      %p186 = scmp.ne.s32.totalorder %s178, %s180
      %p187 = scmp.eq.s32.totalorder %s23, 1
      %p188 = por %p186, %p187
      %p189 = scmp.ne.s32.totalorder %s180, %s181
      %p190 = scmp.eq.s32.totalorder %s23, 0
      %p191 = por %p189, %p190
      %p192 = scmp.ne.s32.totalorder %s180, %s181
      %p193 = scmp.eq.s32.totalorder %s24, 1
      %p194 = por %p192, %p193
      %p196 = scmp.ne.s32.totalorder %s181, %s195
      %p197 = scmp.eq.s32.totalorder %s24, 0
      %p198 = por %p196, %p197
      %s200 = sadd.s32 %s199, 1
      %p203 = scmp.eq.s32.totalorder %s18, 1
      %p204 = scmp.ne.s32.totalorder %s199, %s201
      %p205 = scmp.eq.s32.totalorder %s18, 0
      %p206 = por %p204, %p205
      %p207 = scmp.ne.s32.totalorder %s199, %s201
      %p208 = scmp.eq.s32.totalorder %s23, 1
      %p209 = por %p207, %p208
      %p210 = scmp.ne.s32.totalorder %s201, %s202
      %p211 = scmp.eq.s32.totalorder %s23, 0
      %p212 = por %p210, %p211
      %p213 = scmp.ne.s32.totalorder %s201, %s202
      %p214 = scmp.eq.s32.totalorder %s24, 1
      %p215 = por %p213, %p214
      %p217 = scmp.ne.s32.totalorder %s202, %s216
      %p218 = scmp.eq.s32.totalorder %s24, 0
      %p219 = por %p217, %p218
      %s221 = sadd.s32 %s220, 1
      %p224 = scmp.eq.s32.totalorder %s18, 1
      %p225 = scmp.ne.s32.totalorder %s220, %s222
      %p226 = scmp.eq.s32.totalorder %s18, 0
      %p227 = por %p225, %p226
      %p228 = scmp.ne.s32.totalorder %s220, %s222
      %p229 = scmp.eq.s32.totalorder %s23, 1
      %p230 = por %p228, %p229
      %p231 = scmp.ne.s32.totalorder %s222, %s223
      %p232 = scmp.eq.s32.totalorder %s23, 0
      %p233 = por %p231, %p232
      %p234 = scmp.ne.s32.totalorder %s222, %s223
      %p235 = scmp.eq.s32.totalorder %s24, 1
      %p236 = por %p234, %p235
      %p238 = scmp.ne.s32.totalorder %s223, %s237
      %p239 = scmp.eq.s32.totalorder %s24, 0
      %p240 = por %p238, %p239
      %s242 = sadd.s32 %s241, 1
      %p245 = scmp.eq.s32.totalorder %s18, 1
      %p246 = scmp.ne.s32.totalorder %s241, %s243
      %p247 = scmp.eq.s32.totalorder %s18, 0
      %p248 = por %p246, %p247
      %p249 = scmp.ne.s32.totalorder %s241, %s243
      %p250 = scmp.eq.s32.totalorder %s23, 1
      %p251 = por %p249, %p250
      %p252 = scmp.ne.s32.totalorder %s243, %s244
      %p253 = scmp.eq.s32.totalorder %s23, 0
      %p254 = por %p252, %p253
      %p255 = scmp.ne.s32.totalorder %s243, %s244
      %p256 = scmp.eq.s32.totalorder %s24, 1
      %p257 = por %p255, %p256
      %p259 = scmp.ne.s32.totalorder %s244, %s258
      %p260 = scmp.eq.s32.totalorder %s24, 0
      %p261 = por %p259, %p260
      %s262 = ssub.s32 %s18, %s25
      %p263 = scmp.eq.s32.totalorder %s262, 0
      %s265 = sadd.s32 %s264, 1
      %s266 = scalar_select %p263, %s264, %s265
      %p269 = pneg %p263
      %p270 = scmp.eq.s32.totalorder %s18, 1
      %p271 = por %p269, %p270
      %p272 = scmp.ne.s32.totalorder %s264, %s267
      %p273 = scmp.eq.s32.totalorder %s18, 0
      %p274 = por %p272, %p273
      %p275 = scmp.ne.s32.totalorder %s264, %s267
      %p276 = scmp.eq.s32.totalorder %s23, 1
      %p277 = por %p275, %p276
      %p278 = scmp.ne.s32.totalorder %s267, %s268
      %p279 = scmp.eq.s32.totalorder %s23, 0
      %p280 = por %p278, %p279
      %p281 = scmp.ne.s32.totalorder %s267, %s268
      %p282 = scmp.eq.s32.totalorder %s24, 1
      %p283 = por %p281, %p282
      %p285 = scmp.ne.s32.totalorder %s268, %s284
      %p286 = scmp.eq.s32.totalorder %s24, 0
      %p287 = por %p285, %p286
      %p288 = scmp.le.s32.totalorder 1, %s18
      %p289 = scmp.lt.s32.totalorder %s18, 3
      %p290 = pnand %p288, %p289
      %p291 = pneg %p290
      // Predicated region
      $region9: #{residual_block_forward.1} parent=5 // pred_check
        _
      $region10: #{residual_block_forward.1} parent=5 // pred_check_branch
        %293 = sbr.rel (%p290) target = $region12
      $region11: #{residual_block_forward.1} parent=5 // pred_region
        %s294 = ssub.s32 %s18, 1
        // Predicated region
        $region13: #{residual_block_forward.1} parent=11 // pred_check
          %p295 = pneg %p65
        $region14: #{residual_block_forward.1} parent=11 // pred_check_branch
          %297 = sbr.rel (%p295) target = $region16
        $region15: #{residual_block_forward.1} parent=11 // pred_region
          _
        $region16: #{residual_block_forward.1} parent=11 // pred_fallthru
          _
        // Predicated region
        $region17: #{residual_block_forward.1} parent=11 // pred_check
          %p298 = pneg %p86
        $region18: #{residual_block_forward.1} parent=11 // pred_check_branch
          %300 = sbr.rel (%p298) target = $region20
        $region19: #{residual_block_forward.1} parent=11 // pred_region
          _
        $region20: #{residual_block_forward.1} parent=11 // pred_fallthru
          _
        // Predicated region
        $region21: #{residual_block_forward.1} parent=11 // pred_check
          %p301 = pneg %p107
        $region22: #{residual_block_forward.1} parent=11 // pred_check_branch
          %303 = sbr.rel (%p301) target = $region24
        $region23: #{residual_block_forward.1} parent=11 // pred_region
          _
        $region24: #{residual_block_forward.1} parent=11 // pred_fallthru
          _
        // Predicated region
        $region25: #{residual_block_forward.1} parent=11 // pred_check
          %p304 = pneg %p128
        $region26: #{residual_block_forward.1} parent=11 // pred_check_branch
          %306 = sbr.rel (%p304) target = $region28
        $region27: #{residual_block_forward.1} parent=11 // pred_region
          _
        $region28: #{residual_block_forward.1} parent=11 // pred_fallthru
          _
        // Predicated region
        $region29: #{residual_block_forward.1} parent=11 // pred_check
          %p307 = pneg %p149
        $region30: #{residual_block_forward.1} parent=11 // pred_check_branch
          %309 = sbr.rel (%p307) target = $region32
        $region31: #{residual_block_forward.1} parent=11 // pred_region
          _
        $region32: #{residual_block_forward.1} parent=11 // pred_fallthru
          _
        // Predicated region
        $region33: #{residual_block_forward.1} parent=11 // pred_check
          %p310 = pneg %p170
        $region34: #{residual_block_forward.1} parent=11 // pred_check_branch
          %312 = sbr.rel (%p310) target = $region36
        $region35: #{residual_block_forward.1} parent=11 // pred_region
          _
        $region36: #{residual_block_forward.1} parent=11 // pred_fallthru
          _
        // Predicated region
        $region37: #{residual_block_forward.1} parent=11 // pred_check
          %p313 = pneg %p191
        $region38: #{residual_block_forward.1} parent=11 // pred_check_branch
          %315 = sbr.rel (%p313) target = $region40
        $region39: #{residual_block_forward.1} parent=11 // pred_region
          _
        $region40: #{residual_block_forward.1} parent=11 // pred_fallthru
          _
        // Predicated region
        $region41: #{residual_block_forward.1} parent=11 // pred_check
          %p316 = pneg %p212
        $region42: #{residual_block_forward.1} parent=11 // pred_check_branch
          %318 = sbr.rel (%p316) target = $region44
        $region43: #{residual_block_forward.1} parent=11 // pred_region
          _
        $region44: #{residual_block_forward.1} parent=11 // pred_fallthru
          _
        // Predicated region
        $region45: #{residual_block_forward.1} parent=11 // pred_check
          %p319 = pneg %p233
        $region46: #{residual_block_forward.1} parent=11 // pred_check_branch
          %321 = sbr.rel (%p319) target = $region48
        $region47: #{residual_block_forward.1} parent=11 // pred_region
          _
        $region48: #{residual_block_forward.1} parent=11 // pred_fallthru
          _
        // Predicated region
        $region49: #{residual_block_forward.1} parent=11 // pred_check
          %p322 = pneg %p254
        $region50: #{residual_block_forward.1} parent=11 // pred_check_branch
          %324 = sbr.rel (%p322) target = $region52
        $region51: #{residual_block_forward.1} parent=11 // pred_region
          %s326 = ssub.s32 16, 16
          %327 = vsyncadd [#allocation10], %s326
          %s329 = sshll.u32 %s10, 4
          %s330 = int_to_ptr.vmem [resolvable:$true] %s329
          %332 = dma.vmem_to_smem %s330, 16, [#allocation9], [#allocation10]
        $region52: #{residual_block_forward.1} parent=11 // pred_fallthru
          _
      $region12: #{residual_block_forward.1} parent=5 // pred_fallthru
        _
      %p333 = scmp.lt.s32.totalorder %s18, 2
      // Predicated region
      $region53: #{residual_block_forward.1} parent=5 // pred_check
        %p334 = pneg %p333
      $region54: #{residual_block_forward.1} parent=5 // pred_check_branch
        %336 = sbr.rel (%p334) target = $region56
      $region55: #{residual_block_forward.1} parent=5 // pred_region
        // Predicated region
        $region57: #{residual_block_forward.1} parent=55 // pred_check
          %p337 = pneg %p38
        $region58: #{residual_block_forward.1} parent=55 // pred_check_branch
          %339 = sbr.rel (%p337) target = $region60
        $region59: #{residual_block_forward.1} parent=55 // pred_region
          %p340 = scmp.lt.s32.totalorder %s18, 1
          %s341 = scalar_select %p340, %s18, 1
          %s342 = smul.addr %s341, 4
          %s343 = smul.addr %s342, 8
          %s344 = scalar_lea.vmem %s0, %s343
        $region60: #{residual_block_forward.1} parent=55 // pred_fallthru
          _
      $region56: #{residual_block_forward.1} parent=5 // pred_fallthru
        _
      %p345 = scmp.le.s32.totalorder 1, %s18
      %p346 = scmp.lt.s32.totalorder %s18, 3
      %p347 = pnand %p345, %p346
      %p348 = pneg %p347
      // Predicated region
      $region61: #{residual_block_forward.1} parent=5 // pred_check
        _
      $region62: #{residual_block_forward.1} parent=5 // pred_check_branch
        %350 = sbr.rel (%p347) target = $region64
      $region63: #{residual_block_forward.1} parent=5 // pred_region
        %s351 = ssub.s32 %s18, 1
        // Predicated region
        $region65: #{residual_block_forward.1} parent=63 // pred_check
          %p352 = pneg %p254
        $region66: #{residual_block_forward.1} parent=63 // pred_check_branch
          %354 = sbr.rel (%p352) target = $region68
        $region67: #{residual_block_forward.1} parent=63 // pred_region
          %355 = dma.done [#allocation10], 16
        $region68: #{residual_block_forward.1} parent=63 // pred_fallthru
          _
        %356 = sfence
        %p357 = scmp.lt.s32.totalorder %s23, 1
        %s358 = scalar_select %p357, %s23, 1
        %s359 = smul.addr %s358, 4
        %s360 = smul.addr %s359, 8
        %s361 = scalar_lea.vmem %s0, %s360
        %p362 = pneg %p44
        %p363 = pneg %p41
        %p364 = pneg %p65
        %p365 = pneg %p62
        %p366 = pneg %p86
        %p367 = pneg %p83
        %p368 = pneg %p107
        %p369 = pneg %p104
        %p370 = pneg %p128
        %p371 = pneg %p125
        %p372 = pneg %p149
        %p373 = pneg %p146
        %p374 = pneg %p170
        %p375 = pneg %p167
        %p376 = pneg %p191
        %p377 = pneg %p188
        %p378 = pneg %p212
        %p379 = pneg %p209
        %p380 = pneg %p233
        %p381 = pneg %p230
        %p382 = pneg %p254
        %p383 = pneg %p251
        %p384 = pneg %p280
        %p385 = pneg %p277
        %p386 = scmp.lt.s32.totalorder %s23, 1
        %s387 = scalar_select %p386, %s23, 1
        %s388 = smul.addr %s387, 12
        %s389 = smul.addr %s388, 8
        %s390 = scalar_lea.vmem %s11, %s389
        %p391 = scmp.lt.s32.totalorder %s23, 1
        %s392 = scalar_select %p391, %s23, 1
        %s393 = smul.addr %s392, 4
        %s394 = smul.addr %s393, 8
        %s395 = scalar_lea.vmem %s0, %s394
        %p396 = scmp.lt.s32.totalorder %s23, 1
        %s397 = scalar_select %p396, %s23, 1
        %s398 = smul.addr %s397, 12
        %s399 = smul.addr %s398, 8
        %s400 = scalar_lea.vmem %s11, %s399
        %vm402 = vcmask 7168
        %403 = vst.msk [vmem:[#allocation5] sm:$0xff] %vm402, 0.0
        %404 = vst.msk [vmem:[#allocation5 + $0x8] sm:$0xff] %vm402, 0.0
        %405 = vst.msk [vmem:[#allocation5 + $0x10] sm:$0xff] %vm402, 0.0
        %406 = vst.msk [vmem:[#allocation5 + $0x18] sm:$0xff] %vm402, 0.0
        %407 = vst.msk [vmem:[#allocation5 + $0x20] sm:$0xff] %vm402, 0.0
        %408 = vst.msk [vmem:[#allocation5 + $0x28] sm:$0xff] %vm402, 0.0
        %409 = vst.msk [vmem:[#allocation5 + $0x30] sm:$0xff] %vm402, 0.0
        %410 = vst.msk [vmem:[#allocation5 + $0x38] sm:$0xff] %vm402, 0.0
        %411 = vst.msk [vmem:[#allocation5 + $0x40] sm:$0xff] %vm402, 0.0
        %412 = vst.msk [vmem:[#allocation5 + $0x48] sm:$0xff] %vm402, 0.0
        %413 = vst.msk [vmem:[#allocation5 + $0x50] sm:$0xff] %vm402, 0.0
        %414 = vst.msk [vmem:[#allocation5 + $0x58] sm:$0xff] %vm402, 0.0
        %415 = vst.msk [vmem:[#allocation5 + $0x60] sm:$0xff] %vm402, 0.0
        %416 = vst.msk [vmem:[#allocation5 + $0x68] sm:$0xff] %vm402, 0.0
        %417 = vst.msk [vmem:[#allocation5 + $0x70] sm:$0xff] %vm402, 0.0
        %418 = vst.msk [vmem:[#allocation5 + $0x78] sm:$0xff] %vm402, 0.0
        %419 = vst.msk [vmem:[#allocation5 + $0x80] sm:$0xff] %vm402, 0.0
        %420 = vst.msk [vmem:[#allocation5 + $0x88] sm:$0xff] %vm402, 0.0
        %421 = vst.msk [vmem:[#allocation5 + $0x90] sm:$0xff] %vm402, 0.0
        %422 = vst.msk [vmem:[#allocation5 + $0x98] sm:$0xff] %vm402, 0.0
        %423 = vst.msk [vmem:[#allocation5 + $0xa0] sm:$0xff] %vm402, 0.0
        %424 = vst.msk [vmem:[#allocation5 + $0xa8] sm:$0xff] %vm402, 0.0
        %425 = vst.msk [vmem:[#allocation5 + $0xb0] sm:$0xff] %vm402, 0.0
        %426 = vst.msk [vmem:[#allocation5 + $0xb8] sm:$0xff] %vm402, 0.0
        %427 = vst.msk [vmem:[#allocation5 + $0xc0] sm:$0xff] %vm402, 0.0
        %428 = vst.msk [vmem:[#allocation5 + $0xc8] sm:$0xff] %vm402, 0.0
        %429 = vst.msk [vmem:[#allocation5 + $0xd0] sm:$0xff] %vm402, 0.0
        %430 = vst.msk [vmem:[#allocation5 + $0xd8] sm:$0xff] %vm402, 0.0
        %431 = vst.msk [vmem:[#allocation5 + $0xe0] sm:$0xff] %vm402, 0.0
        %432 = vst.msk [vmem:[#allocation5 + $0xe8] sm:$0xff] %vm402, 0.0
        %433 = vst.msk [vmem:[#allocation5 + $0xf0] sm:$0xff] %vm402, 0.0
        %434 = vst.msk [vmem:[#allocation5 + $0xf8] sm:$0xff] %vm402, 0.0
        %435 = vst.msk [vmem:[#allocation5 + $0x100] sm:$0xff] %vm402, 0.0
        %436 = vst.msk [vmem:[#allocation5 + $0x108] sm:$0xff] %vm402, 0.0
        %437 = vst.msk [vmem:[#allocation5 + $0x110] sm:$0xff] %vm402, 0.0
        %438 = vst.msk [vmem:[#allocation5 + $0x118] sm:$0xff] %vm402, 0.0
        %439 = vst.msk [vmem:[#allocation5 + $0x120] sm:$0xff] %vm402, 0.0
        %440 = vst.msk [vmem:[#allocation5 + $0x128] sm:$0xff] %vm402, 0.0
        %441 = vst.msk [vmem:[#allocation5 + $0x130] sm:$0xff] %vm402, 0.0
        %442 = vst.msk [vmem:[#allocation5 + $0x138] sm:$0xff] %vm402, 0.0
        %443 = vst.msk [vmem:[#allocation5 + $0x140] sm:$0xff] %vm402, 0.0
        %444 = vst.msk [vmem:[#allocation5 + $0x148] sm:$0xff] %vm402, 0.0
        %445 = vst.msk [vmem:[#allocation5 + $0x150] sm:$0xff] %vm402, 0.0
        %446 = vst.msk [vmem:[#allocation5 + $0x158] sm:$0xff] %vm402, 0.0
        %447 = vst.msk [vmem:[#allocation5 + $0x160] sm:$0xff] %vm402, 0.0
        %448 = vst.msk [vmem:[#allocation5 + $0x168] sm:$0xff] %vm402, 0.0
        %449 = vst.msk [vmem:[#allocation5 + $0x170] sm:$0xff] %vm402, 0.0
        %450 = vst.msk [vmem:[#allocation5 + $0x178] sm:$0xff] %vm402, 0.0
        %451 = vst.msk [vmem:[#allocation5] sm:$0xff] %vm402, 1.0
        %452 = vst.msk [vmem:[#allocation5 + $0x8] sm:$0xff] %vm402, 1.0
        %453 = vst.msk [vmem:[#allocation5 + $0x18] sm:$0xff] %vm402, 1.0
        %454 = vst.msk [vmem:[#allocation5 + $0x20] sm:$0xff] %vm402, 1.0
        %455 = vst.msk [vmem:[#allocation5 + $0x30] sm:$0xff] %vm402, 1.0
        %456 = vst.msk [vmem:[#allocation5 + $0x38] sm:$0xff] %vm402, 1.0
        %457 = vst.msk [vmem:[#allocation5 + $0x48] sm:$0xff] %vm402, 1.0
        %458 = vst.msk [vmem:[#allocation5 + $0x50] sm:$0xff] %vm402, 1.0
        %459 = vst.msk [vmem:[#allocation5 + $0x60] sm:$0xff] %vm402, 1.0
        %460 = vst.msk [vmem:[#allocation5 + $0x68] sm:$0xff] %vm402, 1.0
        %461 = vst.msk [vmem:[#allocation5 + $0x78] sm:$0xff] %vm402, 1.0
        %462 = vst.msk [vmem:[#allocation5 + $0x80] sm:$0xff] %vm402, 1.0
        %463 = vst.msk [vmem:[#allocation5 + $0x90] sm:$0xff] %vm402, 1.0
        %464 = vst.msk [vmem:[#allocation5 + $0x98] sm:$0xff] %vm402, 1.0
        %465 = vst.msk [vmem:[#allocation5 + $0xa8] sm:$0xff] %vm402, 1.0
        %466 = vst.msk [vmem:[#allocation5 + $0xb0] sm:$0xff] %vm402, 1.0
        %467 = vst.msk [vmem:[#allocation5 + $0xc0] sm:$0xff] %vm402, 1.0
        %468 = vst.msk [vmem:[#allocation5 + $0xc8] sm:$0xff] %vm402, 1.0
        %469 = vst.msk [vmem:[#allocation5 + $0xd8] sm:$0xff] %vm402, 1.0
        %470 = vst.msk [vmem:[#allocation5 + $0xe0] sm:$0xff] %vm402, 1.0
        %471 = vst.msk [vmem:[#allocation5 + $0xf0] sm:$0xff] %vm402, 1.0
        %472 = vst.msk [vmem:[#allocation5 + $0xf8] sm:$0xff] %vm402, 1.0
        %473 = vst.msk [vmem:[#allocation5 + $0x108] sm:$0xff] %vm402, 1.0
        %474 = vst.msk [vmem:[#allocation5 + $0x110] sm:$0xff] %vm402, 1.0
        %475 = vst.msk [vmem:[#allocation5 + $0x120] sm:$0xff] %vm402, 1.0
        %476 = vst.msk [vmem:[#allocation5 + $0x128] sm:$0xff] %vm402, 1.0
        %477 = vst.msk [vmem:[#allocation5 + $0x138] sm:$0xff] %vm402, 1.0
        %478 = vst.msk [vmem:[#allocation5 + $0x140] sm:$0xff] %vm402, 1.0
        %479 = vst.msk [vmem:[#allocation5 + $0x150] sm:$0xff] %vm402, 1.0
        %480 = vst.msk [vmem:[#allocation5 + $0x158] sm:$0xff] %vm402, 1.0
        %481 = vst.msk [vmem:[#allocation5 + $0x168] sm:$0xff] %vm402, 1.0
        %482 = vst.msk [vmem:[#allocation5 + $0x170] sm:$0xff] %vm402, 1.0
        %v483 = vld [vmem:[#allocation5] sm:$0xff]
        %v484 = vld [vmem:[#allocation5 + $0x8] sm:$0xff]
        %v485 = vld [vmem:[#allocation5 + $0x10] sm:$0xff]
        %v486 = vld [vmem:[#allocation5 + $0x18] sm:$0xff]
        %v487 = vld [vmem:[#allocation5 + $0x20] sm:$0xff]
        %v488 = vld [vmem:[#allocation5 + $0x28] sm:$0xff]
        %v489 = vld [vmem:[#allocation5 + $0x30] sm:$0xff]
        %v490 = vld [vmem:[#allocation5 + $0x38] sm:$0xff]
        %v491 = vld [vmem:[#allocation5 + $0x40] sm:$0xff]
        %v492 = vld [vmem:[#allocation5 + $0x48] sm:$0xff]
        %v493 = vld [vmem:[#allocation5 + $0x50] sm:$0xff]
        %v494 = vld [vmem:[#allocation5 + $0x58] sm:$0xff]
        %v495 = vld [vmem:[#allocation5 + $0x60] sm:$0xff]
        %v496 = vld [vmem:[#allocation5 + $0x68] sm:$0xff]
        %v497 = vld [vmem:[#allocation5 + $0x70] sm:$0xff]
        %v498 = vld [vmem:[#allocation5 + $0x78] sm:$0xff]
        %v499 = vld [vmem:[#allocation5 + $0x80] sm:$0xff]
        %v500 = vld [vmem:[#allocation5 + $0x88] sm:$0xff]
        %v501 = vld [vmem:[#allocation5 + $0x90] sm:$0xff]
        %v502 = vld [vmem:[#allocation5 + $0x98] sm:$0xff]
        %v503 = vld [vmem:[#allocation5 + $0xa0] sm:$0xff]
        %v504 = vld [vmem:[#allocation5 + $0xa8] sm:$0xff]
        %v505 = vld [vmem:[#allocation5 + $0xb0] sm:$0xff]
        %v506 = vld [vmem:[#allocation5 + $0xb8] sm:$0xff]
        %v507 = vld [vmem:[#allocation5 + $0xc0] sm:$0xff]
        %v508 = vld [vmem:[#allocation5 + $0xc8] sm:$0xff]
        %v509 = vld [vmem:[#allocation5 + $0xd0] sm:$0xff]
        %v510 = vld [vmem:[#allocation5 + $0xd8] sm:$0xff]
        %v511 = vld [vmem:[#allocation5 + $0xe0] sm:$0xff]
        %v512 = vld [vmem:[#allocation5 + $0xe8] sm:$0xff]
        %v513 = vld [vmem:[#allocation5 + $0xf0] sm:$0xff]
        %v514 = vld [vmem:[#allocation5 + $0xf8] sm:$0xff]
        %v515 = vld [vmem:[#allocation5 + $0x100] sm:$0xff]
        %v516 = vld [vmem:[#allocation5 + $0x108] sm:$0xff]
        %v517 = vld [vmem:[#allocation5 + $0x110] sm:$0xff]
        %v518 = vld [vmem:[#allocation5 + $0x118] sm:$0xff]
        %v519 = vld [vmem:[#allocation5 + $0x120] sm:$0xff]
        %v520 = vld [vmem:[#allocation5 + $0x128] sm:$0xff]
        %v521 = vld [vmem:[#allocation5 + $0x130] sm:$0xff]
        %v522 = vld [vmem:[#allocation5 + $0x138] sm:$0xff]
        %v523 = vld [vmem:[#allocation5 + $0x140] sm:$0xff]
        %v524 = vld [vmem:[#allocation5 + $0x148] sm:$0xff]
        %v525 = vld [vmem:[#allocation5 + $0x150] sm:$0xff]
        %v526 = vld [vmem:[#allocation5 + $0x158] sm:$0xff]
        %v527 = vld [vmem:[#allocation5 + $0x160] sm:$0xff]
        %v528 = vld [vmem:[#allocation5 + $0x168] sm:$0xff]
        %v529 = vld [vmem:[#allocation5 + $0x170] sm:$0xff]
        %v530 = vld [vmem:[#allocation5 + $0x178] sm:$0xff]
        %vm531 = vcmask 125952
        %532 = vst.msk [vmem:[#allocation2] sm:$0xf] %vm531, 0
        %533 = vst.msk [vmem:[#allocation2 + $0x4] sm:$0xf] %vm531, 0
        %534 = vst.msk [vmem:[#allocation2 + $0x8] sm:$0xf] %vm531, 0
        %535 = vst.msk [vmem:[#allocation2 + $0xc] sm:$0xf] %vm531, 0
        %536 = vst.msk [vmem:[#allocation2 + $0x10] sm:$0xf] %vm531, 0
        %537 = vst.msk [vmem:[#allocation2 + $0x14] sm:$0xf] %vm531, 0
        %538 = vst.msk [vmem:[#allocation2 + $0x18] sm:$0xf] %vm531, 0
        %539 = vst.msk [vmem:[#allocation2 + $0x1c] sm:$0xf] %vm531, 0
        %540 = vst.msk [vmem:[#allocation2 + $0x20] sm:$0xf] %vm531, 0
        %541 = vst.msk [vmem:[#allocation2 + $0x24] sm:$0xf] %vm531, 0
        %542 = vst.msk [vmem:[#allocation2 + $0x28] sm:$0xf] %vm531, 0
        %543 = vst.msk [vmem:[#allocation2 + $0x2c] sm:$0xf] %vm531, 0
        %544 = vst.msk [vmem:[#allocation2 + $0x30] sm:$0xf] %vm531, 0
        %545 = vst.msk [vmem:[#allocation2 + $0x34] sm:$0xf] %vm531, 0
        %546 = vst.msk [vmem:[#allocation2 + $0x38] sm:$0xf] %vm531, 0
        %547 = vst.msk [vmem:[#allocation2 + $0x3c] sm:$0xf] %vm531, 0
        %548 = vst.msk [vmem:[#allocation2 + $0x40] sm:$0xf] %vm531, 0
        %549 = vst.msk [vmem:[#allocation2 + $0x44] sm:$0xf] %vm531, 0
        %550 = vst.msk [vmem:[#allocation2 + $0x48] sm:$0xf] %vm531, 0
        %551 = vst.msk [vmem:[#allocation2 + $0x4c] sm:$0xf] %vm531, 0
        %552 = vst.msk [vmem:[#allocation2 + $0x50] sm:$0xf] %vm531, 0
        %553 = vst.msk [vmem:[#allocation2 + $0x54] sm:$0xf] %vm531, 0
        %554 = vst.msk [vmem:[#allocation2 + $0x58] sm:$0xf] %vm531, 0
        %555 = vst.msk [vmem:[#allocation2 + $0x5c] sm:$0xf] %vm531, 0
        %556 = vst.msk [vmem:[#allocation2 + $0x60] sm:$0xf] %vm531, 0
        %557 = vst.msk [vmem:[#allocation2 + $0x64] sm:$0xf] %vm531, 0
        %558 = vst.msk [vmem:[#allocation2 + $0x68] sm:$0xf] %vm531, 0
        %559 = vst.msk [vmem:[#allocation2 + $0x6c] sm:$0xf] %vm531, 0
        %560 = vst.msk [vmem:[#allocation2 + $0x70] sm:$0xf] %vm531, 0
        %561 = vst.msk [vmem:[#allocation2 + $0x74] sm:$0xf] %vm531, 0
        %562 = vst.msk [vmem:[#allocation2 + $0x78] sm:$0xf] %vm531, 0
        %563 = vst.msk [vmem:[#allocation2 + $0x7c] sm:$0xf] %vm531, 0
        %564 = vst.msk [vmem:[#allocation2 + $0x80] sm:$0xf] %vm531, 0
        %565 = vst.msk [vmem:[#allocation2 + $0x84] sm:$0xf] %vm531, 0
        %566 = vst.msk [vmem:[#allocation2 + $0x88] sm:$0xf] %vm531, 0
        %567 = vst.msk [vmem:[#allocation2 + $0x8c] sm:$0xf] %vm531, 0
        %568 = vst.msk [vmem:[#allocation2 + $0x90] sm:$0xf] %vm531, 0
        %569 = vst.msk [vmem:[#allocation2 + $0x94] sm:$0xf] %vm531, 0
        %570 = vst.msk [vmem:[#allocation2 + $0x98] sm:$0xf] %vm531, 0
        %571 = vst.msk [vmem:[#allocation2 + $0x9c] sm:$0xf] %vm531, 0
        %572 = vst.msk [vmem:[#allocation2 + $0xa0] sm:$0xf] %vm531, 0
        %573 = vst.msk [vmem:[#allocation2 + $0xa4] sm:$0xf] %vm531, 0
        %574 = vst.msk [vmem:[#allocation2 + $0xa8] sm:$0xf] %vm531, 0
        %575 = vst.msk [vmem:[#allocation2 + $0xac] sm:$0xf] %vm531, 0
        %576 = vst.msk [vmem:[#allocation2 + $0xb0] sm:$0xf] %vm531, 0
        %577 = vst.msk [vmem:[#allocation2 + $0xb4] sm:$0xf] %vm531, 0
        %578 = vst.msk [vmem:[#allocation2 + $0xb8] sm:$0xf] %vm531, 0
        %579 = vst.msk [vmem:[#allocation2 + $0xbc] sm:$0xf] %vm531, 0
        %580 = vst.msk [vmem:[#allocation2 + $0xc0] sm:$0xf] %vm531, 0
        %581 = vst.msk [vmem:[#allocation2 + $0xc4] sm:$0xf] %vm531, 0
        %582 = vst.msk [vmem:[#allocation2 + $0xc8] sm:$0xf] %vm531, 0
        %583 = vst.msk [vmem:[#allocation2 + $0xcc] sm:$0xf] %vm531, 0
        %584 = vst.msk [vmem:[#allocation2 + $0xd0] sm:$0xf] %vm531, 0
        %585 = vst.msk [vmem:[#allocation2 + $0xd4] sm:$0xf] %vm531, 0
        %586 = vst.msk [vmem:[#allocation2 + $0xd8] sm:$0xf] %vm531, 0
        %587 = vst.msk [vmem:[#allocation2 + $0xdc] sm:$0xf] %vm531, 0
        %v588 = vld [vmem:[%s395] sm:$0xff]
        %v589 = vld [vmem:[%s395 + $0x8] sm:$0xff]
        %v590 = vld [vmem:[%s395 + $0x10] sm:$0xff]
        %v591 = vld [vmem:[%s395 + $0x18] sm:$0xff]
        %592 = vxpose.xlu0.b32.start [1/16] %v588, 128
        %593 = vxpose.xlu0.b32.cont [2/16] %v590, 128
        %594 = vxpose.xlu0.b32.cont [3/16] 0.0, 128
        %595 = vxpose.xlu0.b32.cont [4/16] 0.0, 128
        %596 = vxpose.xlu0.b32.cont [5/16] 0.0, 128
        %597 = vxpose.xlu0.b32.cont [6/16] 0.0, 128
        %598 = vxpose.xlu0.b32.cont [7/16] 0.0, 128
        %599 = vxpose.xlu0.b32.cont [8/16] 0.0, 128
        %600 = vxpose.xlu0.b32.cont [9/16] 0.0, 128
        %601 = vxpose.xlu0.b32.cont [10/16] 0.0, 128
        %602 = vxpose.xlu0.b32.cont [11/16] 0.0, 128
        %603 = vxpose.xlu0.b32.cont [12/16] 0.0, 128
        %604 = vxpose.xlu0.b32.cont [13/16] 0.0, 128
        %605 = vxpose.xlu0.b32.cont [14/16] 0.0, 128
        %606 = vxpose.xlu0.b32.cont [15/16] 0.0, 128
        %607 = vxpose.xlu0.b32.end [16/16] 0.0, 128
        %v608 = vpop.trf.xlu0
        %v609 = vpop.trf.xlu0
        %v610 = vpop.trf.xlu0
        %v611 = vpop.trf.xlu0
        %v612 = vpop.trf.xlu0
        %v613 = vpop.trf.xlu0
        %v614 = vpop.trf.xlu0
        %v615 = vpop.trf.xlu0
        %v616 = vpop.trf.xlu0
        %v617 = vpop.trf.xlu0
        %v618 = vpop.trf.xlu0
        %v619 = vpop.trf.xlu0
        %v620 = vpop.trf.xlu0
        %v621 = vpop.trf.xlu0
        %v622 = vpop.trf.xlu0
        %v623 = vpop.trf.xlu0
        %624 = vxpose.xlu0.b32.start [1/16] %v589, 128
        %625 = vxpose.xlu0.b32.cont [2/16] %v591, 128
        %626 = vxpose.xlu0.b32.cont [3/16] 0.0, 128
        %627 = vxpose.xlu0.b32.cont [4/16] 0.0, 128
        %628 = vxpose.xlu0.b32.cont [5/16] 0.0, 128
        %629 = vxpose.xlu0.b32.cont [6/16] 0.0, 128
        %630 = vxpose.xlu0.b32.cont [7/16] 0.0, 128
        %631 = vxpose.xlu0.b32.cont [8/16] 0.0, 128
        %632 = vxpose.xlu0.b32.cont [9/16] 0.0, 128
        %633 = vxpose.xlu0.b32.cont [10/16] 0.0, 128
        %634 = vxpose.xlu0.b32.cont [11/16] 0.0, 128
        %635 = vxpose.xlu0.b32.cont [12/16] 0.0, 128
        %636 = vxpose.xlu0.b32.cont [13/16] 0.0, 128
        %637 = vxpose.xlu0.b32.cont [14/16] 0.0, 128
        %638 = vxpose.xlu0.b32.cont [15/16] 0.0, 128
        %639 = vxpose.xlu0.b32.end [16/16] 0.0, 128
        %v640 = vpop.trf.xlu0
        %v641 = vpop.trf.xlu0
        %v642 = vpop.trf.xlu0
        %v643 = vpop.trf.xlu0
        %v644 = vpop.trf.xlu0
        %v645 = vpop.trf.xlu0
        %v646 = vpop.trf.xlu0
        %v647 = vpop.trf.xlu0
        %v648 = vpop.trf.xlu0
        %v649 = vpop.trf.xlu0
        %v650 = vpop.trf.xlu0
        %v651 = vpop.trf.xlu0
        %v652 = vpop.trf.xlu0
        %v653 = vpop.trf.xlu0
        %v654 = vpop.trf.xlu0
        %v655 = vpop.trf.xlu0
        %v656 = vpack.c.bf16 %v609, %v608
        %v657 = vpack.c.bf16 %v611, %v610
        %v658 = vpack.c.bf16 %v613, %v612
        %v659 = vpack.c.bf16 %v615, %v614
        %v660 = vpack.c.bf16 %v617, %v616
        %v661 = vpack.c.bf16 %v619, %v618
        %v662 = vpack.c.bf16 %v621, %v620
        %v663 = vpack.c.bf16 %v623, %v622
        %v664 = vpack.c.bf16 %v641, %v640
        %v665 = vpack.c.bf16 %v643, %v642
        %v666 = vpack.c.bf16 %v645, %v644
        %v667 = vpack.c.bf16 %v647, %v646
        %v668 = vpack.c.bf16 %v649, %v648
        %v669 = vpack.c.bf16 %v651, %v650
        %v670 = vpack.c.bf16 %v653, %v652
        %v671 = vpack.c.bf16 %v655, %v654
        %v673 = vunpack.c.l.b16 %v656
        %v674 = vunpack.c.h.b16 %v656
        %v675 = vpack.c.b16 %v673, %v673
        %v676 = vpack.c.b16 %v674, %v674
        %679 = vst.msk [vmem:[#allocation2 + $0x10] sm:$0xf] %vm531, %v675
        %680 = vst.msk [vmem:[#allocation2 + $0x14] sm:$0xf] %vm531, %v676
        %v682 = vunpack.c.l.b16 %v657
        %v683 = vunpack.c.h.b16 %v657
        %v684 = vpack.c.b16 %v682, %v682
        %v685 = vpack.c.b16 %v683, %v683
        %688 = vst.msk [vmem:[#allocation2 + $0x1c] sm:$0xf] %vm531, %v684
        %689 = vst.msk [vmem:[#allocation2 + $0x20] sm:$0xf] %vm531, %v685
        %v691 = vunpack.c.l.b16 %v658
        %v692 = vunpack.c.h.b16 %v658
        %v693 = vpack.c.b16 %v691, %v691
        %v694 = vpack.c.b16 %v692, %v692
        %697 = vst.msk [vmem:[#allocation2 + $0x28] sm:$0xf] %vm531, %v693
        %698 = vst.msk [vmem:[#allocation2 + $0x2c] sm:$0xf] %vm531, %v694
        %v700 = vunpack.c.l.b16 %v659
        %v701 = vunpack.c.h.b16 %v659
        %v702 = vpack.c.b16 %v700, %v700
        %v703 = vpack.c.b16 %v701, %v701
        %706 = vst.msk [vmem:[#allocation2 + $0x34] sm:$0xf] %vm531, %v702
        %707 = vst.msk [vmem:[#allocation2 + $0x38] sm:$0xf] %vm531, %v703
        %v709 = vunpack.c.l.b16 %v660
        %v710 = vunpack.c.h.b16 %v660
        %v711 = vpack.c.b16 %v709, %v709
        %v712 = vpack.c.b16 %v710, %v710
        %715 = vst.msk [vmem:[#allocation2 + $0x40] sm:$0xf] %vm531, %v711
        %716 = vst.msk [vmem:[#allocation2 + $0x44] sm:$0xf] %vm531, %v712
        %v718 = vunpack.c.l.b16 %v661
        %v719 = vunpack.c.h.b16 %v661
        %v720 = vpack.c.b16 %v718, %v718
        %v721 = vpack.c.b16 %v719, %v719
        %724 = vst.msk [vmem:[#allocation2 + $0x4c] sm:$0xf] %vm531, %v720
        %725 = vst.msk [vmem:[#allocation2 + $0x50] sm:$0xf] %vm531, %v721
        %v727 = vunpack.c.l.b16 %v662
        %v728 = vunpack.c.h.b16 %v662
        %v729 = vpack.c.b16 %v727, %v727
        %v730 = vpack.c.b16 %v728, %v728
        %733 = vst.msk [vmem:[#allocation2 + $0x58] sm:$0xf] %vm531, %v729
        %734 = vst.msk [vmem:[#allocation2 + $0x5c] sm:$0xf] %vm531, %v730
        %v736 = vunpack.c.l.b16 %v663
        %v737 = vunpack.c.h.b16 %v663
        %v738 = vpack.c.b16 %v736, %v736
        %v739 = vpack.c.b16 %v737, %v737
        %742 = vst.msk [vmem:[#allocation2 + $0x64] sm:$0xf] %vm531, %v738
        %743 = vst.msk [vmem:[#allocation2 + $0x68] sm:$0xf] %vm531, %v739
        %v745 = vunpack.c.l.b16 %v664
        %v746 = vunpack.c.h.b16 %v664
        %v747 = vpack.c.b16 %v745, %v745
        %v748 = vpack.c.b16 %v746, %v746
        %751 = vst.msk [vmem:[#allocation2 + $0x70] sm:$0xf] %vm531, %v747
        %752 = vst.msk [vmem:[#allocation2 + $0x74] sm:$0xf] %vm531, %v748
        %v754 = vunpack.c.l.b16 %v665
        %v755 = vunpack.c.h.b16 %v665
        %v756 = vpack.c.b16 %v754, %v754
        %v757 = vpack.c.b16 %v755, %v755
        %760 = vst.msk [vmem:[#allocation2 + $0x7c] sm:$0xf] %vm531, %v756
        %761 = vst.msk [vmem:[#allocation2 + $0x80] sm:$0xf] %vm531, %v757
        %v763 = vunpack.c.l.b16 %v666
        %v764 = vunpack.c.h.b16 %v666
        %v765 = vpack.c.b16 %v763, %v763
        %v766 = vpack.c.b16 %v764, %v764
        %769 = vst.msk [vmem:[#allocation2 + $0x88] sm:$0xf] %vm531, %v765
        %770 = vst.msk [vmem:[#allocation2 + $0x8c] sm:$0xf] %vm531, %v766
        %v772 = vunpack.c.l.b16 %v667
        %v773 = vunpack.c.h.b16 %v667
        %v774 = vpack.c.b16 %v772, %v772
        %v775 = vpack.c.b16 %v773, %v773
        %778 = vst.msk [vmem:[#allocation2 + $0x94] sm:$0xf] %vm531, %v774
        %779 = vst.msk [vmem:[#allocation2 + $0x98] sm:$0xf] %vm531, %v775
        %v781 = vunpack.c.l.b16 %v668
        %v782 = vunpack.c.h.b16 %v668
        %v783 = vpack.c.b16 %v781, %v781
        %v784 = vpack.c.b16 %v782, %v782
        %787 = vst.msk [vmem:[#allocation2 + $0xa0] sm:$0xf] %vm531, %v783
        %788 = vst.msk [vmem:[#allocation2 + $0xa4] sm:$0xf] %vm531, %v784
        %v790 = vunpack.c.l.b16 %v669
        %v791 = vunpack.c.h.b16 %v669
        %v792 = vpack.c.b16 %v790, %v790
        %v793 = vpack.c.b16 %v791, %v791
        %796 = vst.msk [vmem:[#allocation2 + $0xac] sm:$0xf] %vm531, %v792
        %797 = vst.msk [vmem:[#allocation2 + $0xb0] sm:$0xf] %vm531, %v793
        %v799 = vunpack.c.l.b16 %v670
        %v800 = vunpack.c.h.b16 %v670
        %v801 = vpack.c.b16 %v799, %v799
        %v802 = vpack.c.b16 %v800, %v800
        %805 = vst.msk [vmem:[#allocation2 + $0xb8] sm:$0xf] %vm531, %v801
        %806 = vst.msk [vmem:[#allocation2 + $0xbc] sm:$0xf] %vm531, %v802
        %v808 = vunpack.c.l.b16 %v671
        %v809 = vunpack.c.h.b16 %v671
        %v810 = vpack.c.b16 %v808, %v808
        %v811 = vpack.c.b16 %v809, %v809
        %814 = vst.msk [vmem:[#allocation2 + $0xc4] sm:$0xf] %vm531, %v810
        %815 = vst.msk [vmem:[#allocation2 + $0xc8] sm:$0xf] %vm531, %v811
        %v816 = vld [vmem:[#allocation2] sm:$0x8]
        %v817 = vld [vmem:[#allocation2 + $0x4] sm:$0xf]
        %v818 = vld [vmem:[#allocation2 + $0x8] sm:$0xf]
        %v819 = vld [vmem:[#allocation2 + $0xc] sm:$0xf]
        %v820 = vld [vmem:[#allocation2 + $0x10] sm:$0xf]
        %v821 = vld [vmem:[#allocation2 + $0x14] sm:$0xf]
        %v822 = vld [vmem:[#allocation2 + $0x18] sm:$0xf]
        %v823 = vld [vmem:[#allocation2 + $0x1c] sm:$0xf]
        %v824 = vld [vmem:[#allocation2 + $0x20] sm:$0xf]
        %v825 = vld [vmem:[#allocation2 + $0x24] sm:$0xf]
        %v826 = vld [vmem:[#allocation2 + $0x28] sm:$0xf]
        %v827 = vld [vmem:[#allocation2 + $0x2c] sm:$0xf]
        %v828 = vld [vmem:[#allocation2 + $0x30] sm:$0xf]
        %v829 = vld [vmem:[#allocation2 + $0x34] sm:$0xf]
        %v830 = vld [vmem:[#allocation2 + $0x38] sm:$0xf]
        %v831 = vld [vmem:[#allocation2 + $0x3c] sm:$0xf]
        %v832 = vld [vmem:[#allocation2 + $0x40] sm:$0xf]
        %v833 = vld [vmem:[#allocation2 + $0x44] sm:$0xf]
        %v834 = vld [vmem:[#allocation2 + $0x48] sm:$0xf]
        %v835 = vld [vmem:[#allocation2 + $0x4c] sm:$0xf]
        %v836 = vld [vmem:[#allocation2 + $0x50] sm:$0xf]
        %v837 = vld [vmem:[#allocation2 + $0x54] sm:$0xf]
        %v838 = vld [vmem:[#allocation2 + $0x58] sm:$0xf]
        %v839 = vld [vmem:[#allocation2 + $0x5c] sm:$0xf]
        %v840 = vld [vmem:[#allocation2 + $0x60] sm:$0xf]
        %v841 = vld [vmem:[#allocation2 + $0x64] sm:$0xf]
        %v842 = vld [vmem:[#allocation2 + $0x68] sm:$0xf]
        %v843 = vld [vmem:[#allocation2 + $0x6c] sm:$0xf]
        %v844 = vld [vmem:[#allocation2 + $0x70] sm:$0xf]
        %v845 = vld [vmem:[#allocation2 + $0x74] sm:$0xf]
        %v846 = vld [vmem:[#allocation2 + $0x78] sm:$0xf]
        %v847 = vld [vmem:[#allocation2 + $0x7c] sm:$0xf]
        %v848 = vld [vmem:[#allocation2 + $0x80] sm:$0xf]
        %v849 = vld [vmem:[#allocation2 + $0x84] sm:$0xf]
        %v850 = vld [vmem:[#allocation2 + $0x88] sm:$0xf]
        %v851 = vld [vmem:[#allocation2 + $0x8c] sm:$0xf]
        %v852 = vld [vmem:[#allocation2 + $0x90] sm:$0xf]
        %v853 = vld [vmem:[#allocation2 + $0x94] sm:$0xf]
        %v854 = vld [vmem:[#allocation2 + $0x98] sm:$0xf]
        %v855 = vld [vmem:[#allocation2 + $0x9c] sm:$0xf]
        %v856 = vld [vmem:[#allocation2 + $0xa0] sm:$0xf]
        %v857 = vld [vmem:[#allocation2 + $0xa4] sm:$0xf]
        %v858 = vld [vmem:[#allocation2 + $0xa8] sm:$0xf]
        %v859 = vld [vmem:[#allocation2 + $0xac] sm:$0xf]
        %v860 = vld [vmem:[#allocation2 + $0xb0] sm:$0xf]
        %v861 = vld [vmem:[#allocation2 + $0xb4] sm:$0xf]
        %v862 = vld [vmem:[#allocation2 + $0xb8] sm:$0xf]
        %v863 = vld [vmem:[#allocation2 + $0xbc] sm:$0xf]
        %v864 = vld [vmem:[#allocation2 + $0xc0] sm:$0xf]
        %v865 = vld [vmem:[#allocation2 + $0xc4] sm:$0x1]
        %v866 = vld [vmem:[#allocation2 + $0xc] sm:$0x8]
        %v867 = vld [vmem:[#allocation2 + $0xc4] sm:$0xf]
        %v868 = vld [vmem:[#allocation2 + $0xc8] sm:$0xf]
        %v869 = vld [vmem:[#allocation2 + $0xcc] sm:$0xf]
        %v870 = vld [vmem:[#allocation2 + $0xd0] sm:$0x1]
        %v871 = vld [vmem:[#allocation2 + $0x18] sm:$0x8]
        %v872 = vld [vmem:[#allocation2 + $0xd0] sm:$0xf]
        %v873 = vld [vmem:[#allocation2 + $0xd4] sm:$0xf]
        %v874 = vld [vmem:[#allocation2 + $0xd8] sm:$0xf]
        %v875 = vld [vmem:[#allocation2 + $0xdc] sm:$0x1]
        %v925 = vunpack.c.l.b16 %v816
        %v926 = vunpack.c.l.b16 %v817
        %v927 = vunpack.c.l.b16 %v818
        %v928 = vunpack.c.l.b16 %v819
        %v929 = vunpack.c.l.b16 %v820
        %v930 = vunpack.c.l.b16 %v821
        %v931 = vunpack.c.l.b16 %v822
        %v932 = vunpack.c.l.b16 %v823
        %v933 = vunpack.c.l.b16 %v824
        %v934 = vunpack.c.l.b16 %v825
        %v935 = vunpack.c.l.b16 %v826
        %v936 = vunpack.c.l.b16 %v827
        %v937 = vunpack.c.l.b16 %v828
        %v938 = vunpack.c.l.b16 %v829
        %v939 = vunpack.c.l.b16 %v830
        %v940 = vunpack.c.l.b16 %v831
        %v941 = vunpack.c.l.b16 %v832
        %v942 = vunpack.c.l.b16 %v833
        %v943 = vunpack.c.l.b16 %v834
        %v944 = vunpack.c.l.b16 %v835
        %v945 = vunpack.c.l.b16 %v836
        %v946 = vunpack.c.l.b16 %v837
        %v947 = vunpack.c.l.b16 %v838
        %v948 = vunpack.c.l.b16 %v839
        %v949 = vunpack.c.l.b16 %v840
        %v950 = vunpack.c.l.b16 %v841
        %v951 = vunpack.c.l.b16 %v842
        %v952 = vunpack.c.l.b16 %v843
        %v953 = vunpack.c.l.b16 %v844
        %v954 = vunpack.c.l.b16 %v845
        %v955 = vunpack.c.l.b16 %v846
        %v956 = vunpack.c.l.b16 %v847
        %v957 = vunpack.c.l.b16 %v848
        %v958 = vunpack.c.l.b16 %v849
        %v959 = vunpack.c.l.b16 %v850
        %v960 = vunpack.c.l.b16 %v851
        %v961 = vunpack.c.l.b16 %v852
        %v962 = vunpack.c.l.b16 %v853
        %v963 = vunpack.c.l.b16 %v854
        %v964 = vunpack.c.l.b16 %v855
        %v965 = vunpack.c.l.b16 %v856
        %v966 = vunpack.c.l.b16 %v857
        %v967 = vunpack.c.l.b16 %v858
        %v968 = vunpack.c.l.b16 %v859
        %v969 = vunpack.c.l.b16 %v860
        %v970 = vunpack.c.l.b16 %v861
        %v971 = vunpack.c.l.b16 %v862
        %v972 = vunpack.c.l.b16 %v863
        %v973 = vunpack.c.l.b16 %v864
        %v974 = vpack.c.b16 %v926, %v925
        %v975 = vpack.c.b16 %v928, %v927
        %v976 = vpack.c.b16 %v930, %v929
        %v977 = vpack.c.b16 %v932, %v931
        %v978 = vpack.c.b16 %v934, %v933
        %v979 = vpack.c.b16 %v936, %v935
        %v980 = vpack.c.b16 %v938, %v937
        %v981 = vpack.c.b16 %v940, %v939
        %v982 = vpack.c.b16 %v942, %v941
        %v983 = vpack.c.b16 %v944, %v943
        %v984 = vpack.c.b16 %v946, %v945
        %v985 = vpack.c.b16 %v948, %v947
        %v986 = vpack.c.b16 %v950, %v949
        %v987 = vpack.c.b16 %v952, %v951
        %v988 = vpack.c.b16 %v954, %v953
        %v989 = vpack.c.b16 %v956, %v955
        %v990 = vpack.c.b16 %v958, %v957
        %v991 = vpack.c.b16 %v960, %v959
        %v992 = vpack.c.b16 %v962, %v961
        %v993 = vpack.c.b16 %v964, %v963
        %v994 = vpack.c.b16 %v966, %v965
        %v995 = vpack.c.b16 %v968, %v967
        %v996 = vpack.c.b16 %v970, %v969
        %v997 = vpack.c.b16 %v972, %v971
        %v998 = vpack.c.b16 %v973, %v973
        %v999 = vpack.c.b16 %v927, %v926
        %v1000 = vpack.c.b16 %v929, %v928
        %v1001 = vpack.c.b16 %v931, %v930
        %v1002 = vpack.c.b16 %v933, %v932
        %v1003 = vpack.c.b16 %v935, %v934
        %v1004 = vpack.c.b16 %v937, %v936
        %v1005 = vpack.c.b16 %v939, %v938
        %v1006 = vpack.c.b16 %v941, %v940
        %v1007 = vpack.c.b16 %v943, %v942
        %v1008 = vpack.c.b16 %v945, %v944
        %v1009 = vpack.c.b16 %v947, %v946
        %v1010 = vpack.c.b16 %v949, %v948
        %v1011 = vpack.c.b16 %v951, %v950
        %v1012 = vpack.c.b16 %v953, %v952
        %v1013 = vpack.c.b16 %v955, %v954
        %v1014 = vpack.c.b16 %v957, %v956
        %v1015 = vpack.c.b16 %v959, %v958
        %v1016 = vpack.c.b16 %v961, %v960
        %v1017 = vpack.c.b16 %v963, %v962
        %v1018 = vpack.c.b16 %v965, %v964
        %v1019 = vpack.c.b16 %v967, %v966
        %v1020 = vpack.c.b16 %v969, %v968
        %v1021 = vpack.c.b16 %v971, %v970
        %v1022 = vpack.c.b16 %v973, %v972
        %vm1023 = vsmask.f32 3328
        %v1025 = vshrl.u32 %v999, 16
        %v1027 = vrot.slane %v1025, 4
        %v1028 = vshll.u32 %v999, 16
        %v1030 = vrot.slane %v1028, 5
        %v1031 = vor.u32 %v1027, %v1030
        %v1033 = vshrl.u32 %v1000, 16
        %v1035 = vrot.slane %v1033, 4
        %v1036 = vshll.u32 %v1000, 16
        %v1038 = vrot.slane %v1036, 5
        %v1039 = vor.u32 %v1035, %v1038
        %v1040 = vsel %vm1023, %v1031, %v1039
        %v1042 = vshrl.u32 %v1001, 16
        %v1044 = vrot.slane %v1042, 4
        %v1045 = vshll.u32 %v1001, 16
        %v1047 = vrot.slane %v1045, 5
        %v1048 = vor.u32 %v1044, %v1047
        %v1049 = vsel %vm1023, %v1039, %v1048
        %v1051 = vshrl.u32 %v1002, 16
        %v1053 = vrot.slane %v1051, 4
        %v1054 = vshll.u32 %v1002, 16
        %v1056 = vrot.slane %v1054, 5
        %v1057 = vor.u32 %v1053, %v1056
        %v1058 = vsel %vm1023, %v1048, %v1057
        %v1060 = vshrl.u32 %v1003, 16
        %v1062 = vrot.slane %v1060, 4
        %v1063 = vshll.u32 %v1003, 16
        %v1065 = vrot.slane %v1063, 5
        %v1066 = vor.u32 %v1062, %v1065
        %v1067 = vsel %vm1023, %v1057, %v1066
        %v1069 = vshrl.u32 %v1004, 16
        %v1071 = vrot.slane %v1069, 4
        %v1072 = vshll.u32 %v1004, 16
        %v1074 = vrot.slane %v1072, 5
        %v1075 = vor.u32 %v1071, %v1074
        %v1076 = vsel %vm1023, %v1066, %v1075
        %v1078 = vshrl.u32 %v1005, 16
        %v1080 = vrot.slane %v1078, 4
        %v1081 = vshll.u32 %v1005, 16
        %v1083 = vrot.slane %v1081, 5
        %v1084 = vor.u32 %v1080, %v1083
        %v1085 = vsel %vm1023, %v1075, %v1084
        %v1087 = vshrl.u32 %v1006, 16
        %v1089 = vrot.slane %v1087, 4
        %v1090 = vshll.u32 %v1006, 16
        %v1092 = vrot.slane %v1090, 5
        %v1093 = vor.u32 %v1089, %v1092
        %v1094 = vsel %vm1023, %v1084, %v1093
        %v1096 = vshrl.u32 %v1007, 16
        %v1098 = vrot.slane %v1096, 4
        %v1099 = vshll.u32 %v1007, 16
        %v1101 = vrot.slane %v1099, 5
        %v1102 = vor.u32 %v1098, %v1101
        %v1103 = vsel %vm1023, %v1093, %v1102
        %v1105 = vshrl.u32 %v1008, 16
        %v1107 = vrot.slane %v1105, 4
        %v1108 = vshll.u32 %v1008, 16
        %v1110 = vrot.slane %v1108, 5
        %v1111 = vor.u32 %v1107, %v1110
        %v1112 = vsel %vm1023, %v1102, %v1111
        %v1114 = vshrl.u32 %v1009, 16
        %v1116 = vrot.slane %v1114, 4
        %v1117 = vshll.u32 %v1009, 16
        %v1119 = vrot.slane %v1117, 5
        %v1120 = vor.u32 %v1116, %v1119
        %v1121 = vsel %vm1023, %v1111, %v1120
        %v1123 = vshrl.u32 %v1010, 16
        %v1125 = vrot.slane %v1123, 4
        %v1126 = vshll.u32 %v1010, 16
        %v1128 = vrot.slane %v1126, 5
        %v1129 = vor.u32 %v1125, %v1128
        %v1130 = vsel %vm1023, %v1120, %v1129
        %v1132 = vshrl.u32 %v1011, 16
        %v1134 = vrot.slane %v1132, 4
        %v1135 = vshll.u32 %v1011, 16
        %v1137 = vrot.slane %v1135, 5
        %v1138 = vor.u32 %v1134, %v1137
        %v1139 = vsel %vm1023, %v1129, %v1138
        %v1141 = vshrl.u32 %v1012, 16
        %v1143 = vrot.slane %v1141, 4
        %v1144 = vshll.u32 %v1012, 16
        %v1146 = vrot.slane %v1144, 5
        %v1147 = vor.u32 %v1143, %v1146
        %v1148 = vsel %vm1023, %v1138, %v1147
        %v1150 = vshrl.u32 %v1013, 16
        %v1152 = vrot.slane %v1150, 4
        %v1153 = vshll.u32 %v1013, 16
        %v1155 = vrot.slane %v1153, 5
        %v1156 = vor.u32 %v1152, %v1155
        %v1157 = vsel %vm1023, %v1147, %v1156
        %v1159 = vshrl.u32 %v1014, 16
        %v1161 = vrot.slane %v1159, 4
        %v1162 = vshll.u32 %v1014, 16
        %v1164 = vrot.slane %v1162, 5
        %v1165 = vor.u32 %v1161, %v1164
        %v1166 = vsel %vm1023, %v1156, %v1165
        %v1168 = vshrl.u32 %v1015, 16
        %v1170 = vrot.slane %v1168, 4
        %v1171 = vshll.u32 %v1015, 16
        %v1173 = vrot.slane %v1171, 5
        %v1174 = vor.u32 %v1170, %v1173
        %v1175 = vsel %vm1023, %v1165, %v1174
        %v1177 = vshrl.u32 %v1016, 16
        %v1179 = vrot.slane %v1177, 4
        %v1180 = vshll.u32 %v1016, 16
        %v1182 = vrot.slane %v1180, 5
        %v1183 = vor.u32 %v1179, %v1182
        %v1184 = vsel %vm1023, %v1174, %v1183
        %v1186 = vshrl.u32 %v1017, 16
        %v1188 = vrot.slane %v1186, 4
        %v1189 = vshll.u32 %v1017, 16
        %v1191 = vrot.slane %v1189, 5
        %v1192 = vor.u32 %v1188, %v1191
        %v1193 = vsel %vm1023, %v1183, %v1192
        %v1195 = vshrl.u32 %v1018, 16
        %v1197 = vrot.slane %v1195, 4
        %v1198 = vshll.u32 %v1018, 16
        %v1200 = vrot.slane %v1198, 5
        %v1201 = vor.u32 %v1197, %v1200
        %v1202 = vsel %vm1023, %v1192, %v1201
        %v1204 = vshrl.u32 %v1019, 16
        %v1206 = vrot.slane %v1204, 4
        %v1207 = vshll.u32 %v1019, 16
        %v1209 = vrot.slane %v1207, 5
        %v1210 = vor.u32 %v1206, %v1209
        %v1211 = vsel %vm1023, %v1201, %v1210
        %v1213 = vshrl.u32 %v1020, 16
        %v1215 = vrot.slane %v1213, 4
        %v1216 = vshll.u32 %v1020, 16
        %v1218 = vrot.slane %v1216, 5
        %v1219 = vor.u32 %v1215, %v1218
        %v1220 = vsel %vm1023, %v1210, %v1219
        %v1222 = vshrl.u32 %v1021, 16
        %v1224 = vrot.slane %v1222, 4
        %v1225 = vshll.u32 %v1021, 16
        %v1227 = vrot.slane %v1225, 5
        %v1228 = vor.u32 %v1224, %v1227
        %v1229 = vsel %vm1023, %v1219, %v1228
        %v1231 = vshrl.u32 %v1022, 16
        %v1233 = vrot.slane %v1231, 4
        %v1234 = vshll.u32 %v1022, 16
        %v1236 = vrot.slane %v1234, 5
        %v1237 = vor.u32 %v1233, %v1236
        %v1238 = vsel %vm1023, %v1228, %v1237
        %1239 = vrot.lane.b32.xlu0 %v1031, 16
        %v1240 = vpop.permute.xlu0 %1239
        %1241 = vrot.lane.b32.xlu0 %v1040, 16
        %v1242 = vpop.permute.xlu0 %1241
        %1243 = vrot.lane.b32.xlu0 %v1049, 16
        %v1244 = vpop.permute.xlu0 %1243
        %1245 = vrot.lane.b32.xlu0 %v1058, 16
        %v1246 = vpop.permute.xlu0 %1245
        %1247 = vrot.lane.b32.xlu0 %v1067, 16
        %v1248 = vpop.permute.xlu0 %1247
        %1249 = vrot.lane.b32.xlu0 %v1076, 16
        %v1250 = vpop.permute.xlu0 %1249
        %1251 = vrot.lane.b32.xlu0 %v1085, 16
        %v1252 = vpop.permute.xlu0 %1251
        %1253 = vrot.lane.b32.xlu0 %v1094, 16
        %v1254 = vpop.permute.xlu0 %1253
        %1255 = vrot.lane.b32.xlu0 %v1103, 16
        %v1256 = vpop.permute.xlu0 %1255
        %1257 = vrot.lane.b32.xlu0 %v1112, 16
        %v1258 = vpop.permute.xlu0 %1257
        %1259 = vrot.lane.b32.xlu0 %v1121, 16
        %v1260 = vpop.permute.xlu0 %1259
        %1261 = vrot.lane.b32.xlu0 %v1130, 16
        %v1262 = vpop.permute.xlu0 %1261
        %1263 = vrot.lane.b32.xlu0 %v1139, 16
        %v1264 = vpop.permute.xlu0 %1263
        %1265 = vrot.lane.b32.xlu0 %v1148, 16
        %v1266 = vpop.permute.xlu0 %1265
        %1267 = vrot.lane.b32.xlu0 %v1157, 16
        %v1268 = vpop.permute.xlu0 %1267
        %1269 = vrot.lane.b32.xlu0 %v1166, 16
        %v1270 = vpop.permute.xlu0 %1269
        %1271 = vrot.lane.b32.xlu0 %v1175, 16
        %v1272 = vpop.permute.xlu0 %1271
        %1273 = vrot.lane.b32.xlu0 %v1184, 16
        %v1274 = vpop.permute.xlu0 %1273
        %1275 = vrot.lane.b32.xlu0 %v1193, 16
        %v1276 = vpop.permute.xlu0 %1275
        %1277 = vrot.lane.b32.xlu0 %v1202, 16
        %v1278 = vpop.permute.xlu0 %1277
        %1279 = vrot.lane.b32.xlu0 %v1211, 16
        %v1280 = vpop.permute.xlu0 %1279
        %1281 = vrot.lane.b32.xlu0 %v1220, 16
        %v1282 = vpop.permute.xlu0 %1281
        %1283 = vrot.lane.b32.xlu0 %v1229, 16
        %v1284 = vpop.permute.xlu0 %1283
        %1285 = vrot.lane.b32.xlu0 %v1238, 16
        %v1286 = vpop.permute.xlu0 %1285
        %1287 = vrot.lane.b32.xlu0 %v1237, 16
        %v1288 = vpop.permute.xlu0 %1287
        %v1290 = vunpack.c.l.b16 %v865
        %v1291 = vpack.c.b16 %v1290, %v1290
        %vm1292 = vcmask 1042432
        %v1293 = vrot.slane %v999, 5
        %v1294 = vrot.slane %v1000, 5
        %v1295 = vsel %vm1292, %v1293, %v1294
        %v1296 = vrot.slane %v1001, 5
        %v1297 = vsel %vm1292, %v1294, %v1296
        %v1298 = vrot.slane %v1002, 5
        %v1299 = vsel %vm1292, %v1296, %v1298
        %v1300 = vrot.slane %v1003, 5
        %v1301 = vsel %vm1292, %v1298, %v1300
        %v1302 = vrot.slane %v1004, 5
        %v1303 = vsel %vm1292, %v1300, %v1302
        %v1304 = vrot.slane %v1005, 5
        %v1305 = vsel %vm1292, %v1302, %v1304
        %v1306 = vrot.slane %v1006, 5
        %v1307 = vsel %vm1292, %v1304, %v1306
        %v1308 = vrot.slane %v1007, 5
        %v1309 = vsel %vm1292, %v1306, %v1308
        %v1310 = vrot.slane %v1008, 5
        %v1311 = vsel %vm1292, %v1308, %v1310
        %v1312 = vrot.slane %v1009, 5
        %v1313 = vsel %vm1292, %v1310, %v1312
        %v1314 = vrot.slane %v1010, 5
        %v1315 = vsel %vm1292, %v1312, %v1314
        %v1316 = vrot.slane %v1011, 5
        %v1317 = vsel %vm1292, %v1314, %v1316
        %v1318 = vrot.slane %v1012, 5
        %v1319 = vsel %vm1292, %v1316, %v1318
        %v1320 = vrot.slane %v1013, 5
        %v1321 = vsel %vm1292, %v1318, %v1320
        %v1322 = vrot.slane %v1014, 5
        %v1323 = vsel %vm1292, %v1320, %v1322
        %v1324 = vrot.slane %v1015, 5
        %v1325 = vsel %vm1292, %v1322, %v1324
        %v1326 = vrot.slane %v1016, 5
        %v1327 = vsel %vm1292, %v1324, %v1326
        %v1328 = vrot.slane %v1017, 5
        %v1329 = vsel %vm1292, %v1326, %v1328
        %v1330 = vrot.slane %v1018, 5
        %v1331 = vsel %vm1292, %v1328, %v1330
        %v1332 = vrot.slane %v1019, 5
        %v1333 = vsel %vm1292, %v1330, %v1332
        %v1334 = vrot.slane %v1020, 5
        %v1335 = vsel %vm1292, %v1332, %v1334
        %v1336 = vrot.slane %v1021, 5
        %v1337 = vsel %vm1292, %v1334, %v1336
        %v1338 = vrot.slane %v1022, 5
        %v1339 = vsel %vm1292, %v1336, %v1338
        %v1340 = vrot.slane %v1291, 5
        %v1341 = vsel %vm1292, %v1338, %v1340
        %1342 = vrot.lane.b32.xlu0 %v1293, 32
        %v1343 = vpop.permute.xlu0 %1342
        %1344 = vrot.lane.b32.xlu0 %v1295, 32
        %v1345 = vpop.permute.xlu0 %1344
        %1346 = vrot.lane.b32.xlu0 %v1297, 32
        %v1347 = vpop.permute.xlu0 %1346
        %1348 = vrot.lane.b32.xlu0 %v1299, 32
        %v1349 = vpop.permute.xlu0 %1348
        %1350 = vrot.lane.b32.xlu0 %v1301, 32
        %v1351 = vpop.permute.xlu0 %1350
        %1352 = vrot.lane.b32.xlu0 %v1303, 32
        %v1353 = vpop.permute.xlu0 %1352
        %1354 = vrot.lane.b32.xlu0 %v1305, 32
        %v1355 = vpop.permute.xlu0 %1354
        %1356 = vrot.lane.b32.xlu0 %v1307, 32
        %v1357 = vpop.permute.xlu0 %1356
        %1358 = vrot.lane.b32.xlu0 %v1309, 32
        %v1359 = vpop.permute.xlu0 %1358
        %1360 = vrot.lane.b32.xlu0 %v1311, 32
        %v1361 = vpop.permute.xlu0 %1360
        %1362 = vrot.lane.b32.xlu0 %v1313, 32
        %v1363 = vpop.permute.xlu0 %1362
        %1364 = vrot.lane.b32.xlu0 %v1315, 32
        %v1365 = vpop.permute.xlu0 %1364
        %1366 = vrot.lane.b32.xlu0 %v1317, 32
        %v1367 = vpop.permute.xlu0 %1366
        %1368 = vrot.lane.b32.xlu0 %v1319, 32
        %v1369 = vpop.permute.xlu0 %1368
        %1370 = vrot.lane.b32.xlu0 %v1321, 32
        %v1371 = vpop.permute.xlu0 %1370
        %1372 = vrot.lane.b32.xlu0 %v1323, 32
        %v1373 = vpop.permute.xlu0 %1372
        %1374 = vrot.lane.b32.xlu0 %v1325, 32
        %v1375 = vpop.permute.xlu0 %1374
        %1376 = vrot.lane.b32.xlu0 %v1327, 32
        %v1377 = vpop.permute.xlu0 %1376
        %1378 = vrot.lane.b32.xlu0 %v1329, 32
        %v1379 = vpop.permute.xlu0 %1378
        %1380 = vrot.lane.b32.xlu0 %v1331, 32
        %v1381 = vpop.permute.xlu0 %1380
        %1382 = vrot.lane.b32.xlu0 %v1333, 32
        %v1383 = vpop.permute.xlu0 %1382
        %1384 = vrot.lane.b32.xlu0 %v1335, 32
        %v1385 = vpop.permute.xlu0 %1384
        %1386 = vrot.lane.b32.xlu0 %v1337, 32
        %v1387 = vpop.permute.xlu0 %1386
        %1388 = vrot.lane.b32.xlu0 %v1339, 32
        %v1389 = vpop.permute.xlu0 %1388
        %1390 = vrot.lane.b32.xlu0 %v1341, 32
        %v1391 = vpop.permute.xlu0 %1390
        %v1396 = vunpack.c.l.b16 %v866
        %v1397 = vunpack.c.l.b16 %v867
        %v1398 = vunpack.c.l.b16 %v868
        %v1399 = vunpack.c.l.b16 %v869
        %v1400 = vpack.c.b16 %v929, %v1396
        %v1401 = vpack.c.b16 %v1398, %v1397
        %v1402 = vpack.c.b16 %v1399, %v1399
        %1403 = vrot.lane.b32.xlu0 %v1400, 48
        %v1404 = vpop.permute.xlu0 %1403
        %1405 = vrot.lane.b32.xlu0 %v1001, 48
        %v1406 = vpop.permute.xlu0 %1405
        %1407 = vrot.lane.b32.xlu0 %v1002, 48
        %v1408 = vpop.permute.xlu0 %1407
        %1409 = vrot.lane.b32.xlu0 %v1003, 48
        %v1410 = vpop.permute.xlu0 %1409
        %1411 = vrot.lane.b32.xlu0 %v1004, 48
        %v1412 = vpop.permute.xlu0 %1411
        %1413 = vrot.lane.b32.xlu0 %v1005, 48
        %v1414 = vpop.permute.xlu0 %1413
        %1415 = vrot.lane.b32.xlu0 %v1006, 48
        %v1416 = vpop.permute.xlu0 %1415
        %1417 = vrot.lane.b32.xlu0 %v1007, 48
        %v1418 = vpop.permute.xlu0 %1417
        %1419 = vrot.lane.b32.xlu0 %v1008, 48
        %v1420 = vpop.permute.xlu0 %1419
        %1421 = vrot.lane.b32.xlu0 %v1009, 48
        %v1422 = vpop.permute.xlu0 %1421
        %1423 = vrot.lane.b32.xlu0 %v1010, 48
        %v1424 = vpop.permute.xlu0 %1423
        %1425 = vrot.lane.b32.xlu0 %v1011, 48
        %v1426 = vpop.permute.xlu0 %1425
        %1427 = vrot.lane.b32.xlu0 %v1012, 48
        %v1428 = vpop.permute.xlu0 %1427
        %1429 = vrot.lane.b32.xlu0 %v1013, 48
        %v1430 = vpop.permute.xlu0 %1429
        %1431 = vrot.lane.b32.xlu0 %v1014, 48
        %v1432 = vpop.permute.xlu0 %1431
        %1433 = vrot.lane.b32.xlu0 %v1015, 48
        %v1434 = vpop.permute.xlu0 %1433
        %1435 = vrot.lane.b32.xlu0 %v1016, 48
        %v1436 = vpop.permute.xlu0 %1435
        %1437 = vrot.lane.b32.xlu0 %v1017, 48
        %v1438 = vpop.permute.xlu0 %1437
        %1439 = vrot.lane.b32.xlu0 %v1018, 48
        %v1440 = vpop.permute.xlu0 %1439
        %1441 = vrot.lane.b32.xlu0 %v1019, 48
        %v1442 = vpop.permute.xlu0 %1441
        %1443 = vrot.lane.b32.xlu0 %v1020, 48
        %v1444 = vpop.permute.xlu0 %1443
        %1445 = vrot.lane.b32.xlu0 %v1021, 48
        %v1446 = vpop.permute.xlu0 %1445
        %1447 = vrot.lane.b32.xlu0 %v1022, 48
        %v1448 = vpop.permute.xlu0 %1447
        %1449 = vrot.lane.b32.xlu0 %v1401, 48
        %v1450 = vpop.permute.xlu0 %1449
        %1451 = vrot.lane.b32.xlu0 %v1402, 48
        %v1452 = vpop.permute.xlu0 %1451
        %v1453 = vpack.c.b16 %v1397, %v973
        %v1454 = vpack.c.b16 %v1399, %v1398
        %v1456 = vshrl.u32 %v976, 16
        %v1458 = vrot.slane %v1456, 4
        %v1459 = vshll.u32 %v976, 16
        %v1461 = vrot.slane %v1459, 5
        %v1462 = vor.u32 %v1458, %v1461
        %v1464 = vshrl.u32 %v977, 16
        %v1466 = vrot.slane %v1464, 4
        %v1467 = vshll.u32 %v977, 16
        %v1469 = vrot.slane %v1467, 5
        %v1470 = vor.u32 %v1466, %v1469
        %v1471 = vsel %vm1023, %v1462, %v1470
        %v1473 = vshrl.u32 %v978, 16
        %v1475 = vrot.slane %v1473, 4
        %v1476 = vshll.u32 %v978, 16
        %v1478 = vrot.slane %v1476, 5
        %v1479 = vor.u32 %v1475, %v1478
        %v1480 = vsel %vm1023, %v1470, %v1479
        %v1482 = vshrl.u32 %v979, 16
        %v1484 = vrot.slane %v1482, 4
        %v1485 = vshll.u32 %v979, 16
        %v1487 = vrot.slane %v1485, 5
        %v1488 = vor.u32 %v1484, %v1487
        %v1489 = vsel %vm1023, %v1479, %v1488
        %v1491 = vshrl.u32 %v980, 16
        %v1493 = vrot.slane %v1491, 4
        %v1494 = vshll.u32 %v980, 16
        %v1496 = vrot.slane %v1494, 5
        %v1497 = vor.u32 %v1493, %v1496
        %v1498 = vsel %vm1023, %v1488, %v1497
        %v1500 = vshrl.u32 %v981, 16
        %v1502 = vrot.slane %v1500, 4
        %v1503 = vshll.u32 %v981, 16
        %v1505 = vrot.slane %v1503, 5
        %v1506 = vor.u32 %v1502, %v1505
        %v1507 = vsel %vm1023, %v1497, %v1506
        %v1509 = vshrl.u32 %v982, 16
        %v1511 = vrot.slane %v1509, 4
        %v1512 = vshll.u32 %v982, 16
        %v1514 = vrot.slane %v1512, 5
        %v1515 = vor.u32 %v1511, %v1514
        %v1516 = vsel %vm1023, %v1506, %v1515
        %v1518 = vshrl.u32 %v983, 16
        %v1520 = vrot.slane %v1518, 4
        %v1521 = vshll.u32 %v983, 16
        %v1523 = vrot.slane %v1521, 5
        %v1524 = vor.u32 %v1520, %v1523
        %v1525 = vsel %vm1023, %v1515, %v1524
        %v1527 = vshrl.u32 %v984, 16
        %v1529 = vrot.slane %v1527, 4
        %v1530 = vshll.u32 %v984, 16
        %v1532 = vrot.slane %v1530, 5
        %v1533 = vor.u32 %v1529, %v1532
        %v1534 = vsel %vm1023, %v1524, %v1533
        %v1536 = vshrl.u32 %v985, 16
        %v1538 = vrot.slane %v1536, 4
        %v1539 = vshll.u32 %v985, 16
        %v1541 = vrot.slane %v1539, 5
        %v1542 = vor.u32 %v1538, %v1541
        %v1543 = vsel %vm1023, %v1533, %v1542
        %v1545 = vshrl.u32 %v986, 16
        %v1547 = vrot.slane %v1545, 4
        %v1548 = vshll.u32 %v986, 16
        %v1550 = vrot.slane %v1548, 5
        %v1551 = vor.u32 %v1547, %v1550
        %v1552 = vsel %vm1023, %v1542, %v1551
        %v1554 = vshrl.u32 %v987, 16
        %v1556 = vrot.slane %v1554, 4
        %v1557 = vshll.u32 %v987, 16
        %v1559 = vrot.slane %v1557, 5
        %v1560 = vor.u32 %v1556, %v1559
        %v1561 = vsel %vm1023, %v1551, %v1560
        %v1563 = vshrl.u32 %v988, 16
        %v1565 = vrot.slane %v1563, 4
        %v1566 = vshll.u32 %v988, 16
        %v1568 = vrot.slane %v1566, 5
        %v1569 = vor.u32 %v1565, %v1568
        %v1570 = vsel %vm1023, %v1560, %v1569
        %v1572 = vshrl.u32 %v989, 16
        %v1574 = vrot.slane %v1572, 4
        %v1575 = vshll.u32 %v989, 16
        %v1577 = vrot.slane %v1575, 5
        %v1578 = vor.u32 %v1574, %v1577
        %v1579 = vsel %vm1023, %v1569, %v1578
        %v1581 = vshrl.u32 %v990, 16
        %v1583 = vrot.slane %v1581, 4
        %v1584 = vshll.u32 %v990, 16
        %v1586 = vrot.slane %v1584, 5
        %v1587 = vor.u32 %v1583, %v1586
        %v1588 = vsel %vm1023, %v1578, %v1587
        %v1590 = vshrl.u32 %v991, 16
        %v1592 = vrot.slane %v1590, 4
        %v1593 = vshll.u32 %v991, 16
        %v1595 = vrot.slane %v1593, 5
        %v1596 = vor.u32 %v1592, %v1595
        %v1597 = vsel %vm1023, %v1587, %v1596
        %v1599 = vshrl.u32 %v992, 16
        %v1601 = vrot.slane %v1599, 4
        %v1602 = vshll.u32 %v992, 16
        %v1604 = vrot.slane %v1602, 5
        %v1605 = vor.u32 %v1601, %v1604
        %v1606 = vsel %vm1023, %v1596, %v1605
        %v1608 = vshrl.u32 %v993, 16
        %v1610 = vrot.slane %v1608, 4
        %v1611 = vshll.u32 %v993, 16
        %v1613 = vrot.slane %v1611, 5
        %v1614 = vor.u32 %v1610, %v1613
        %v1615 = vsel %vm1023, %v1605, %v1614
        %v1617 = vshrl.u32 %v994, 16
        %v1619 = vrot.slane %v1617, 4
        %v1620 = vshll.u32 %v994, 16
        %v1622 = vrot.slane %v1620, 5
        %v1623 = vor.u32 %v1619, %v1622
        %v1624 = vsel %vm1023, %v1614, %v1623
        %v1626 = vshrl.u32 %v995, 16
        %v1628 = vrot.slane %v1626, 4
        %v1629 = vshll.u32 %v995, 16
        %v1631 = vrot.slane %v1629, 5
        %v1632 = vor.u32 %v1628, %v1631
        %v1633 = vsel %vm1023, %v1623, %v1632
        %v1635 = vshrl.u32 %v996, 16
        %v1637 = vrot.slane %v1635, 4
        %v1638 = vshll.u32 %v996, 16
        %v1640 = vrot.slane %v1638, 5
        %v1641 = vor.u32 %v1637, %v1640
        %v1642 = vsel %vm1023, %v1632, %v1641
        %v1644 = vshrl.u32 %v997, 16
        %v1646 = vrot.slane %v1644, 4
        %v1647 = vshll.u32 %v997, 16
        %v1649 = vrot.slane %v1647, 5
        %v1650 = vor.u32 %v1646, %v1649
        %v1651 = vsel %vm1023, %v1641, %v1650
        %v1653 = vshrl.u32 %v1453, 16
        %v1655 = vrot.slane %v1653, 4
        %v1656 = vshll.u32 %v1453, 16
        %v1658 = vrot.slane %v1656, 5
        %v1659 = vor.u32 %v1655, %v1658
        %v1660 = vsel %vm1023, %v1650, %v1659
        %v1662 = vshrl.u32 %v1454, 16
        %v1664 = vrot.slane %v1662, 4
        %v1665 = vshll.u32 %v1454, 16
        %v1667 = vrot.slane %v1665, 5
        %v1668 = vor.u32 %v1664, %v1667
        %v1669 = vsel %vm1023, %v1659, %v1668
        %1670 = vrot.lane.b32.xlu0 %v1462, 64
        %v1671 = vpop.permute.xlu0 %1670
        %1672 = vrot.lane.b32.xlu0 %v1471, 64
        %v1673 = vpop.permute.xlu0 %1672
        %1674 = vrot.lane.b32.xlu0 %v1480, 64
        %v1675 = vpop.permute.xlu0 %1674
        %1676 = vrot.lane.b32.xlu0 %v1489, 64
        %v1677 = vpop.permute.xlu0 %1676
        %1678 = vrot.lane.b32.xlu0 %v1498, 64
        %v1679 = vpop.permute.xlu0 %1678
        %1680 = vrot.lane.b32.xlu0 %v1507, 64
        %v1681 = vpop.permute.xlu0 %1680
        %1682 = vrot.lane.b32.xlu0 %v1516, 64
        %v1683 = vpop.permute.xlu0 %1682
        %1684 = vrot.lane.b32.xlu0 %v1525, 64
        %v1685 = vpop.permute.xlu0 %1684
        %1686 = vrot.lane.b32.xlu0 %v1534, 64
        %v1687 = vpop.permute.xlu0 %1686
        %1688 = vrot.lane.b32.xlu0 %v1543, 64
        %v1689 = vpop.permute.xlu0 %1688
        %1690 = vrot.lane.b32.xlu0 %v1552, 64
        %v1691 = vpop.permute.xlu0 %1690
        %1692 = vrot.lane.b32.xlu0 %v1561, 64
        %v1693 = vpop.permute.xlu0 %1692
        %1694 = vrot.lane.b32.xlu0 %v1570, 64
        %v1695 = vpop.permute.xlu0 %1694
        %1696 = vrot.lane.b32.xlu0 %v1579, 64
        %v1697 = vpop.permute.xlu0 %1696
        %1698 = vrot.lane.b32.xlu0 %v1588, 64
        %v1699 = vpop.permute.xlu0 %1698
        %1700 = vrot.lane.b32.xlu0 %v1597, 64
        %v1701 = vpop.permute.xlu0 %1700
        %1702 = vrot.lane.b32.xlu0 %v1606, 64
        %v1703 = vpop.permute.xlu0 %1702
        %1704 = vrot.lane.b32.xlu0 %v1615, 64
        %v1705 = vpop.permute.xlu0 %1704
        %1706 = vrot.lane.b32.xlu0 %v1624, 64
        %v1707 = vpop.permute.xlu0 %1706
        %1708 = vrot.lane.b32.xlu0 %v1633, 64
        %v1709 = vpop.permute.xlu0 %1708
        %1710 = vrot.lane.b32.xlu0 %v1642, 64
        %v1711 = vpop.permute.xlu0 %1710
        %1712 = vrot.lane.b32.xlu0 %v1651, 64
        %v1713 = vpop.permute.xlu0 %1712
        %1714 = vrot.lane.b32.xlu0 %v1660, 64
        %v1715 = vpop.permute.xlu0 %1714
        %1716 = vrot.lane.b32.xlu0 %v1669, 64
        %v1717 = vpop.permute.xlu0 %1716
        %1718 = vrot.lane.b32.xlu0 %v1668, 64
        %v1719 = vpop.permute.xlu0 %1718
        %v1721 = vunpack.c.l.b16 %v870
        %v1722 = vpack.c.b16 %v1721, %v1721
        %v1723 = vrot.slane %v976, 5
        %v1724 = vrot.slane %v977, 5
        %v1725 = vsel %vm1292, %v1723, %v1724
        %v1726 = vrot.slane %v978, 5
        %v1727 = vsel %vm1292, %v1724, %v1726
        %v1728 = vrot.slane %v979, 5
        %v1729 = vsel %vm1292, %v1726, %v1728
        %v1730 = vrot.slane %v980, 5
        %v1731 = vsel %vm1292, %v1728, %v1730
        %v1732 = vrot.slane %v981, 5
        %v1733 = vsel %vm1292, %v1730, %v1732
        %v1734 = vrot.slane %v982, 5
        %v1735 = vsel %vm1292, %v1732, %v1734
        %v1736 = vrot.slane %v983, 5
        %v1737 = vsel %vm1292, %v1734, %v1736
        %v1738 = vrot.slane %v984, 5
        %v1739 = vsel %vm1292, %v1736, %v1738
        %v1740 = vrot.slane %v985, 5
        %v1741 = vsel %vm1292, %v1738, %v1740
        %v1742 = vrot.slane %v986, 5
        %v1743 = vsel %vm1292, %v1740, %v1742
        %v1744 = vrot.slane %v987, 5
        %v1745 = vsel %vm1292, %v1742, %v1744
        %v1746 = vrot.slane %v988, 5
        %v1747 = vsel %vm1292, %v1744, %v1746
        %v1748 = vrot.slane %v989, 5
        %v1749 = vsel %vm1292, %v1746, %v1748
        %v1750 = vrot.slane %v990, 5
        %v1751 = vsel %vm1292, %v1748, %v1750
        %v1752 = vrot.slane %v991, 5
        %v1753 = vsel %vm1292, %v1750, %v1752
        %v1754 = vrot.slane %v992, 5
        %v1755 = vsel %vm1292, %v1752, %v1754
        %v1756 = vrot.slane %v993, 5
        %v1757 = vsel %vm1292, %v1754, %v1756
        %v1758 = vrot.slane %v994, 5
        %v1759 = vsel %vm1292, %v1756, %v1758
        %v1760 = vrot.slane %v995, 5
        %v1761 = vsel %vm1292, %v1758, %v1760
        %v1762 = vrot.slane %v996, 5
        %v1763 = vsel %vm1292, %v1760, %v1762
        %v1764 = vrot.slane %v997, 5
        %v1765 = vsel %vm1292, %v1762, %v1764
        %v1766 = vrot.slane %v1453, 5
        %v1767 = vsel %vm1292, %v1764, %v1766
        %v1768 = vrot.slane %v1454, 5
        %v1769 = vsel %vm1292, %v1766, %v1768
        %v1770 = vrot.slane %v1722, 5
        %v1771 = vsel %vm1292, %v1768, %v1770
        %1772 = vrot.lane.b32.xlu0 %v1723, 80
        %v1773 = vpop.permute.xlu0 %1772
        %1774 = vrot.lane.b32.xlu0 %v1725, 80
        %v1775 = vpop.permute.xlu0 %1774
        %1776 = vrot.lane.b32.xlu0 %v1727, 80
        %v1777 = vpop.permute.xlu0 %1776
        %1778 = vrot.lane.b32.xlu0 %v1729, 80
        %v1779 = vpop.permute.xlu0 %1778
        %1780 = vrot.lane.b32.xlu0 %v1731, 80
        %v1781 = vpop.permute.xlu0 %1780
        %1782 = vrot.lane.b32.xlu0 %v1733, 80
        %v1783 = vpop.permute.xlu0 %1782
        %1784 = vrot.lane.b32.xlu0 %v1735, 80
        %v1785 = vpop.permute.xlu0 %1784
        %1786 = vrot.lane.b32.xlu0 %v1737, 80
        %v1787 = vpop.permute.xlu0 %1786
        %1788 = vrot.lane.b32.xlu0 %v1739, 80
        %v1789 = vpop.permute.xlu0 %1788
        %1790 = vrot.lane.b32.xlu0 %v1741, 80
        %v1791 = vpop.permute.xlu0 %1790
        %1792 = vrot.lane.b32.xlu0 %v1743, 80
        %v1793 = vpop.permute.xlu0 %1792
        %1794 = vrot.lane.b32.xlu0 %v1745, 80
        %v1795 = vpop.permute.xlu0 %1794
        %1796 = vrot.lane.b32.xlu0 %v1747, 80
        %v1797 = vpop.permute.xlu0 %1796
        %1798 = vrot.lane.b32.xlu0 %v1749, 80
        %v1799 = vpop.permute.xlu0 %1798
        %1800 = vrot.lane.b32.xlu0 %v1751, 80
        %v1801 = vpop.permute.xlu0 %1800
        %1802 = vrot.lane.b32.xlu0 %v1753, 80
        %v1803 = vpop.permute.xlu0 %1802
        %1804 = vrot.lane.b32.xlu0 %v1755, 80
        %v1805 = vpop.permute.xlu0 %1804
        %1806 = vrot.lane.b32.xlu0 %v1757, 80
        %v1807 = vpop.permute.xlu0 %1806
        %1808 = vrot.lane.b32.xlu0 %v1759, 80
        %v1809 = vpop.permute.xlu0 %1808
        %1810 = vrot.lane.b32.xlu0 %v1761, 80
        %v1811 = vpop.permute.xlu0 %1810
        %1812 = vrot.lane.b32.xlu0 %v1763, 80
        %v1813 = vpop.permute.xlu0 %1812
        %1814 = vrot.lane.b32.xlu0 %v1765, 80
        %v1815 = vpop.permute.xlu0 %1814
        %1816 = vrot.lane.b32.xlu0 %v1767, 80
        %v1817 = vpop.permute.xlu0 %1816
        %1818 = vrot.lane.b32.xlu0 %v1769, 80
        %v1819 = vpop.permute.xlu0 %1818
        %1820 = vrot.lane.b32.xlu0 %v1771, 80
        %v1821 = vpop.permute.xlu0 %1820
        %v1826 = vunpack.c.l.b16 %v871
        %v1827 = vunpack.c.l.b16 %v872
        %v1828 = vunpack.c.l.b16 %v873
        %v1829 = vunpack.c.l.b16 %v874
        %v1830 = vpack.c.b16 %v932, %v1826
        %v1831 = vpack.c.b16 %v1828, %v1827
        %v1832 = vpack.c.b16 %v1829, %v1829
        %1833 = vrot.lane.b32.xlu0 %v1830, 96
        %v1834 = vpop.permute.xlu0 %1833
        %1835 = vrot.lane.b32.xlu0 %v978, 96
        %v1836 = vpop.permute.xlu0 %1835
        %1837 = vrot.lane.b32.xlu0 %v979, 96
        %v1838 = vpop.permute.xlu0 %1837
        %1839 = vrot.lane.b32.xlu0 %v980, 96
        %v1840 = vpop.permute.xlu0 %1839
        %1841 = vrot.lane.b32.xlu0 %v981, 96
        %v1842 = vpop.permute.xlu0 %1841
        %1843 = vrot.lane.b32.xlu0 %v982, 96
        %v1844 = vpop.permute.xlu0 %1843
        %1845 = vrot.lane.b32.xlu0 %v983, 96
        %v1846 = vpop.permute.xlu0 %1845
        %1847 = vrot.lane.b32.xlu0 %v984, 96
        %v1848 = vpop.permute.xlu0 %1847
        %1849 = vrot.lane.b32.xlu0 %v985, 96
        %v1850 = vpop.permute.xlu0 %1849
        %1851 = vrot.lane.b32.xlu0 %v986, 96
        %v1852 = vpop.permute.xlu0 %1851
        %1853 = vrot.lane.b32.xlu0 %v987, 96
        %v1854 = vpop.permute.xlu0 %1853
        %1855 = vrot.lane.b32.xlu0 %v988, 96
        %v1856 = vpop.permute.xlu0 %1855
        %1857 = vrot.lane.b32.xlu0 %v989, 96
        %v1858 = vpop.permute.xlu0 %1857
        %1859 = vrot.lane.b32.xlu0 %v990, 96
        %v1860 = vpop.permute.xlu0 %1859
        %1861 = vrot.lane.b32.xlu0 %v991, 96
        %v1862 = vpop.permute.xlu0 %1861
        %1863 = vrot.lane.b32.xlu0 %v992, 96
        %v1864 = vpop.permute.xlu0 %1863
        %1865 = vrot.lane.b32.xlu0 %v993, 96
        %v1866 = vpop.permute.xlu0 %1865
        %1867 = vrot.lane.b32.xlu0 %v994, 96
        %v1868 = vpop.permute.xlu0 %1867
        %1869 = vrot.lane.b32.xlu0 %v995, 96
        %v1870 = vpop.permute.xlu0 %1869
        %1871 = vrot.lane.b32.xlu0 %v996, 96
        %v1872 = vpop.permute.xlu0 %1871
        %1873 = vrot.lane.b32.xlu0 %v997, 96
        %v1874 = vpop.permute.xlu0 %1873
        %1875 = vrot.lane.b32.xlu0 %v1453, 96
        %v1876 = vpop.permute.xlu0 %1875
        %1877 = vrot.lane.b32.xlu0 %v1454, 96
        %v1878 = vpop.permute.xlu0 %1877
        %1879 = vrot.lane.b32.xlu0 %v1831, 96
        %v1880 = vpop.permute.xlu0 %1879
        %1881 = vrot.lane.b32.xlu0 %v1832, 96
        %v1882 = vpop.permute.xlu0 %1881
        %v1883 = vpack.c.b16 %v1827, %v1399
        %v1884 = vpack.c.b16 %v1829, %v1828
        %v1886 = vshrl.u32 %v1401, 16
        %v1888 = vrot.slane %v1886, 4
        %v1889 = vshll.u32 %v1401, 16
        %v1891 = vrot.slane %v1889, 5
        %v1892 = vor.u32 %v1888, %v1891
        %v1893 = vsel %vm1023, %v1237, %v1892
        %v1895 = vshrl.u32 %v1883, 16
        %v1897 = vrot.slane %v1895, 4
        %v1898 = vshll.u32 %v1883, 16
        %v1900 = vrot.slane %v1898, 5
        %v1901 = vor.u32 %v1897, %v1900
        %v1902 = vsel %vm1023, %v1892, %v1901
        %v1904 = vshrl.u32 %v1884, 16
        %v1906 = vrot.slane %v1904, 4
        %v1907 = vshll.u32 %v1884, 16
        %v1909 = vrot.slane %v1907, 5
        %v1910 = vor.u32 %v1906, %v1909
        %v1911 = vsel %vm1023, %v1901, %v1910
        %1912 = vrot.lane.b32.xlu0 %v1057, 112
        %v1913 = vpop.permute.xlu0 %1912
        %1914 = vrot.lane.b32.xlu0 %v1067, 112
        %v1915 = vpop.permute.xlu0 %1914
        %1916 = vrot.lane.b32.xlu0 %v1076, 112
        %v1917 = vpop.permute.xlu0 %1916
        %1918 = vrot.lane.b32.xlu0 %v1085, 112
        %v1919 = vpop.permute.xlu0 %1918
        %1920 = vrot.lane.b32.xlu0 %v1094, 112
        %v1921 = vpop.permute.xlu0 %1920
        %1922 = vrot.lane.b32.xlu0 %v1103, 112
        %v1923 = vpop.permute.xlu0 %1922
        %1924 = vrot.lane.b32.xlu0 %v1112, 112
        %v1925 = vpop.permute.xlu0 %1924
        %1926 = vrot.lane.b32.xlu0 %v1121, 112
        %v1927 = vpop.permute.xlu0 %1926
        %1928 = vrot.lane.b32.xlu0 %v1130, 112
        %v1929 = vpop.permute.xlu0 %1928
        %1930 = vrot.lane.b32.xlu0 %v1139, 112
        %v1931 = vpop.permute.xlu0 %1930
        %1932 = vrot.lane.b32.xlu0 %v1148, 112
        %v1933 = vpop.permute.xlu0 %1932
        %1934 = vrot.lane.b32.xlu0 %v1157, 112
        %v1935 = vpop.permute.xlu0 %1934
        %1936 = vrot.lane.b32.xlu0 %v1166, 112
        %v1937 = vpop.permute.xlu0 %1936
        %1938 = vrot.lane.b32.xlu0 %v1175, 112
        %v1939 = vpop.permute.xlu0 %1938
        %1940 = vrot.lane.b32.xlu0 %v1184, 112
        %v1941 = vpop.permute.xlu0 %1940
        %1942 = vrot.lane.b32.xlu0 %v1193, 112
        %v1943 = vpop.permute.xlu0 %1942
        %1944 = vrot.lane.b32.xlu0 %v1202, 112
        %v1945 = vpop.permute.xlu0 %1944
        %1946 = vrot.lane.b32.xlu0 %v1211, 112
        %v1947 = vpop.permute.xlu0 %1946
        %1948 = vrot.lane.b32.xlu0 %v1220, 112
        %v1949 = vpop.permute.xlu0 %1948
        %1950 = vrot.lane.b32.xlu0 %v1229, 112
        %v1951 = vpop.permute.xlu0 %1950
        %1952 = vrot.lane.b32.xlu0 %v1238, 112
        %v1953 = vpop.permute.xlu0 %1952
        %1954 = vrot.lane.b32.xlu0 %v1893, 112
        %v1955 = vpop.permute.xlu0 %1954
        %1956 = vrot.lane.b32.xlu0 %v1902, 112
        %v1957 = vpop.permute.xlu0 %1956
        %1958 = vrot.lane.b32.xlu0 %v1911, 112
        %v1959 = vpop.permute.xlu0 %1958
        %1960 = vrot.lane.b32.xlu0 %v1910, 112
        %v1961 = vpop.permute.xlu0 %1960
        %v1963 = vunpack.c.l.b16 %v875
        %v1964 = vpack.c.b16 %v1963, %v1963
        %v1965 = vrot.slane %v1401, 5
        %v1966 = vsel %vm1292, %v1338, %v1965
        %v1967 = vrot.slane %v1883, 5
        %v1968 = vsel %vm1292, %v1965, %v1967
        %v1969 = vrot.slane %v1884, 5
        %v1970 = vsel %vm1292, %v1967, %v1969
        %v1971 = vrot.slane %v1964, 5
        %v1972 = vsel %vm1292, %v1969, %v1971
        %vm1973 = vcmask 130048
        %v1976 = vsel %vm1973, %v974, %v1240
        %v1979 = vsel %vm1973, %v975, %v1242
        %v1981 = vsel %vm1973, %v976, %v1244
        %v1983 = vsel %vm1973, %v977, %v1246
        %v1985 = vsel %vm1973, %v978, %v1248
        %v1987 = vsel %vm1973, %v979, %v1250
        %v1989 = vsel %vm1973, %v980, %v1252
        %v1991 = vsel %vm1973, %v981, %v1254
        %v1993 = vsel %vm1973, %v982, %v1256
        %v1995 = vsel %vm1973, %v983, %v1258
        %v1997 = vsel %vm1973, %v984, %v1260
        %v1999 = vsel %vm1973, %v985, %v1262
        %v2001 = vsel %vm1973, %v986, %v1264
        %v2003 = vsel %vm1973, %v987, %v1266
        %v2005 = vsel %vm1973, %v988, %v1268
        %v2007 = vsel %vm1973, %v989, %v1270
        %v2009 = vsel %vm1973, %v990, %v1272
        %v2011 = vsel %vm1973, %v991, %v1274
        %v2013 = vsel %vm1973, %v992, %v1276
        %v2015 = vsel %vm1973, %v993, %v1278
        %v2017 = vsel %vm1973, %v994, %v1280
        %v2019 = vsel %vm1973, %v995, %v1282
        %v2021 = vsel %vm1973, %v996, %v1284
        %v2023 = vsel %vm1973, %v997, %v1286
        %v2026 = vsel %vm1973, %v998, %v1288
        %vm2027 = vcmask 261120
        %v2029 = vsel %vm2027, %v1976, %v1343
        %v2031 = vsel %vm2027, %v1979, %v1345
        %v2033 = vsel %vm2027, %v1981, %v1347
        %v2035 = vsel %vm2027, %v1983, %v1349
        %v2037 = vsel %vm2027, %v1985, %v1351
        %v2039 = vsel %vm2027, %v1987, %v1353
        %v2041 = vsel %vm2027, %v1989, %v1355
        %v2043 = vsel %vm2027, %v1991, %v1357
        %v2045 = vsel %vm2027, %v1993, %v1359
        %v2047 = vsel %vm2027, %v1995, %v1361
        %v2049 = vsel %vm2027, %v1997, %v1363
        %v2051 = vsel %vm2027, %v1999, %v1365
        %v2053 = vsel %vm2027, %v2001, %v1367
        %v2055 = vsel %vm2027, %v2003, %v1369
        %v2057 = vsel %vm2027, %v2005, %v1371
        %v2059 = vsel %vm2027, %v2007, %v1373
        %v2061 = vsel %vm2027, %v2009, %v1375
        %v2063 = vsel %vm2027, %v2011, %v1377
        %v2065 = vsel %vm2027, %v2013, %v1379
        %v2067 = vsel %vm2027, %v2015, %v1381
        %v2069 = vsel %vm2027, %v2017, %v1383
        %v2071 = vsel %vm2027, %v2019, %v1385
        %v2073 = vsel %vm2027, %v2021, %v1387
        %v2075 = vsel %vm2027, %v2023, %v1389
        %v2077 = vsel %vm2027, %v2026, %v1391
        %vm2078 = vcmask 392192
        %v2080 = vsel %vm2078, %v2029, %v1404
        %v2082 = vsel %vm2078, %v2031, %v1406
        %v2084 = vsel %vm2078, %v2033, %v1408
        %v2086 = vsel %vm2078, %v2035, %v1410
        %v2088 = vsel %vm2078, %v2037, %v1412
        %v2090 = vsel %vm2078, %v2039, %v1414
        %v2092 = vsel %vm2078, %v2041, %v1416
        %v2094 = vsel %vm2078, %v2043, %v1418
        %v2096 = vsel %vm2078, %v2045, %v1420
        %v2098 = vsel %vm2078, %v2047, %v1422
        %v2100 = vsel %vm2078, %v2049, %v1424
        %v2102 = vsel %vm2078, %v2051, %v1426
        %v2104 = vsel %vm2078, %v2053, %v1428
        %v2106 = vsel %vm2078, %v2055, %v1430
        %v2108 = vsel %vm2078, %v2057, %v1432
        %v2110 = vsel %vm2078, %v2059, %v1434
        %v2112 = vsel %vm2078, %v2061, %v1436
        %v2114 = vsel %vm2078, %v2063, %v1438
        %v2116 = vsel %vm2078, %v2065, %v1440
        %v2118 = vsel %vm2078, %v2067, %v1442
        %v2120 = vsel %vm2078, %v2069, %v1444
        %v2122 = vsel %vm2078, %v2071, %v1446
        %v2124 = vsel %vm2078, %v2073, %v1448
        %v2126 = vsel %vm2078, %v2075, %v1450
        %v2128 = vsel %vm2078, %v2077, %v1452
        %vm2129 = vcmask 523264
        %v2131 = vsel %vm2129, %v2080, %v1671
        %v2133 = vsel %vm2129, %v2082, %v1673
        %v2135 = vsel %vm2129, %v2084, %v1675
        %v2137 = vsel %vm2129, %v2086, %v1677
        %v2139 = vsel %vm2129, %v2088, %v1679
        %v2141 = vsel %vm2129, %v2090, %v1681
        %v2143 = vsel %vm2129, %v2092, %v1683
        %v2145 = vsel %vm2129, %v2094, %v1685
        %v2147 = vsel %vm2129, %v2096, %v1687
        %v2149 = vsel %vm2129, %v2098, %v1689
        %v2151 = vsel %vm2129, %v2100, %v1691
        %v2153 = vsel %vm2129, %v2102, %v1693
        %v2155 = vsel %vm2129, %v2104, %v1695
        %v2157 = vsel %vm2129, %v2106, %v1697
        %v2159 = vsel %vm2129, %v2108, %v1699
        %v2161 = vsel %vm2129, %v2110, %v1701
        %v2163 = vsel %vm2129, %v2112, %v1703
        %v2165 = vsel %vm2129, %v2114, %v1705
        %v2167 = vsel %vm2129, %v2116, %v1707
        %v2169 = vsel %vm2129, %v2118, %v1709
        %v2171 = vsel %vm2129, %v2120, %v1711
        %v2173 = vsel %vm2129, %v2122, %v1713
        %v2175 = vsel %vm2129, %v2124, %v1715
        %v2177 = vsel %vm2129, %v2126, %v1717
        %v2179 = vsel %vm2129, %v2128, %v1719
        %vm2180 = vcmask 654336
        %v2182 = vsel %vm2180, %v2131, %v1773
        %v2184 = vsel %vm2180, %v2133, %v1775
        %v2186 = vsel %vm2180, %v2135, %v1777
        %v2188 = vsel %vm2180, %v2137, %v1779
        %v2190 = vsel %vm2180, %v2139, %v1781
        %v2192 = vsel %vm2180, %v2141, %v1783
        %v2194 = vsel %vm2180, %v2143, %v1785
        %v2196 = vsel %vm2180, %v2145, %v1787
        %v2198 = vsel %vm2180, %v2147, %v1789
        %v2200 = vsel %vm2180, %v2149, %v1791
        %v2202 = vsel %vm2180, %v2151, %v1793
        %v2204 = vsel %vm2180, %v2153, %v1795
        %v2206 = vsel %vm2180, %v2155, %v1797
        %v2208 = vsel %vm2180, %v2157, %v1799
        %v2210 = vsel %vm2180, %v2159, %v1801
        %v2212 = vsel %vm2180, %v2161, %v1803
        %v2214 = vsel %vm2180, %v2163, %v1805
        %v2216 = vsel %vm2180, %v2165, %v1807
        %v2218 = vsel %vm2180, %v2167, %v1809
        %v2220 = vsel %vm2180, %v2169, %v1811
        %v2222 = vsel %vm2180, %v2171, %v1813
        %v2224 = vsel %vm2180, %v2173, %v1815
        %v2226 = vsel %vm2180, %v2175, %v1817
        %v2228 = vsel %vm2180, %v2177, %v1819
        %v2230 = vsel %vm2180, %v2179, %v1821
        %vm2231 = vcmask 785408
        %v2233 = vsel %vm2231, %v2182, %v1834
        %v2235 = vsel %vm2231, %v2184, %v1836
        %v2237 = vsel %vm2231, %v2186, %v1838
        %v2239 = vsel %vm2231, %v2188, %v1840
        %v2241 = vsel %vm2231, %v2190, %v1842
        %v2243 = vsel %vm2231, %v2192, %v1844
        %v2245 = vsel %vm2231, %v2194, %v1846
        %v2247 = vsel %vm2231, %v2196, %v1848
        %v2249 = vsel %vm2231, %v2198, %v1850
        %v2251 = vsel %vm2231, %v2200, %v1852
        %v2253 = vsel %vm2231, %v2202, %v1854
        %v2255 = vsel %vm2231, %v2204, %v1856
        %v2257 = vsel %vm2231, %v2206, %v1858
        %v2259 = vsel %vm2231, %v2208, %v1860
        %v2261 = vsel %vm2231, %v2210, %v1862
        %v2263 = vsel %vm2231, %v2212, %v1864
        %v2265 = vsel %vm2231, %v2214, %v1866
        %v2267 = vsel %vm2231, %v2216, %v1868
        %v2269 = vsel %vm2231, %v2218, %v1870
        %v2271 = vsel %vm2231, %v2220, %v1872
        %v2273 = vsel %vm2231, %v2222, %v1874
        %v2275 = vsel %vm2231, %v2224, %v1876
        %v2277 = vsel %vm2231, %v2226, %v1878
        %v2279 = vsel %vm2231, %v2228, %v1880
        %v2281 = vsel %vm2231, %v2230, %v1882
        %vm2282 = vcmask 916480
        %v2284 = vsel %vm2282, %v2233, %v1913
        %v2286 = vsel %vm2282, %v2235, %v1915
        %v2288 = vsel %vm2282, %v2237, %v1917
        %v2290 = vsel %vm2282, %v2239, %v1919
        %v2292 = vsel %vm2282, %v2241, %v1921
        %v2294 = vsel %vm2282, %v2243, %v1923
        %v2296 = vsel %vm2282, %v2245, %v1925
        %v2298 = vsel %vm2282, %v2247, %v1927
        %v2300 = vsel %vm2282, %v2249, %v1929
        %v2302 = vsel %vm2282, %v2251, %v1931
        %v2304 = vsel %vm2282, %v2253, %v1933
        %v2306 = vsel %vm2282, %v2255, %v1935
        %v2308 = vsel %vm2282, %v2257, %v1937
        %v2310 = vsel %vm2282, %v2259, %v1939
        %v2312 = vsel %vm2282, %v2261, %v1941
        %v2314 = vsel %vm2282, %v2263, %v1943
        %v2316 = vsel %vm2282, %v2265, %v1945
        %v2318 = vsel %vm2282, %v2267, %v1947
        %v2320 = vsel %vm2282, %v2269, %v1949
        %v2322 = vsel %vm2282, %v2271, %v1951
        %v2324 = vsel %vm2282, %v2273, %v1953
        %v2326 = vsel %vm2282, %v2275, %v1955
        %v2328 = vsel %vm2282, %v2277, %v1957
        %v2330 = vsel %vm2282, %v2279, %v1959
        %v2332 = vsel %vm2282, %v2281, %v1961
        %v2333 = vld [vmem:[%s1] sm:$0xf]
        %v2334 = vld [vmem:[%s1 + $0x4] sm:$0xf]
        %v2335 = vld [vmem:[%s1 + $0x8] sm:$0xf]
        %v2336 = vld [vmem:[%s1 + $0xc] sm:$0xf]
        %v2337 = vld [vmem:[%s1 + $0x10] sm:$0xf]
        %v2338 = vld [vmem:[%s1 + $0x14] sm:$0xf]
        %v2339 = vld [vmem:[%s1 + $0x18] sm:$0xf]
        %v2340 = vld [vmem:[%s1 + $0x1c] sm:$0xf]
        %v2341 = vld [vmem:[%s1 + $0x20] sm:$0xf]
        %v2342 = vld [vmem:[%s1 + $0x24] sm:$0xf]
        %v2343 = vld [vmem:[%s1 + $0x28] sm:$0xf]
        %v2344 = vld [vmem:[%s1 + $0x2c] sm:$0xf]
        %v2345 = vld [vmem:[%s1 + $0x30] sm:$0xf]
        %v2346 = vld [vmem:[%s1 + $0x34] sm:$0xf]
        %v2347 = vld [vmem:[%s1 + $0x38] sm:$0xf]
        %v2348 = vld [vmem:[%s1 + $0x3c] sm:$0xf]
        %v2349 = vld [vmem:[%s1 + $0x40] sm:$0xf]
        %v2350 = vld [vmem:[%s1 + $0x44] sm:$0xf]
        %vm2351 = vsmask.f32 4352
        %v2352 = vshrl.u32 %v2284, 16
        %v2354 = vrot.slane %v2352, 3
        %v2355 = vshll.u32 %v2284, 16
        %v2357 = vrot.slane %v2355, 4
        %v2358 = vor.u32 %v2354, %v2357
        %v2359 = vshrl.u32 %v2286, 16
        %v2361 = vrot.slane %v2359, 3
        %v2362 = vshll.u32 %v2286, 16
        %v2364 = vrot.slane %v2362, 4
        %v2365 = vor.u32 %v2361, %v2364
        %v2366 = vsel %vm2351, %v2358, %v2365
        %v2368 = vshrl.u32 %v1298, 16
        %v2370 = vrot.slane %v2368, 3
        %v2371 = vshll.u32 %v1298, 16
        %v2373 = vrot.slane %v2371, 4
        %v2374 = vor.u32 %v2370, %v2373
        %v2376 = vshrl.u32 %v1301, 16
        %v2378 = vrot.slane %v2376, 3
        %v2379 = vshll.u32 %v1301, 16
        %v2381 = vrot.slane %v2379, 4
        %v2382 = vor.u32 %v2378, %v2381
        %v2383 = vsel %vm2351, %v2374, %v2382
        %v2384 = vshrl.u32 %v2288, 16
        %v2386 = vrot.slane %v2384, 3
        %v2387 = vshll.u32 %v2288, 16
        %v2389 = vrot.slane %v2387, 4
        %v2390 = vor.u32 %v2386, %v2389
        %v2391 = vsel %vm2351, %v2365, %v2390
        %v2393 = vshrl.u32 %v1303, 16
        %v2395 = vrot.slane %v2393, 3
        %v2396 = vshll.u32 %v1303, 16
        %v2398 = vrot.slane %v2396, 4
        %v2399 = vor.u32 %v2395, %v2398
        %v2400 = vsel %vm2351, %v2382, %v2399
        %v2401 = vshrl.u32 %v2290, 16
        %v2403 = vrot.slane %v2401, 3
        %v2404 = vshll.u32 %v2290, 16
        %v2406 = vrot.slane %v2404, 4
        %v2407 = vor.u32 %v2403, %v2406
        %v2408 = vsel %vm2351, %v2390, %v2407
        %v2410 = vshrl.u32 %v1305, 16
        %v2412 = vrot.slane %v2410, 3
        %v2413 = vshll.u32 %v1305, 16
        %v2415 = vrot.slane %v2413, 4
        %v2416 = vor.u32 %v2412, %v2415
        %v2417 = vsel %vm2351, %v2399, %v2416
        %v2418 = vshrl.u32 %v2292, 16
        %v2420 = vrot.slane %v2418, 3
        %v2421 = vshll.u32 %v2292, 16
        %v2423 = vrot.slane %v2421, 4
        %v2424 = vor.u32 %v2420, %v2423
        %v2425 = vsel %vm2351, %v2407, %v2424
        %v2427 = vshrl.u32 %v1307, 16
        %v2429 = vrot.slane %v2427, 3
        %v2430 = vshll.u32 %v1307, 16
        %v2432 = vrot.slane %v2430, 4
        %v2433 = vor.u32 %v2429, %v2432
        %v2434 = vsel %vm2351, %v2416, %v2433
        %v2435 = vshrl.u32 %v2294, 16
        %v2437 = vrot.slane %v2435, 3
        %v2438 = vshll.u32 %v2294, 16
        %v2440 = vrot.slane %v2438, 4
        %v2441 = vor.u32 %v2437, %v2440
        %v2442 = vsel %vm2351, %v2424, %v2441
        %v2444 = vshrl.u32 %v1309, 16
        %v2446 = vrot.slane %v2444, 3
        %v2447 = vshll.u32 %v1309, 16
        %v2449 = vrot.slane %v2447, 4
        %v2450 = vor.u32 %v2446, %v2449
        %v2451 = vsel %vm2351, %v2433, %v2450
        %v2452 = vshrl.u32 %v2296, 16
        %v2454 = vrot.slane %v2452, 3
        %v2455 = vshll.u32 %v2296, 16
        %v2457 = vrot.slane %v2455, 4
        %v2458 = vor.u32 %v2454, %v2457
        %v2459 = vsel %vm2351, %v2441, %v2458
        %v2461 = vshrl.u32 %v1311, 16
        %v2463 = vrot.slane %v2461, 3
        %v2464 = vshll.u32 %v1311, 16
        %v2466 = vrot.slane %v2464, 4
        %v2467 = vor.u32 %v2463, %v2466
        %v2468 = vsel %vm2351, %v2450, %v2467
        %v2469 = vshrl.u32 %v2298, 16
        %v2471 = vrot.slane %v2469, 3
        %v2472 = vshll.u32 %v2298, 16
        %v2474 = vrot.slane %v2472, 4
        %v2475 = vor.u32 %v2471, %v2474
        %v2476 = vsel %vm2351, %v2458, %v2475
        %v2478 = vshrl.u32 %v1313, 16
        %v2480 = vrot.slane %v2478, 3
        %v2481 = vshll.u32 %v1313, 16
        %v2483 = vrot.slane %v2481, 4
        %v2484 = vor.u32 %v2480, %v2483
        %v2485 = vsel %vm2351, %v2467, %v2484
        %v2486 = vshrl.u32 %v2300, 16
        %v2488 = vrot.slane %v2486, 3
        %v2489 = vshll.u32 %v2300, 16
        %v2491 = vrot.slane %v2489, 4
        %v2492 = vor.u32 %v2488, %v2491
        %v2493 = vsel %vm2351, %v2475, %v2492
        %v2495 = vshrl.u32 %v1315, 16
        %v2497 = vrot.slane %v2495, 3
        %v2498 = vshll.u32 %v1315, 16
        %v2500 = vrot.slane %v2498, 4
        %v2501 = vor.u32 %v2497, %v2500
        %v2502 = vsel %vm2351, %v2484, %v2501
        %v2503 = vshrl.u32 %v2302, 16
        %v2505 = vrot.slane %v2503, 3
        %v2506 = vshll.u32 %v2302, 16
        %v2508 = vrot.slane %v2506, 4
        %v2509 = vor.u32 %v2505, %v2508
        %v2510 = vsel %vm2351, %v2492, %v2509
        %v2512 = vshrl.u32 %v1317, 16
        %v2514 = vrot.slane %v2512, 3
        %v2515 = vshll.u32 %v1317, 16
        %v2517 = vrot.slane %v2515, 4
        %v2518 = vor.u32 %v2514, %v2517
        %v2519 = vsel %vm2351, %v2501, %v2518
        %v2520 = vshrl.u32 %v2304, 16
        %v2522 = vrot.slane %v2520, 3
        %v2523 = vshll.u32 %v2304, 16
        %v2525 = vrot.slane %v2523, 4
        %v2526 = vor.u32 %v2522, %v2525
        %v2527 = vsel %vm2351, %v2509, %v2526
        %v2529 = vshrl.u32 %v1319, 16
        %v2531 = vrot.slane %v2529, 3
        %v2532 = vshll.u32 %v1319, 16
        %v2534 = vrot.slane %v2532, 4
        %v2535 = vor.u32 %v2531, %v2534
        %v2536 = vsel %vm2351, %v2518, %v2535
        %v2537 = vshrl.u32 %v2306, 16
        %v2539 = vrot.slane %v2537, 3
        %v2540 = vshll.u32 %v2306, 16
        %v2542 = vrot.slane %v2540, 4
        %v2543 = vor.u32 %v2539, %v2542
        %v2544 = vsel %vm2351, %v2526, %v2543
        %v2546 = vshrl.u32 %v1321, 16
        %v2548 = vrot.slane %v2546, 3
        %v2549 = vshll.u32 %v1321, 16
        %v2551 = vrot.slane %v2549, 4
        %v2552 = vor.u32 %v2548, %v2551
        %v2553 = vsel %vm2351, %v2535, %v2552
        %v2554 = vshrl.u32 %v2308, 16
        %v2556 = vrot.slane %v2554, 3
        %v2557 = vshll.u32 %v2308, 16
        %v2559 = vrot.slane %v2557, 4
        %v2560 = vor.u32 %v2556, %v2559
        %v2561 = vsel %vm2351, %v2543, %v2560
        %v2563 = vshrl.u32 %v1323, 16
        %v2565 = vrot.slane %v2563, 3
        %v2566 = vshll.u32 %v1323, 16
        %v2568 = vrot.slane %v2566, 4
        %v2569 = vor.u32 %v2565, %v2568
        %v2570 = vsel %vm2351, %v2552, %v2569
        %v2571 = vshrl.u32 %v2310, 16
        %v2573 = vrot.slane %v2571, 3
        %v2574 = vshll.u32 %v2310, 16
        %v2576 = vrot.slane %v2574, 4
        %v2577 = vor.u32 %v2573, %v2576
        %v2578 = vsel %vm2351, %v2560, %v2577
        %v2580 = vshrl.u32 %v1325, 16
        %v2582 = vrot.slane %v2580, 3
        %v2583 = vshll.u32 %v1325, 16
        %v2585 = vrot.slane %v2583, 4
        %v2586 = vor.u32 %v2582, %v2585
        %v2587 = vsel %vm2351, %v2569, %v2586
        %v2588 = vshrl.u32 %v2312, 16
        %v2590 = vrot.slane %v2588, 3
        %v2591 = vshll.u32 %v2312, 16
        %v2593 = vrot.slane %v2591, 4
        %v2594 = vor.u32 %v2590, %v2593
        %v2595 = vsel %vm2351, %v2577, %v2594
        %v2597 = vshrl.u32 %v1327, 16
        %v2599 = vrot.slane %v2597, 3
        %v2600 = vshll.u32 %v1327, 16
        %v2602 = vrot.slane %v2600, 4
        %v2603 = vor.u32 %v2599, %v2602
        %v2604 = vsel %vm2351, %v2586, %v2603
        %v2605 = vshrl.u32 %v2314, 16
        %v2607 = vrot.slane %v2605, 3
        %v2608 = vshll.u32 %v2314, 16
        %v2610 = vrot.slane %v2608, 4
        %v2611 = vor.u32 %v2607, %v2610
        %v2612 = vsel %vm2351, %v2594, %v2611
        %v2614 = vshrl.u32 %v1329, 16
        %v2616 = vrot.slane %v2614, 3
        %v2617 = vshll.u32 %v1329, 16
        %v2619 = vrot.slane %v2617, 4
        %v2620 = vor.u32 %v2616, %v2619
        %v2621 = vsel %vm2351, %v2603, %v2620
        %v2622 = vshrl.u32 %v2316, 16
        %v2624 = vrot.slane %v2622, 3
        %v2625 = vshll.u32 %v2316, 16
        %v2627 = vrot.slane %v2625, 4
        %v2628 = vor.u32 %v2624, %v2627
        %v2629 = vsel %vm2351, %v2611, %v2628
        %v2631 = vshrl.u32 %v1331, 16
        %v2633 = vrot.slane %v2631, 3
        %v2634 = vshll.u32 %v1331, 16
        %v2636 = vrot.slane %v2634, 4
        %v2637 = vor.u32 %v2633, %v2636
        %v2638 = vsel %vm2351, %v2620, %v2637
        %v2639 = vshrl.u32 %v2318, 16
        %v2641 = vrot.slane %v2639, 3
        %v2642 = vshll.u32 %v2318, 16
        %v2644 = vrot.slane %v2642, 4
        %v2645 = vor.u32 %v2641, %v2644
        %v2646 = vsel %vm2351, %v2628, %v2645
        %v2648 = vshrl.u32 %v1333, 16
        %v2650 = vrot.slane %v2648, 3
        %v2651 = vshll.u32 %v1333, 16
        %v2653 = vrot.slane %v2651, 4
        %v2654 = vor.u32 %v2650, %v2653
        %v2655 = vsel %vm2351, %v2637, %v2654
        %v2656 = vshrl.u32 %v2320, 16
        %v2658 = vrot.slane %v2656, 3
        %v2659 = vshll.u32 %v2320, 16
        %v2661 = vrot.slane %v2659, 4
        %v2662 = vor.u32 %v2658, %v2661
        %v2663 = vsel %vm2351, %v2645, %v2662
        %v2665 = vshrl.u32 %v1335, 16
        %v2667 = vrot.slane %v2665, 3
        %v2668 = vshll.u32 %v1335, 16
        %v2670 = vrot.slane %v2668, 4
        %v2671 = vor.u32 %v2667, %v2670
        %v2672 = vsel %vm2351, %v2654, %v2671
        %v2673 = vshrl.u32 %v2322, 16
        %v2675 = vrot.slane %v2673, 3
        %v2676 = vshll.u32 %v2322, 16
        %v2678 = vrot.slane %v2676, 4
        %v2679 = vor.u32 %v2675, %v2678
        %v2680 = vsel %vm2351, %v2662, %v2679
        %v2682 = vshrl.u32 %v1337, 16
        %v2684 = vrot.slane %v2682, 3
        %v2685 = vshll.u32 %v1337, 16
        %v2687 = vrot.slane %v2685, 4
        %v2688 = vor.u32 %v2684, %v2687
        %v2689 = vsel %vm2351, %v2671, %v2688
        %v2690 = vshrl.u32 %v2324, 16
        %v2692 = vrot.slane %v2690, 3
        %v2693 = vshll.u32 %v2324, 16
        %v2695 = vrot.slane %v2693, 4
        %v2696 = vor.u32 %v2692, %v2695
        %v2697 = vsel %vm2351, %v2679, %v2696
        %v2699 = vshrl.u32 %v1339, 16
        %v2701 = vrot.slane %v2699, 3
        %v2702 = vshll.u32 %v1339, 16
        %v2704 = vrot.slane %v2702, 4
        %v2705 = vor.u32 %v2701, %v2704
        %v2706 = vsel %vm2351, %v2688, %v2705
        %v2707 = vshrl.u32 %v2326, 16
        %v2709 = vrot.slane %v2707, 3
        %v2710 = vshll.u32 %v2326, 16
        %v2712 = vrot.slane %v2710, 4
        %v2713 = vor.u32 %v2709, %v2712
        %v2714 = vsel %vm2351, %v2696, %v2713
        %v2716 = vshrl.u32 %v1966, 16
        %v2718 = vrot.slane %v2716, 3
        %v2719 = vshll.u32 %v1966, 16
        %v2721 = vrot.slane %v2719, 4
        %v2722 = vor.u32 %v2718, %v2721
        %v2723 = vsel %vm2351, %v2705, %v2722
        %v2724 = vshrl.u32 %v2328, 16
        %v2726 = vrot.slane %v2724, 3
        %v2727 = vshll.u32 %v2328, 16
        %v2729 = vrot.slane %v2727, 4
        %v2730 = vor.u32 %v2726, %v2729
        %v2731 = vsel %vm2351, %v2713, %v2730
        %v2733 = vshrl.u32 %v1968, 16
        %v2735 = vrot.slane %v2733, 3
        %v2736 = vshll.u32 %v1968, 16
        %v2738 = vrot.slane %v2736, 4
        %v2739 = vor.u32 %v2735, %v2738
        %v2740 = vsel %vm2351, %v2722, %v2739
        %v2741 = vshrl.u32 %v2330, 16
        %v2743 = vrot.slane %v2741, 3
        %v2744 = vshll.u32 %v2330, 16
        %v2746 = vrot.slane %v2744, 4
        %v2747 = vor.u32 %v2743, %v2746
        %v2748 = vsel %vm2351, %v2730, %v2747
        %v2750 = vshrl.u32 %v1970, 16
        %v2752 = vrot.slane %v2750, 3
        %v2753 = vshll.u32 %v1970, 16
        %v2755 = vrot.slane %v2753, 4
        %v2756 = vor.u32 %v2752, %v2755
        %v2757 = vsel %vm2351, %v2739, %v2756
        %v2758 = vshrl.u32 %v2332, 16
        %v2760 = vrot.slane %v2758, 3
        %v2761 = vshll.u32 %v2332, 16
        %v2763 = vrot.slane %v2761, 4
        %v2764 = vor.u32 %v2760, %v2763
        %v2765 = vsel %vm2351, %v2747, %v2764
        %v2767 = vshrl.u32 %v1972, 16
        %v2769 = vrot.slane %v2767, 3
        %v2770 = vshll.u32 %v1972, 16
        %v2772 = vrot.slane %v2770, 4
        %v2773 = vor.u32 %v2769, %v2772
        %v2774 = vsel %vm2351, %v2756, %v2773
        %v2817 = vunpack.c.l.b16 %v2333
        %v2818 = vunpack.c.l.b16 %v2334
        %v2819 = vunpack.c.l.b16 %v2335
        %v2820 = vunpack.c.l.b16 %v2336
        %v2821 = vunpack.c.l.b16 %v2337
        %v2822 = vunpack.c.l.b16 %v2338
        %v2823 = vunpack.c.l.b16 %v2339
        %v2824 = vunpack.c.l.b16 %v2340
        %v2825 = vunpack.c.l.b16 %v2341
        %v2826 = vunpack.c.l.b16 %v2342
        %v2827 = vunpack.c.l.b16 %v2343
        %v2828 = vunpack.c.l.b16 %v2344
        %v2829 = vunpack.c.l.b16 %v2345
        %v2830 = vunpack.c.l.b16 %v2346
        %v2831 = vunpack.c.l.b16 %v2347
        %v2832 = vunpack.c.l.b16 %v2348
        %v2833 = vunpack.c.l.b16 %v2349
        %v2834 = vunpack.c.l.b16 %v2350
        %v2835 = vpack.c.b16 %v2818, %v2817
        %v2836 = vpack.c.b16 %v2820, %v2819
        %v2837 = vpack.c.b16 %v2822, %v2821
        %v2838 = vpack.c.b16 %v2824, %v2823
        %v2839 = vpack.c.b16 %v2826, %v2825
        %v2840 = vpack.c.b16 %v2828, %v2827
        %v2841 = vpack.c.b16 %v2830, %v2829
        %v2842 = vpack.c.b16 %v2832, %v2831
        %v2843 = vpack.c.b16 %v2834, %v2833
        %v2854 = vsel %vm1973, %v2383, 0
        %v2857 = vsel %vm1973, %v2400, 0
        %v2860 = vsel %vm1973, %v2417, 0
        %v2863 = vsel %vm1973, %v2434, 0
        %v2866 = vsel %vm1973, %v2451, 0
        %v2869 = vsel %vm1973, %v2468, 0
        %v2872 = vsel %vm1973, %v2485, 0
        %v2875 = vsel %vm1973, %v2502, 0
        %v2878 = vsel %vm1973, %v2519, 0
        %v2881 = vsel %vm1973, %v2536, 0
        %v2884 = vsel %vm1973, %v2553, 0
        %v2887 = vsel %vm1973, %v2570, 0
        %v2890 = vsel %vm1973, %v2587, 0
        %v2893 = vsel %vm1973, %v2604, 0
        %v2896 = vsel %vm1973, %v2621, 0
        %v2899 = vsel %vm1973, %v2638, 0
        %v2902 = vsel %vm1973, %v2655, 0
        %v2905 = vsel %vm1973, %v2672, 0
        %v2908 = vsel %vm1973, %v2689, 0
        %v2911 = vsel %vm1973, %v2706, 0
        %v2914 = vsel %vm1973, %v2723, 0
        %v2917 = vsel %vm1973, %v2740, 0
        %v2920 = vsel %vm1973, %v2757, 0
        %v2923 = vsel %vm1973, %v2774, 0
        %2925 = vmatprep.subr.bf16.mxu0 0
        %2926 = vmatpush1.bf16.msra.mxu0 %v2842
        %2927 = vmatprep.subr.bf16.mxu0 0
        %2928 = vmatpush1.bf16.msra.mxu0 %v2841
        %2929 = vmatprep.subr.bf16.mxu0 0
        %2930 = vmatpush1.bf16.msra.mxu0 %v2840
        %2931 = vmatprep.subr.bf16.mxu0 0
        %2932 = vmatpush1.bf16.msra.mxu0 %v2839
        %2933 = vmatprep.subr.bf16.mxu0 0
        %2934 = vmatpush1.bf16.msra.mxu0 %v2838
        %2935 = vmatprep.subr.bf16.mxu0 0
        %2936 = vmatpush1.bf16.msra.mxu0 %v2837
        %2937 = vmatprep.subr.bf16.mxu0 0
        %2938 = vmatpush1.bf16.msra.mxu0 %v2836
        %2939 = vmatprep.subr.bf16.mxu0 0
        %2940 = vmatpush1.bf16.msra.mxu0 %v2835
        %2941 = vmatprep.subr.bf16.mxu0 0
        %2942 = vmatpush2.bf16.msra.mxu0 0
        %2943 = vmatprep.subr.bf16.mxu0 0
        %2944 = vmatpush2.bf16.msra.mxu0 0
        %2945 = vmatprep.subr.bf16.mxu0 0
        %2946 = vmatpush2.bf16.msra.mxu0 0
        %2947 = vmatprep.subr.bf16.mxu0 0
        %2948 = vmatpush2.bf16.msra.mxu0 0
        %2949 = vmatprep.subr.bf16.mxu0 0
        %2950 = vmatpush2.bf16.msra.mxu0 0
        %2951 = vmatprep.subr.bf16.mxu0 0
        %2952 = vmatpush2.bf16.msra.mxu0 0
        %2953 = vmatprep.subr.bf16.mxu0 0
        %2954 = vmatpush2.bf16.msra.mxu0 0
        %2955 = vmatprep.subr.bf16.mxu0 0
        %2956 = vmatpush2.bf16.msra.mxu0 %v2843
        %2957 = vmatprep.mubr.bf16.mxu0 %v2854
        %2958 = vmatmul.mubr.bf16.gmra.mxu0 %v2366
        %v2959 = vpop.f32.mrf.mxu0
        %v2960 = vadd.f32 0.0, %v2959
        %v2961 = vpop.f32.mrf.mxu0
        %v2962 = vpop.f32.mrf.mxu0
        %v2963 = vadd.f32 0.0, %v2962
        %v2964 = vpop.f32.mrf.mxu0
        %2965 = vmatprep.mubr.bf16.mxu0 %v2857
        %2966 = vmatmul.mubr.bf16.gmra.mxu0 %v2391
        %v2967 = vpop.f32.mrf.mxu0
        %v2968 = vadd.f32 0.0, %v2967
        %v2969 = vpop.f32.mrf.mxu0
        %v2970 = vpop.f32.mrf.mxu0
        %v2971 = vadd.f32 0.0, %v2970
        %v2972 = vpop.f32.mrf.mxu0
        %2973 = vmatprep.mubr.bf16.mxu0 %v2860
        %2974 = vmatmul.mubr.bf16.gmra.mxu0 %v2408
        %v2975 = vpop.f32.mrf.mxu0
        %v2976 = vadd.f32 0.0, %v2975
        %v2977 = vpop.f32.mrf.mxu0
        %v2978 = vpop.f32.mrf.mxu0
        %v2979 = vadd.f32 0.0, %v2978
        %v2980 = vpop.f32.mrf.mxu0
        %2981 = vmatprep.mubr.bf16.mxu0 %v2863
        %2982 = vmatmul.mubr.bf16.gmra.mxu0 %v2425
        %v2983 = vpop.f32.mrf.mxu0
        %v2984 = vadd.f32 0.0, %v2983
        %v2985 = vpop.f32.mrf.mxu0
        %v2986 = vpop.f32.mrf.mxu0
        %v2987 = vadd.f32 0.0, %v2986
        %v2988 = vpop.f32.mrf.mxu0
        %2989 = vmatprep.mubr.bf16.mxu0 %v2866
        %2990 = vmatmul.mubr.bf16.gmra.mxu0 %v2442
        %v2991 = vpop.f32.mrf.mxu0
        %v2992 = vadd.f32 0.0, %v2991
        %v2993 = vpop.f32.mrf.mxu0
        %v2994 = vpop.f32.mrf.mxu0
        %v2995 = vadd.f32 0.0, %v2994
        %v2996 = vpop.f32.mrf.mxu0
        %2997 = vmatprep.mubr.bf16.mxu0 %v2869
        %2998 = vmatmul.mubr.bf16.gmra.mxu0 %v2459
        %v2999 = vpop.f32.mrf.mxu0
        %v3000 = vadd.f32 0.0, %v2999
        %v3001 = vpop.f32.mrf.mxu0
        %v3002 = vpop.f32.mrf.mxu0
        %v3003 = vadd.f32 0.0, %v3002
        %v3004 = vpop.f32.mrf.mxu0
        %3005 = vmatprep.mubr.bf16.mxu0 %v2872
        %3006 = vmatmul.mubr.bf16.gmra.mxu0 %v2476
        %v3007 = vpop.f32.mrf.mxu0
        %v3008 = vadd.f32 0.0, %v3007
        %v3009 = vpop.f32.mrf.mxu0
        %v3010 = vpop.f32.mrf.mxu0
        %v3011 = vadd.f32 0.0, %v3010
        %v3012 = vpop.f32.mrf.mxu0
        %3013 = vmatprep.mubr.bf16.mxu0 %v2875
        %3014 = vmatmul.mubr.bf16.gmra.mxu0 %v2493
        %v3015 = vpop.f32.mrf.mxu0
        %v3016 = vadd.f32 0.0, %v3015
        %v3017 = vpop.f32.mrf.mxu0
        %v3018 = vpop.f32.mrf.mxu0
        %v3019 = vadd.f32 0.0, %v3018
        %v3020 = vpop.f32.mrf.mxu0
        %3021 = vmatprep.mubr.bf16.mxu0 %v2878
        %3022 = vmatmul.mubr.bf16.gmra.mxu0 %v2510
        %v3023 = vpop.f32.mrf.mxu0
        %v3024 = vadd.f32 0.0, %v3023
        %v3025 = vpop.f32.mrf.mxu0
        %v3026 = vpop.f32.mrf.mxu0
        %v3027 = vadd.f32 0.0, %v3026
        %v3028 = vpop.f32.mrf.mxu0
        %3029 = vmatprep.mubr.bf16.mxu0 %v2881
        %3030 = vmatmul.mubr.bf16.gmra.mxu0 %v2527
        %v3031 = vpop.f32.mrf.mxu0
        %v3032 = vadd.f32 0.0, %v3031
        %v3033 = vpop.f32.mrf.mxu0
        %v3034 = vpop.f32.mrf.mxu0
        %v3035 = vadd.f32 0.0, %v3034
        %v3036 = vpop.f32.mrf.mxu0
        %3037 = vmatprep.mubr.bf16.mxu0 %v2884
        %3038 = vmatmul.mubr.bf16.gmra.mxu0 %v2544
        %v3039 = vpop.f32.mrf.mxu0
        %v3040 = vadd.f32 0.0, %v3039
        %v3041 = vpop.f32.mrf.mxu0
        %v3042 = vpop.f32.mrf.mxu0
        %v3043 = vadd.f32 0.0, %v3042
        %v3044 = vpop.f32.mrf.mxu0
        %3045 = vmatprep.mubr.bf16.mxu0 %v2887
        %3046 = vmatmul.mubr.bf16.gmra.mxu0 %v2561
        %v3047 = vpop.f32.mrf.mxu0
        %v3048 = vadd.f32 0.0, %v3047
        %v3049 = vpop.f32.mrf.mxu0
        %v3050 = vpop.f32.mrf.mxu0
        %v3051 = vadd.f32 0.0, %v3050
        %v3052 = vpop.f32.mrf.mxu0
        %3053 = vmatprep.mubr.bf16.mxu0 %v2890
        %3054 = vmatmul.mubr.bf16.gmra.mxu0 %v2578
        %v3055 = vpop.f32.mrf.mxu0
        %v3056 = vadd.f32 0.0, %v3055
        %v3057 = vpop.f32.mrf.mxu0
        %v3058 = vpop.f32.mrf.mxu0
        %v3059 = vadd.f32 0.0, %v3058
        %v3060 = vpop.f32.mrf.mxu0
        %3061 = vmatprep.mubr.bf16.mxu0 %v2893
        %3062 = vmatmul.mubr.bf16.gmra.mxu0 %v2595
        %v3063 = vpop.f32.mrf.mxu0
        %v3064 = vadd.f32 0.0, %v3063
        %v3065 = vpop.f32.mrf.mxu0
        %v3066 = vpop.f32.mrf.mxu0
        %v3067 = vadd.f32 0.0, %v3066
        %v3068 = vpop.f32.mrf.mxu0
        %3069 = vmatprep.mubr.bf16.mxu0 %v2896
        %3070 = vmatmul.mubr.bf16.gmra.mxu0 %v2612
        %v3071 = vpop.f32.mrf.mxu0
        %v3072 = vadd.f32 0.0, %v3071
        %v3073 = vpop.f32.mrf.mxu0
        %v3074 = vpop.f32.mrf.mxu0
        %v3075 = vadd.f32 0.0, %v3074
        %v3076 = vpop.f32.mrf.mxu0
        %3077 = vmatprep.mubr.bf16.mxu0 %v2899
        %3078 = vmatmul.mubr.bf16.gmra.mxu0 %v2629
        %v3079 = vpop.f32.mrf.mxu0
        %v3080 = vadd.f32 0.0, %v3079
        %v3081 = vpop.f32.mrf.mxu0
        %v3082 = vpop.f32.mrf.mxu0
        %v3083 = vadd.f32 0.0, %v3082
        %v3084 = vpop.f32.mrf.mxu0
        %3085 = vmatprep.mubr.bf16.mxu0 %v2902
        %3086 = vmatmul.mubr.bf16.gmra.mxu0 %v2646
        %v3087 = vpop.f32.mrf.mxu0
        %v3088 = vadd.f32 0.0, %v3087
        %v3089 = vpop.f32.mrf.mxu0
        %v3090 = vpop.f32.mrf.mxu0
        %v3091 = vadd.f32 0.0, %v3090
        %v3092 = vpop.f32.mrf.mxu0
        %3093 = vmatprep.mubr.bf16.mxu0 %v2905
        %3094 = vmatmul.mubr.bf16.gmra.mxu0 %v2663
        %v3095 = vpop.f32.mrf.mxu0
        %v3096 = vadd.f32 0.0, %v3095
        %v3097 = vpop.f32.mrf.mxu0
        %v3098 = vpop.f32.mrf.mxu0
        %v3099 = vadd.f32 0.0, %v3098
        %v3100 = vpop.f32.mrf.mxu0
        %3101 = vmatprep.mubr.bf16.mxu0 %v2908
        %3102 = vmatmul.mubr.bf16.gmra.mxu0 %v2680
        %v3103 = vpop.f32.mrf.mxu0
        %v3104 = vadd.f32 0.0, %v3103
        %v3105 = vpop.f32.mrf.mxu0
        %v3106 = vpop.f32.mrf.mxu0
        %v3107 = vadd.f32 0.0, %v3106
        %v3108 = vpop.f32.mrf.mxu0
        %3109 = vmatprep.mubr.bf16.mxu0 %v2911
        %3110 = vmatmul.mubr.bf16.gmra.mxu0 %v2697
        %v3111 = vpop.f32.mrf.mxu0
        %v3112 = vadd.f32 0.0, %v3111
        %v3113 = vpop.f32.mrf.mxu0
        %v3114 = vpop.f32.mrf.mxu0
        %v3115 = vadd.f32 0.0, %v3114
        %v3116 = vpop.f32.mrf.mxu0
        %3117 = vmatprep.mubr.bf16.mxu0 %v2914
        %3118 = vmatmul.mubr.bf16.gmra.mxu0 %v2714
        %v3119 = vpop.f32.mrf.mxu0
        %v3120 = vadd.f32 0.0, %v3119
        %v3121 = vpop.f32.mrf.mxu0
        %v3122 = vpop.f32.mrf.mxu0
        %v3123 = vadd.f32 0.0, %v3122
        %v3124 = vpop.f32.mrf.mxu0
        %3125 = vmatprep.mubr.bf16.mxu0 %v2917
        %3126 = vmatmul.mubr.bf16.gmra.mxu0 %v2731
        %v3127 = vpop.f32.mrf.mxu0
        %v3128 = vadd.f32 0.0, %v3127
        %v3129 = vpop.f32.mrf.mxu0
        %v3130 = vpop.f32.mrf.mxu0
        %v3131 = vadd.f32 0.0, %v3130
        %v3132 = vpop.f32.mrf.mxu0
        %3133 = vmatprep.mubr.bf16.mxu0 %v2920
        %3134 = vmatmul.mubr.bf16.gmra.mxu0 %v2748
        %v3135 = vpop.f32.mrf.mxu0
        %v3136 = vadd.f32 0.0, %v3135
        %v3137 = vpop.f32.mrf.mxu0
        %v3138 = vpop.f32.mrf.mxu0
        %v3139 = vadd.f32 0.0, %v3138
        %v3140 = vpop.f32.mrf.mxu0
        %3141 = vmatprep.mubr.bf16.mxu0 %v2923
        %3142 = vmatmul.mubr.bf16.gmra.mxu0 %v2765
        %v3143 = vpop.f32.mrf.mxu0
        %v3144 = vadd.f32 0.0, %v3143
        %v3145 = vpop.f32.mrf.mxu0
        %v3146 = vpop.f32.mrf.mxu0
        %v3147 = vadd.f32 0.0, %v3146
        %v3148 = vpop.f32.mrf.mxu0
        %3149 = vdwg.mxu0
        %v3150 = vld [vmem:[%s3] sm:$0x1]
        %v3151 = vlaneseq
        %v3152 = vshrl.u32 %v3151, 7
        %v3153 = vsub.s32 0, %v3152
        %v3154 = vrot.slane %v3150, %v3153
        %v3155 = vmul.f32 %v2960, %v3154
        %v3156 = vmul.f32 %v2963, %v3154
        %v3157 = vmul.f32 %v2968, %v3154
        %v3158 = vmul.f32 %v2971, %v3154
        %v3159 = vmul.f32 %v2976, %v3154
        %v3160 = vmul.f32 %v2979, %v3154
        %v3161 = vmul.f32 %v2984, %v3154
        %v3162 = vmul.f32 %v2987, %v3154
        %v3163 = vmul.f32 %v2992, %v3154
        %v3164 = vmul.f32 %v2995, %v3154
        %v3165 = vmul.f32 %v3000, %v3154
        %v3166 = vmul.f32 %v3003, %v3154
        %v3167 = vmul.f32 %v3008, %v3154
        %v3168 = vmul.f32 %v3011, %v3154
        %v3169 = vmul.f32 %v3016, %v3154
        %v3170 = vmul.f32 %v3019, %v3154
        %v3171 = vmul.f32 %v3024, %v3154
        %v3172 = vmul.f32 %v3027, %v3154
        %v3173 = vmul.f32 %v3032, %v3154
        %v3174 = vmul.f32 %v3035, %v3154
        %v3175 = vmul.f32 %v3040, %v3154
        %v3176 = vmul.f32 %v3043, %v3154
        %v3177 = vmul.f32 %v3048, %v3154
        %v3178 = vmul.f32 %v3051, %v3154
        %v3179 = vmul.f32 %v3056, %v3154
        %v3180 = vmul.f32 %v3059, %v3154
        %v3181 = vmul.f32 %v3064, %v3154
        %v3182 = vmul.f32 %v3067, %v3154
        %v3183 = vmul.f32 %v3072, %v3154
        %v3184 = vmul.f32 %v3075, %v3154
        %v3185 = vmul.f32 %v3080, %v3154
        %v3186 = vmul.f32 %v3083, %v3154
        %v3187 = vmul.f32 %v3088, %v3154
        %v3188 = vmul.f32 %v3091, %v3154
        %v3189 = vmul.f32 %v3096, %v3154
        %v3190 = vmul.f32 %v3099, %v3154
        %v3191 = vmul.f32 %v3104, %v3154
        %v3192 = vmul.f32 %v3107, %v3154
        %v3193 = vmul.f32 %v3112, %v3154
        %v3194 = vmul.f32 %v3115, %v3154
        %v3195 = vmul.f32 %v3120, %v3154
        %v3196 = vmul.f32 %v3123, %v3154
        %v3197 = vmul.f32 %v3128, %v3154
        %v3198 = vmul.f32 %v3131, %v3154
        %v3199 = vmul.f32 %v3136, %v3154
        %v3200 = vmul.f32 %v3139, %v3154
        %v3201 = vmul.f32 %v3144, %v3154
        %v3202 = vmul.f32 %v3147, %v3154
        %v3203 = vld [vmem:[%s3 + $0x1] sm:$0x1]
        %v3204 = vlaneseq
        %v3205 = vshrl.u32 %v3204, 7
        %v3206 = vsub.s32 0, %v3205
        %v3207 = vrot.slane %v3203, %v3206
        %v3208 = vadd.f32 %v3155, %v3207
        %v3209 = vadd.f32 %v3156, %v3207
        %v3210 = vadd.f32 %v3157, %v3207
        %v3211 = vadd.f32 %v3158, %v3207
        %v3212 = vadd.f32 %v3159, %v3207
        %v3213 = vadd.f32 %v3160, %v3207
        %v3214 = vadd.f32 %v3161, %v3207
        %v3215 = vadd.f32 %v3162, %v3207
        %v3216 = vadd.f32 %v3163, %v3207
        %v3217 = vadd.f32 %v3164, %v3207
        %v3218 = vadd.f32 %v3165, %v3207
        %v3219 = vadd.f32 %v3166, %v3207
        %v3220 = vadd.f32 %v3167, %v3207
        %v3221 = vadd.f32 %v3168, %v3207
        %v3222 = vadd.f32 %v3169, %v3207
        %v3223 = vadd.f32 %v3170, %v3207
        %v3224 = vadd.f32 %v3171, %v3207
        %v3225 = vadd.f32 %v3172, %v3207
        %v3226 = vadd.f32 %v3173, %v3207
        %v3227 = vadd.f32 %v3174, %v3207
        %v3228 = vadd.f32 %v3175, %v3207
        %v3229 = vadd.f32 %v3176, %v3207
        %v3230 = vadd.f32 %v3177, %v3207
        %v3231 = vadd.f32 %v3178, %v3207
        %v3232 = vadd.f32 %v3179, %v3207
        %v3233 = vadd.f32 %v3180, %v3207
        %v3234 = vadd.f32 %v3181, %v3207
        %v3235 = vadd.f32 %v3182, %v3207
        %v3236 = vadd.f32 %v3183, %v3207
        %v3237 = vadd.f32 %v3184, %v3207
        %v3238 = vadd.f32 %v3185, %v3207
        %v3239 = vadd.f32 %v3186, %v3207
        %v3240 = vadd.f32 %v3187, %v3207
        %v3241 = vadd.f32 %v3188, %v3207
        %v3242 = vadd.f32 %v3189, %v3207
        %v3243 = vadd.f32 %v3190, %v3207
        %v3244 = vadd.f32 %v3191, %v3207
        %v3245 = vadd.f32 %v3192, %v3207
        %v3246 = vadd.f32 %v3193, %v3207
        %v3247 = vadd.f32 %v3194, %v3207
        %v3248 = vadd.f32 %v3195, %v3207
        %v3249 = vadd.f32 %v3196, %v3207
        %v3250 = vadd.f32 %v3197, %v3207
        %v3251 = vadd.f32 %v3198, %v3207
        %v3252 = vadd.f32 %v3199, %v3207
        %v3253 = vadd.f32 %v3200, %v3207
        %v3254 = vadd.f32 %v3201, %v3207
        %v3255 = vadd.f32 %v3202, %v3207
        %v3256 = vmax.f32 %v3208, 0.0
        %v3257 = vmax.f32 %v3209, 0.0
        %v3258 = vmax.f32 %v3210, 0.0
        %v3259 = vmax.f32 %v3211, 0.0
        %v3260 = vmax.f32 %v3212, 0.0
        %v3261 = vmax.f32 %v3213, 0.0
        %v3262 = vmax.f32 %v3214, 0.0
        %v3263 = vmax.f32 %v3215, 0.0
        %v3264 = vmax.f32 %v3216, 0.0
        %v3265 = vmax.f32 %v3217, 0.0
        %v3266 = vmax.f32 %v3218, 0.0
        %v3267 = vmax.f32 %v3219, 0.0
        %v3268 = vmax.f32 %v3220, 0.0
        %v3269 = vmax.f32 %v3221, 0.0
        %v3270 = vmax.f32 %v3222, 0.0
        %v3271 = vmax.f32 %v3223, 0.0
        %v3272 = vmax.f32 %v3224, 0.0
        %v3273 = vmax.f32 %v3225, 0.0
        %v3274 = vmax.f32 %v3226, 0.0
        %v3275 = vmax.f32 %v3227, 0.0
        %v3276 = vmax.f32 %v3228, 0.0
        %v3277 = vmax.f32 %v3229, 0.0
        %v3278 = vmax.f32 %v3230, 0.0
        %v3279 = vmax.f32 %v3231, 0.0
        %v3280 = vmax.f32 %v3232, 0.0
        %v3281 = vmax.f32 %v3233, 0.0
        %v3282 = vmax.f32 %v3234, 0.0
        %v3283 = vmax.f32 %v3235, 0.0
        %v3284 = vmax.f32 %v3236, 0.0
        %v3285 = vmax.f32 %v3237, 0.0
        %v3286 = vmax.f32 %v3238, 0.0
        %v3287 = vmax.f32 %v3239, 0.0
        %v3288 = vmax.f32 %v3240, 0.0
        %v3289 = vmax.f32 %v3241, 0.0
        %v3290 = vmax.f32 %v3242, 0.0
        %v3291 = vmax.f32 %v3243, 0.0
        %v3292 = vmax.f32 %v3244, 0.0
        %v3293 = vmax.f32 %v3245, 0.0
        %v3294 = vmax.f32 %v3246, 0.0
        %v3295 = vmax.f32 %v3247, 0.0
        %v3296 = vmax.f32 %v3248, 0.0
        %v3297 = vmax.f32 %v3249, 0.0
        %v3298 = vmax.f32 %v3250, 0.0
        %v3299 = vmax.f32 %v3251, 0.0
        %v3300 = vmax.f32 %v3252, 0.0
        %v3301 = vmax.f32 %v3253, 0.0
        %v3302 = vmax.f32 %v3254, 0.0
        %v3303 = vmax.f32 %v3255, 0.0
        %3305 = vset.pattern.permute.xlu0 0
        %3306 = vperm.xlu0 %3305, %v483
        %v3307 = vpop.permute.xlu0 %3306
        %3310 = vset.pattern.permute.xlu0 0
        %3311 = vperm.xlu0 %3310, %v484
        %v3312 = vpop.permute.xlu0 %3311
        %3315 = vset.pattern.permute.xlu0 0
        %3316 = vperm.xlu0 %3315, %v485
        %v3317 = vpop.permute.xlu0 %3316
        %3320 = vset.pattern.permute.xlu0 0
        %3321 = vperm.xlu0 %3320, %v486
        %v3322 = vpop.permute.xlu0 %3321
        %3325 = vset.pattern.permute.xlu0 0
        %3326 = vperm.xlu0 %3325, %v487
        %v3327 = vpop.permute.xlu0 %3326
        %3330 = vset.pattern.permute.xlu0 0
        %3331 = vperm.xlu0 %3330, %v488
        %v3332 = vpop.permute.xlu0 %3331
        %3335 = vset.pattern.permute.xlu0 0
        %3336 = vperm.xlu0 %3335, %v489
        %v3337 = vpop.permute.xlu0 %3336
        %3340 = vset.pattern.permute.xlu0 0
        %3341 = vperm.xlu0 %3340, %v490
        %v3342 = vpop.permute.xlu0 %3341
        %3345 = vset.pattern.permute.xlu0 0
        %3346 = vperm.xlu0 %3345, %v491
        %v3347 = vpop.permute.xlu0 %3346
        %3350 = vset.pattern.permute.xlu0 0
        %3351 = vperm.xlu0 %3350, %v492
        %v3352 = vpop.permute.xlu0 %3351
        %3355 = vset.pattern.permute.xlu0 0
        %3356 = vperm.xlu0 %3355, %v493
        %v3357 = vpop.permute.xlu0 %3356
        %3360 = vset.pattern.permute.xlu0 0
        %3361 = vperm.xlu0 %3360, %v494
        %v3362 = vpop.permute.xlu0 %3361
        %3365 = vset.pattern.permute.xlu0 0
        %3366 = vperm.xlu0 %3365, %v495
        %v3367 = vpop.permute.xlu0 %3366
        %3370 = vset.pattern.permute.xlu0 0
        %3371 = vperm.xlu0 %3370, %v496
        %v3372 = vpop.permute.xlu0 %3371
        %3375 = vset.pattern.permute.xlu0 0
        %3376 = vperm.xlu0 %3375, %v497
        %v3377 = vpop.permute.xlu0 %3376
        %3380 = vset.pattern.permute.xlu0 0
        %3381 = vperm.xlu0 %3380, %v498
        %v3382 = vpop.permute.xlu0 %3381
        %3385 = vset.pattern.permute.xlu0 0
        %3386 = vperm.xlu0 %3385, %v499
        %v3387 = vpop.permute.xlu0 %3386
        %3390 = vset.pattern.permute.xlu0 0
        %3391 = vperm.xlu0 %3390, %v500
        %v3392 = vpop.permute.xlu0 %3391
        %3395 = vset.pattern.permute.xlu0 0
        %3396 = vperm.xlu0 %3395, %v501
        %v3397 = vpop.permute.xlu0 %3396
        %3400 = vset.pattern.permute.xlu0 0
        %3401 = vperm.xlu0 %3400, %v502
        %v3402 = vpop.permute.xlu0 %3401
        %3405 = vset.pattern.permute.xlu0 0
        %3406 = vperm.xlu0 %3405, %v503
        %v3407 = vpop.permute.xlu0 %3406
        %3410 = vset.pattern.permute.xlu0 0
        %3411 = vperm.xlu0 %3410, %v504
        %v3412 = vpop.permute.xlu0 %3411
        %3415 = vset.pattern.permute.xlu0 0
        %3416 = vperm.xlu0 %3415, %v505
        %v3417 = vpop.permute.xlu0 %3416
        %3420 = vset.pattern.permute.xlu0 0
        %3421 = vperm.xlu0 %3420, %v506
        %v3422 = vpop.permute.xlu0 %3421
        %3425 = vset.pattern.permute.xlu0 0
        %3426 = vperm.xlu0 %3425, %v507
        %v3427 = vpop.permute.xlu0 %3426
        %3430 = vset.pattern.permute.xlu0 0
        %3431 = vperm.xlu0 %3430, %v508
        %v3432 = vpop.permute.xlu0 %3431
        %3435 = vset.pattern.permute.xlu0 0
        %3436 = vperm.xlu0 %3435, %v509
        %v3437 = vpop.permute.xlu0 %3436
        %3440 = vset.pattern.permute.xlu0 0
        %3441 = vperm.xlu0 %3440, %v510
        %v3442 = vpop.permute.xlu0 %3441
        %3445 = vset.pattern.permute.xlu0 0
        %3446 = vperm.xlu0 %3445, %v511
        %v3447 = vpop.permute.xlu0 %3446
        %3450 = vset.pattern.permute.xlu0 0
        %3451 = vperm.xlu0 %3450, %v512
        %v3452 = vpop.permute.xlu0 %3451
        %3455 = vset.pattern.permute.xlu0 0
        %3456 = vperm.xlu0 %3455, %v513
        %v3457 = vpop.permute.xlu0 %3456
        %3460 = vset.pattern.permute.xlu0 0
        %3461 = vperm.xlu0 %3460, %v514
        %v3462 = vpop.permute.xlu0 %3461
        %3465 = vset.pattern.permute.xlu0 0
        %3466 = vperm.xlu0 %3465, %v515
        %v3467 = vpop.permute.xlu0 %3466
        %3470 = vset.pattern.permute.xlu0 0
        %3471 = vperm.xlu0 %3470, %v516
        %v3472 = vpop.permute.xlu0 %3471
        %3475 = vset.pattern.permute.xlu0 0
        %3476 = vperm.xlu0 %3475, %v517
        %v3477 = vpop.permute.xlu0 %3476
        %3480 = vset.pattern.permute.xlu0 0
        %3481 = vperm.xlu0 %3480, %v518
        %v3482 = vpop.permute.xlu0 %3481
        %3485 = vset.pattern.permute.xlu0 0
        %3486 = vperm.xlu0 %3485, %v519
        %v3487 = vpop.permute.xlu0 %3486
        %3490 = vset.pattern.permute.xlu0 0
        %3491 = vperm.xlu0 %3490, %v520
        %v3492 = vpop.permute.xlu0 %3491
        %3495 = vset.pattern.permute.xlu0 0
        %3496 = vperm.xlu0 %3495, %v521
        %v3497 = vpop.permute.xlu0 %3496
        %3500 = vset.pattern.permute.xlu0 0
        %3501 = vperm.xlu0 %3500, %v522
        %v3502 = vpop.permute.xlu0 %3501
        %3505 = vset.pattern.permute.xlu0 0
        %3506 = vperm.xlu0 %3505, %v523
        %v3507 = vpop.permute.xlu0 %3506
        %3510 = vset.pattern.permute.xlu0 0
        %3511 = vperm.xlu0 %3510, %v524
        %v3512 = vpop.permute.xlu0 %3511
        %3515 = vset.pattern.permute.xlu0 0
        %3516 = vperm.xlu0 %3515, %v525
        %v3517 = vpop.permute.xlu0 %3516
        %3520 = vset.pattern.permute.xlu0 0
        %3521 = vperm.xlu0 %3520, %v526
        %v3522 = vpop.permute.xlu0 %3521
        %3525 = vset.pattern.permute.xlu0 0
        %3526 = vperm.xlu0 %3525, %v527
        %v3527 = vpop.permute.xlu0 %3526
        %3530 = vset.pattern.permute.xlu0 0
        %3531 = vperm.xlu0 %3530, %v528
        %v3532 = vpop.permute.xlu0 %3531
        %3535 = vset.pattern.permute.xlu0 0
        %3536 = vperm.xlu0 %3535, %v529
        %v3537 = vpop.permute.xlu0 %3536
        %3540 = vset.pattern.permute.xlu0 0
        %3541 = vperm.xlu0 %3540, %v530
        %v3542 = vpop.permute.xlu0 %3541
        %v3544 = vmul.f32 %v3256, %v3307
        %v3545 = vmul.f32 %v3257, %v3312
        %v3546 = vmul.f32 %v3258, %v3317
        %v3547 = vmul.f32 %v3259, %v3322
        %v3548 = vmul.f32 %v3260, %v3327
        %v3549 = vmul.f32 %v3261, %v3332
        %v3550 = vmul.f32 %v3262, %v3337
        %v3551 = vmul.f32 %v3263, %v3342
        %v3552 = vmul.f32 %v3264, %v3347
        %v3553 = vmul.f32 %v3265, %v3352
        %v3554 = vmul.f32 %v3266, %v3357
        %v3555 = vmul.f32 %v3267, %v3362
        %v3556 = vmul.f32 %v3268, %v3367
        %v3557 = vmul.f32 %v3269, %v3372
        %v3558 = vmul.f32 %v3270, %v3377
        %v3559 = vmul.f32 %v3271, %v3382
        %v3560 = vmul.f32 %v3272, %v3387
        %v3561 = vmul.f32 %v3273, %v3392
        %v3562 = vmul.f32 %v3274, %v3397
        %v3563 = vmul.f32 %v3275, %v3402
        %v3564 = vmul.f32 %v3276, %v3407
        %v3565 = vmul.f32 %v3277, %v3412
        %v3566 = vmul.f32 %v3278, %v3417
        %v3567 = vmul.f32 %v3279, %v3422
        %v3568 = vmul.f32 %v3280, %v3427
        %v3569 = vmul.f32 %v3281, %v3432
        %v3570 = vmul.f32 %v3282, %v3437
        %v3571 = vmul.f32 %v3283, %v3442
        %v3572 = vmul.f32 %v3284, %v3447
        %v3573 = vmul.f32 %v3285, %v3452
        %v3574 = vmul.f32 %v3286, %v3457
        %v3575 = vmul.f32 %v3287, %v3462
        %v3576 = vmul.f32 %v3288, %v3467
        %v3577 = vmul.f32 %v3289, %v3472
        %v3578 = vmul.f32 %v3290, %v3477
        %v3579 = vmul.f32 %v3291, %v3482
        %v3580 = vmul.f32 %v3292, %v3487
        %v3581 = vmul.f32 %v3293, %v3492
        %v3582 = vmul.f32 %v3294, %v3497
        %v3583 = vmul.f32 %v3295, %v3502
        %v3584 = vmul.f32 %v3296, %v3507
        %v3585 = vmul.f32 %v3297, %v3512
        %v3586 = vmul.f32 %v3298, %v3517
        %v3587 = vmul.f32 %v3299, %v3522
        %v3588 = vmul.f32 %v3300, %v3527
        %v3589 = vmul.f32 %v3301, %v3532
        %v3590 = vmul.f32 %v3302, %v3537
        %v3591 = vmul.f32 %v3303, %v3542
        %v3592 = vld [vmem:[%s2] sm:$0xf]
        %v3593 = vld [vmem:[%s2 + $0x4] sm:$0xf]
        %v3596 = vunpack.c.l.b16 %v3592
        %v3597 = vunpack.c.l.b16 %v3593
        %v3598 = vpack.c.b16 %v3597, %v3596
        %v3600 = vsel %vm1973, %v976, 0
        %v3602 = vsel %vm1973, %v977, 0
        %v3604 = vsel %vm1973, %v978, 0
        %v3606 = vsel %vm1973, %v979, 0
        %v3608 = vsel %vm1973, %v980, 0
        %v3610 = vsel %vm1973, %v981, 0
        %v3612 = vsel %vm1973, %v982, 0
        %v3614 = vsel %vm1973, %v983, 0
        %v3616 = vsel %vm1973, %v984, 0
        %v3618 = vsel %vm1973, %v985, 0
        %v3620 = vsel %vm1973, %v986, 0
        %v3622 = vsel %vm1973, %v987, 0
        %v3624 = vsel %vm1973, %v988, 0
        %v3626 = vsel %vm1973, %v989, 0
        %v3628 = vsel %vm1973, %v990, 0
        %v3630 = vsel %vm1973, %v991, 0
        %v3632 = vsel %vm1973, %v992, 0
        %v3634 = vsel %vm1973, %v993, 0
        %v3636 = vsel %vm1973, %v994, 0
        %v3638 = vsel %vm1973, %v995, 0
        %v3640 = vsel %vm1973, %v996, 0
        %v3642 = vsel %vm1973, %v997, 0
        %v3644 = vsel %vm1973, %v1453, 0
        %v3646 = vsel %vm1973, %v1454, 0
        %3648 = vmatprep.subr.bf16.mxu0 0
        %3649 = vmatpush1.bf16.msra.mxu0 0
        %3650 = vmatprep.subr.bf16.mxu0 0
        %3651 = vmatpush1.bf16.msra.mxu0 0
        %3652 = vmatprep.subr.bf16.mxu0 0
        %3653 = vmatpush1.bf16.msra.mxu0 0
        %3654 = vmatprep.subr.bf16.mxu0 0
        %3655 = vmatpush1.bf16.msra.mxu0 0
        %3656 = vmatprep.subr.bf16.mxu0 0
        %3657 = vmatpush1.bf16.msra.mxu0 0
        %3658 = vmatprep.subr.bf16.mxu0 0
        %3659 = vmatpush1.bf16.msra.mxu0 0
        %3660 = vmatprep.subr.bf16.mxu0 0
        %3661 = vmatpush1.bf16.msra.mxu0 0
        %3662 = vmatprep.subr.bf16.mxu0 0
        %3663 = vmatpush1.bf16.msra.mxu0 %v3598
        %3664 = vmatprep.subr.bf16.mxu0 0
        %3665 = vmatpush2.bf16.msra.mxu0 0
        %3666 = vmatprep.subr.bf16.mxu0 0
        %3667 = vmatpush2.bf16.msra.mxu0 0
        %3668 = vmatprep.subr.bf16.mxu0 0
        %3669 = vmatpush2.bf16.msra.mxu0 0
        %3670 = vmatprep.subr.bf16.mxu0 0
        %3671 = vmatpush2.bf16.msra.mxu0 0
        %3672 = vmatprep.subr.bf16.mxu0 0
        %3673 = vmatpush2.bf16.msra.mxu0 0
        %3674 = vmatprep.subr.bf16.mxu0 0
        %3675 = vmatpush2.bf16.msra.mxu0 0
        %3676 = vmatprep.subr.bf16.mxu0 0
        %3677 = vmatpush2.bf16.msra.mxu0 0
        %3678 = vmatprep.subr.bf16.mxu0 0
        %3679 = vmatpush2.bf16.msra.mxu0 0
        %3680 = vmatprep.mubr.bf16.mxu0 0
        %3681 = vmatmul.mubr.bf16.gmra.mxu0 %v3600
        %v3682 = vpop.f32.mrf.mxu0
        %v3683 = vadd.f32 0.0, %v3682
        %v3684 = vpop.f32.mrf.mxu0
        %v3685 = vpop.f32.mrf.mxu0
        %v3686 = vadd.f32 0.0, %v3685
        %v3687 = vpop.f32.mrf.mxu0
        %3688 = vmatprep.mubr.bf16.mxu0 0
        %3689 = vmatmul.mubr.bf16.gmra.mxu0 %v3602
        %v3690 = vpop.f32.mrf.mxu0
        %v3691 = vadd.f32 0.0, %v3690
        %v3692 = vpop.f32.mrf.mxu0
        %v3693 = vpop.f32.mrf.mxu0
        %v3694 = vadd.f32 0.0, %v3693
        %v3695 = vpop.f32.mrf.mxu0
        %3696 = vmatprep.mubr.bf16.mxu0 0
        %3697 = vmatmul.mubr.bf16.gmra.mxu0 %v3604
        %v3698 = vpop.f32.mrf.mxu0
        %v3699 = vadd.f32 0.0, %v3698
        %v3700 = vpop.f32.mrf.mxu0
        %v3701 = vpop.f32.mrf.mxu0
        %v3702 = vadd.f32 0.0, %v3701
        %v3703 = vpop.f32.mrf.mxu0
        %3704 = vmatprep.mubr.bf16.mxu0 0
        %3705 = vmatmul.mubr.bf16.gmra.mxu0 %v3606
        %v3706 = vpop.f32.mrf.mxu0
        %v3707 = vadd.f32 0.0, %v3706
        %v3708 = vpop.f32.mrf.mxu0
        %v3709 = vpop.f32.mrf.mxu0
        %v3710 = vadd.f32 0.0, %v3709
        %v3711 = vpop.f32.mrf.mxu0
        %3712 = vmatprep.mubr.bf16.mxu0 0
        %3713 = vmatmul.mubr.bf16.gmra.mxu0 %v3608
        %v3714 = vpop.f32.mrf.mxu0
        %v3715 = vadd.f32 0.0, %v3714
        %v3716 = vpop.f32.mrf.mxu0
        %v3717 = vpop.f32.mrf.mxu0
        %v3718 = vadd.f32 0.0, %v3717
        %v3719 = vpop.f32.mrf.mxu0
        %3720 = vmatprep.mubr.bf16.mxu0 0
        %3721 = vmatmul.mubr.bf16.gmra.mxu0 %v3610
        %v3722 = vpop.f32.mrf.mxu0
        %v3723 = vadd.f32 0.0, %v3722
        %v3724 = vpop.f32.mrf.mxu0
        %v3725 = vpop.f32.mrf.mxu0
        %v3726 = vadd.f32 0.0, %v3725
        %v3727 = vpop.f32.mrf.mxu0
        %3728 = vmatprep.mubr.bf16.mxu0 0
        %3729 = vmatmul.mubr.bf16.gmra.mxu0 %v3612
        %v3730 = vpop.f32.mrf.mxu0
        %v3731 = vadd.f32 0.0, %v3730
        %v3732 = vpop.f32.mrf.mxu0
        %v3733 = vpop.f32.mrf.mxu0
        %v3734 = vadd.f32 0.0, %v3733
        %v3735 = vpop.f32.mrf.mxu0
        %3736 = vmatprep.mubr.bf16.mxu0 0
        %3737 = vmatmul.mubr.bf16.gmra.mxu0 %v3614
        %v3738 = vpop.f32.mrf.mxu0
        %v3739 = vadd.f32 0.0, %v3738
        %v3740 = vpop.f32.mrf.mxu0
        %v3741 = vpop.f32.mrf.mxu0
        %v3742 = vadd.f32 0.0, %v3741
        %v3743 = vpop.f32.mrf.mxu0
        %3744 = vmatprep.mubr.bf16.mxu0 0
        %3745 = vmatmul.mubr.bf16.gmra.mxu0 %v3616
        %v3746 = vpop.f32.mrf.mxu0
        %v3747 = vadd.f32 0.0, %v3746
        %v3748 = vpop.f32.mrf.mxu0
        %v3749 = vpop.f32.mrf.mxu0
        %v3750 = vadd.f32 0.0, %v3749
        %v3751 = vpop.f32.mrf.mxu0
        %3752 = vmatprep.mubr.bf16.mxu0 0
        %3753 = vmatmul.mubr.bf16.gmra.mxu0 %v3618
        %v3754 = vpop.f32.mrf.mxu0
        %v3755 = vadd.f32 0.0, %v3754
        %v3756 = vpop.f32.mrf.mxu0
        %v3757 = vpop.f32.mrf.mxu0
        %v3758 = vadd.f32 0.0, %v3757
        %v3759 = vpop.f32.mrf.mxu0
        %3760 = vmatprep.mubr.bf16.mxu0 0
        %3761 = vmatmul.mubr.bf16.gmra.mxu0 %v3620
        %v3762 = vpop.f32.mrf.mxu0
        %v3763 = vadd.f32 0.0, %v3762
        %v3764 = vpop.f32.mrf.mxu0
        %v3765 = vpop.f32.mrf.mxu0
        %v3766 = vadd.f32 0.0, %v3765
        %v3767 = vpop.f32.mrf.mxu0
        %3768 = vmatprep.mubr.bf16.mxu0 0
        %3769 = vmatmul.mubr.bf16.gmra.mxu0 %v3622
        %v3770 = vpop.f32.mrf.mxu0
        %v3771 = vadd.f32 0.0, %v3770
        %v3772 = vpop.f32.mrf.mxu0
        %v3773 = vpop.f32.mrf.mxu0
        %v3774 = vadd.f32 0.0, %v3773
        %v3775 = vpop.f32.mrf.mxu0
        %3776 = vmatprep.mubr.bf16.mxu0 0
        %3777 = vmatmul.mubr.bf16.gmra.mxu0 %v3624
        %v3778 = vpop.f32.mrf.mxu0
        %v3779 = vadd.f32 0.0, %v3778
        %v3780 = vpop.f32.mrf.mxu0
        %v3781 = vpop.f32.mrf.mxu0
        %v3782 = vadd.f32 0.0, %v3781
        %v3783 = vpop.f32.mrf.mxu0
        %3784 = vmatprep.mubr.bf16.mxu0 0
        %3785 = vmatmul.mubr.bf16.gmra.mxu0 %v3626
        %v3786 = vpop.f32.mrf.mxu0
        %v3787 = vadd.f32 0.0, %v3786
        %v3788 = vpop.f32.mrf.mxu0
        %v3789 = vpop.f32.mrf.mxu0
        %v3790 = vadd.f32 0.0, %v3789
        %v3791 = vpop.f32.mrf.mxu0
        %3792 = vmatprep.mubr.bf16.mxu0 0
        %3793 = vmatmul.mubr.bf16.gmra.mxu0 %v3628
        %v3794 = vpop.f32.mrf.mxu0
        %v3795 = vadd.f32 0.0, %v3794
        %v3796 = vpop.f32.mrf.mxu0
        %v3797 = vpop.f32.mrf.mxu0
        %v3798 = vadd.f32 0.0, %v3797
        %v3799 = vpop.f32.mrf.mxu0
        %3800 = vmatprep.mubr.bf16.mxu0 0
        %3801 = vmatmul.mubr.bf16.gmra.mxu0 %v3630
        %v3802 = vpop.f32.mrf.mxu0
        %v3803 = vadd.f32 0.0, %v3802
        %v3804 = vpop.f32.mrf.mxu0
        %v3805 = vpop.f32.mrf.mxu0
        %v3806 = vadd.f32 0.0, %v3805
        %v3807 = vpop.f32.mrf.mxu0
        %3808 = vmatprep.mubr.bf16.mxu0 0
        %3809 = vmatmul.mubr.bf16.gmra.mxu0 %v3632
        %v3810 = vpop.f32.mrf.mxu0
        %v3811 = vadd.f32 0.0, %v3810
        %v3812 = vpop.f32.mrf.mxu0
        %v3813 = vpop.f32.mrf.mxu0
        %v3814 = vadd.f32 0.0, %v3813
        %v3815 = vpop.f32.mrf.mxu0
        %3816 = vmatprep.mubr.bf16.mxu0 0
        %3817 = vmatmul.mubr.bf16.gmra.mxu0 %v3634
        %v3818 = vpop.f32.mrf.mxu0
        %v3819 = vadd.f32 0.0, %v3818
        %v3820 = vpop.f32.mrf.mxu0
        %v3821 = vpop.f32.mrf.mxu0
        %v3822 = vadd.f32 0.0, %v3821
        %v3823 = vpop.f32.mrf.mxu0
        %3824 = vmatprep.mubr.bf16.mxu0 0
        %3825 = vmatmul.mubr.bf16.gmra.mxu0 %v3636
        %v3826 = vpop.f32.mrf.mxu0
        %v3827 = vadd.f32 0.0, %v3826
        %v3828 = vpop.f32.mrf.mxu0
        %v3829 = vpop.f32.mrf.mxu0
        %v3830 = vadd.f32 0.0, %v3829
        %v3831 = vpop.f32.mrf.mxu0
        %3832 = vmatprep.mubr.bf16.mxu0 0
        %3833 = vmatmul.mubr.bf16.gmra.mxu0 %v3638
        %v3834 = vpop.f32.mrf.mxu0
        %v3835 = vadd.f32 0.0, %v3834
        %v3836 = vpop.f32.mrf.mxu0
        %v3837 = vpop.f32.mrf.mxu0
        %v3838 = vadd.f32 0.0, %v3837
        %v3839 = vpop.f32.mrf.mxu0
        %3840 = vmatprep.mubr.bf16.mxu0 0
        %3841 = vmatmul.mubr.bf16.gmra.mxu0 %v3640
        %v3842 = vpop.f32.mrf.mxu0
        %v3843 = vadd.f32 0.0, %v3842
        %v3844 = vpop.f32.mrf.mxu0
        %v3845 = vpop.f32.mrf.mxu0
        %v3846 = vadd.f32 0.0, %v3845
        %v3847 = vpop.f32.mrf.mxu0
        %3848 = vmatprep.mubr.bf16.mxu0 0
        %3849 = vmatmul.mubr.bf16.gmra.mxu0 %v3642
        %v3850 = vpop.f32.mrf.mxu0
        %v3851 = vadd.f32 0.0, %v3850
        %v3852 = vpop.f32.mrf.mxu0
        %v3853 = vpop.f32.mrf.mxu0
        %v3854 = vadd.f32 0.0, %v3853
        %v3855 = vpop.f32.mrf.mxu0
        %3856 = vmatprep.mubr.bf16.mxu0 0
        %3857 = vmatmul.mubr.bf16.gmra.mxu0 %v3644
        %v3858 = vpop.f32.mrf.mxu0
        %v3859 = vadd.f32 0.0, %v3858
        %v3860 = vpop.f32.mrf.mxu0
        %v3861 = vpop.f32.mrf.mxu0
        %v3862 = vadd.f32 0.0, %v3861
        %v3863 = vpop.f32.mrf.mxu0
        %3864 = vmatprep.mubr.bf16.mxu0 0
        %3865 = vmatmul.mubr.bf16.gmra.mxu0 %v3646
        %v3866 = vpop.f32.mrf.mxu0
        %v3867 = vadd.f32 0.0, %v3866
        %v3868 = vpop.f32.mrf.mxu0
        %v3869 = vpop.f32.mrf.mxu0
        %v3870 = vadd.f32 0.0, %v3869
        %v3871 = vpop.f32.mrf.mxu0
        %3872 = vdwg.mxu0
        %v3873 = vld [vmem:[%s3 + $0x2] sm:$0x1]
        %v3874 = vlaneseq
        %v3875 = vshrl.u32 %v3874, 7
        %v3876 = vsub.s32 0, %v3875
        %v3877 = vrot.slane %v3873, %v3876
        %v3878 = vmul.f32 %v3683, %v3877
        %v3879 = vmul.f32 %v3686, %v3877
        %v3880 = vmul.f32 %v3691, %v3877
        %v3881 = vmul.f32 %v3694, %v3877
        %v3882 = vmul.f32 %v3699, %v3877
        %v3883 = vmul.f32 %v3702, %v3877
        %v3884 = vmul.f32 %v3707, %v3877
        %v3885 = vmul.f32 %v3710, %v3877
        %v3886 = vmul.f32 %v3715, %v3877
        %v3887 = vmul.f32 %v3718, %v3877
        %v3888 = vmul.f32 %v3723, %v3877
        %v3889 = vmul.f32 %v3726, %v3877
        %v3890 = vmul.f32 %v3731, %v3877
        %v3891 = vmul.f32 %v3734, %v3877
        %v3892 = vmul.f32 %v3739, %v3877
        %v3893 = vmul.f32 %v3742, %v3877
        %v3894 = vmul.f32 %v3747, %v3877
        %v3895 = vmul.f32 %v3750, %v3877
        %v3896 = vmul.f32 %v3755, %v3877
        %v3897 = vmul.f32 %v3758, %v3877
        %v3898 = vmul.f32 %v3763, %v3877
        %v3899 = vmul.f32 %v3766, %v3877
        %v3900 = vmul.f32 %v3771, %v3877
        %v3901 = vmul.f32 %v3774, %v3877
        %v3902 = vmul.f32 %v3779, %v3877
        %v3903 = vmul.f32 %v3782, %v3877
        %v3904 = vmul.f32 %v3787, %v3877
        %v3905 = vmul.f32 %v3790, %v3877
        %v3906 = vmul.f32 %v3795, %v3877
        %v3907 = vmul.f32 %v3798, %v3877
        %v3908 = vmul.f32 %v3803, %v3877
        %v3909 = vmul.f32 %v3806, %v3877
        %v3910 = vmul.f32 %v3811, %v3877
        %v3911 = vmul.f32 %v3814, %v3877
        %v3912 = vmul.f32 %v3819, %v3877
        %v3913 = vmul.f32 %v3822, %v3877
        %v3914 = vmul.f32 %v3827, %v3877
        %v3915 = vmul.f32 %v3830, %v3877
        %v3916 = vmul.f32 %v3835, %v3877
        %v3917 = vmul.f32 %v3838, %v3877
        %v3918 = vmul.f32 %v3843, %v3877
        %v3919 = vmul.f32 %v3846, %v3877
        %v3920 = vmul.f32 %v3851, %v3877
        %v3921 = vmul.f32 %v3854, %v3877
        %v3922 = vmul.f32 %v3859, %v3877
        %v3923 = vmul.f32 %v3862, %v3877
        %v3924 = vmul.f32 %v3867, %v3877
        %v3925 = vmul.f32 %v3870, %v3877
        %v3926 = vld [vmem:[%s3 + $0x3] sm:$0x1]
        %v3927 = vlaneseq
        %v3928 = vshrl.u32 %v3927, 7
        %v3929 = vsub.s32 0, %v3928
        %v3930 = vrot.slane %v3926, %v3929
        %v3931 = vadd.f32 %v3878, %v3930
        %v3932 = vadd.f32 %v3879, %v3930
        %v3933 = vadd.f32 %v3880, %v3930
        %v3934 = vadd.f32 %v3881, %v3930
        %v3935 = vadd.f32 %v3882, %v3930
        %v3936 = vadd.f32 %v3883, %v3930
        %v3937 = vadd.f32 %v3884, %v3930
        %v3938 = vadd.f32 %v3885, %v3930
        %v3939 = vadd.f32 %v3886, %v3930
        %v3940 = vadd.f32 %v3887, %v3930
        %v3941 = vadd.f32 %v3888, %v3930
        %v3942 = vadd.f32 %v3889, %v3930
        %v3943 = vadd.f32 %v3890, %v3930
        %v3944 = vadd.f32 %v3891, %v3930
        %v3945 = vadd.f32 %v3892, %v3930
        %v3946 = vadd.f32 %v3893, %v3930
        %v3947 = vadd.f32 %v3894, %v3930
        %v3948 = vadd.f32 %v3895, %v3930
        %v3949 = vadd.f32 %v3896, %v3930
        %v3950 = vadd.f32 %v3897, %v3930
        %v3951 = vadd.f32 %v3898, %v3930
        %v3952 = vadd.f32 %v3899, %v3930
        %v3953 = vadd.f32 %v3900, %v3930
        %v3954 = vadd.f32 %v3901, %v3930
        %v3955 = vadd.f32 %v3902, %v3930
        %v3956 = vadd.f32 %v3903, %v3930
        %v3957 = vadd.f32 %v3904, %v3930
        %v3958 = vadd.f32 %v3905, %v3930
        %v3959 = vadd.f32 %v3906, %v3930
        %v3960 = vadd.f32 %v3907, %v3930
        %v3961 = vadd.f32 %v3908, %v3930
        %v3962 = vadd.f32 %v3909, %v3930
        %v3963 = vadd.f32 %v3910, %v3930
        %v3964 = vadd.f32 %v3911, %v3930
        %v3965 = vadd.f32 %v3912, %v3930
        %v3966 = vadd.f32 %v3913, %v3930
        %v3967 = vadd.f32 %v3914, %v3930
        %v3968 = vadd.f32 %v3915, %v3930
        %v3969 = vadd.f32 %v3916, %v3930
        %v3970 = vadd.f32 %v3917, %v3930
        %v3971 = vadd.f32 %v3918, %v3930
        %v3972 = vadd.f32 %v3919, %v3930
        %v3973 = vadd.f32 %v3920, %v3930
        %v3974 = vadd.f32 %v3921, %v3930
        %v3975 = vadd.f32 %v3922, %v3930
        %v3976 = vadd.f32 %v3923, %v3930
        %v3977 = vadd.f32 %v3924, %v3930
        %v3978 = vadd.f32 %v3925, %v3930
        %3979 = vxpose.xlu0.b32.start [1/16] %v3931, 128
        %3980 = vxpose.xlu0.b32.cont [2/16] %v3932, 128
        %3981 = vxpose.xlu0.b32.cont [3/16] %v3933, 128
        %3982 = vxpose.xlu0.b32.cont [4/16] %v3934, 128
        %3983 = vxpose.xlu0.b32.cont [5/16] %v3935, 128
        %3984 = vxpose.xlu0.b32.cont [6/16] %v3936, 128
        %3985 = vxpose.xlu0.b32.cont [7/16] %v3937, 128
        %3986 = vxpose.xlu0.b32.cont [8/16] %v3938, 128
        %3987 = vxpose.xlu0.b32.cont [9/16] %v3939, 128
        %3988 = vxpose.xlu0.b32.cont [10/16] %v3940, 128
        %3989 = vxpose.xlu0.b32.cont [11/16] %v3941, 128
        %3990 = vxpose.xlu0.b32.cont [12/16] %v3942, 128
        %3991 = vxpose.xlu0.b32.cont [13/16] %v3943, 128
        %3992 = vxpose.xlu0.b32.cont [14/16] %v3944, 128
        %3993 = vxpose.xlu0.b32.cont [15/16] %v3945, 128
        %3994 = vxpose.xlu0.b32.end [16/16] %v3946, 128
        %v3995 = vpop.trf.xlu0
        %v3996 = vpop.trf.xlu0
        %v3997 = vpop.trf.xlu0
        %v3998 = vpop.trf.xlu0
        %v3999 = vpop.trf.xlu0
        %v4000 = vpop.trf.xlu0
        %v4001 = vpop.trf.xlu0
        %v4002 = vpop.trf.xlu0
        %v4003 = vpop.trf.xlu0
        %v4004 = vpop.trf.xlu0
        %v4005 = vpop.trf.xlu0
        %v4006 = vpop.trf.xlu0
        %v4007 = vpop.trf.xlu0
        %v4008 = vpop.trf.xlu0
        %v4009 = vpop.trf.xlu0
        %v4010 = vpop.trf.xlu0
        %4011 = vxpose.xlu0.b32.start [1/16] %v3947, 128
        %4012 = vxpose.xlu0.b32.cont [2/16] %v3948, 128
        %4013 = vxpose.xlu0.b32.cont [3/16] %v3949, 128
        %4014 = vxpose.xlu0.b32.cont [4/16] %v3950, 128
        %4015 = vxpose.xlu0.b32.cont [5/16] %v3951, 128
        %4016 = vxpose.xlu0.b32.cont [6/16] %v3952, 128
        %4017 = vxpose.xlu0.b32.cont [7/16] %v3953, 128
        %4018 = vxpose.xlu0.b32.cont [8/16] %v3954, 128
        %4019 = vxpose.xlu0.b32.cont [9/16] %v3955, 128
        %4020 = vxpose.xlu0.b32.cont [10/16] %v3956, 128
        %4021 = vxpose.xlu0.b32.cont [11/16] %v3957, 128
        %4022 = vxpose.xlu0.b32.cont [12/16] %v3958, 128
        %4023 = vxpose.xlu0.b32.cont [13/16] %v3959, 128
        %4024 = vxpose.xlu0.b32.cont [14/16] %v3960, 128
        %4025 = vxpose.xlu0.b32.cont [15/16] %v3961, 128
        %4026 = vxpose.xlu0.b32.end [16/16] %v3962, 128
        %v4027 = vpop.trf.xlu0
        %v4028 = vpop.trf.xlu0
        %v4029 = vpop.trf.xlu0
        %v4030 = vpop.trf.xlu0
        %v4031 = vpop.trf.xlu0
        %v4032 = vpop.trf.xlu0
        %v4033 = vpop.trf.xlu0
        %v4034 = vpop.trf.xlu0
        %v4035 = vpop.trf.xlu0
        %v4036 = vpop.trf.xlu0
        %v4037 = vpop.trf.xlu0
        %v4038 = vpop.trf.xlu0
        %v4039 = vpop.trf.xlu0
        %v4040 = vpop.trf.xlu0
        %v4041 = vpop.trf.xlu0
        %v4042 = vpop.trf.xlu0
        %4043 = vxpose.xlu0.b32.start [1/16] %v3963, 128
        %4044 = vxpose.xlu0.b32.cont [2/16] %v3964, 128
        %4045 = vxpose.xlu0.b32.cont [3/16] %v3965, 128
        %4046 = vxpose.xlu0.b32.cont [4/16] %v3966, 128
        %4047 = vxpose.xlu0.b32.cont [5/16] %v3967, 128
        %4048 = vxpose.xlu0.b32.cont [6/16] %v3968, 128
        %4049 = vxpose.xlu0.b32.cont [7/16] %v3969, 128
        %4050 = vxpose.xlu0.b32.cont [8/16] %v3970, 128
        %4051 = vxpose.xlu0.b32.cont [9/16] %v3971, 128
        %4052 = vxpose.xlu0.b32.cont [10/16] %v3972, 128
        %4053 = vxpose.xlu0.b32.cont [11/16] %v3973, 128
        %4054 = vxpose.xlu0.b32.cont [12/16] %v3974, 128
        %4055 = vxpose.xlu0.b32.cont [13/16] %v3975, 128
        %4056 = vxpose.xlu0.b32.cont [14/16] %v3976, 128
        %4057 = vxpose.xlu0.b32.cont [15/16] %v3977, 128
        %4058 = vxpose.xlu0.b32.end [16/16] %v3978, 128
        %v4059 = vpop.trf.xlu0
        %v4060 = vpop.trf.xlu0
        %v4061 = vpop.trf.xlu0
        %v4062 = vpop.trf.xlu0
        %v4063 = vpop.trf.xlu0
        %v4064 = vpop.trf.xlu0
        %v4065 = vpop.trf.xlu0
        %v4066 = vpop.trf.xlu0
        %v4067 = vpop.trf.xlu0
        %v4068 = vpop.trf.xlu0
        %v4069 = vpop.trf.xlu0
        %v4070 = vpop.trf.xlu0
        %v4071 = vpop.trf.xlu0
        %v4072 = vpop.trf.xlu0
        %v4073 = vpop.trf.xlu0
        %v4074 = vpop.trf.xlu0
        %4075 = vst [vmem:[#allocation4] sm:$0xff] %v3995
        %4076 = vst [vmem:[#allocation4 + $0x8] sm:$0xff] %v4027
        %4077 = vst [vmem:[#allocation4 + $0x10] sm:$0xff] %v4059
        %4078 = vst [vmem:[#allocation4 + $0x18] sm:$0xff] %v3996
        %4079 = vst [vmem:[#allocation4 + $0x20] sm:$0xff] %v4028
        %4080 = vst [vmem:[#allocation4 + $0x28] sm:$0xff] %v4060
        %4081 = vst [vmem:[#allocation4 + $0x30] sm:$0xff] %v3997
        %4082 = vst [vmem:[#allocation4 + $0x38] sm:$0xff] %v4029
        %4083 = vst [vmem:[#allocation4 + $0x40] sm:$0xff] %v4061
        %4084 = vst [vmem:[#allocation4 + $0x48] sm:$0xff] %v3998
        %4085 = vst [vmem:[#allocation4 + $0x50] sm:$0xff] %v4030
        %4086 = vst [vmem:[#allocation4 + $0x58] sm:$0xff] %v4062
        %vm4087 = vcmask 257024
        %4088 = vst.msk [vmem:[#allocation3] sm:$0xf] %vm4087, 0
        %4089 = vst.msk [vmem:[#allocation3 + $0x4] sm:$0xf] %vm4087, 0
        %4090 = vst.msk [vmem:[#allocation3 + $0x8] sm:$0xf] %vm4087, 0
        %4091 = vst.msk [vmem:[#allocation3 + $0xc] sm:$0xf] %vm4087, 0
        %4092 = vst.msk [vmem:[#allocation3 + $0xd0] sm:$0xf] %vm4087, 0
        %4093 = vst.msk [vmem:[#allocation3 + $0xd4] sm:$0xf] %vm4087, 0
        %4094 = vst.msk [vmem:[#allocation3 + $0xd8] sm:$0xf] %vm4087, 0
        %4095 = vst.msk [vmem:[#allocation3 + $0xdc] sm:$0xf] %vm4087, 0
        %v4096 = vpack.c.bf16 %v3545, %v3544
        %v4097 = vpack.c.bf16 %v3547, %v3546
        %v4098 = vpack.c.bf16 %v3549, %v3548
        %v4099 = vpack.c.bf16 %v3551, %v3550
        %v4100 = vpack.c.bf16 %v3553, %v3552
        %v4101 = vpack.c.bf16 %v3555, %v3554
        %v4102 = vpack.c.bf16 %v3557, %v3556
        %v4103 = vpack.c.bf16 %v3559, %v3558
        %v4104 = vpack.c.bf16 %v3561, %v3560
        %v4105 = vpack.c.bf16 %v3563, %v3562
        %v4106 = vpack.c.bf16 %v3565, %v3564
        %v4107 = vpack.c.bf16 %v3567, %v3566
        %v4108 = vpack.c.bf16 %v3569, %v3568
        %v4109 = vpack.c.bf16 %v3571, %v3570
        %v4110 = vpack.c.bf16 %v3573, %v3572
        %v4111 = vpack.c.bf16 %v3575, %v3574
        %v4112 = vpack.c.bf16 %v3577, %v3576
        %v4113 = vpack.c.bf16 %v3579, %v3578
        %v4114 = vpack.c.bf16 %v3581, %v3580
        %v4115 = vpack.c.bf16 %v3583, %v3582
        %v4116 = vpack.c.bf16 %v3585, %v3584
        %v4117 = vpack.c.bf16 %v3587, %v3586
        %v4118 = vpack.c.bf16 %v3589, %v3588
        %v4119 = vpack.c.bf16 %v3591, %v3590
        %v4144 = vunpack.c.l.b16 %v4096
        %v4145 = vunpack.c.h.b16 %v4096
        %v4146 = vunpack.c.l.b16 %v4097
        %v4147 = vunpack.c.h.b16 %v4097
        %v4148 = vunpack.c.l.b16 %v4098
        %v4149 = vunpack.c.h.b16 %v4098
        %v4150 = vunpack.c.l.b16 %v4099
        %v4151 = vunpack.c.h.b16 %v4099
        %v4152 = vunpack.c.l.b16 %v4100
        %v4153 = vunpack.c.h.b16 %v4100
        %v4154 = vunpack.c.l.b16 %v4101
        %v4155 = vunpack.c.h.b16 %v4101
        %v4156 = vunpack.c.l.b16 %v4102
        %v4157 = vunpack.c.h.b16 %v4102
        %v4158 = vunpack.c.l.b16 %v4103
        %v4159 = vunpack.c.h.b16 %v4103
        %v4160 = vunpack.c.l.b16 %v4104
        %v4161 = vunpack.c.h.b16 %v4104
        %v4162 = vunpack.c.l.b16 %v4105
        %v4163 = vunpack.c.h.b16 %v4105
        %v4164 = vunpack.c.l.b16 %v4106
        %v4165 = vunpack.c.h.b16 %v4106
        %v4166 = vunpack.c.l.b16 %v4107
        %v4167 = vunpack.c.h.b16 %v4107
        %v4168 = vunpack.c.l.b16 %v4108
        %v4169 = vunpack.c.h.b16 %v4108
        %v4170 = vunpack.c.l.b16 %v4109
        %v4171 = vunpack.c.h.b16 %v4109
        %v4172 = vunpack.c.l.b16 %v4110
        %v4173 = vunpack.c.h.b16 %v4110
        %v4174 = vunpack.c.l.b16 %v4111
        %v4175 = vunpack.c.h.b16 %v4111
        %v4176 = vunpack.c.l.b16 %v4112
        %v4177 = vunpack.c.h.b16 %v4112
        %v4178 = vunpack.c.l.b16 %v4113
        %v4179 = vunpack.c.h.b16 %v4113
        %v4180 = vunpack.c.l.b16 %v4114
        %v4181 = vunpack.c.h.b16 %v4114
        %v4182 = vunpack.c.l.b16 %v4115
        %v4183 = vunpack.c.h.b16 %v4115
        %v4184 = vunpack.c.l.b16 %v4116
        %v4185 = vunpack.c.h.b16 %v4116
        %v4186 = vunpack.c.l.b16 %v4117
        %v4187 = vunpack.c.h.b16 %v4117
        %v4188 = vunpack.c.l.b16 %v4118
        %v4189 = vunpack.c.h.b16 %v4118
        %v4190 = vunpack.c.l.b16 %v4119
        %v4191 = vunpack.c.h.b16 %v4119
        %v4192 = vpack.c.b16 %v4144, %v4144
        %v4193 = vpack.c.b16 %v4145, %v4145
        %v4194 = vpack.c.b16 %v4146, %v4146
        %v4195 = vpack.c.b16 %v4147, %v4147
        %v4196 = vpack.c.b16 %v4148, %v4148
        %v4197 = vpack.c.b16 %v4149, %v4149
        %v4198 = vpack.c.b16 %v4150, %v4150
        %v4199 = vpack.c.b16 %v4151, %v4151
        %v4200 = vpack.c.b16 %v4152, %v4152
        %v4201 = vpack.c.b16 %v4153, %v4153
        %v4202 = vpack.c.b16 %v4154, %v4154
        %v4203 = vpack.c.b16 %v4155, %v4155
        %v4204 = vpack.c.b16 %v4156, %v4156
        %v4205 = vpack.c.b16 %v4157, %v4157
        %v4206 = vpack.c.b16 %v4158, %v4158
        %v4207 = vpack.c.b16 %v4159, %v4159
        %v4208 = vpack.c.b16 %v4160, %v4160
        %v4209 = vpack.c.b16 %v4161, %v4161
        %v4210 = vpack.c.b16 %v4162, %v4162
        %v4211 = vpack.c.b16 %v4163, %v4163
        %v4212 = vpack.c.b16 %v4164, %v4164
        %v4213 = vpack.c.b16 %v4165, %v4165
        %v4214 = vpack.c.b16 %v4166, %v4166
        %v4215 = vpack.c.b16 %v4167, %v4167
        %v4216 = vpack.c.b16 %v4168, %v4168
        %v4217 = vpack.c.b16 %v4169, %v4169
        %v4218 = vpack.c.b16 %v4170, %v4170
        %v4219 = vpack.c.b16 %v4171, %v4171
        %v4220 = vpack.c.b16 %v4172, %v4172
        %v4221 = vpack.c.b16 %v4173, %v4173
        %v4222 = vpack.c.b16 %v4174, %v4174
        %v4223 = vpack.c.b16 %v4175, %v4175
        %v4224 = vpack.c.b16 %v4176, %v4176
        %v4225 = vpack.c.b16 %v4177, %v4177
        %v4226 = vpack.c.b16 %v4178, %v4178
        %v4227 = vpack.c.b16 %v4179, %v4179
        %v4228 = vpack.c.b16 %v4180, %v4180
        %v4229 = vpack.c.b16 %v4181, %v4181
        %v4230 = vpack.c.b16 %v4182, %v4182
        %v4231 = vpack.c.b16 %v4183, %v4183
        %v4232 = vpack.c.b16 %v4184, %v4184
        %v4233 = vpack.c.b16 %v4185, %v4185
        %v4234 = vpack.c.b16 %v4186, %v4186
        %v4235 = vpack.c.b16 %v4187, %v4187
        %v4236 = vpack.c.b16 %v4188, %v4188
        %v4237 = vpack.c.b16 %v4189, %v4189
        %v4238 = vpack.c.b16 %v4190, %v4190
        %v4239 = vpack.c.b16 %v4191, %v4191
        %4288 = vst.msk [vmem:[#allocation3 + $0x10] sm:$0xf] %vm4087, %v4192
        %4289 = vst.msk [vmem:[#allocation3 + $0x14] sm:$0xf] %vm4087, %v4193
        %4290 = vst.msk [vmem:[#allocation3 + $0x18] sm:$0xf] %vm4087, %v4194
        %4291 = vst.msk [vmem:[#allocation3 + $0x1c] sm:$0xf] %vm4087, %v4195
        %4292 = vst.msk [vmem:[#allocation3 + $0x20] sm:$0xf] %vm4087, %v4196
        %4293 = vst.msk [vmem:[#allocation3 + $0x24] sm:$0xf] %vm4087, %v4197
        %4294 = vst.msk [vmem:[#allocation3 + $0x28] sm:$0xf] %vm4087, %v4198
        %4295 = vst.msk [vmem:[#allocation3 + $0x2c] sm:$0xf] %vm4087, %v4199
        %4296 = vst.msk [vmem:[#allocation3 + $0x30] sm:$0xf] %vm4087, %v4200
        %4297 = vst.msk [vmem:[#allocation3 + $0x34] sm:$0xf] %vm4087, %v4201
        %4298 = vst.msk [vmem:[#allocation3 + $0x38] sm:$0xf] %vm4087, %v4202
        %4299 = vst.msk [vmem:[#allocation3 + $0x3c] sm:$0xf] %vm4087, %v4203
        %4300 = vst.msk [vmem:[#allocation3 + $0x40] sm:$0xf] %vm4087, %v4204
        %4301 = vst.msk [vmem:[#allocation3 + $0x44] sm:$0xf] %vm4087, %v4205
        %4302 = vst.msk [vmem:[#allocation3 + $0x48] sm:$0xf] %vm4087, %v4206
        %4303 = vst.msk [vmem:[#allocation3 + $0x4c] sm:$0xf] %vm4087, %v4207
        %4304 = vst.msk [vmem:[#allocation3 + $0x50] sm:$0xf] %vm4087, %v4208
        %4305 = vst.msk [vmem:[#allocation3 + $0x54] sm:$0xf] %vm4087, %v4209
        %4306 = vst.msk [vmem:[#allocation3 + $0x58] sm:$0xf] %vm4087, %v4210
        %4307 = vst.msk [vmem:[#allocation3 + $0x5c] sm:$0xf] %vm4087, %v4211
        %4308 = vst.msk [vmem:[#allocation3 + $0x60] sm:$0xf] %vm4087, %v4212
        %4309 = vst.msk [vmem:[#allocation3 + $0x64] sm:$0xf] %vm4087, %v4213
        %4310 = vst.msk [vmem:[#allocation3 + $0x68] sm:$0xf] %vm4087, %v4214
        %4311 = vst.msk [vmem:[#allocation3 + $0x6c] sm:$0xf] %vm4087, %v4215
        %4312 = vst.msk [vmem:[#allocation3 + $0x70] sm:$0xf] %vm4087, %v4216
        %4313 = vst.msk [vmem:[#allocation3 + $0x74] sm:$0xf] %vm4087, %v4217
        %4314 = vst.msk [vmem:[#allocation3 + $0x78] sm:$0xf] %vm4087, %v4218
        %4315 = vst.msk [vmem:[#allocation3 + $0x7c] sm:$0xf] %vm4087, %v4219
        %4316 = vst.msk [vmem:[#allocation3 + $0x80] sm:$0xf] %vm4087, %v4220
        %4317 = vst.msk [vmem:[#allocation3 + $0x84] sm:$0xf] %vm4087, %v4221
        %4318 = vst.msk [vmem:[#allocation3 + $0x88] sm:$0xf] %vm4087, %v4222
        %4319 = vst.msk [vmem:[#allocation3 + $0x8c] sm:$0xf] %vm4087, %v4223
        %4320 = vst.msk [vmem:[#allocation3 + $0x90] sm:$0xf] %vm4087, %v4224
        %4321 = vst.msk [vmem:[#allocation3 + $0x94] sm:$0xf] %vm4087, %v4225
        %4322 = vst.msk [vmem:[#allocation3 + $0x98] sm:$0xf] %vm4087, %v4226
        %4323 = vst.msk [vmem:[#allocation3 + $0x9c] sm:$0xf] %vm4087, %v4227
        %4324 = vst.msk [vmem:[#allocation3 + $0xa0] sm:$0xf] %vm4087, %v4228
        %4325 = vst.msk [vmem:[#allocation3 + $0xa4] sm:$0xf] %vm4087, %v4229
        %4326 = vst.msk [vmem:[#allocation3 + $0xa8] sm:$0xf] %vm4087, %v4230
        %4327 = vst.msk [vmem:[#allocation3 + $0xac] sm:$0xf] %vm4087, %v4231
        %4328 = vst.msk [vmem:[#allocation3 + $0xb0] sm:$0xf] %vm4087, %v4232
        %4329 = vst.msk [vmem:[#allocation3 + $0xb4] sm:$0xf] %vm4087, %v4233
        %4330 = vst.msk [vmem:[#allocation3 + $0xb8] sm:$0xf] %vm4087, %v4234
        %4331 = vst.msk [vmem:[#allocation3 + $0xbc] sm:$0xf] %vm4087, %v4235
        %4332 = vst.msk [vmem:[#allocation3 + $0xc0] sm:$0xf] %vm4087, %v4236
        %4333 = vst.msk [vmem:[#allocation3 + $0xc4] sm:$0xf] %vm4087, %v4237
        %4334 = vst.msk [vmem:[#allocation3 + $0xc8] sm:$0xf] %vm4087, %v4238
        %4335 = vst.msk [vmem:[#allocation3 + $0xcc] sm:$0xf] %vm4087, %v4239
        %v4336 = vld [vmem:[#allocation3] sm:$0x8]
        %v4337 = vld [vmem:[#allocation3 + $0x4] sm:$0xf]
        %v4338 = vld [vmem:[#allocation3 + $0x8] sm:$0xf]
        %v4339 = vld [vmem:[#allocation3 + $0xc] sm:$0xf]
        %v4340 = vld [vmem:[#allocation3 + $0x10] sm:$0xf]
        %v4341 = vld [vmem:[#allocation3 + $0x14] sm:$0xf]
        %v4342 = vld [vmem:[#allocation3 + $0x18] sm:$0xf]
        %v4343 = vld [vmem:[#allocation3 + $0x1c] sm:$0xf]
        %v4344 = vld [vmem:[#allocation3 + $0x20] sm:$0xf]
        %v4345 = vld [vmem:[#allocation3 + $0x24] sm:$0xf]
        %v4346 = vld [vmem:[#allocation3 + $0x28] sm:$0xf]
        %v4347 = vld [vmem:[#allocation3 + $0x2c] sm:$0xf]
        %v4348 = vld [vmem:[#allocation3 + $0x30] sm:$0xf]
        %v4349 = vld [vmem:[#allocation3 + $0x34] sm:$0xf]
        %v4350 = vld [vmem:[#allocation3 + $0x38] sm:$0xf]
        %v4351 = vld [vmem:[#allocation3 + $0x3c] sm:$0xf]
        %v4352 = vld [vmem:[#allocation3 + $0x40] sm:$0xf]
        %v4353 = vld [vmem:[#allocation3 + $0x44] sm:$0xf]
        %v4354 = vld [vmem:[#allocation3 + $0x48] sm:$0xf]
        %v4355 = vld [vmem:[#allocation3 + $0x4c] sm:$0xf]
        %v4356 = vld [vmem:[#allocation3 + $0x50] sm:$0xf]
        %v4357 = vld [vmem:[#allocation3 + $0x54] sm:$0xf]
        %v4358 = vld [vmem:[#allocation3 + $0x58] sm:$0xf]
        %v4359 = vld [vmem:[#allocation3 + $0x5c] sm:$0xf]
        %v4360 = vld [vmem:[#allocation3 + $0x60] sm:$0xf]
        %v4361 = vld [vmem:[#allocation3 + $0x64] sm:$0xf]
        %v4362 = vld [vmem:[#allocation3 + $0x68] sm:$0xf]
        %v4363 = vld [vmem:[#allocation3 + $0x6c] sm:$0xf]
        %v4364 = vld [vmem:[#allocation3 + $0x70] sm:$0xf]
        %v4365 = vld [vmem:[#allocation3 + $0x74] sm:$0xf]
        %v4366 = vld [vmem:[#allocation3 + $0x78] sm:$0xf]
        %v4367 = vld [vmem:[#allocation3 + $0x7c] sm:$0xf]
        %v4368 = vld [vmem:[#allocation3 + $0x80] sm:$0xf]
        %v4369 = vld [vmem:[#allocation3 + $0x84] sm:$0xf]
        %v4370 = vld [vmem:[#allocation3 + $0x88] sm:$0xf]
        %v4371 = vld [vmem:[#allocation3 + $0x8c] sm:$0xf]
        %v4372 = vld [vmem:[#allocation3 + $0x90] sm:$0xf]
        %v4373 = vld [vmem:[#allocation3 + $0x94] sm:$0xf]
        %v4374 = vld [vmem:[#allocation3 + $0x98] sm:$0xf]
        %v4375 = vld [vmem:[#allocation3 + $0x9c] sm:$0xf]
        %v4376 = vld [vmem:[#allocation3 + $0xa0] sm:$0xf]
        %v4377 = vld [vmem:[#allocation3 + $0xa4] sm:$0xf]
        %v4378 = vld [vmem:[#allocation3 + $0xa8] sm:$0xf]
        %v4379 = vld [vmem:[#allocation3 + $0xac] sm:$0xf]
        %v4380 = vld [vmem:[#allocation3 + $0xb0] sm:$0xf]
        %v4381 = vld [vmem:[#allocation3 + $0xb4] sm:$0xf]
        %v4382 = vld [vmem:[#allocation3 + $0xb8] sm:$0xf]
        %v4383 = vld [vmem:[#allocation3 + $0xbc] sm:$0xf]
        %v4384 = vld [vmem:[#allocation3 + $0xc0] sm:$0xf]
        %v4385 = vld [vmem:[#allocation3 + $0xc4] sm:$0x1]
        %v4386 = vld [vmem:[#allocation3 + $0xc] sm:$0x8]
        %v4387 = vld [vmem:[#allocation3 + $0xc4] sm:$0xf]
        %v4388 = vld [vmem:[#allocation3 + $0xc8] sm:$0xf]
        %v4389 = vld [vmem:[#allocation3 + $0xcc] sm:$0xf]
        %v4390 = vld [vmem:[#allocation3 + $0xd0] sm:$0x1]
        %v4391 = vld [vmem:[#allocation3 + $0x18] sm:$0x8]
        %v4392 = vld [vmem:[#allocation3 + $0xd0] sm:$0xf]
        %v4393 = vld [vmem:[#allocation3 + $0xd4] sm:$0xf]
        %v4394 = vld [vmem:[#allocation3 + $0xd8] sm:$0xf]
        %v4395 = vld [vmem:[#allocation3 + $0xdc] sm:$0x1]
        %v4445 = vunpack.c.l.b16 %v4336
        %v4446 = vunpack.c.l.b16 %v4337
        %v4447 = vunpack.c.l.b16 %v4338
        %v4448 = vunpack.c.l.b16 %v4339
        %v4449 = vunpack.c.l.b16 %v4340
        %v4450 = vunpack.c.l.b16 %v4341
        %v4451 = vunpack.c.l.b16 %v4342
        %v4452 = vunpack.c.l.b16 %v4343
        %v4453 = vunpack.c.l.b16 %v4344
        %v4454 = vunpack.c.l.b16 %v4345
        %v4455 = vunpack.c.l.b16 %v4346
        %v4456 = vunpack.c.l.b16 %v4347
        %v4457 = vunpack.c.l.b16 %v4348
        %v4458 = vunpack.c.l.b16 %v4349
        %v4459 = vunpack.c.l.b16 %v4350
        %v4460 = vunpack.c.l.b16 %v4351
        %v4461 = vunpack.c.l.b16 %v4352
        %v4462 = vunpack.c.l.b16 %v4353
        %v4463 = vunpack.c.l.b16 %v4354
        %v4464 = vunpack.c.l.b16 %v4355
        %v4465 = vunpack.c.l.b16 %v4356
        %v4466 = vunpack.c.l.b16 %v4357
        %v4467 = vunpack.c.l.b16 %v4358
        %v4468 = vunpack.c.l.b16 %v4359
        %v4469 = vunpack.c.l.b16 %v4360
        %v4470 = vunpack.c.l.b16 %v4361
        %v4471 = vunpack.c.l.b16 %v4362
        %v4472 = vunpack.c.l.b16 %v4363
        %v4473 = vunpack.c.l.b16 %v4364
        %v4474 = vunpack.c.l.b16 %v4365
        %v4475 = vunpack.c.l.b16 %v4366
        %v4476 = vunpack.c.l.b16 %v4367
        %v4477 = vunpack.c.l.b16 %v4368
        %v4478 = vunpack.c.l.b16 %v4369
        %v4479 = vunpack.c.l.b16 %v4370
        %v4480 = vunpack.c.l.b16 %v4371
        %v4481 = vunpack.c.l.b16 %v4372
        %v4482 = vunpack.c.l.b16 %v4373
        %v4483 = vunpack.c.l.b16 %v4374
        %v4484 = vunpack.c.l.b16 %v4375
        %v4485 = vunpack.c.l.b16 %v4376
        %v4486 = vunpack.c.l.b16 %v4377
        %v4487 = vunpack.c.l.b16 %v4378
        %v4488 = vunpack.c.l.b16 %v4379
        %v4489 = vunpack.c.l.b16 %v4380
        %v4490 = vunpack.c.l.b16 %v4381
        %v4491 = vunpack.c.l.b16 %v4382
        %v4492 = vunpack.c.l.b16 %v4383
        %v4493 = vunpack.c.l.b16 %v4384
        %v4494 = vpack.c.b16 %v4446, %v4445
        %v4495 = vpack.c.b16 %v4448, %v4447
        %v4496 = vpack.c.b16 %v4450, %v4449
        %v4497 = vpack.c.b16 %v4452, %v4451
        %v4498 = vpack.c.b16 %v4454, %v4453
        %v4499 = vpack.c.b16 %v4456, %v4455
        %v4500 = vpack.c.b16 %v4458, %v4457
        %v4501 = vpack.c.b16 %v4460, %v4459
        %v4502 = vpack.c.b16 %v4462, %v4461
        %v4503 = vpack.c.b16 %v4464, %v4463
        %v4504 = vpack.c.b16 %v4466, %v4465
        %v4505 = vpack.c.b16 %v4468, %v4467
        %v4506 = vpack.c.b16 %v4470, %v4469
        %v4507 = vpack.c.b16 %v4472, %v4471
        %v4508 = vpack.c.b16 %v4474, %v4473
        %v4509 = vpack.c.b16 %v4476, %v4475
        %v4510 = vpack.c.b16 %v4478, %v4477
        %v4511 = vpack.c.b16 %v4480, %v4479
        %v4512 = vpack.c.b16 %v4482, %v4481
        %v4513 = vpack.c.b16 %v4484, %v4483
        %v4514 = vpack.c.b16 %v4486, %v4485
        %v4515 = vpack.c.b16 %v4488, %v4487
        %v4516 = vpack.c.b16 %v4490, %v4489
        %v4517 = vpack.c.b16 %v4492, %v4491
        %v4518 = vpack.c.b16 %v4493, %v4493
        %v4519 = vpack.c.b16 %v4447, %v4446
        %v4520 = vpack.c.b16 %v4449, %v4448
        %v4521 = vpack.c.b16 %v4451, %v4450
        %v4522 = vpack.c.b16 %v4453, %v4452
        %v4523 = vpack.c.b16 %v4455, %v4454
        %v4524 = vpack.c.b16 %v4457, %v4456
        %v4525 = vpack.c.b16 %v4459, %v4458
        %v4526 = vpack.c.b16 %v4461, %v4460
        %v4527 = vpack.c.b16 %v4463, %v4462
        %v4528 = vpack.c.b16 %v4465, %v4464
        %v4529 = vpack.c.b16 %v4467, %v4466
        %v4530 = vpack.c.b16 %v4469, %v4468
        %v4531 = vpack.c.b16 %v4471, %v4470
        %v4532 = vpack.c.b16 %v4473, %v4472
        %v4533 = vpack.c.b16 %v4475, %v4474
        %v4534 = vpack.c.b16 %v4477, %v4476
        %v4535 = vpack.c.b16 %v4479, %v4478
        %v4536 = vpack.c.b16 %v4481, %v4480
        %v4537 = vpack.c.b16 %v4483, %v4482
        %v4538 = vpack.c.b16 %v4485, %v4484
        %v4539 = vpack.c.b16 %v4487, %v4486
        %v4540 = vpack.c.b16 %v4489, %v4488
        %v4541 = vpack.c.b16 %v4491, %v4490
        %v4542 = vpack.c.b16 %v4493, %v4492
        %v4544 = vshrl.u32 %v4519, 16
        %v4546 = vrot.slane %v4544, 4
        %v4547 = vshll.u32 %v4519, 16
        %v4549 = vrot.slane %v4547, 5
        %v4550 = vor.u32 %v4546, %v4549
        %v4552 = vshrl.u32 %v4520, 16
        %v4554 = vrot.slane %v4552, 4
        %v4555 = vshll.u32 %v4520, 16
        %v4557 = vrot.slane %v4555, 5
        %v4558 = vor.u32 %v4554, %v4557
        %v4559 = vsel %vm1023, %v4550, %v4558
        %v4561 = vshrl.u32 %v4521, 16
        %v4563 = vrot.slane %v4561, 4
        %v4564 = vshll.u32 %v4521, 16
        %v4566 = vrot.slane %v4564, 5
        %v4567 = vor.u32 %v4563, %v4566
        %v4568 = vsel %vm1023, %v4558, %v4567
        %v4570 = vshrl.u32 %v4522, 16
        %v4572 = vrot.slane %v4570, 4
        %v4573 = vshll.u32 %v4522, 16
        %v4575 = vrot.slane %v4573, 5
        %v4576 = vor.u32 %v4572, %v4575
        %v4577 = vsel %vm1023, %v4567, %v4576
        %v4579 = vshrl.u32 %v4523, 16
        %v4581 = vrot.slane %v4579, 4
        %v4582 = vshll.u32 %v4523, 16
        %v4584 = vrot.slane %v4582, 5
        %v4585 = vor.u32 %v4581, %v4584
        %v4586 = vsel %vm1023, %v4576, %v4585
        %v4588 = vshrl.u32 %v4524, 16
        %v4590 = vrot.slane %v4588, 4
        %v4591 = vshll.u32 %v4524, 16
        %v4593 = vrot.slane %v4591, 5
        %v4594 = vor.u32 %v4590, %v4593
        %v4595 = vsel %vm1023, %v4585, %v4594
        %v4597 = vshrl.u32 %v4525, 16
        %v4599 = vrot.slane %v4597, 4
        %v4600 = vshll.u32 %v4525, 16
        %v4602 = vrot.slane %v4600, 5
        %v4603 = vor.u32 %v4599, %v4602
        %v4604 = vsel %vm1023, %v4594, %v4603
        %v4606 = vshrl.u32 %v4526, 16
        %v4608 = vrot.slane %v4606, 4
        %v4609 = vshll.u32 %v4526, 16
        %v4611 = vrot.slane %v4609, 5
        %v4612 = vor.u32 %v4608, %v4611
        %v4613 = vsel %vm1023, %v4603, %v4612
        %v4615 = vshrl.u32 %v4527, 16
        %v4617 = vrot.slane %v4615, 4
        %v4618 = vshll.u32 %v4527, 16
        %v4620 = vrot.slane %v4618, 5
        %v4621 = vor.u32 %v4617, %v4620
        %v4622 = vsel %vm1023, %v4612, %v4621
        %v4624 = vshrl.u32 %v4528, 16
        %v4626 = vrot.slane %v4624, 4
        %v4627 = vshll.u32 %v4528, 16
        %v4629 = vrot.slane %v4627, 5
        %v4630 = vor.u32 %v4626, %v4629
        %v4631 = vsel %vm1023, %v4621, %v4630
        %v4633 = vshrl.u32 %v4529, 16
        %v4635 = vrot.slane %v4633, 4
        %v4636 = vshll.u32 %v4529, 16
        %v4638 = vrot.slane %v4636, 5
        %v4639 = vor.u32 %v4635, %v4638
        %v4640 = vsel %vm1023, %v4630, %v4639
        %v4642 = vshrl.u32 %v4530, 16
        %v4644 = vrot.slane %v4642, 4
        %v4645 = vshll.u32 %v4530, 16
        %v4647 = vrot.slane %v4645, 5
        %v4648 = vor.u32 %v4644, %v4647
        %v4649 = vsel %vm1023, %v4639, %v4648
        %v4651 = vshrl.u32 %v4531, 16
        %v4653 = vrot.slane %v4651, 4
        %v4654 = vshll.u32 %v4531, 16
        %v4656 = vrot.slane %v4654, 5
        %v4657 = vor.u32 %v4653, %v4656
        %v4658 = vsel %vm1023, %v4648, %v4657
        %v4660 = vshrl.u32 %v4532, 16
        %v4662 = vrot.slane %v4660, 4
        %v4663 = vshll.u32 %v4532, 16
        %v4665 = vrot.slane %v4663, 5
        %v4666 = vor.u32 %v4662, %v4665
        %v4667 = vsel %vm1023, %v4657, %v4666
        %v4669 = vshrl.u32 %v4533, 16
        %v4671 = vrot.slane %v4669, 4
        %v4672 = vshll.u32 %v4533, 16
        %v4674 = vrot.slane %v4672, 5
        %v4675 = vor.u32 %v4671, %v4674
        %v4676 = vsel %vm1023, %v4666, %v4675
        %v4678 = vshrl.u32 %v4534, 16
        %v4680 = vrot.slane %v4678, 4
        %v4681 = vshll.u32 %v4534, 16
        %v4683 = vrot.slane %v4681, 5
        %v4684 = vor.u32 %v4680, %v4683
        %v4685 = vsel %vm1023, %v4675, %v4684
        %v4687 = vshrl.u32 %v4535, 16
        %v4689 = vrot.slane %v4687, 4
        %v4690 = vshll.u32 %v4535, 16
        %v4692 = vrot.slane %v4690, 5
        %v4693 = vor.u32 %v4689, %v4692
        %v4694 = vsel %vm1023, %v4684, %v4693
        %v4696 = vshrl.u32 %v4536, 16
        %v4698 = vrot.slane %v4696, 4
        %v4699 = vshll.u32 %v4536, 16
        %v4701 = vrot.slane %v4699, 5
        %v4702 = vor.u32 %v4698, %v4701
        %v4703 = vsel %vm1023, %v4693, %v4702
        %v4705 = vshrl.u32 %v4537, 16
        %v4707 = vrot.slane %v4705, 4
        %v4708 = vshll.u32 %v4537, 16
        %v4710 = vrot.slane %v4708, 5
        %v4711 = vor.u32 %v4707, %v4710
        %v4712 = vsel %vm1023, %v4702, %v4711
        %v4714 = vshrl.u32 %v4538, 16
        %v4716 = vrot.slane %v4714, 4
        %v4717 = vshll.u32 %v4538, 16
        %v4719 = vrot.slane %v4717, 5
        %v4720 = vor.u32 %v4716, %v4719
        %v4721 = vsel %vm1023, %v4711, %v4720
        %v4723 = vshrl.u32 %v4539, 16
        %v4725 = vrot.slane %v4723, 4
        %v4726 = vshll.u32 %v4539, 16
        %v4728 = vrot.slane %v4726, 5
        %v4729 = vor.u32 %v4725, %v4728
        %v4730 = vsel %vm1023, %v4720, %v4729
        %v4732 = vshrl.u32 %v4540, 16
        %v4734 = vrot.slane %v4732, 4
        %v4735 = vshll.u32 %v4540, 16
        %v4737 = vrot.slane %v4735, 5
        %v4738 = vor.u32 %v4734, %v4737
        %v4739 = vsel %vm1023, %v4729, %v4738
        %v4741 = vshrl.u32 %v4541, 16
        %v4743 = vrot.slane %v4741, 4
        %v4744 = vshll.u32 %v4541, 16
        %v4746 = vrot.slane %v4744, 5
        %v4747 = vor.u32 %v4743, %v4746
        %v4748 = vsel %vm1023, %v4738, %v4747
        %v4750 = vshrl.u32 %v4542, 16
        %v4752 = vrot.slane %v4750, 4
        %v4753 = vshll.u32 %v4542, 16
        %v4755 = vrot.slane %v4753, 5
        %v4756 = vor.u32 %v4752, %v4755
        %v4757 = vsel %vm1023, %v4747, %v4756
        %4758 = vrot.lane.b32.xlu0 %v4550, 32
        %v4759 = vpop.permute.xlu0 %4758
        %4760 = vrot.lane.b32.xlu0 %v4559, 32
        %v4761 = vpop.permute.xlu0 %4760
        %4762 = vrot.lane.b32.xlu0 %v4568, 32
        %v4763 = vpop.permute.xlu0 %4762
        %4764 = vrot.lane.b32.xlu0 %v4577, 32
        %v4765 = vpop.permute.xlu0 %4764
        %4766 = vrot.lane.b32.xlu0 %v4586, 32
        %v4767 = vpop.permute.xlu0 %4766
        %4768 = vrot.lane.b32.xlu0 %v4595, 32
        %v4769 = vpop.permute.xlu0 %4768
        %4770 = vrot.lane.b32.xlu0 %v4604, 32
        %v4771 = vpop.permute.xlu0 %4770
        %4772 = vrot.lane.b32.xlu0 %v4613, 32
        %v4773 = vpop.permute.xlu0 %4772
        %4774 = vrot.lane.b32.xlu0 %v4622, 32
        %v4775 = vpop.permute.xlu0 %4774
        %4776 = vrot.lane.b32.xlu0 %v4631, 32
        %v4777 = vpop.permute.xlu0 %4776
        %4778 = vrot.lane.b32.xlu0 %v4640, 32
        %v4779 = vpop.permute.xlu0 %4778
        %4780 = vrot.lane.b32.xlu0 %v4649, 32
        %v4781 = vpop.permute.xlu0 %4780
        %4782 = vrot.lane.b32.xlu0 %v4658, 32
        %v4783 = vpop.permute.xlu0 %4782
        %4784 = vrot.lane.b32.xlu0 %v4667, 32
        %v4785 = vpop.permute.xlu0 %4784
        %4786 = vrot.lane.b32.xlu0 %v4676, 32
        %v4787 = vpop.permute.xlu0 %4786
        %4788 = vrot.lane.b32.xlu0 %v4685, 32
        %v4789 = vpop.permute.xlu0 %4788
        %4790 = vrot.lane.b32.xlu0 %v4694, 32
        %v4791 = vpop.permute.xlu0 %4790
        %4792 = vrot.lane.b32.xlu0 %v4703, 32
        %v4793 = vpop.permute.xlu0 %4792
        %4794 = vrot.lane.b32.xlu0 %v4712, 32
        %v4795 = vpop.permute.xlu0 %4794
        %4796 = vrot.lane.b32.xlu0 %v4721, 32
        %v4797 = vpop.permute.xlu0 %4796
        %4798 = vrot.lane.b32.xlu0 %v4730, 32
        %v4799 = vpop.permute.xlu0 %4798
        %4800 = vrot.lane.b32.xlu0 %v4739, 32
        %v4801 = vpop.permute.xlu0 %4800
        %4802 = vrot.lane.b32.xlu0 %v4748, 32
        %v4803 = vpop.permute.xlu0 %4802
        %4804 = vrot.lane.b32.xlu0 %v4757, 32
        %v4805 = vpop.permute.xlu0 %4804
        %4806 = vrot.lane.b32.xlu0 %v4756, 32
        %v4807 = vpop.permute.xlu0 %4806
        %v4809 = vunpack.c.l.b16 %v4385
        %v4810 = vpack.c.b16 %v4809, %v4809
        %v4811 = vrot.slane %v4519, 5
        %v4812 = vrot.slane %v4520, 5
        %v4813 = vsel %vm1292, %v4811, %v4812
        %v4814 = vrot.slane %v4521, 5
        %v4815 = vsel %vm1292, %v4812, %v4814
        %v4816 = vrot.slane %v4522, 5
        %v4817 = vsel %vm1292, %v4814, %v4816
        %v4818 = vrot.slane %v4523, 5
        %v4819 = vsel %vm1292, %v4816, %v4818
        %v4820 = vrot.slane %v4524, 5
        %v4821 = vsel %vm1292, %v4818, %v4820
        %v4822 = vrot.slane %v4525, 5
        %v4823 = vsel %vm1292, %v4820, %v4822
        %v4824 = vrot.slane %v4526, 5
        %v4825 = vsel %vm1292, %v4822, %v4824
        %v4826 = vrot.slane %v4527, 5
        %v4827 = vsel %vm1292, %v4824, %v4826
        %v4828 = vrot.slane %v4528, 5
        %v4829 = vsel %vm1292, %v4826, %v4828
        %v4830 = vrot.slane %v4529, 5
        %v4831 = vsel %vm1292, %v4828, %v4830
        %v4832 = vrot.slane %v4530, 5
        %v4833 = vsel %vm1292, %v4830, %v4832
        %v4834 = vrot.slane %v4531, 5
        %v4835 = vsel %vm1292, %v4832, %v4834
        %v4836 = vrot.slane %v4532, 5
        %v4837 = vsel %vm1292, %v4834, %v4836
        %v4838 = vrot.slane %v4533, 5
        %v4839 = vsel %vm1292, %v4836, %v4838
        %v4840 = vrot.slane %v4534, 5
        %v4841 = vsel %vm1292, %v4838, %v4840
        %v4842 = vrot.slane %v4535, 5
        %v4843 = vsel %vm1292, %v4840, %v4842
        %v4844 = vrot.slane %v4536, 5
        %v4845 = vsel %vm1292, %v4842, %v4844
        %v4846 = vrot.slane %v4537, 5
        %v4847 = vsel %vm1292, %v4844, %v4846
        %v4848 = vrot.slane %v4538, 5
        %v4849 = vsel %vm1292, %v4846, %v4848
        %v4850 = vrot.slane %v4539, 5
        %v4851 = vsel %vm1292, %v4848, %v4850
        %v4852 = vrot.slane %v4540, 5
        %v4853 = vsel %vm1292, %v4850, %v4852
        %v4854 = vrot.slane %v4541, 5
        %v4855 = vsel %vm1292, %v4852, %v4854
        %v4856 = vrot.slane %v4542, 5
        %v4857 = vsel %vm1292, %v4854, %v4856
        %v4858 = vrot.slane %v4810, 5
        %v4859 = vsel %vm1292, %v4856, %v4858
        %4860 = vrot.lane.b32.xlu0 %v4811, 64
        %v4861 = vpop.permute.xlu0 %4860
        %4862 = vrot.lane.b32.xlu0 %v4813, 64
        %v4863 = vpop.permute.xlu0 %4862
        %4864 = vrot.lane.b32.xlu0 %v4815, 64
        %v4865 = vpop.permute.xlu0 %4864
        %4866 = vrot.lane.b32.xlu0 %v4817, 64
        %v4867 = vpop.permute.xlu0 %4866
        %4868 = vrot.lane.b32.xlu0 %v4819, 64
        %v4869 = vpop.permute.xlu0 %4868
        %4870 = vrot.lane.b32.xlu0 %v4821, 64
        %v4871 = vpop.permute.xlu0 %4870
        %4872 = vrot.lane.b32.xlu0 %v4823, 64
        %v4873 = vpop.permute.xlu0 %4872
        %4874 = vrot.lane.b32.xlu0 %v4825, 64
        %v4875 = vpop.permute.xlu0 %4874
        %4876 = vrot.lane.b32.xlu0 %v4827, 64
        %v4877 = vpop.permute.xlu0 %4876
        %4878 = vrot.lane.b32.xlu0 %v4829, 64
        %v4879 = vpop.permute.xlu0 %4878
        %4880 = vrot.lane.b32.xlu0 %v4831, 64
        %v4881 = vpop.permute.xlu0 %4880
        %4882 = vrot.lane.b32.xlu0 %v4833, 64
        %v4883 = vpop.permute.xlu0 %4882
        %4884 = vrot.lane.b32.xlu0 %v4835, 64
        %v4885 = vpop.permute.xlu0 %4884
        %4886 = vrot.lane.b32.xlu0 %v4837, 64
        %v4887 = vpop.permute.xlu0 %4886
        %4888 = vrot.lane.b32.xlu0 %v4839, 64
        %v4889 = vpop.permute.xlu0 %4888
        %4890 = vrot.lane.b32.xlu0 %v4841, 64
        %v4891 = vpop.permute.xlu0 %4890
        %4892 = vrot.lane.b32.xlu0 %v4843, 64
        %v4893 = vpop.permute.xlu0 %4892
        %4894 = vrot.lane.b32.xlu0 %v4845, 64
        %v4895 = vpop.permute.xlu0 %4894
        %4896 = vrot.lane.b32.xlu0 %v4847, 64
        %v4897 = vpop.permute.xlu0 %4896
        %4898 = vrot.lane.b32.xlu0 %v4849, 64
        %v4899 = vpop.permute.xlu0 %4898
        %4900 = vrot.lane.b32.xlu0 %v4851, 64
        %v4901 = vpop.permute.xlu0 %4900
        %4902 = vrot.lane.b32.xlu0 %v4853, 64
        %v4903 = vpop.permute.xlu0 %4902
        %4904 = vrot.lane.b32.xlu0 %v4855, 64
        %v4905 = vpop.permute.xlu0 %4904
        %4906 = vrot.lane.b32.xlu0 %v4857, 64
        %v4907 = vpop.permute.xlu0 %4906
        %4908 = vrot.lane.b32.xlu0 %v4859, 64
        %v4909 = vpop.permute.xlu0 %4908
        %v4914 = vunpack.c.l.b16 %v4386
        %v4915 = vunpack.c.l.b16 %v4387
        %v4916 = vunpack.c.l.b16 %v4388
        %v4917 = vunpack.c.l.b16 %v4389
        %v4918 = vpack.c.b16 %v4449, %v4914
        %v4919 = vpack.c.b16 %v4916, %v4915
        %v4920 = vpack.c.b16 %v4917, %v4917
        %4921 = vrot.lane.b32.xlu0 %v4918, 96
        %v4922 = vpop.permute.xlu0 %4921
        %4923 = vrot.lane.b32.xlu0 %v4521, 96
        %v4924 = vpop.permute.xlu0 %4923
        %4925 = vrot.lane.b32.xlu0 %v4522, 96
        %v4926 = vpop.permute.xlu0 %4925
        %4927 = vrot.lane.b32.xlu0 %v4523, 96
        %v4928 = vpop.permute.xlu0 %4927
        %4929 = vrot.lane.b32.xlu0 %v4524, 96
        %v4930 = vpop.permute.xlu0 %4929
        %4931 = vrot.lane.b32.xlu0 %v4525, 96
        %v4932 = vpop.permute.xlu0 %4931
        %4933 = vrot.lane.b32.xlu0 %v4526, 96
        %v4934 = vpop.permute.xlu0 %4933
        %4935 = vrot.lane.b32.xlu0 %v4527, 96
        %v4936 = vpop.permute.xlu0 %4935
        %4937 = vrot.lane.b32.xlu0 %v4528, 96
        %v4938 = vpop.permute.xlu0 %4937
        %4939 = vrot.lane.b32.xlu0 %v4529, 96
        %v4940 = vpop.permute.xlu0 %4939
        %4941 = vrot.lane.b32.xlu0 %v4530, 96
        %v4942 = vpop.permute.xlu0 %4941
        %4943 = vrot.lane.b32.xlu0 %v4531, 96
        %v4944 = vpop.permute.xlu0 %4943
        %4945 = vrot.lane.b32.xlu0 %v4532, 96
        %v4946 = vpop.permute.xlu0 %4945
        %4947 = vrot.lane.b32.xlu0 %v4533, 96
        %v4948 = vpop.permute.xlu0 %4947
        %4949 = vrot.lane.b32.xlu0 %v4534, 96
        %v4950 = vpop.permute.xlu0 %4949
        %4951 = vrot.lane.b32.xlu0 %v4535, 96
        %v4952 = vpop.permute.xlu0 %4951
        %4953 = vrot.lane.b32.xlu0 %v4536, 96
        %v4954 = vpop.permute.xlu0 %4953
        %4955 = vrot.lane.b32.xlu0 %v4537, 96
        %v4956 = vpop.permute.xlu0 %4955
        %4957 = vrot.lane.b32.xlu0 %v4538, 96
        %v4958 = vpop.permute.xlu0 %4957
        %4959 = vrot.lane.b32.xlu0 %v4539, 96
        %v4960 = vpop.permute.xlu0 %4959
        %4961 = vrot.lane.b32.xlu0 %v4540, 96
        %v4962 = vpop.permute.xlu0 %4961
        %4963 = vrot.lane.b32.xlu0 %v4541, 96
        %v4964 = vpop.permute.xlu0 %4963
        %4965 = vrot.lane.b32.xlu0 %v4542, 96
        %v4966 = vpop.permute.xlu0 %4965
        %4967 = vrot.lane.b32.xlu0 %v4919, 96
        %v4968 = vpop.permute.xlu0 %4967
        %4969 = vrot.lane.b32.xlu0 %v4920, 96
        %v4970 = vpop.permute.xlu0 %4969
        %v4971 = vpack.c.b16 %v4915, %v4493
        %v4972 = vpack.c.b16 %v4917, %v4916
        %v4974 = vshrl.u32 %v4496, 16
        %v4976 = vrot.slane %v4974, 4
        %v4977 = vshll.u32 %v4496, 16
        %v4979 = vrot.slane %v4977, 5
        %v4980 = vor.u32 %v4976, %v4979
        %v4982 = vshrl.u32 %v4497, 16
        %v4984 = vrot.slane %v4982, 4
        %v4985 = vshll.u32 %v4497, 16
        %v4987 = vrot.slane %v4985, 5
        %v4988 = vor.u32 %v4984, %v4987
        %v4989 = vsel %vm1023, %v4980, %v4988
        %v4991 = vshrl.u32 %v4498, 16
        %v4993 = vrot.slane %v4991, 4
        %v4994 = vshll.u32 %v4498, 16
        %v4996 = vrot.slane %v4994, 5
        %v4997 = vor.u32 %v4993, %v4996
        %v4998 = vsel %vm1023, %v4988, %v4997
        %v5000 = vshrl.u32 %v4499, 16
        %v5002 = vrot.slane %v5000, 4
        %v5003 = vshll.u32 %v4499, 16
        %v5005 = vrot.slane %v5003, 5
        %v5006 = vor.u32 %v5002, %v5005
        %v5007 = vsel %vm1023, %v4997, %v5006
        %v5009 = vshrl.u32 %v4500, 16
        %v5011 = vrot.slane %v5009, 4
        %v5012 = vshll.u32 %v4500, 16
        %v5014 = vrot.slane %v5012, 5
        %v5015 = vor.u32 %v5011, %v5014
        %v5016 = vsel %vm1023, %v5006, %v5015
        %v5018 = vshrl.u32 %v4501, 16
        %v5020 = vrot.slane %v5018, 4
        %v5021 = vshll.u32 %v4501, 16
        %v5023 = vrot.slane %v5021, 5
        %v5024 = vor.u32 %v5020, %v5023
        %v5025 = vsel %vm1023, %v5015, %v5024
        %v5027 = vshrl.u32 %v4502, 16
        %v5029 = vrot.slane %v5027, 4
        %v5030 = vshll.u32 %v4502, 16
        %v5032 = vrot.slane %v5030, 5
        %v5033 = vor.u32 %v5029, %v5032
        %v5034 = vsel %vm1023, %v5024, %v5033
        %v5036 = vshrl.u32 %v4503, 16
        %v5038 = vrot.slane %v5036, 4
        %v5039 = vshll.u32 %v4503, 16
        %v5041 = vrot.slane %v5039, 5
        %v5042 = vor.u32 %v5038, %v5041
        %v5043 = vsel %vm1023, %v5033, %v5042
        %v5045 = vshrl.u32 %v4504, 16
        %v5047 = vrot.slane %v5045, 4
        %v5048 = vshll.u32 %v4504, 16
        %v5050 = vrot.slane %v5048, 5
        %v5051 = vor.u32 %v5047, %v5050
        %v5052 = vsel %vm1023, %v5042, %v5051
        %v5054 = vshrl.u32 %v4505, 16
        %v5056 = vrot.slane %v5054, 4
        %v5057 = vshll.u32 %v4505, 16
        %v5059 = vrot.slane %v5057, 5
        %v5060 = vor.u32 %v5056, %v5059
        %v5061 = vsel %vm1023, %v5051, %v5060
        %v5063 = vshrl.u32 %v4506, 16
        %v5065 = vrot.slane %v5063, 4
        %v5066 = vshll.u32 %v4506, 16
        %v5068 = vrot.slane %v5066, 5
        %v5069 = vor.u32 %v5065, %v5068
        %v5070 = vsel %vm1023, %v5060, %v5069
        %v5072 = vshrl.u32 %v4507, 16
        %v5074 = vrot.slane %v5072, 4
        %v5075 = vshll.u32 %v4507, 16
        %v5077 = vrot.slane %v5075, 5
        %v5078 = vor.u32 %v5074, %v5077
        %v5079 = vsel %vm1023, %v5069, %v5078
        %v5081 = vshrl.u32 %v4508, 16
        %v5083 = vrot.slane %v5081, 4
        %v5084 = vshll.u32 %v4508, 16
        %v5086 = vrot.slane %v5084, 5
        %v5087 = vor.u32 %v5083, %v5086
        %v5088 = vsel %vm1023, %v5078, %v5087
        %v5090 = vshrl.u32 %v4509, 16
        %v5092 = vrot.slane %v5090, 4
        %v5093 = vshll.u32 %v4509, 16
        %v5095 = vrot.slane %v5093, 5
        %v5096 = vor.u32 %v5092, %v5095
        %v5097 = vsel %vm1023, %v5087, %v5096
        %v5099 = vshrl.u32 %v4510, 16
        %v5101 = vrot.slane %v5099, 4
        %v5102 = vshll.u32 %v4510, 16
        %v5104 = vrot.slane %v5102, 5
        %v5105 = vor.u32 %v5101, %v5104
        %v5106 = vsel %vm1023, %v5096, %v5105
        %v5108 = vshrl.u32 %v4511, 16
        %v5110 = vrot.slane %v5108, 4
        %v5111 = vshll.u32 %v4511, 16
        %v5113 = vrot.slane %v5111, 5
        %v5114 = vor.u32 %v5110, %v5113
        %v5115 = vsel %vm1023, %v5105, %v5114
        %v5117 = vshrl.u32 %v4512, 16
        %v5119 = vrot.slane %v5117, 4
        %v5120 = vshll.u32 %v4512, 16
        %v5122 = vrot.slane %v5120, 5
        %v5123 = vor.u32 %v5119, %v5122
        %v5124 = vsel %vm1023, %v5114, %v5123
        %v5126 = vshrl.u32 %v4513, 16
        %v5128 = vrot.slane %v5126, 4
        %v5129 = vshll.u32 %v4513, 16
        %v5131 = vrot.slane %v5129, 5
        %v5132 = vor.u32 %v5128, %v5131
        %v5133 = vsel %vm1023, %v5123, %v5132
        %v5135 = vshrl.u32 %v4514, 16
        %v5137 = vrot.slane %v5135, 4
        %v5138 = vshll.u32 %v4514, 16
        %v5140 = vrot.slane %v5138, 5
        %v5141 = vor.u32 %v5137, %v5140
        %v5142 = vsel %vm1023, %v5132, %v5141
        %v5144 = vshrl.u32 %v4515, 16
        %v5146 = vrot.slane %v5144, 4
        %v5147 = vshll.u32 %v4515, 16
        %v5149 = vrot.slane %v5147, 5
        %v5150 = vor.u32 %v5146, %v5149
        %v5151 = vsel %vm1023, %v5141, %v5150
        %v5153 = vshrl.u32 %v4516, 16
        %v5155 = vrot.slane %v5153, 4
        %v5156 = vshll.u32 %v4516, 16
        %v5158 = vrot.slane %v5156, 5
        %v5159 = vor.u32 %v5155, %v5158
        %v5160 = vsel %vm1023, %v5150, %v5159
        %v5162 = vshrl.u32 %v4517, 16
        %v5164 = vrot.slane %v5162, 4
        %v5165 = vshll.u32 %v4517, 16
        %v5167 = vrot.slane %v5165, 5
        %v5168 = vor.u32 %v5164, %v5167
        %v5169 = vsel %vm1023, %v5159, %v5168
        %v5171 = vshrl.u32 %v4971, 16
        %v5173 = vrot.slane %v5171, 4
        %v5174 = vshll.u32 %v4971, 16
        %v5176 = vrot.slane %v5174, 5
        %v5177 = vor.u32 %v5173, %v5176
        %v5178 = vsel %vm1023, %v5168, %v5177
        %v5180 = vshrl.u32 %v4972, 16
        %v5182 = vrot.slane %v5180, 4
        %v5183 = vshll.u32 %v4972, 16
        %v5185 = vrot.slane %v5183, 5
        %v5186 = vor.u32 %v5182, %v5185
        %v5187 = vsel %vm1023, %v5177, %v5186
        %v5189 = vunpack.c.l.b16 %v4390
        %v5190 = vpack.c.b16 %v5189, %v5189
        %v5191 = vrot.slane %v4496, 5
        %v5192 = vrot.slane %v4497, 5
        %v5193 = vsel %vm1292, %v5191, %v5192
        %v5194 = vrot.slane %v4498, 5
        %v5195 = vsel %vm1292, %v5192, %v5194
        %v5196 = vrot.slane %v4499, 5
        %v5197 = vsel %vm1292, %v5194, %v5196
        %v5198 = vrot.slane %v4500, 5
        %v5199 = vsel %vm1292, %v5196, %v5198
        %v5200 = vrot.slane %v4501, 5
        %v5201 = vsel %vm1292, %v5198, %v5200
        %v5202 = vrot.slane %v4502, 5
        %v5203 = vsel %vm1292, %v5200, %v5202
        %v5204 = vrot.slane %v4503, 5
        %v5205 = vsel %vm1292, %v5202, %v5204
        %v5206 = vrot.slane %v4504, 5
        %v5207 = vsel %vm1292, %v5204, %v5206
        %v5208 = vrot.slane %v4505, 5
        %v5209 = vsel %vm1292, %v5206, %v5208
        %v5210 = vrot.slane %v4506, 5
        %v5211 = vsel %vm1292, %v5208, %v5210
        %v5212 = vrot.slane %v4507, 5
        %v5213 = vsel %vm1292, %v5210, %v5212
        %v5214 = vrot.slane %v4508, 5
        %v5215 = vsel %vm1292, %v5212, %v5214
        %v5216 = vrot.slane %v4509, 5
        %v5217 = vsel %vm1292, %v5214, %v5216
        %v5218 = vrot.slane %v4510, 5
        %v5219 = vsel %vm1292, %v5216, %v5218
        %v5220 = vrot.slane %v4511, 5
        %v5221 = vsel %vm1292, %v5218, %v5220
        %v5222 = vrot.slane %v4512, 5
        %v5223 = vsel %vm1292, %v5220, %v5222
        %v5224 = vrot.slane %v4513, 5
        %v5225 = vsel %vm1292, %v5222, %v5224
        %v5226 = vrot.slane %v4514, 5
        %v5227 = vsel %vm1292, %v5224, %v5226
        %v5228 = vrot.slane %v4515, 5
        %v5229 = vsel %vm1292, %v5226, %v5228
        %v5230 = vrot.slane %v4516, 5
        %v5231 = vsel %vm1292, %v5228, %v5230
        %v5232 = vrot.slane %v4517, 5
        %v5233 = vsel %vm1292, %v5230, %v5232
        %v5234 = vrot.slane %v4971, 5
        %v5235 = vsel %vm1292, %v5232, %v5234
        %v5236 = vrot.slane %v4972, 5
        %v5237 = vsel %vm1292, %v5234, %v5236
        %v5238 = vrot.slane %v5190, 5
        %v5239 = vsel %vm1292, %v5236, %v5238
        %5240 = vrot.lane.b32.xlu0 %v5191, 32
        %v5241 = vpop.permute.xlu0 %5240
        %5242 = vrot.lane.b32.xlu0 %v5193, 32
        %v5243 = vpop.permute.xlu0 %5242
        %5244 = vrot.lane.b32.xlu0 %v5195, 32
        %v5245 = vpop.permute.xlu0 %5244
        %5246 = vrot.lane.b32.xlu0 %v5197, 32
        %v5247 = vpop.permute.xlu0 %5246
        %5248 = vrot.lane.b32.xlu0 %v5199, 32
        %v5249 = vpop.permute.xlu0 %5248
        %5250 = vrot.lane.b32.xlu0 %v5201, 32
        %v5251 = vpop.permute.xlu0 %5250
        %5252 = vrot.lane.b32.xlu0 %v5203, 32
        %v5253 = vpop.permute.xlu0 %5252
        %5254 = vrot.lane.b32.xlu0 %v5205, 32
        %v5255 = vpop.permute.xlu0 %5254
        %5256 = vrot.lane.b32.xlu0 %v5207, 32
        %v5257 = vpop.permute.xlu0 %5256
        %5258 = vrot.lane.b32.xlu0 %v5209, 32
        %v5259 = vpop.permute.xlu0 %5258
        %5260 = vrot.lane.b32.xlu0 %v5211, 32
        %v5261 = vpop.permute.xlu0 %5260
        %5262 = vrot.lane.b32.xlu0 %v5213, 32
        %v5263 = vpop.permute.xlu0 %5262
        %5264 = vrot.lane.b32.xlu0 %v5215, 32
        %v5265 = vpop.permute.xlu0 %5264
        %5266 = vrot.lane.b32.xlu0 %v5217, 32
        %v5267 = vpop.permute.xlu0 %5266
        %5268 = vrot.lane.b32.xlu0 %v5219, 32
        %v5269 = vpop.permute.xlu0 %5268
        %5270 = vrot.lane.b32.xlu0 %v5221, 32
        %v5271 = vpop.permute.xlu0 %5270
        %5272 = vrot.lane.b32.xlu0 %v5223, 32
        %v5273 = vpop.permute.xlu0 %5272
        %5274 = vrot.lane.b32.xlu0 %v5225, 32
        %v5275 = vpop.permute.xlu0 %5274
        %5276 = vrot.lane.b32.xlu0 %v5227, 32
        %v5277 = vpop.permute.xlu0 %5276
        %5278 = vrot.lane.b32.xlu0 %v5229, 32
        %v5279 = vpop.permute.xlu0 %5278
        %5280 = vrot.lane.b32.xlu0 %v5231, 32
        %v5281 = vpop.permute.xlu0 %5280
        %5282 = vrot.lane.b32.xlu0 %v5233, 32
        %v5283 = vpop.permute.xlu0 %5282
        %5284 = vrot.lane.b32.xlu0 %v5235, 32
        %v5285 = vpop.permute.xlu0 %5284
        %5286 = vrot.lane.b32.xlu0 %v5237, 32
        %v5287 = vpop.permute.xlu0 %5286
        %5288 = vrot.lane.b32.xlu0 %v5239, 32
        %v5289 = vpop.permute.xlu0 %5288
        %v5294 = vunpack.c.l.b16 %v4391
        %v5295 = vunpack.c.l.b16 %v4392
        %v5296 = vunpack.c.l.b16 %v4393
        %v5297 = vunpack.c.l.b16 %v4394
        %v5298 = vpack.c.b16 %v4452, %v5294
        %v5299 = vpack.c.b16 %v5296, %v5295
        %v5300 = vpack.c.b16 %v5297, %v5297
        %5301 = vrot.lane.b32.xlu0 %v5298, 64
        %v5302 = vpop.permute.xlu0 %5301
        %5303 = vrot.lane.b32.xlu0 %v4498, 64
        %v5304 = vpop.permute.xlu0 %5303
        %5305 = vrot.lane.b32.xlu0 %v4499, 64
        %v5306 = vpop.permute.xlu0 %5305
        %5307 = vrot.lane.b32.xlu0 %v4500, 64
        %v5308 = vpop.permute.xlu0 %5307
        %5309 = vrot.lane.b32.xlu0 %v4501, 64
        %v5310 = vpop.permute.xlu0 %5309
        %5311 = vrot.lane.b32.xlu0 %v4502, 64
        %v5312 = vpop.permute.xlu0 %5311
        %5313 = vrot.lane.b32.xlu0 %v4503, 64
        %v5314 = vpop.permute.xlu0 %5313
        %5315 = vrot.lane.b32.xlu0 %v4504, 64
        %v5316 = vpop.permute.xlu0 %5315
        %5317 = vrot.lane.b32.xlu0 %v4505, 64
        %v5318 = vpop.permute.xlu0 %5317
        %5319 = vrot.lane.b32.xlu0 %v4506, 64
        %v5320 = vpop.permute.xlu0 %5319
        %5321 = vrot.lane.b32.xlu0 %v4507, 64
        %v5322 = vpop.permute.xlu0 %5321
        %5323 = vrot.lane.b32.xlu0 %v4508, 64
        %v5324 = vpop.permute.xlu0 %5323
        %5325 = vrot.lane.b32.xlu0 %v4509, 64
        %v5326 = vpop.permute.xlu0 %5325
        %5327 = vrot.lane.b32.xlu0 %v4510, 64
        %v5328 = vpop.permute.xlu0 %5327
        %5329 = vrot.lane.b32.xlu0 %v4511, 64
        %v5330 = vpop.permute.xlu0 %5329
        %5331 = vrot.lane.b32.xlu0 %v4512, 64
        %v5332 = vpop.permute.xlu0 %5331
        %5333 = vrot.lane.b32.xlu0 %v4513, 64
        %v5334 = vpop.permute.xlu0 %5333
        %5335 = vrot.lane.b32.xlu0 %v4514, 64
        %v5336 = vpop.permute.xlu0 %5335
        %5337 = vrot.lane.b32.xlu0 %v4515, 64
        %v5338 = vpop.permute.xlu0 %5337
        %5339 = vrot.lane.b32.xlu0 %v4516, 64
        %v5340 = vpop.permute.xlu0 %5339
        %5341 = vrot.lane.b32.xlu0 %v4517, 64
        %v5342 = vpop.permute.xlu0 %5341
        %5343 = vrot.lane.b32.xlu0 %v4971, 64
        %v5344 = vpop.permute.xlu0 %5343
        %5345 = vrot.lane.b32.xlu0 %v4972, 64
        %v5346 = vpop.permute.xlu0 %5345
        %5347 = vrot.lane.b32.xlu0 %v5299, 64
        %v5348 = vpop.permute.xlu0 %5347
        %5349 = vrot.lane.b32.xlu0 %v5300, 64
        %v5350 = vpop.permute.xlu0 %5349
        %v5351 = vpack.c.b16 %v5295, %v4917
        %v5352 = vpack.c.b16 %v5297, %v5296
        %v5354 = vshrl.u32 %v4919, 16
        %v5356 = vrot.slane %v5354, 4
        %v5357 = vshll.u32 %v4919, 16
        %v5359 = vrot.slane %v5357, 5
        %v5360 = vor.u32 %v5356, %v5359
        %v5361 = vsel %vm1023, %v4756, %v5360
        %v5363 = vshrl.u32 %v5351, 16
        %v5365 = vrot.slane %v5363, 4
        %v5366 = vshll.u32 %v5351, 16
        %v5368 = vrot.slane %v5366, 5
        %v5369 = vor.u32 %v5365, %v5368
        %v5370 = vsel %vm1023, %v5360, %v5369
        %v5372 = vshrl.u32 %v5352, 16
        %v5374 = vrot.slane %v5372, 4
        %v5375 = vshll.u32 %v5352, 16
        %v5377 = vrot.slane %v5375, 5
        %v5378 = vor.u32 %v5374, %v5377
        %v5379 = vsel %vm1023, %v5369, %v5378
        %5380 = vrot.lane.b32.xlu0 %v4576, 96
        %v5381 = vpop.permute.xlu0 %5380
        %5382 = vrot.lane.b32.xlu0 %v4586, 96
        %v5383 = vpop.permute.xlu0 %5382
        %5384 = vrot.lane.b32.xlu0 %v4595, 96
        %v5385 = vpop.permute.xlu0 %5384
        %5386 = vrot.lane.b32.xlu0 %v4604, 96
        %v5387 = vpop.permute.xlu0 %5386
        %5388 = vrot.lane.b32.xlu0 %v4613, 96
        %v5389 = vpop.permute.xlu0 %5388
        %5390 = vrot.lane.b32.xlu0 %v4622, 96
        %v5391 = vpop.permute.xlu0 %5390
        %5392 = vrot.lane.b32.xlu0 %v4631, 96
        %v5393 = vpop.permute.xlu0 %5392
        %5394 = vrot.lane.b32.xlu0 %v4640, 96
        %v5395 = vpop.permute.xlu0 %5394
        %5396 = vrot.lane.b32.xlu0 %v4649, 96
        %v5397 = vpop.permute.xlu0 %5396
        %5398 = vrot.lane.b32.xlu0 %v4658, 96
        %v5399 = vpop.permute.xlu0 %5398
        %5400 = vrot.lane.b32.xlu0 %v4667, 96
        %v5401 = vpop.permute.xlu0 %5400
        %5402 = vrot.lane.b32.xlu0 %v4676, 96
        %v5403 = vpop.permute.xlu0 %5402
        %5404 = vrot.lane.b32.xlu0 %v4685, 96
        %v5405 = vpop.permute.xlu0 %5404
        %5406 = vrot.lane.b32.xlu0 %v4694, 96
        %v5407 = vpop.permute.xlu0 %5406
        %5408 = vrot.lane.b32.xlu0 %v4703, 96
        %v5409 = vpop.permute.xlu0 %5408
        %5410 = vrot.lane.b32.xlu0 %v4712, 96
        %v5411 = vpop.permute.xlu0 %5410
        %5412 = vrot.lane.b32.xlu0 %v4721, 96
        %v5413 = vpop.permute.xlu0 %5412
        %5414 = vrot.lane.b32.xlu0 %v4730, 96
        %v5415 = vpop.permute.xlu0 %5414
        %5416 = vrot.lane.b32.xlu0 %v4739, 96
        %v5417 = vpop.permute.xlu0 %5416
        %5418 = vrot.lane.b32.xlu0 %v4748, 96
        %v5419 = vpop.permute.xlu0 %5418
        %5420 = vrot.lane.b32.xlu0 %v4757, 96
        %v5421 = vpop.permute.xlu0 %5420
        %5422 = vrot.lane.b32.xlu0 %v5361, 96
        %v5423 = vpop.permute.xlu0 %5422
        %5424 = vrot.lane.b32.xlu0 %v5370, 96
        %v5425 = vpop.permute.xlu0 %5424
        %5426 = vrot.lane.b32.xlu0 %v5379, 96
        %v5427 = vpop.permute.xlu0 %5426
        %5428 = vrot.lane.b32.xlu0 %v5378, 96
        %v5429 = vpop.permute.xlu0 %5428
        %v5431 = vunpack.c.l.b16 %v4395
        %v5432 = vpack.c.b16 %v5431, %v5431
        %v5433 = vrot.slane %v4919, 5
        %v5434 = vsel %vm1292, %v4856, %v5433
        %v5435 = vrot.slane %v5351, 5
        %v5436 = vsel %vm1292, %v5433, %v5435
        %v5437 = vrot.slane %v5352, 5
        %v5438 = vsel %vm1292, %v5435, %v5437
        %v5439 = vrot.slane %v5432, 5
        %v5440 = vsel %vm1292, %v5437, %v5439
        %v5443 = vsel %vm2027, %v4494, %v4759
        %v5446 = vsel %vm2027, %v4495, %v4761
        %v5448 = vsel %vm2027, %v4496, %v4763
        %v5450 = vsel %vm2027, %v4497, %v4765
        %v5452 = vsel %vm2027, %v4498, %v4767
        %v5454 = vsel %vm2027, %v4499, %v4769
        %v5456 = vsel %vm2027, %v4500, %v4771
        %v5458 = vsel %vm2027, %v4501, %v4773
        %v5460 = vsel %vm2027, %v4502, %v4775
        %v5462 = vsel %vm2027, %v4503, %v4777
        %v5464 = vsel %vm2027, %v4504, %v4779
        %v5466 = vsel %vm2027, %v4505, %v4781
        %v5468 = vsel %vm2027, %v4506, %v4783
        %v5470 = vsel %vm2027, %v4507, %v4785
        %v5472 = vsel %vm2027, %v4508, %v4787
        %v5474 = vsel %vm2027, %v4509, %v4789
        %v5476 = vsel %vm2027, %v4510, %v4791
        %v5478 = vsel %vm2027, %v4511, %v4793
        %v5480 = vsel %vm2027, %v4512, %v4795
        %v5482 = vsel %vm2027, %v4513, %v4797
        %v5484 = vsel %vm2027, %v4514, %v4799
        %v5486 = vsel %vm2027, %v4515, %v4801
        %v5488 = vsel %vm2027, %v4516, %v4803
        %v5490 = vsel %vm2027, %v4517, %v4805
        %v5493 = vsel %vm2027, %v4518, %v4807
        %v5495 = vsel %vm2129, %v5443, %v4861
        %v5497 = vsel %vm2129, %v5446, %v4863
        %v5499 = vsel %vm2129, %v5448, %v4865
        %v5501 = vsel %vm2129, %v5450, %v4867
        %v5503 = vsel %vm2129, %v5452, %v4869
        %v5505 = vsel %vm2129, %v5454, %v4871
        %v5507 = vsel %vm2129, %v5456, %v4873
        %v5509 = vsel %vm2129, %v5458, %v4875
        %v5511 = vsel %vm2129, %v5460, %v4877
        %v5513 = vsel %vm2129, %v5462, %v4879
        %v5515 = vsel %vm2129, %v5464, %v4881
        %v5517 = vsel %vm2129, %v5466, %v4883
        %v5519 = vsel %vm2129, %v5468, %v4885
        %v5521 = vsel %vm2129, %v5470, %v4887
        %v5523 = vsel %vm2129, %v5472, %v4889
        %v5525 = vsel %vm2129, %v5474, %v4891
        %v5527 = vsel %vm2129, %v5476, %v4893
        %v5529 = vsel %vm2129, %v5478, %v4895
        %v5531 = vsel %vm2129, %v5480, %v4897
        %v5533 = vsel %vm2129, %v5482, %v4899
        %v5535 = vsel %vm2129, %v5484, %v4901
        %v5537 = vsel %vm2129, %v5486, %v4903
        %v5539 = vsel %vm2129, %v5488, %v4905
        %v5541 = vsel %vm2129, %v5490, %v4907
        %v5543 = vsel %vm2129, %v5493, %v4909
        %v5545 = vsel %vm2231, %v5495, %v4922
        %v5547 = vsel %vm2231, %v5497, %v4924
        %v5549 = vsel %vm2231, %v5499, %v4926
        %v5551 = vsel %vm2231, %v5501, %v4928
        %v5553 = vsel %vm2231, %v5503, %v4930
        %v5555 = vsel %vm2231, %v5505, %v4932
        %v5557 = vsel %vm2231, %v5507, %v4934
        %v5559 = vsel %vm2231, %v5509, %v4936
        %v5561 = vsel %vm2231, %v5511, %v4938
        %v5563 = vsel %vm2231, %v5513, %v4940
        %v5565 = vsel %vm2231, %v5515, %v4942
        %v5567 = vsel %vm2231, %v5517, %v4944
        %v5569 = vsel %vm2231, %v5519, %v4946
        %v5571 = vsel %vm2231, %v5521, %v4948
        %v5573 = vsel %vm2231, %v5523, %v4950
        %v5575 = vsel %vm2231, %v5525, %v4952
        %v5577 = vsel %vm2231, %v5527, %v4954
        %v5579 = vsel %vm2231, %v5529, %v4956
        %v5581 = vsel %vm2231, %v5531, %v4958
        %v5583 = vsel %vm2231, %v5533, %v4960
        %v5585 = vsel %vm2231, %v5535, %v4962
        %v5587 = vsel %vm2231, %v5537, %v4964
        %v5589 = vsel %vm2231, %v5539, %v4966
        %v5591 = vsel %vm2231, %v5541, %v4968
        %v5593 = vsel %vm2231, %v5543, %v4970
        %v5596 = vsel %vm2027, %v4980, %v5241
        %v5599 = vsel %vm2027, %v4989, %v5243
        %v5602 = vsel %vm2027, %v4998, %v5245
        %v5605 = vsel %vm2027, %v5007, %v5247
        %v5608 = vsel %vm2027, %v5016, %v5249
        %v5611 = vsel %vm2027, %v5025, %v5251
        %v5614 = vsel %vm2027, %v5034, %v5253
        %v5617 = vsel %vm2027, %v5043, %v5255
        %v5620 = vsel %vm2027, %v5052, %v5257
        %v5623 = vsel %vm2027, %v5061, %v5259
        %v5626 = vsel %vm2027, %v5070, %v5261
        %v5629 = vsel %vm2027, %v5079, %v5263
        %v5632 = vsel %vm2027, %v5088, %v5265
        %v5635 = vsel %vm2027, %v5097, %v5267
        %v5638 = vsel %vm2027, %v5106, %v5269
        %v5641 = vsel %vm2027, %v5115, %v5271
        %v5644 = vsel %vm2027, %v5124, %v5273
        %v5647 = vsel %vm2027, %v5133, %v5275
        %v5650 = vsel %vm2027, %v5142, %v5277
        %v5653 = vsel %vm2027, %v5151, %v5279
        %v5656 = vsel %vm2027, %v5160, %v5281
        %v5659 = vsel %vm2027, %v5169, %v5283
        %v5662 = vsel %vm2027, %v5178, %v5285
        %v5665 = vsel %vm2027, %v5187, %v5287
        %v5668 = vsel %vm2027, %v5186, %v5289
        %v5670 = vsel %vm2129, %v5596, %v5302
        %v5672 = vsel %vm2129, %v5599, %v5304
        %v5674 = vsel %vm2129, %v5602, %v5306
        %v5676 = vsel %vm2129, %v5605, %v5308
        %v5678 = vsel %vm2129, %v5608, %v5310
        %v5680 = vsel %vm2129, %v5611, %v5312
        %v5682 = vsel %vm2129, %v5614, %v5314
        %v5684 = vsel %vm2129, %v5617, %v5316
        %v5686 = vsel %vm2129, %v5620, %v5318
        %v5688 = vsel %vm2129, %v5623, %v5320
        %v5690 = vsel %vm2129, %v5626, %v5322
        %v5692 = vsel %vm2129, %v5629, %v5324
        %v5694 = vsel %vm2129, %v5632, %v5326
        %v5696 = vsel %vm2129, %v5635, %v5328
        %v5698 = vsel %vm2129, %v5638, %v5330
        %v5700 = vsel %vm2129, %v5641, %v5332
        %v5702 = vsel %vm2129, %v5644, %v5334
        %v5704 = vsel %vm2129, %v5647, %v5336
        %v5706 = vsel %vm2129, %v5650, %v5338
        %v5708 = vsel %vm2129, %v5653, %v5340
        %v5710 = vsel %vm2129, %v5656, %v5342
        %v5712 = vsel %vm2129, %v5659, %v5344
        %v5714 = vsel %vm2129, %v5662, %v5346
        %v5716 = vsel %vm2129, %v5665, %v5348
        %v5718 = vsel %vm2129, %v5668, %v5350
        %v5720 = vsel %vm2231, %v5670, %v5381
        %v5722 = vsel %vm2231, %v5672, %v5383
        %v5724 = vsel %vm2231, %v5674, %v5385
        %v5726 = vsel %vm2231, %v5676, %v5387
        %v5728 = vsel %vm2231, %v5678, %v5389
        %v5730 = vsel %vm2231, %v5680, %v5391
        %v5732 = vsel %vm2231, %v5682, %v5393
        %v5734 = vsel %vm2231, %v5684, %v5395
        %v5736 = vsel %vm2231, %v5686, %v5397
        %v5738 = vsel %vm2231, %v5688, %v5399
        %v5740 = vsel %vm2231, %v5690, %v5401
        %v5742 = vsel %vm2231, %v5692, %v5403
        %v5744 = vsel %vm2231, %v5694, %v5405
        %v5746 = vsel %vm2231, %v5696, %v5407
        %v5748 = vsel %vm2231, %v5698, %v5409
        %v5750 = vsel %vm2231, %v5700, %v5411
        %v5752 = vsel %vm2231, %v5702, %v5413
        %v5754 = vsel %vm2231, %v5704, %v5415
        %v5756 = vsel %vm2231, %v5706, %v5417
        %v5758 = vsel %vm2231, %v5708, %v5419
        %v5760 = vsel %vm2231, %v5710, %v5421
        %v5762 = vsel %vm2231, %v5712, %v5423
        %v5764 = vsel %vm2231, %v5714, %v5425
        %v5766 = vsel %vm2231, %v5716, %v5427
        %v5768 = vsel %vm2231, %v5718, %v5429
        %v5769 = vld [vmem:[%s4] sm:$0xf]
        %v5770 = vld [vmem:[%s4 + $0x4] sm:$0xf]
        %v5771 = vld [vmem:[%s4 + $0x8] sm:$0xf]
        %v5772 = vld [vmem:[%s4 + $0xc] sm:$0xf]
        %v5773 = vld [vmem:[%s4 + $0x10] sm:$0xf]
        %v5774 = vld [vmem:[%s4 + $0x14] sm:$0xf]
        %v5775 = vld [vmem:[%s4 + $0x18] sm:$0xf]
        %v5776 = vld [vmem:[%s4 + $0x1c] sm:$0xf]
        %v5777 = vld [vmem:[%s4 + $0x20] sm:$0xf]
        %v5778 = vld [vmem:[%s4 + $0x24] sm:$0xf]
        %v5779 = vld [vmem:[%s4 + $0x28] sm:$0xf]
        %v5780 = vld [vmem:[%s4 + $0x2c] sm:$0xf]
        %v5781 = vld [vmem:[%s4 + $0x30] sm:$0xf]
        %v5782 = vld [vmem:[%s4 + $0x34] sm:$0xf]
        %v5783 = vld [vmem:[%s4 + $0x38] sm:$0xf]
        %v5784 = vld [vmem:[%s4 + $0x3c] sm:$0xf]
        %v5785 = vld [vmem:[%s4 + $0x40] sm:$0xf]
        %v5786 = vld [vmem:[%s4 + $0x44] sm:$0xf]
        %v5787 = vld [vmem:[%s4 + $0x48] sm:$0xf]
        %v5788 = vld [vmem:[%s4 + $0x4c] sm:$0xf]
        %v5789 = vld [vmem:[%s4 + $0x50] sm:$0xf]
        %v5790 = vld [vmem:[%s4 + $0x54] sm:$0xf]
        %v5791 = vld [vmem:[%s4 + $0x58] sm:$0xf]
        %v5792 = vld [vmem:[%s4 + $0x5c] sm:$0xf]
        %v5793 = vld [vmem:[%s4 + $0x60] sm:$0xf]
        %v5794 = vld [vmem:[%s4 + $0x64] sm:$0xf]
        %v5795 = vld [vmem:[%s4 + $0x68] sm:$0xf]
        %v5796 = vld [vmem:[%s4 + $0x6c] sm:$0xf]
        %v5797 = vld [vmem:[%s4 + $0x70] sm:$0xf]
        %v5798 = vld [vmem:[%s4 + $0x74] sm:$0xf]
        %v5799 = vld [vmem:[%s4 + $0x78] sm:$0xf]
        %v5800 = vld [vmem:[%s4 + $0x7c] sm:$0xf]
        %v5801 = vld [vmem:[%s4 + $0x80] sm:$0xf]
        %v5802 = vld [vmem:[%s4 + $0x84] sm:$0xf]
        %v5803 = vld [vmem:[%s4 + $0x88] sm:$0xf]
        %v5804 = vld [vmem:[%s4 + $0x8c] sm:$0xf]
        %v5805 = vshrl.u32 %v5545, 16
        %v5807 = vrot.slane %v5805, 3
        %v5808 = vshll.u32 %v5545, 16
        %v5810 = vrot.slane %v5808, 4
        %v5811 = vor.u32 %v5807, %v5810
        %v5812 = vshrl.u32 %v5547, 16
        %v5814 = vrot.slane %v5812, 3
        %v5815 = vshll.u32 %v5547, 16
        %v5817 = vrot.slane %v5815, 4
        %v5818 = vor.u32 %v5814, %v5817
        %v5819 = vsel %vm2351, %v5811, %v5818
        %v5820 = vshrl.u32 %v5720, 16
        %v5822 = vrot.slane %v5820, 3
        %v5823 = vshll.u32 %v5720, 16
        %v5825 = vrot.slane %v5823, 4
        %v5826 = vor.u32 %v5822, %v5825
        %v5827 = vshrl.u32 %v5722, 16
        %v5829 = vrot.slane %v5827, 3
        %v5830 = vshll.u32 %v5722, 16
        %v5832 = vrot.slane %v5830, 4
        %v5833 = vor.u32 %v5829, %v5832
        %v5834 = vsel %vm2351, %v5826, %v5833
        %v5836 = vshrl.u32 %v4816, 16
        %v5838 = vrot.slane %v5836, 3
        %v5839 = vshll.u32 %v4816, 16
        %v5841 = vrot.slane %v5839, 4
        %v5842 = vor.u32 %v5838, %v5841
        %v5844 = vshrl.u32 %v4819, 16
        %v5846 = vrot.slane %v5844, 3
        %v5847 = vshll.u32 %v4819, 16
        %v5849 = vrot.slane %v5847, 4
        %v5850 = vor.u32 %v5846, %v5849
        %v5851 = vsel %vm2351, %v5842, %v5850
        %v5852 = vshrl.u32 %v5549, 16
        %v5854 = vrot.slane %v5852, 3
        %v5855 = vshll.u32 %v5549, 16
        %v5857 = vrot.slane %v5855, 4
        %v5858 = vor.u32 %v5854, %v5857
        %v5859 = vsel %vm2351, %v5818, %v5858
        %v5860 = vshrl.u32 %v5724, 16
        %v5862 = vrot.slane %v5860, 3
        %v5863 = vshll.u32 %v5724, 16
        %v5865 = vrot.slane %v5863, 4
        %v5866 = vor.u32 %v5862, %v5865
        %v5867 = vsel %vm2351, %v5833, %v5866
        %v5869 = vshrl.u32 %v4821, 16
        %v5871 = vrot.slane %v5869, 3
        %v5872 = vshll.u32 %v4821, 16
        %v5874 = vrot.slane %v5872, 4
        %v5875 = vor.u32 %v5871, %v5874
        %v5876 = vsel %vm2351, %v5850, %v5875
        %v5877 = vshrl.u32 %v5551, 16
        %v5879 = vrot.slane %v5877, 3
        %v5880 = vshll.u32 %v5551, 16
        %v5882 = vrot.slane %v5880, 4
        %v5883 = vor.u32 %v5879, %v5882
        %v5884 = vsel %vm2351, %v5858, %v5883
        %v5885 = vshrl.u32 %v5726, 16
        %v5887 = vrot.slane %v5885, 3
        %v5888 = vshll.u32 %v5726, 16
        %v5890 = vrot.slane %v5888, 4
        %v5891 = vor.u32 %v5887, %v5890
        %v5892 = vsel %vm2351, %v5866, %v5891
        %v5894 = vshrl.u32 %v4823, 16
        %v5896 = vrot.slane %v5894, 3
        %v5897 = vshll.u32 %v4823, 16
        %v5899 = vrot.slane %v5897, 4
        %v5900 = vor.u32 %v5896, %v5899
        %v5901 = vsel %vm2351, %v5875, %v5900
        %v5902 = vshrl.u32 %v5553, 16
        %v5904 = vrot.slane %v5902, 3
        %v5905 = vshll.u32 %v5553, 16
        %v5907 = vrot.slane %v5905, 4
        %v5908 = vor.u32 %v5904, %v5907
        %v5909 = vsel %vm2351, %v5883, %v5908
        %v5910 = vshrl.u32 %v5728, 16
        %v5912 = vrot.slane %v5910, 3
        %v5913 = vshll.u32 %v5728, 16
        %v5915 = vrot.slane %v5913, 4
        %v5916 = vor.u32 %v5912, %v5915
        %v5917 = vsel %vm2351, %v5891, %v5916
        %v5919 = vshrl.u32 %v4825, 16
        %v5921 = vrot.slane %v5919, 3
        %v5922 = vshll.u32 %v4825, 16
        %v5924 = vrot.slane %v5922, 4
        %v5925 = vor.u32 %v5921, %v5924
        %v5926 = vsel %vm2351, %v5900, %v5925
        %v5927 = vshrl.u32 %v5555, 16
        %v5929 = vrot.slane %v5927, 3
        %v5930 = vshll.u32 %v5555, 16
        %v5932 = vrot.slane %v5930, 4
        %v5933 = vor.u32 %v5929, %v5932
        %v5934 = vsel %vm2351, %v5908, %v5933
        %v5935 = vshrl.u32 %v5730, 16
        %v5937 = vrot.slane %v5935, 3
        %v5938 = vshll.u32 %v5730, 16
        %v5940 = vrot.slane %v5938, 4
        %v5941 = vor.u32 %v5937, %v5940
        %v5942 = vsel %vm2351, %v5916, %v5941
        %v5944 = vshrl.u32 %v4827, 16
        %v5946 = vrot.slane %v5944, 3
        %v5947 = vshll.u32 %v4827, 16
        %v5949 = vrot.slane %v5947, 4
        %v5950 = vor.u32 %v5946, %v5949
        %v5951 = vsel %vm2351, %v5925, %v5950
        %v5952 = vshrl.u32 %v5557, 16
        %v5954 = vrot.slane %v5952, 3
        %v5955 = vshll.u32 %v5557, 16
        %v5957 = vrot.slane %v5955, 4
        %v5958 = vor.u32 %v5954, %v5957
        %v5959 = vsel %vm2351, %v5933, %v5958
        %v5960 = vshrl.u32 %v5732, 16
        %v5962 = vrot.slane %v5960, 3
        %v5963 = vshll.u32 %v5732, 16
        %v5965 = vrot.slane %v5963, 4
        %v5966 = vor.u32 %v5962, %v5965
        %v5967 = vsel %vm2351, %v5941, %v5966
        %v5969 = vshrl.u32 %v4829, 16
        %v5971 = vrot.slane %v5969, 3
        %v5972 = vshll.u32 %v4829, 16
        %v5974 = vrot.slane %v5972, 4
        %v5975 = vor.u32 %v5971, %v5974
        %v5976 = vsel %vm2351, %v5950, %v5975
        %v5977 = vshrl.u32 %v5559, 16
        %v5979 = vrot.slane %v5977, 3
        %v5980 = vshll.u32 %v5559, 16
        %v5982 = vrot.slane %v5980, 4
        %v5983 = vor.u32 %v5979, %v5982
        %v5984 = vsel %vm2351, %v5958, %v5983
        %v5985 = vshrl.u32 %v5734, 16
        %v5987 = vrot.slane %v5985, 3
        %v5988 = vshll.u32 %v5734, 16
        %v5990 = vrot.slane %v5988, 4
        %v5991 = vor.u32 %v5987, %v5990
        %v5992 = vsel %vm2351, %v5966, %v5991
        %v5994 = vshrl.u32 %v4831, 16
        %v5996 = vrot.slane %v5994, 3
        %v5997 = vshll.u32 %v4831, 16
        %v5999 = vrot.slane %v5997, 4
        %v6000 = vor.u32 %v5996, %v5999
        %v6001 = vsel %vm2351, %v5975, %v6000
        %v6002 = vshrl.u32 %v5561, 16
        %v6004 = vrot.slane %v6002, 3
        %v6005 = vshll.u32 %v5561, 16
        %v6007 = vrot.slane %v6005, 4
        %v6008 = vor.u32 %v6004, %v6007
        %v6009 = vsel %vm2351, %v5983, %v6008
        %v6010 = vshrl.u32 %v5736, 16
        %v6012 = vrot.slane %v6010, 3
        %v6013 = vshll.u32 %v5736, 16
        %v6015 = vrot.slane %v6013, 4
        %v6016 = vor.u32 %v6012, %v6015
        %v6017 = vsel %vm2351, %v5991, %v6016
        %v6019 = vshrl.u32 %v4833, 16
        %v6021 = vrot.slane %v6019, 3
        %v6022 = vshll.u32 %v4833, 16
        %v6024 = vrot.slane %v6022, 4
        %v6025 = vor.u32 %v6021, %v6024
        %v6026 = vsel %vm2351, %v6000, %v6025
        %v6027 = vshrl.u32 %v5563, 16
        %v6029 = vrot.slane %v6027, 3
        %v6030 = vshll.u32 %v5563, 16
        %v6032 = vrot.slane %v6030, 4
        %v6033 = vor.u32 %v6029, %v6032
        %v6034 = vsel %vm2351, %v6008, %v6033
        %v6035 = vshrl.u32 %v5738, 16
        %v6037 = vrot.slane %v6035, 3
        %v6038 = vshll.u32 %v5738, 16
        %v6040 = vrot.slane %v6038, 4
        %v6041 = vor.u32 %v6037, %v6040
        %v6042 = vsel %vm2351, %v6016, %v6041
        %v6044 = vshrl.u32 %v4835, 16
        %v6046 = vrot.slane %v6044, 3
        %v6047 = vshll.u32 %v4835, 16
        %v6049 = vrot.slane %v6047, 4
        %v6050 = vor.u32 %v6046, %v6049
        %v6051 = vsel %vm2351, %v6025, %v6050
        %v6052 = vshrl.u32 %v5565, 16
        %v6054 = vrot.slane %v6052, 3
        %v6055 = vshll.u32 %v5565, 16
        %v6057 = vrot.slane %v6055, 4
        %v6058 = vor.u32 %v6054, %v6057
        %v6059 = vsel %vm2351, %v6033, %v6058
        %v6060 = vshrl.u32 %v5740, 16
        %v6062 = vrot.slane %v6060, 3
        %v6063 = vshll.u32 %v5740, 16
        %v6065 = vrot.slane %v6063, 4
        %v6066 = vor.u32 %v6062, %v6065
        %v6067 = vsel %vm2351, %v6041, %v6066
        %v6069 = vshrl.u32 %v4837, 16
        %v6071 = vrot.slane %v6069, 3
        %v6072 = vshll.u32 %v4837, 16
        %v6074 = vrot.slane %v6072, 4
        %v6075 = vor.u32 %v6071, %v6074
        %v6076 = vsel %vm2351, %v6050, %v6075
        %v6077 = vshrl.u32 %v5567, 16
        %v6079 = vrot.slane %v6077, 3
        %v6080 = vshll.u32 %v5567, 16
        %v6082 = vrot.slane %v6080, 4
        %v6083 = vor.u32 %v6079, %v6082
        %v6084 = vsel %vm2351, %v6058, %v6083
        %v6085 = vshrl.u32 %v5742, 16
        %v6087 = vrot.slane %v6085, 3
        %v6088 = vshll.u32 %v5742, 16
        %v6090 = vrot.slane %v6088, 4
        %v6091 = vor.u32 %v6087, %v6090
        %v6092 = vsel %vm2351, %v6066, %v6091
        %v6094 = vshrl.u32 %v4839, 16
        %v6096 = vrot.slane %v6094, 3
        %v6097 = vshll.u32 %v4839, 16
        %v6099 = vrot.slane %v6097, 4
        %v6100 = vor.u32 %v6096, %v6099
        %v6101 = vsel %vm2351, %v6075, %v6100
        %v6102 = vshrl.u32 %v5569, 16
        %v6104 = vrot.slane %v6102, 3
        %v6105 = vshll.u32 %v5569, 16
        %v6107 = vrot.slane %v6105, 4
        %v6108 = vor.u32 %v6104, %v6107
        %v6109 = vsel %vm2351, %v6083, %v6108
        %v6110 = vshrl.u32 %v5744, 16
        %v6112 = vrot.slane %v6110, 3
        %v6113 = vshll.u32 %v5744, 16
        %v6115 = vrot.slane %v6113, 4
        %v6116 = vor.u32 %v6112, %v6115
        %v6117 = vsel %vm2351, %v6091, %v6116
        %v6119 = vshrl.u32 %v4841, 16
        %v6121 = vrot.slane %v6119, 3
        %v6122 = vshll.u32 %v4841, 16
        %v6124 = vrot.slane %v6122, 4
        %v6125 = vor.u32 %v6121, %v6124
        %v6126 = vsel %vm2351, %v6100, %v6125
        %v6127 = vshrl.u32 %v5571, 16
        %v6129 = vrot.slane %v6127, 3
        %v6130 = vshll.u32 %v5571, 16
        %v6132 = vrot.slane %v6130, 4
        %v6133 = vor.u32 %v6129, %v6132
        %v6134 = vsel %vm2351, %v6108, %v6133
        %v6135 = vshrl.u32 %v5746, 16
        %v6137 = vrot.slane %v6135, 3
        %v6138 = vshll.u32 %v5746, 16
        %v6140 = vrot.slane %v6138, 4
        %v6141 = vor.u32 %v6137, %v6140
        %v6142 = vsel %vm2351, %v6116, %v6141
        %v6144 = vshrl.u32 %v4843, 16
        %v6146 = vrot.slane %v6144, 3
        %v6147 = vshll.u32 %v4843, 16
        %v6149 = vrot.slane %v6147, 4
        %v6150 = vor.u32 %v6146, %v6149
        %v6151 = vsel %vm2351, %v6125, %v6150
        %v6152 = vshrl.u32 %v5573, 16
        %v6154 = vrot.slane %v6152, 3
        %v6155 = vshll.u32 %v5573, 16
        %v6157 = vrot.slane %v6155, 4
        %v6158 = vor.u32 %v6154, %v6157
        %v6159 = vsel %vm2351, %v6133, %v6158
        %v6160 = vshrl.u32 %v5748, 16
        %v6162 = vrot.slane %v6160, 3
        %v6163 = vshll.u32 %v5748, 16
        %v6165 = vrot.slane %v6163, 4
        %v6166 = vor.u32 %v6162, %v6165
        %v6167 = vsel %vm2351, %v6141, %v6166
        %v6169 = vshrl.u32 %v4845, 16
        %v6171 = vrot.slane %v6169, 3
        %v6172 = vshll.u32 %v4845, 16
        %v6174 = vrot.slane %v6172, 4
        %v6175 = vor.u32 %v6171, %v6174
        %v6176 = vsel %vm2351, %v6150, %v6175
        %v6177 = vshrl.u32 %v5575, 16
        %v6179 = vrot.slane %v6177, 3
        %v6180 = vshll.u32 %v5575, 16
        %v6182 = vrot.slane %v6180, 4
        %v6183 = vor.u32 %v6179, %v6182
        %v6184 = vsel %vm2351, %v6158, %v6183
        %v6185 = vshrl.u32 %v5750, 16
        %v6187 = vrot.slane %v6185, 3
        %v6188 = vshll.u32 %v5750, 16
        %v6190 = vrot.slane %v6188, 4
        %v6191 = vor.u32 %v6187, %v6190
        %v6192 = vsel %vm2351, %v6166, %v6191
        %v6194 = vshrl.u32 %v4847, 16
        %v6196 = vrot.slane %v6194, 3
        %v6197 = vshll.u32 %v4847, 16
        %v6199 = vrot.slane %v6197, 4
        %v6200 = vor.u32 %v6196, %v6199
        %v6201 = vsel %vm2351, %v6175, %v6200
        %v6202 = vshrl.u32 %v5577, 16
        %v6204 = vrot.slane %v6202, 3
        %v6205 = vshll.u32 %v5577, 16
        %v6207 = vrot.slane %v6205, 4
        %v6208 = vor.u32 %v6204, %v6207
        %v6209 = vsel %vm2351, %v6183, %v6208
        %v6210 = vshrl.u32 %v5752, 16
        %v6212 = vrot.slane %v6210, 3
        %v6213 = vshll.u32 %v5752, 16
        %v6215 = vrot.slane %v6213, 4
        %v6216 = vor.u32 %v6212, %v6215
        %v6217 = vsel %vm2351, %v6191, %v6216
        %v6219 = vshrl.u32 %v4849, 16
        %v6221 = vrot.slane %v6219, 3
        %v6222 = vshll.u32 %v4849, 16
        %v6224 = vrot.slane %v6222, 4
        %v6225 = vor.u32 %v6221, %v6224
        %v6226 = vsel %vm2351, %v6200, %v6225
        %v6227 = vshrl.u32 %v5579, 16
        %v6229 = vrot.slane %v6227, 3
        %v6230 = vshll.u32 %v5579, 16
        %v6232 = vrot.slane %v6230, 4
        %v6233 = vor.u32 %v6229, %v6232
        %v6234 = vsel %vm2351, %v6208, %v6233
        %v6235 = vshrl.u32 %v5754, 16
        %v6237 = vrot.slane %v6235, 3
        %v6238 = vshll.u32 %v5754, 16
        %v6240 = vrot.slane %v6238, 4
        %v6241 = vor.u32 %v6237, %v6240
        %v6242 = vsel %vm2351, %v6216, %v6241
        %v6244 = vshrl.u32 %v4851, 16
        %v6246 = vrot.slane %v6244, 3
        %v6247 = vshll.u32 %v4851, 16
        %v6249 = vrot.slane %v6247, 4
        %v6250 = vor.u32 %v6246, %v6249
        %v6251 = vsel %vm2351, %v6225, %v6250
        %v6252 = vshrl.u32 %v5581, 16
        %v6254 = vrot.slane %v6252, 3
        %v6255 = vshll.u32 %v5581, 16
        %v6257 = vrot.slane %v6255, 4
        %v6258 = vor.u32 %v6254, %v6257
        %v6259 = vsel %vm2351, %v6233, %v6258
        %v6260 = vshrl.u32 %v5756, 16
        %v6262 = vrot.slane %v6260, 3
        %v6263 = vshll.u32 %v5756, 16
        %v6265 = vrot.slane %v6263, 4
        %v6266 = vor.u32 %v6262, %v6265
        %v6267 = vsel %vm2351, %v6241, %v6266
        %v6269 = vshrl.u32 %v4853, 16
        %v6271 = vrot.slane %v6269, 3
        %v6272 = vshll.u32 %v4853, 16
        %v6274 = vrot.slane %v6272, 4
        %v6275 = vor.u32 %v6271, %v6274
        %v6276 = vsel %vm2351, %v6250, %v6275
        %v6277 = vshrl.u32 %v5583, 16
        %v6279 = vrot.slane %v6277, 3
        %v6280 = vshll.u32 %v5583, 16
        %v6282 = vrot.slane %v6280, 4
        %v6283 = vor.u32 %v6279, %v6282
        %v6284 = vsel %vm2351, %v6258, %v6283
        %v6285 = vshrl.u32 %v5758, 16
        %v6287 = vrot.slane %v6285, 3
        %v6288 = vshll.u32 %v5758, 16
        %v6290 = vrot.slane %v6288, 4
        %v6291 = vor.u32 %v6287, %v6290
        %v6292 = vsel %vm2351, %v6266, %v6291
        %v6294 = vshrl.u32 %v4855, 16
        %v6296 = vrot.slane %v6294, 3
        %v6297 = vshll.u32 %v4855, 16
        %v6299 = vrot.slane %v6297, 4
        %v6300 = vor.u32 %v6296, %v6299
        %v6301 = vsel %vm2351, %v6275, %v6300
        %v6302 = vshrl.u32 %v5585, 16
        %v6304 = vrot.slane %v6302, 3
        %v6305 = vshll.u32 %v5585, 16
        %v6307 = vrot.slane %v6305, 4
        %v6308 = vor.u32 %v6304, %v6307
        %v6309 = vsel %vm2351, %v6283, %v6308
        %v6310 = vshrl.u32 %v5760, 16
        %v6312 = vrot.slane %v6310, 3
        %v6313 = vshll.u32 %v5760, 16
        %v6315 = vrot.slane %v6313, 4
        %v6316 = vor.u32 %v6312, %v6315
        %v6317 = vsel %vm2351, %v6291, %v6316
        %v6319 = vshrl.u32 %v4857, 16
        %v6321 = vrot.slane %v6319, 3
        %v6322 = vshll.u32 %v4857, 16
        %v6324 = vrot.slane %v6322, 4
        %v6325 = vor.u32 %v6321, %v6324
        %v6326 = vsel %vm2351, %v6300, %v6325
        %v6327 = vshrl.u32 %v5587, 16
        %v6329 = vrot.slane %v6327, 3
        %v6330 = vshll.u32 %v5587, 16
        %v6332 = vrot.slane %v6330, 4
        %v6333 = vor.u32 %v6329, %v6332
        %v6334 = vsel %vm2351, %v6308, %v6333
        %v6335 = vshrl.u32 %v5762, 16
        %v6337 = vrot.slane %v6335, 3
        %v6338 = vshll.u32 %v5762, 16
        %v6340 = vrot.slane %v6338, 4
        %v6341 = vor.u32 %v6337, %v6340
        %v6342 = vsel %vm2351, %v6316, %v6341
        %v6344 = vshrl.u32 %v5434, 16
        %v6346 = vrot.slane %v6344, 3
        %v6347 = vshll.u32 %v5434, 16
        %v6349 = vrot.slane %v6347, 4
        %v6350 = vor.u32 %v6346, %v6349
        %v6351 = vsel %vm2351, %v6325, %v6350
        %v6352 = vshrl.u32 %v5589, 16
        %v6354 = vrot.slane %v6352, 3
        %v6355 = vshll.u32 %v5589, 16
        %v6357 = vrot.slane %v6355, 4
        %v6358 = vor.u32 %v6354, %v6357
        %v6359 = vsel %vm2351, %v6333, %v6358
        %v6360 = vshrl.u32 %v5764, 16
        %v6362 = vrot.slane %v6360, 3
        %v6363 = vshll.u32 %v5764, 16
        %v6365 = vrot.slane %v6363, 4
        %v6366 = vor.u32 %v6362, %v6365
        %v6367 = vsel %vm2351, %v6341, %v6366
        %v6369 = vshrl.u32 %v5436, 16
        %v6371 = vrot.slane %v6369, 3
        %v6372 = vshll.u32 %v5436, 16
        %v6374 = vrot.slane %v6372, 4
        %v6375 = vor.u32 %v6371, %v6374
        %v6376 = vsel %vm2351, %v6350, %v6375
        %v6377 = vshrl.u32 %v5591, 16
        %v6379 = vrot.slane %v6377, 3
        %v6380 = vshll.u32 %v5591, 16
        %v6382 = vrot.slane %v6380, 4
        %v6383 = vor.u32 %v6379, %v6382
        %v6384 = vsel %vm2351, %v6358, %v6383
        %v6385 = vshrl.u32 %v5766, 16
        %v6387 = vrot.slane %v6385, 3
        %v6388 = vshll.u32 %v5766, 16
        %v6390 = vrot.slane %v6388, 4
        %v6391 = vor.u32 %v6387, %v6390
        %v6392 = vsel %vm2351, %v6366, %v6391
        %v6394 = vshrl.u32 %v5438, 16
        %v6396 = vrot.slane %v6394, 3
        %v6397 = vshll.u32 %v5438, 16
        %v6399 = vrot.slane %v6397, 4
        %v6400 = vor.u32 %v6396, %v6399
        %v6401 = vsel %vm2351, %v6375, %v6400
        %v6402 = vshrl.u32 %v5593, 16
        %v6404 = vrot.slane %v6402, 3
        %v6405 = vshll.u32 %v5593, 16
        %v6407 = vrot.slane %v6405, 4
        %v6408 = vor.u32 %v6404, %v6407
        %v6409 = vsel %vm2351, %v6383, %v6408
        %v6410 = vshrl.u32 %v5768, 16
        %v6412 = vrot.slane %v6410, 3
        %v6413 = vshll.u32 %v5768, 16
        %v6415 = vrot.slane %v6413, 4
        %v6416 = vor.u32 %v6412, %v6415
        %v6417 = vsel %vm2351, %v6391, %v6416
        %v6419 = vshrl.u32 %v5440, 16
        %v6421 = vrot.slane %v6419, 3
        %v6422 = vshll.u32 %v5440, 16
        %v6424 = vrot.slane %v6422, 4
        %v6425 = vor.u32 %v6421, %v6424
        %v6426 = vsel %vm2351, %v6400, %v6425
        %v6511 = vunpack.c.l.b16 %v5769
        %v6512 = vunpack.c.l.b16 %v5770
        %v6513 = vunpack.c.l.b16 %v5771
        %v6514 = vunpack.c.l.b16 %v5772
        %v6515 = vunpack.c.l.b16 %v5773
        %v6516 = vunpack.c.l.b16 %v5774
        %v6517 = vunpack.c.l.b16 %v5775
        %v6518 = vunpack.c.l.b16 %v5776
        %v6519 = vunpack.c.l.b16 %v5777
        %v6520 = vunpack.c.l.b16 %v5778
        %v6521 = vunpack.c.l.b16 %v5779
        %v6522 = vunpack.c.l.b16 %v5780
        %v6523 = vunpack.c.l.b16 %v5781
        %v6524 = vunpack.c.l.b16 %v5782
        %v6525 = vunpack.c.l.b16 %v5783
        %v6526 = vunpack.c.l.b16 %v5784
        %v6527 = vunpack.c.l.b16 %v5785
        %v6528 = vunpack.c.l.b16 %v5786
        %v6529 = vunpack.c.l.b16 %v5787
        %v6530 = vunpack.c.l.b16 %v5788
        %v6531 = vunpack.c.l.b16 %v5789
        %v6532 = vunpack.c.l.b16 %v5790
        %v6533 = vunpack.c.l.b16 %v5791
        %v6534 = vunpack.c.l.b16 %v5792
        %v6535 = vunpack.c.l.b16 %v5793
        %v6536 = vunpack.c.l.b16 %v5794
        %v6537 = vunpack.c.l.b16 %v5795
        %v6538 = vunpack.c.l.b16 %v5796
        %v6539 = vunpack.c.l.b16 %v5797
        %v6540 = vunpack.c.l.b16 %v5798
        %v6541 = vunpack.c.l.b16 %v5799
        %v6542 = vunpack.c.l.b16 %v5800
        %v6543 = vunpack.c.l.b16 %v5801
        %v6544 = vunpack.c.l.b16 %v5802
        %v6545 = vunpack.c.l.b16 %v5803
        %v6546 = vunpack.c.l.b16 %v5804
        %v6547 = vpack.c.b16 %v6512, %v6511
        %v6548 = vpack.c.b16 %v6514, %v6513
        %v6549 = vpack.c.b16 %v6516, %v6515
        %v6550 = vpack.c.b16 %v6518, %v6517
        %v6551 = vpack.c.b16 %v6520, %v6519
        %v6552 = vpack.c.b16 %v6522, %v6521
        %v6553 = vpack.c.b16 %v6524, %v6523
        %v6554 = vpack.c.b16 %v6526, %v6525
        %v6555 = vpack.c.b16 %v6528, %v6527
        %v6556 = vpack.c.b16 %v6530, %v6529
        %v6557 = vpack.c.b16 %v6532, %v6531
        %v6558 = vpack.c.b16 %v6534, %v6533
        %v6559 = vpack.c.b16 %v6536, %v6535
        %v6560 = vpack.c.b16 %v6538, %v6537
        %v6561 = vpack.c.b16 %v6540, %v6539
        %v6562 = vpack.c.b16 %v6542, %v6541
        %v6563 = vpack.c.b16 %v6544, %v6543
        %v6564 = vpack.c.b16 %v6546, %v6545
        %v6584 = vsel %vm2027, %v5851, 0
        %v6587 = vsel %vm2027, %v5876, 0
        %v6590 = vsel %vm2027, %v5901, 0
        %v6593 = vsel %vm2027, %v5926, 0
        %v6596 = vsel %vm2027, %v5951, 0
        %v6599 = vsel %vm2027, %v5976, 0
        %v6602 = vsel %vm2027, %v6001, 0
        %v6605 = vsel %vm2027, %v6026, 0
        %v6608 = vsel %vm2027, %v6051, 0
        %v6611 = vsel %vm2027, %v6076, 0
        %v6614 = vsel %vm2027, %v6101, 0
        %v6617 = vsel %vm2027, %v6126, 0
        %v6620 = vsel %vm2027, %v6151, 0
        %v6623 = vsel %vm2027, %v6176, 0
        %v6626 = vsel %vm2027, %v6201, 0
        %v6629 = vsel %vm2027, %v6226, 0
        %v6632 = vsel %vm2027, %v6251, 0
        %v6635 = vsel %vm2027, %v6276, 0
        %v6638 = vsel %vm2027, %v6301, 0
        %v6641 = vsel %vm2027, %v6326, 0
        %v6644 = vsel %vm2027, %v6351, 0
        %v6647 = vsel %vm2027, %v6376, 0
        %v6650 = vsel %vm2027, %v6401, 0
        %v6653 = vsel %vm2027, %v6426, 0
        %6655 = vmatprep.subr.bf16.mxu0 0
        %6656 = vmatpush1.bf16.msra.mxu0 %v6554
        %6657 = vmatprep.subr.bf16.mxu0 0
        %6658 = vmatpush1.bf16.msra.mxu0 %v6553
        %6659 = vmatprep.subr.bf16.mxu0 0
        %6660 = vmatpush1.bf16.msra.mxu0 %v6552
        %6661 = vmatprep.subr.bf16.mxu0 0
        %6662 = vmatpush1.bf16.msra.mxu0 %v6551
        %6663 = vmatprep.subr.bf16.mxu0 0
        %6664 = vmatpush1.bf16.msra.mxu0 %v6550
        %6665 = vmatprep.subr.bf16.mxu0 0
        %6666 = vmatpush1.bf16.msra.mxu0 %v6549
        %6667 = vmatprep.subr.bf16.mxu0 0
        %6668 = vmatpush1.bf16.msra.mxu0 %v6548
        %6669 = vmatprep.subr.bf16.mxu0 0
        %6670 = vmatpush1.bf16.msra.mxu0 %v6547
        %6671 = vmatprep.subr.bf16.mxu0 0
        %6672 = vmatpush2.bf16.msra.mxu0 %v6562
        %6673 = vmatprep.subr.bf16.mxu0 0
        %6674 = vmatpush2.bf16.msra.mxu0 %v6561
        %6675 = vmatprep.subr.bf16.mxu0 0
        %6676 = vmatpush2.bf16.msra.mxu0 %v6560
        %6677 = vmatprep.subr.bf16.mxu0 0
        %6678 = vmatpush2.bf16.msra.mxu0 %v6559
        %6679 = vmatprep.subr.bf16.mxu0 0
        %6680 = vmatpush2.bf16.msra.mxu0 %v6558
        %6681 = vmatprep.subr.bf16.mxu0 0
        %6682 = vmatpush2.bf16.msra.mxu0 %v6557
        %6683 = vmatprep.subr.bf16.mxu0 0
        %6684 = vmatpush2.bf16.msra.mxu0 %v6556
        %6685 = vmatprep.subr.bf16.mxu0 0
        %6686 = vmatpush2.bf16.msra.mxu0 %v6555
        %6687 = vmatprep.mubr.bf16.mxu0 %v5834
        %6688 = vmatmul.mubr.bf16.gmra.mxu0 %v5819
        %v6689 = vpop.f32.mrf.mxu0
        %v6690 = vadd.f32 0.0, %v6689
        %v6691 = vpop.f32.mrf.mxu0
        %v6692 = vpop.f32.mrf.mxu0
        %v6693 = vadd.f32 0.0, %v6692
        %v6694 = vpop.f32.mrf.mxu0
        %6695 = vmatprep.mubr.bf16.mxu0 %v5867
        %6696 = vmatmul.mubr.bf16.gmra.mxu0 %v5859
        %v6697 = vpop.f32.mrf.mxu0
        %v6698 = vadd.f32 0.0, %v6697
        %v6699 = vpop.f32.mrf.mxu0
        %v6700 = vpop.f32.mrf.mxu0
        %v6701 = vadd.f32 0.0, %v6700
        %v6702 = vpop.f32.mrf.mxu0
        %6703 = vmatprep.mubr.bf16.mxu0 %v5892
        %6704 = vmatmul.mubr.bf16.gmra.mxu0 %v5884
        %v6705 = vpop.f32.mrf.mxu0
        %v6706 = vadd.f32 0.0, %v6705
        %v6707 = vpop.f32.mrf.mxu0
        %v6708 = vpop.f32.mrf.mxu0
        %v6709 = vadd.f32 0.0, %v6708
        %v6710 = vpop.f32.mrf.mxu0
        %6711 = vmatprep.mubr.bf16.mxu0 %v5917
        %6712 = vmatmul.mubr.bf16.gmra.mxu0 %v5909
        %v6713 = vpop.f32.mrf.mxu0
        %v6714 = vadd.f32 0.0, %v6713
        %v6715 = vpop.f32.mrf.mxu0
        %v6716 = vpop.f32.mrf.mxu0
        %v6717 = vadd.f32 0.0, %v6716
        %v6718 = vpop.f32.mrf.mxu0
        %6719 = vmatprep.mubr.bf16.mxu0 %v5942
        %6720 = vmatmul.mubr.bf16.gmra.mxu0 %v5934
        %v6721 = vpop.f32.mrf.mxu0
        %v6722 = vadd.f32 0.0, %v6721
        %v6723 = vpop.f32.mrf.mxu0
        %v6724 = vpop.f32.mrf.mxu0
        %v6725 = vadd.f32 0.0, %v6724
        %v6726 = vpop.f32.mrf.mxu0
        %6727 = vmatprep.mubr.bf16.mxu0 %v5967
        %6728 = vmatmul.mubr.bf16.gmra.mxu0 %v5959
        %v6729 = vpop.f32.mrf.mxu0
        %v6730 = vadd.f32 0.0, %v6729
        %v6731 = vpop.f32.mrf.mxu0
        %v6732 = vpop.f32.mrf.mxu0
        %v6733 = vadd.f32 0.0, %v6732
        %v6734 = vpop.f32.mrf.mxu0
        %6735 = vmatprep.mubr.bf16.mxu0 %v5992
        %6736 = vmatmul.mubr.bf16.gmra.mxu0 %v5984
        %v6737 = vpop.f32.mrf.mxu0
        %v6738 = vadd.f32 0.0, %v6737
        %v6739 = vpop.f32.mrf.mxu0
        %v6740 = vpop.f32.mrf.mxu0
        %v6741 = vadd.f32 0.0, %v6740
        %v6742 = vpop.f32.mrf.mxu0
        %6743 = vmatprep.mubr.bf16.mxu0 %v6017
        %6744 = vmatmul.mubr.bf16.gmra.mxu0 %v6009
        %v6745 = vpop.f32.mrf.mxu0
        %v6746 = vadd.f32 0.0, %v6745
        %v6747 = vpop.f32.mrf.mxu0
        %v6748 = vpop.f32.mrf.mxu0
        %v6749 = vadd.f32 0.0, %v6748
        %v6750 = vpop.f32.mrf.mxu0
        %6751 = vmatprep.mubr.bf16.mxu0 %v6042
        %6752 = vmatmul.mubr.bf16.gmra.mxu0 %v6034
        %v6753 = vpop.f32.mrf.mxu0
        %v6754 = vadd.f32 0.0, %v6753
        %v6755 = vpop.f32.mrf.mxu0
        %v6756 = vpop.f32.mrf.mxu0
        %v6757 = vadd.f32 0.0, %v6756
        %v6758 = vpop.f32.mrf.mxu0
        %6759 = vmatprep.mubr.bf16.mxu0 %v6067
        %6760 = vmatmul.mubr.bf16.gmra.mxu0 %v6059
        %v6761 = vpop.f32.mrf.mxu0
        %v6762 = vadd.f32 0.0, %v6761
        %v6763 = vpop.f32.mrf.mxu0
        %v6764 = vpop.f32.mrf.mxu0
        %v6765 = vadd.f32 0.0, %v6764
        %v6766 = vpop.f32.mrf.mxu0
        %6767 = vmatprep.mubr.bf16.mxu0 %v6092
        %6768 = vmatmul.mubr.bf16.gmra.mxu0 %v6084
        %v6769 = vpop.f32.mrf.mxu0
        %v6770 = vadd.f32 0.0, %v6769
        %v6771 = vpop.f32.mrf.mxu0
        %v6772 = vpop.f32.mrf.mxu0
        %v6773 = vadd.f32 0.0, %v6772
        %v6774 = vpop.f32.mrf.mxu0
        %6775 = vmatprep.mubr.bf16.mxu0 %v6117
        %6776 = vmatmul.mubr.bf16.gmra.mxu0 %v6109
        %v6777 = vpop.f32.mrf.mxu0
        %v6778 = vadd.f32 0.0, %v6777
        %v6779 = vpop.f32.mrf.mxu0
        %v6780 = vpop.f32.mrf.mxu0
        %v6781 = vadd.f32 0.0, %v6780
        %v6782 = vpop.f32.mrf.mxu0
        %6783 = vmatprep.mubr.bf16.mxu0 %v6142
        %6784 = vmatmul.mubr.bf16.gmra.mxu0 %v6134
        %v6785 = vpop.f32.mrf.mxu0
        %v6786 = vadd.f32 0.0, %v6785
        %v6787 = vpop.f32.mrf.mxu0
        %v6788 = vpop.f32.mrf.mxu0
        %v6789 = vadd.f32 0.0, %v6788
        %v6790 = vpop.f32.mrf.mxu0
        %6791 = vmatprep.mubr.bf16.mxu0 %v6167
        %6792 = vmatmul.mubr.bf16.gmra.mxu0 %v6159
        %v6793 = vpop.f32.mrf.mxu0
        %v6794 = vadd.f32 0.0, %v6793
        %v6795 = vpop.f32.mrf.mxu0
        %v6796 = vpop.f32.mrf.mxu0
        %v6797 = vadd.f32 0.0, %v6796
        %v6798 = vpop.f32.mrf.mxu0
        %6799 = vmatprep.mubr.bf16.mxu0 %v6192
        %6800 = vmatmul.mubr.bf16.gmra.mxu0 %v6184
        %v6801 = vpop.f32.mrf.mxu0
        %v6802 = vadd.f32 0.0, %v6801
        %v6803 = vpop.f32.mrf.mxu0
        %v6804 = vpop.f32.mrf.mxu0
        %v6805 = vadd.f32 0.0, %v6804
        %v6806 = vpop.f32.mrf.mxu0
        %6807 = vmatprep.mubr.bf16.mxu0 %v6217
        %6808 = vmatmul.mubr.bf16.gmra.mxu0 %v6209
        %v6809 = vpop.f32.mrf.mxu0
        %v6810 = vadd.f32 0.0, %v6809
        %v6811 = vpop.f32.mrf.mxu0
        %v6812 = vpop.f32.mrf.mxu0
        %v6813 = vadd.f32 0.0, %v6812
        %v6814 = vpop.f32.mrf.mxu0
        %6815 = vmatprep.mubr.bf16.mxu0 %v6242
        %6816 = vmatmul.mubr.bf16.gmra.mxu0 %v6234
        %v6817 = vpop.f32.mrf.mxu0
        %v6818 = vadd.f32 0.0, %v6817
        %v6819 = vpop.f32.mrf.mxu0
        %v6820 = vpop.f32.mrf.mxu0
        %v6821 = vadd.f32 0.0, %v6820
        %v6822 = vpop.f32.mrf.mxu0
        %6823 = vmatprep.mubr.bf16.mxu0 %v6267
        %6824 = vmatmul.mubr.bf16.gmra.mxu0 %v6259
        %v6825 = vpop.f32.mrf.mxu0
        %v6826 = vadd.f32 0.0, %v6825
        %v6827 = vpop.f32.mrf.mxu0
        %v6828 = vpop.f32.mrf.mxu0
        %v6829 = vadd.f32 0.0, %v6828
        %v6830 = vpop.f32.mrf.mxu0
        %6831 = vmatprep.mubr.bf16.mxu0 %v6292
        %6832 = vmatmul.mubr.bf16.gmra.mxu0 %v6284
        %v6833 = vpop.f32.mrf.mxu0
        %v6834 = vadd.f32 0.0, %v6833
        %v6835 = vpop.f32.mrf.mxu0
        %v6836 = vpop.f32.mrf.mxu0
        %v6837 = vadd.f32 0.0, %v6836
        %v6838 = vpop.f32.mrf.mxu0
        %6839 = vmatprep.mubr.bf16.mxu0 %v6317
        %6840 = vmatmul.mubr.bf16.gmra.mxu0 %v6309
        %v6841 = vpop.f32.mrf.mxu0
        %v6842 = vadd.f32 0.0, %v6841
        %v6843 = vpop.f32.mrf.mxu0
        %v6844 = vpop.f32.mrf.mxu0
        %v6845 = vadd.f32 0.0, %v6844
        %v6846 = vpop.f32.mrf.mxu0
        %6847 = vmatprep.mubr.bf16.mxu0 %v6342
        %6848 = vmatmul.mubr.bf16.gmra.mxu0 %v6334
        %v6849 = vpop.f32.mrf.mxu0
        %v6850 = vadd.f32 0.0, %v6849
        %v6851 = vpop.f32.mrf.mxu0
        %v6852 = vpop.f32.mrf.mxu0
        %v6853 = vadd.f32 0.0, %v6852
        %v6854 = vpop.f32.mrf.mxu0
        %6855 = vmatprep.mubr.bf16.mxu0 %v6367
        %6856 = vmatmul.mubr.bf16.gmra.mxu0 %v6359
        %v6857 = vpop.f32.mrf.mxu0
        %v6858 = vadd.f32 0.0, %v6857
        %v6859 = vpop.f32.mrf.mxu0
        %v6860 = vpop.f32.mrf.mxu0
        %v6861 = vadd.f32 0.0, %v6860
        %v6862 = vpop.f32.mrf.mxu0
        %6863 = vmatprep.mubr.bf16.mxu0 %v6392
        %6864 = vmatmul.mubr.bf16.gmra.mxu0 %v6384
        %v6865 = vpop.f32.mrf.mxu0
        %v6866 = vadd.f32 0.0, %v6865
        %v6867 = vpop.f32.mrf.mxu0
        %v6868 = vpop.f32.mrf.mxu0
        %v6869 = vadd.f32 0.0, %v6868
        %v6870 = vpop.f32.mrf.mxu0
        %6871 = vmatprep.mubr.bf16.mxu0 %v6417
        %6872 = vmatmul.mubr.bf16.gmra.mxu0 %v6409
        %v6873 = vpop.f32.mrf.mxu0
        %v6874 = vadd.f32 0.0, %v6873
        %v6875 = vpop.f32.mrf.mxu0
        %v6876 = vpop.f32.mrf.mxu0
        %v6877 = vadd.f32 0.0, %v6876
        %v6878 = vpop.f32.mrf.mxu0
        %6879 = vdwg.mxu0
        %6880 = vmatprep.subr.bf16.mxu0 0
        %6881 = vmatpush1.bf16.msra.mxu0 0
        %6882 = vmatprep.subr.bf16.mxu0 0
        %6883 = vmatpush1.bf16.msra.mxu0 0
        %6884 = vmatprep.subr.bf16.mxu0 0
        %6885 = vmatpush1.bf16.msra.mxu0 0
        %6886 = vmatprep.subr.bf16.mxu0 0
        %6887 = vmatpush1.bf16.msra.mxu0 0
        %6888 = vmatprep.subr.bf16.mxu0 0
        %6889 = vmatpush1.bf16.msra.mxu0 0
        %6890 = vmatprep.subr.bf16.mxu0 0
        %6891 = vmatpush1.bf16.msra.mxu0 0
        %6892 = vmatprep.subr.bf16.mxu0 0
        %6893 = vmatpush1.bf16.msra.mxu0 %v6564
        %6894 = vmatprep.subr.bf16.mxu0 0
        %6895 = vmatpush1.bf16.msra.mxu0 %v6563
        %6896 = vmatprep.subr.bf16.mxu0 0
        %6897 = vmatpush2.bf16.msra.mxu0 0
        %6898 = vmatprep.subr.bf16.mxu0 0
        %6899 = vmatpush2.bf16.msra.mxu0 0
        %6900 = vmatprep.subr.bf16.mxu0 0
        %6901 = vmatpush2.bf16.msra.mxu0 0
        %6902 = vmatprep.subr.bf16.mxu0 0
        %6903 = vmatpush2.bf16.msra.mxu0 0
        %6904 = vmatprep.subr.bf16.mxu0 0
        %6905 = vmatpush2.bf16.msra.mxu0 0
        %6906 = vmatprep.subr.bf16.mxu0 0
        %6907 = vmatpush2.bf16.msra.mxu0 0
        %6908 = vmatprep.subr.bf16.mxu0 0
        %6909 = vmatpush2.bf16.msra.mxu0 0
        %6910 = vmatprep.subr.bf16.mxu0 0
        %6911 = vmatpush2.bf16.msra.mxu0 0
        %6912 = vmatprep.mubr.bf16.mxu0 0
        %6913 = vmatmul.mubr.bf16.gmra.mxu0 %v6584
        %v6914 = vpop.f32.mrf.mxu0
        %v6915 = vadd.f32 %v6690, %v6914
        %v6916 = vpop.f32.mrf.mxu0
        %v6917 = vpop.f32.mrf.mxu0
        %v6918 = vadd.f32 %v6693, %v6917
        %v6919 = vpop.f32.mrf.mxu0
        %6920 = vmatprep.mubr.bf16.mxu0 0
        %6921 = vmatmul.mubr.bf16.gmra.mxu0 %v6587
        %v6922 = vpop.f32.mrf.mxu0
        %v6923 = vadd.f32 %v6698, %v6922
        %v6924 = vpop.f32.mrf.mxu0
        %v6925 = vpop.f32.mrf.mxu0
        %v6926 = vadd.f32 %v6701, %v6925
        %v6927 = vpop.f32.mrf.mxu0
        %6928 = vmatprep.mubr.bf16.mxu0 0
        %6929 = vmatmul.mubr.bf16.gmra.mxu0 %v6590
        %v6930 = vpop.f32.mrf.mxu0
        %v6931 = vadd.f32 %v6706, %v6930
        %v6932 = vpop.f32.mrf.mxu0
        %v6933 = vpop.f32.mrf.mxu0
        %v6934 = vadd.f32 %v6709, %v6933
        %v6935 = vpop.f32.mrf.mxu0
        %6936 = vmatprep.mubr.bf16.mxu0 0
        %6937 = vmatmul.mubr.bf16.gmra.mxu0 %v6593
        %v6938 = vpop.f32.mrf.mxu0
        %v6939 = vadd.f32 %v6714, %v6938
        %v6940 = vpop.f32.mrf.mxu0
        %v6941 = vpop.f32.mrf.mxu0
        %v6942 = vadd.f32 %v6717, %v6941
        %v6943 = vpop.f32.mrf.mxu0
        %6944 = vmatprep.mubr.bf16.mxu0 0
        %6945 = vmatmul.mubr.bf16.gmra.mxu0 %v6596
        %v6946 = vpop.f32.mrf.mxu0
        %v6947 = vadd.f32 %v6722, %v6946
        %v6948 = vpop.f32.mrf.mxu0
        %v6949 = vpop.f32.mrf.mxu0
        %v6950 = vadd.f32 %v6725, %v6949
        %v6951 = vpop.f32.mrf.mxu0
        %6952 = vmatprep.mubr.bf16.mxu0 0
        %6953 = vmatmul.mubr.bf16.gmra.mxu0 %v6599
        %v6954 = vpop.f32.mrf.mxu0
        %v6955 = vadd.f32 %v6730, %v6954
        %v6956 = vpop.f32.mrf.mxu0
        %v6957 = vpop.f32.mrf.mxu0
        %v6958 = vadd.f32 %v6733, %v6957
        %v6959 = vpop.f32.mrf.mxu0
        %6960 = vmatprep.mubr.bf16.mxu0 0
        %6961 = vmatmul.mubr.bf16.gmra.mxu0 %v6602
        %v6962 = vpop.f32.mrf.mxu0
        %v6963 = vadd.f32 %v6738, %v6962
        %v6964 = vpop.f32.mrf.mxu0
        %v6965 = vpop.f32.mrf.mxu0
        %v6966 = vadd.f32 %v6741, %v6965
        %v6967 = vpop.f32.mrf.mxu0
        %6968 = vmatprep.mubr.bf16.mxu0 0
        %6969 = vmatmul.mubr.bf16.gmra.mxu0 %v6605
        %v6970 = vpop.f32.mrf.mxu0
        %v6971 = vadd.f32 %v6746, %v6970
        %v6972 = vpop.f32.mrf.mxu0
        %v6973 = vpop.f32.mrf.mxu0
        %v6974 = vadd.f32 %v6749, %v6973
        %v6975 = vpop.f32.mrf.mxu0
        %6976 = vmatprep.mubr.bf16.mxu0 0
        %6977 = vmatmul.mubr.bf16.gmra.mxu0 %v6608
        %v6978 = vpop.f32.mrf.mxu0
        %v6979 = vadd.f32 %v6754, %v6978
        %v6980 = vpop.f32.mrf.mxu0
        %v6981 = vpop.f32.mrf.mxu0
        %v6982 = vadd.f32 %v6757, %v6981
        %v6983 = vpop.f32.mrf.mxu0
        %6984 = vmatprep.mubr.bf16.mxu0 0
        %6985 = vmatmul.mubr.bf16.gmra.mxu0 %v6611
        %v6986 = vpop.f32.mrf.mxu0
        %v6987 = vadd.f32 %v6762, %v6986
        %v6988 = vpop.f32.mrf.mxu0
        %v6989 = vpop.f32.mrf.mxu0
        %v6990 = vadd.f32 %v6765, %v6989
        %v6991 = vpop.f32.mrf.mxu0
        %6992 = vmatprep.mubr.bf16.mxu0 0
        %6993 = vmatmul.mubr.bf16.gmra.mxu0 %v6614
        %v6994 = vpop.f32.mrf.mxu0
        %v6995 = vadd.f32 %v6770, %v6994
        %v6996 = vpop.f32.mrf.mxu0
        %v6997 = vpop.f32.mrf.mxu0
        %v6998 = vadd.f32 %v6773, %v6997
        %v6999 = vpop.f32.mrf.mxu0
        %7000 = vmatprep.mubr.bf16.mxu0 0
        %7001 = vmatmul.mubr.bf16.gmra.mxu0 %v6617
        %v7002 = vpop.f32.mrf.mxu0
        %v7003 = vadd.f32 %v6778, %v7002
        %v7004 = vpop.f32.mrf.mxu0
        %v7005 = vpop.f32.mrf.mxu0
        %v7006 = vadd.f32 %v6781, %v7005
        %v7007 = vpop.f32.mrf.mxu0
        %7008 = vmatprep.mubr.bf16.mxu0 0
        %7009 = vmatmul.mubr.bf16.gmra.mxu0 %v6620
        %v7010 = vpop.f32.mrf.mxu0
        %v7011 = vadd.f32 %v6786, %v7010
        %v7012 = vpop.f32.mrf.mxu0
        %v7013 = vpop.f32.mrf.mxu0
        %v7014 = vadd.f32 %v6789, %v7013
        %v7015 = vpop.f32.mrf.mxu0
        %7016 = vmatprep.mubr.bf16.mxu0 0
        %7017 = vmatmul.mubr.bf16.gmra.mxu0 %v6623
        %v7018 = vpop.f32.mrf.mxu0
        %v7019 = vadd.f32 %v6794, %v7018
        %v7020 = vpop.f32.mrf.mxu0
        %v7021 = vpop.f32.mrf.mxu0
        %v7022 = vadd.f32 %v6797, %v7021
        %v7023 = vpop.f32.mrf.mxu0
        %7024 = vmatprep.mubr.bf16.mxu0 0
        %7025 = vmatmul.mubr.bf16.gmra.mxu0 %v6626
        %v7026 = vpop.f32.mrf.mxu0
        %v7027 = vadd.f32 %v6802, %v7026
        %v7028 = vpop.f32.mrf.mxu0
        %v7029 = vpop.f32.mrf.mxu0
        %v7030 = vadd.f32 %v6805, %v7029
        %v7031 = vpop.f32.mrf.mxu0
        %7032 = vmatprep.mubr.bf16.mxu0 0
        %7033 = vmatmul.mubr.bf16.gmra.mxu0 %v6629
        %v7034 = vpop.f32.mrf.mxu0
        %v7035 = vadd.f32 %v6810, %v7034
        %v7036 = vpop.f32.mrf.mxu0
        %v7037 = vpop.f32.mrf.mxu0
        %v7038 = vadd.f32 %v6813, %v7037
        %v7039 = vpop.f32.mrf.mxu0
        %7040 = vmatprep.mubr.bf16.mxu0 0
        %7041 = vmatmul.mubr.bf16.gmra.mxu0 %v6632
        %v7042 = vpop.f32.mrf.mxu0
        %v7043 = vadd.f32 %v6818, %v7042
        %v7044 = vpop.f32.mrf.mxu0
        %v7045 = vpop.f32.mrf.mxu0
        %v7046 = vadd.f32 %v6821, %v7045
        %v7047 = vpop.f32.mrf.mxu0
        %7048 = vmatprep.mubr.bf16.mxu0 0
        %7049 = vmatmul.mubr.bf16.gmra.mxu0 %v6635
        %v7050 = vpop.f32.mrf.mxu0
        %v7051 = vadd.f32 %v6826, %v7050
        %v7052 = vpop.f32.mrf.mxu0
        %v7053 = vpop.f32.mrf.mxu0
        %v7054 = vadd.f32 %v6829, %v7053
        %v7055 = vpop.f32.mrf.mxu0
        %7056 = vmatprep.mubr.bf16.mxu0 0
        %7057 = vmatmul.mubr.bf16.gmra.mxu0 %v6638
        %v7058 = vpop.f32.mrf.mxu0
        %v7059 = vadd.f32 %v6834, %v7058
        %v7060 = vpop.f32.mrf.mxu0
        %v7061 = vpop.f32.mrf.mxu0
        %v7062 = vadd.f32 %v6837, %v7061
        %v7063 = vpop.f32.mrf.mxu0
        %7064 = vmatprep.mubr.bf16.mxu0 0
        %7065 = vmatmul.mubr.bf16.gmra.mxu0 %v6641
        %v7066 = vpop.f32.mrf.mxu0
        %v7067 = vadd.f32 %v6842, %v7066
        %v7068 = vpop.f32.mrf.mxu0
        %v7069 = vpop.f32.mrf.mxu0
        %v7070 = vadd.f32 %v6845, %v7069
        %v7071 = vpop.f32.mrf.mxu0
        %7072 = vmatprep.mubr.bf16.mxu0 0
        %7073 = vmatmul.mubr.bf16.gmra.mxu0 %v6644
        %v7074 = vpop.f32.mrf.mxu0
        %v7075 = vadd.f32 %v6850, %v7074
        %v7076 = vpop.f32.mrf.mxu0
        %v7077 = vpop.f32.mrf.mxu0
        %v7078 = vadd.f32 %v6853, %v7077
        %v7079 = vpop.f32.mrf.mxu0
        %7080 = vmatprep.mubr.bf16.mxu0 0
        %7081 = vmatmul.mubr.bf16.gmra.mxu0 %v6647
        %v7082 = vpop.f32.mrf.mxu0
        %v7083 = vadd.f32 %v6858, %v7082
        %v7084 = vpop.f32.mrf.mxu0
        %v7085 = vpop.f32.mrf.mxu0
        %v7086 = vadd.f32 %v6861, %v7085
        %v7087 = vpop.f32.mrf.mxu0
        %7088 = vmatprep.mubr.bf16.mxu0 0
        %7089 = vmatmul.mubr.bf16.gmra.mxu0 %v6650
        %v7090 = vpop.f32.mrf.mxu0
        %v7091 = vadd.f32 %v6866, %v7090
        %v7092 = vpop.f32.mrf.mxu0
        %v7093 = vpop.f32.mrf.mxu0
        %v7094 = vadd.f32 %v6869, %v7093
        %v7095 = vpop.f32.mrf.mxu0
        %7096 = vmatprep.mubr.bf16.mxu0 0
        %7097 = vmatmul.mubr.bf16.gmra.mxu0 %v6653
        %v7098 = vpop.f32.mrf.mxu0
        %v7099 = vadd.f32 %v6874, %v7098
        %v7100 = vpop.f32.mrf.mxu0
        %v7101 = vpop.f32.mrf.mxu0
        %v7102 = vadd.f32 %v6877, %v7101
        %v7103 = vpop.f32.mrf.mxu0
        %7104 = vdwg.mxu0
        %v7105 = vld [vmem:[%s5] sm:$0x1]
        %v7106 = vlaneseq
        %v7107 = vshrl.u32 %v7106, 7
        %v7108 = vsub.s32 0, %v7107
        %v7109 = vrot.slane %v7105, %v7108
        %v7110 = vmul.f32 %v6915, %v7109
        %v7111 = vmul.f32 %v6918, %v7109
        %v7112 = vmul.f32 %v6923, %v7109
        %v7113 = vmul.f32 %v6926, %v7109
        %v7114 = vmul.f32 %v6931, %v7109
        %v7115 = vmul.f32 %v6934, %v7109
        %v7116 = vmul.f32 %v6939, %v7109
        %v7117 = vmul.f32 %v6942, %v7109
        %v7118 = vmul.f32 %v6947, %v7109
        %v7119 = vmul.f32 %v6950, %v7109
        %v7120 = vmul.f32 %v6955, %v7109
        %v7121 = vmul.f32 %v6958, %v7109
        %v7122 = vmul.f32 %v6963, %v7109
        %v7123 = vmul.f32 %v6966, %v7109
        %v7124 = vmul.f32 %v6971, %v7109
        %v7125 = vmul.f32 %v6974, %v7109
        %v7126 = vmul.f32 %v6979, %v7109
        %v7127 = vmul.f32 %v6982, %v7109
        %v7128 = vmul.f32 %v6987, %v7109
        %v7129 = vmul.f32 %v6990, %v7109
        %v7130 = vmul.f32 %v6995, %v7109
        %v7131 = vmul.f32 %v6998, %v7109
        %v7132 = vmul.f32 %v7003, %v7109
        %v7133 = vmul.f32 %v7006, %v7109
        %v7134 = vmul.f32 %v7011, %v7109
        %v7135 = vmul.f32 %v7014, %v7109
        %v7136 = vmul.f32 %v7019, %v7109
        %v7137 = vmul.f32 %v7022, %v7109
        %v7138 = vmul.f32 %v7027, %v7109
        %v7139 = vmul.f32 %v7030, %v7109
        %v7140 = vmul.f32 %v7035, %v7109
        %v7141 = vmul.f32 %v7038, %v7109
        %v7142 = vmul.f32 %v7043, %v7109
        %v7143 = vmul.f32 %v7046, %v7109
        %v7144 = vmul.f32 %v7051, %v7109
        %v7145 = vmul.f32 %v7054, %v7109
        %v7146 = vmul.f32 %v7059, %v7109
        %v7147 = vmul.f32 %v7062, %v7109
        %v7148 = vmul.f32 %v7067, %v7109
        %v7149 = vmul.f32 %v7070, %v7109
        %v7150 = vmul.f32 %v7075, %v7109
        %v7151 = vmul.f32 %v7078, %v7109
        %v7152 = vmul.f32 %v7083, %v7109
        %v7153 = vmul.f32 %v7086, %v7109
        %v7154 = vmul.f32 %v7091, %v7109
        %v7155 = vmul.f32 %v7094, %v7109
        %v7156 = vmul.f32 %v7099, %v7109
        %v7157 = vmul.f32 %v7102, %v7109
        %v7158 = vld [vmem:[%s5 + $0x1] sm:$0x1]
        %v7159 = vlaneseq
        %v7160 = vshrl.u32 %v7159, 7
        %v7161 = vsub.s32 0, %v7160
        %v7162 = vrot.slane %v7158, %v7161
        %v7163 = vadd.f32 %v7110, %v7162
        %v7164 = vadd.f32 %v7111, %v7162
        %v7165 = vadd.f32 %v7112, %v7162
        %v7166 = vadd.f32 %v7113, %v7162
        %v7167 = vadd.f32 %v7114, %v7162
        %v7168 = vadd.f32 %v7115, %v7162
        %v7169 = vadd.f32 %v7116, %v7162
        %v7170 = vadd.f32 %v7117, %v7162
        %v7171 = vadd.f32 %v7118, %v7162
        %v7172 = vadd.f32 %v7119, %v7162
        %v7173 = vadd.f32 %v7120, %v7162
        %v7174 = vadd.f32 %v7121, %v7162
        %v7175 = vadd.f32 %v7122, %v7162
        %v7176 = vadd.f32 %v7123, %v7162
        %v7177 = vadd.f32 %v7124, %v7162
        %v7178 = vadd.f32 %v7125, %v7162
        %v7179 = vadd.f32 %v7126, %v7162
        %v7180 = vadd.f32 %v7127, %v7162
        %v7181 = vadd.f32 %v7128, %v7162
        %v7182 = vadd.f32 %v7129, %v7162
        %v7183 = vadd.f32 %v7130, %v7162
        %v7184 = vadd.f32 %v7131, %v7162
        %v7185 = vadd.f32 %v7132, %v7162
        %v7186 = vadd.f32 %v7133, %v7162
        %v7187 = vadd.f32 %v7134, %v7162
        %v7188 = vadd.f32 %v7135, %v7162
        %v7189 = vadd.f32 %v7136, %v7162
        %v7190 = vadd.f32 %v7137, %v7162
        %v7191 = vadd.f32 %v7138, %v7162
        %v7192 = vadd.f32 %v7139, %v7162
        %v7193 = vadd.f32 %v7140, %v7162
        %v7194 = vadd.f32 %v7141, %v7162
        %v7195 = vadd.f32 %v7142, %v7162
        %v7196 = vadd.f32 %v7143, %v7162
        %v7197 = vadd.f32 %v7144, %v7162
        %v7198 = vadd.f32 %v7145, %v7162
        %v7199 = vadd.f32 %v7146, %v7162
        %v7200 = vadd.f32 %v7147, %v7162
        %v7201 = vadd.f32 %v7148, %v7162
        %v7202 = vadd.f32 %v7149, %v7162
        %v7203 = vadd.f32 %v7150, %v7162
        %v7204 = vadd.f32 %v7151, %v7162
        %v7205 = vadd.f32 %v7152, %v7162
        %v7206 = vadd.f32 %v7153, %v7162
        %v7207 = vadd.f32 %v7154, %v7162
        %v7208 = vadd.f32 %v7155, %v7162
        %v7209 = vadd.f32 %v7156, %v7162
        %v7210 = vadd.f32 %v7157, %v7162
        %v7211 = vmul.f32 %v7163, %v3307
        %v7212 = vmul.f32 %v7164, %v3312
        %v7213 = vmul.f32 %v7165, %v3317
        %v7214 = vmul.f32 %v7166, %v3322
        %v7215 = vmul.f32 %v7167, %v3327
        %v7216 = vmul.f32 %v7168, %v3332
        %v7217 = vmul.f32 %v7169, %v3337
        %v7218 = vmul.f32 %v7170, %v3342
        %v7219 = vmul.f32 %v7171, %v3347
        %v7220 = vmul.f32 %v7172, %v3352
        %v7221 = vmul.f32 %v7173, %v3357
        %v7222 = vmul.f32 %v7174, %v3362
        %v7223 = vmul.f32 %v7175, %v3367
        %v7224 = vmul.f32 %v7176, %v3372
        %v7225 = vmul.f32 %v7177, %v3377
        %v7226 = vmul.f32 %v7178, %v3382
        %v7227 = vmul.f32 %v7179, %v3387
        %v7228 = vmul.f32 %v7180, %v3392
        %v7229 = vmul.f32 %v7181, %v3397
        %v7230 = vmul.f32 %v7182, %v3402
        %v7231 = vmul.f32 %v7183, %v3407
        %v7232 = vmul.f32 %v7184, %v3412
        %v7233 = vmul.f32 %v7185, %v3417
        %v7234 = vmul.f32 %v7186, %v3422
        %v7235 = vmul.f32 %v7187, %v3427
        %v7236 = vmul.f32 %v7188, %v3432
        %v7237 = vmul.f32 %v7189, %v3437
        %v7238 = vmul.f32 %v7190, %v3442
        %v7239 = vmul.f32 %v7191, %v3447
        %v7240 = vmul.f32 %v7192, %v3452
        %v7241 = vmul.f32 %v7193, %v3457
        %v7242 = vmul.f32 %v7194, %v3462
        %v7243 = vmul.f32 %v7195, %v3467
        %v7244 = vmul.f32 %v7196, %v3472
        %v7245 = vmul.f32 %v7197, %v3477
        %v7246 = vmul.f32 %v7198, %v3482
        %v7247 = vmul.f32 %v7199, %v3487
        %v7248 = vmul.f32 %v7200, %v3492
        %v7249 = vmul.f32 %v7201, %v3497
        %v7250 = vmul.f32 %v7202, %v3502
        %v7251 = vmul.f32 %v7203, %v3507
        %v7252 = vmul.f32 %v7204, %v3512
        %v7253 = vmul.f32 %v7205, %v3517
        %v7254 = vmul.f32 %v7206, %v3522
        %v7255 = vmul.f32 %v7207, %v3527
        %v7256 = vmul.f32 %v7208, %v3532
        %v7257 = vmul.f32 %v7209, %v3537
        %v7258 = vmul.f32 %v7210, %v3542
        %v7259 = vsel %vm2027, %v7211, 0.0
        %v7260 = vsel %vm2027, %v7212, 0.0
        %v7261 = vadd.f32 %v7259, %v7260
        %v7262 = vsel %vm2027, %v7213, 0.0
        %v7263 = vadd.f32 %v7261, %v7262
        %v7264 = vsel %vm2027, %v7214, 0.0
        %v7265 = vadd.f32 %v7263, %v7264
        %v7266 = vsel %vm2027, %v7215, 0.0
        %v7267 = vadd.f32 %v7265, %v7266
        %v7268 = vsel %vm2027, %v7216, 0.0
        %v7269 = vadd.f32 %v7267, %v7268
        %v7270 = vsel %vm2027, %v7217, 0.0
        %v7271 = vadd.f32 %v7269, %v7270
        %v7272 = vsel %vm2027, %v7218, 0.0
        %v7273 = vadd.f32 %v7271, %v7272
        %v7274 = vsel %vm2027, %v7219, 0.0
        %v7275 = vadd.f32 %v7273, %v7274
        %v7276 = vsel %vm2027, %v7220, 0.0
        %v7277 = vadd.f32 %v7275, %v7276
        %v7278 = vsel %vm2027, %v7221, 0.0
        %v7279 = vadd.f32 %v7277, %v7278
        %v7280 = vsel %vm2027, %v7222, 0.0
        %v7281 = vadd.f32 %v7279, %v7280
        %v7282 = vsel %vm2027, %v7223, 0.0
        %v7283 = vadd.f32 %v7281, %v7282
        %v7284 = vsel %vm2027, %v7224, 0.0
        %v7285 = vadd.f32 %v7283, %v7284
        %v7286 = vsel %vm2027, %v7225, 0.0
        %v7287 = vadd.f32 %v7285, %v7286
        %v7288 = vsel %vm2027, %v7226, 0.0
        %v7289 = vadd.f32 %v7287, %v7288
        %v7290 = vsel %vm2027, %v7227, 0.0
        %v7291 = vadd.f32 %v7289, %v7290
        %v7292 = vsel %vm2027, %v7228, 0.0
        %v7293 = vadd.f32 %v7291, %v7292
        %v7294 = vsel %vm2027, %v7229, 0.0
        %v7295 = vadd.f32 %v7293, %v7294
        %v7296 = vsel %vm2027, %v7230, 0.0
        %v7297 = vadd.f32 %v7295, %v7296
        %v7298 = vsel %vm2027, %v7231, 0.0
        %v7299 = vadd.f32 %v7297, %v7298
        %v7300 = vsel %vm2027, %v7232, 0.0
        %v7301 = vadd.f32 %v7299, %v7300
        %v7302 = vsel %vm2027, %v7233, 0.0
        %v7303 = vadd.f32 %v7301, %v7302
        %v7304 = vsel %vm2027, %v7234, 0.0
        %v7305 = vadd.f32 %v7303, %v7304
        %v7306 = vsel %vm2027, %v7235, 0.0
        %v7307 = vadd.f32 %v7305, %v7306
        %v7308 = vsel %vm2027, %v7236, 0.0
        %v7309 = vadd.f32 %v7307, %v7308
        %v7310 = vsel %vm2027, %v7237, 0.0
        %v7311 = vadd.f32 %v7309, %v7310
        %v7312 = vsel %vm2027, %v7238, 0.0
        %v7313 = vadd.f32 %v7311, %v7312
        %v7314 = vsel %vm2027, %v7239, 0.0
        %v7315 = vadd.f32 %v7313, %v7314
        %v7316 = vsel %vm2027, %v7240, 0.0
        %v7317 = vadd.f32 %v7315, %v7316
        %v7318 = vsel %vm2027, %v7241, 0.0
        %v7319 = vadd.f32 %v7317, %v7318
        %v7320 = vsel %vm2027, %v7242, 0.0
        %v7321 = vadd.f32 %v7319, %v7320
        %v7322 = vsel %vm2027, %v7243, 0.0
        %v7323 = vadd.f32 %v7321, %v7322
        %v7324 = vsel %vm2027, %v7244, 0.0
        %v7325 = vadd.f32 %v7323, %v7324
        %v7326 = vsel %vm2027, %v7245, 0.0
        %v7327 = vadd.f32 %v7325, %v7326
        %v7328 = vsel %vm2027, %v7246, 0.0
        %v7329 = vadd.f32 %v7327, %v7328
        %v7330 = vsel %vm2027, %v7247, 0.0
        %v7331 = vadd.f32 %v7329, %v7330
        %v7332 = vsel %vm2027, %v7248, 0.0
        %v7333 = vadd.f32 %v7331, %v7332
        %v7334 = vsel %vm2027, %v7249, 0.0
        %v7335 = vadd.f32 %v7333, %v7334
        %v7336 = vsel %vm2027, %v7250, 0.0
        %v7337 = vadd.f32 %v7335, %v7336
        %v7338 = vsel %vm2027, %v7251, 0.0
        %v7339 = vadd.f32 %v7337, %v7338
        %v7340 = vsel %vm2027, %v7252, 0.0
        %v7341 = vadd.f32 %v7339, %v7340
        %v7342 = vsel %vm2027, %v7253, 0.0
        %v7343 = vadd.f32 %v7341, %v7342
        %v7344 = vsel %vm2027, %v7254, 0.0
        %v7345 = vadd.f32 %v7343, %v7344
        %v7346 = vsel %vm2027, %v7255, 0.0
        %v7347 = vadd.f32 %v7345, %v7346
        %v7348 = vsel %vm2027, %v7256, 0.0
        %v7349 = vadd.f32 %v7347, %v7348
        %v7350 = vsel %vm2027, %v7257, 0.0
        %v7351 = vadd.f32 %v7349, %v7350
        %v7352 = vsel %vm2027, %v7258, 0.0
        %v7353 = vadd.f32 %v7351, %v7352
        %v7354 = vrot.slane %v7353, 4
        %v7355 = vadd.f32 %v7353, %v7354
        %v7356 = vrot.slane %v7355, 2
        %v7357 = vadd.f32 %v7355, %v7356
        %v7358 = vrot.slane %v7357, 1
        %v7359 = vadd.f32 %v7357, %v7358
        %v7360 = vmul.f32 %v7359, 0.00390625
        %vm7361 = vcmp.gt.f32.partialorder %v483, 0.5
        %vm7362 = vcmp.gt.f32.partialorder %v484, 0.5
        %vm7363 = vcmp.gt.f32.partialorder %v485, 0.5
        %vm7364 = vcmp.gt.f32.partialorder %v486, 0.5
        %vm7365 = vcmp.gt.f32.partialorder %v487, 0.5
        %vm7366 = vcmp.gt.f32.partialorder %v488, 0.5
        %vm7367 = vcmp.gt.f32.partialorder %v489, 0.5
        %vm7368 = vcmp.gt.f32.partialorder %v490, 0.5
        %vm7369 = vcmp.gt.f32.partialorder %v491, 0.5
        %vm7370 = vcmp.gt.f32.partialorder %v492, 0.5
        %vm7371 = vcmp.gt.f32.partialorder %v493, 0.5
        %vm7372 = vcmp.gt.f32.partialorder %v494, 0.5
        %vm7373 = vcmp.gt.f32.partialorder %v495, 0.5
        %vm7374 = vcmp.gt.f32.partialorder %v496, 0.5
        %vm7375 = vcmp.gt.f32.partialorder %v497, 0.5
        %vm7376 = vcmp.gt.f32.partialorder %v498, 0.5
        %vm7377 = vcmp.gt.f32.partialorder %v499, 0.5
        %vm7378 = vcmp.gt.f32.partialorder %v500, 0.5
        %vm7379 = vcmp.gt.f32.partialorder %v501, 0.5
        %vm7380 = vcmp.gt.f32.partialorder %v502, 0.5
        %vm7381 = vcmp.gt.f32.partialorder %v503, 0.5
        %vm7382 = vcmp.gt.f32.partialorder %v504, 0.5
        %vm7383 = vcmp.gt.f32.partialorder %v505, 0.5
        %vm7384 = vcmp.gt.f32.partialorder %v506, 0.5
        %vm7385 = vcmp.gt.f32.partialorder %v507, 0.5
        %vm7386 = vcmp.gt.f32.partialorder %v508, 0.5
        %vm7387 = vcmp.gt.f32.partialorder %v509, 0.5
        %vm7388 = vcmp.gt.f32.partialorder %v510, 0.5
        %vm7389 = vcmp.gt.f32.partialorder %v511, 0.5
        %vm7390 = vcmp.gt.f32.partialorder %v512, 0.5
        %vm7391 = vcmp.gt.f32.partialorder %v513, 0.5
        %vm7392 = vcmp.gt.f32.partialorder %v514, 0.5
        %vm7393 = vcmp.gt.f32.partialorder %v515, 0.5
        %vm7394 = vcmp.gt.f32.partialorder %v516, 0.5
        %vm7395 = vcmp.gt.f32.partialorder %v517, 0.5
        %vm7396 = vcmp.gt.f32.partialorder %v518, 0.5
        %vm7397 = vcmp.gt.f32.partialorder %v519, 0.5
        %vm7398 = vcmp.gt.f32.partialorder %v520, 0.5
        %vm7399 = vcmp.gt.f32.partialorder %v521, 0.5
        %vm7400 = vcmp.gt.f32.partialorder %v522, 0.5
        %vm7401 = vcmp.gt.f32.partialorder %v523, 0.5
        %vm7402 = vcmp.gt.f32.partialorder %v524, 0.5
        %vm7403 = vcmp.gt.f32.partialorder %v525, 0.5
        %vm7404 = vcmp.gt.f32.partialorder %v526, 0.5
        %vm7405 = vcmp.gt.f32.partialorder %v527, 0.5
        %vm7406 = vcmp.gt.f32.partialorder %v528, 0.5
        %vm7407 = vcmp.gt.f32.partialorder %v529, 0.5
        %vm7408 = vcmp.gt.f32.partialorder %v530, 0.5
        %v7409 = vsel %vm7361, 1, 0
        %v7410 = vsel %vm7362, 1, 0
        %v7411 = vsel %vm7363, 1, 0
        %v7412 = vsel %vm7364, 1, 0
        %v7413 = vsel %vm7365, 1, 0
        %v7414 = vsel %vm7366, 1, 0
        %v7415 = vsel %vm7367, 1, 0
        %v7416 = vsel %vm7368, 1, 0
        %v7417 = vsel %vm7369, 1, 0
        %v7418 = vsel %vm7370, 1, 0
        %v7419 = vsel %vm7371, 1, 0
        %v7420 = vsel %vm7372, 1, 0
        %v7421 = vsel %vm7373, 1, 0
        %v7422 = vsel %vm7374, 1, 0
        %v7423 = vsel %vm7375, 1, 0
        %v7424 = vsel %vm7376, 1, 0
        %v7425 = vsel %vm7377, 1, 0
        %v7426 = vsel %vm7378, 1, 0
        %v7427 = vsel %vm7379, 1, 0
        %v7428 = vsel %vm7380, 1, 0
        %v7429 = vsel %vm7381, 1, 0
        %v7430 = vsel %vm7382, 1, 0
        %v7431 = vsel %vm7383, 1, 0
        %v7432 = vsel %vm7384, 1, 0
        %v7433 = vsel %vm7385, 1, 0
        %v7434 = vsel %vm7386, 1, 0
        %v7435 = vsel %vm7387, 1, 0
        %v7436 = vsel %vm7388, 1, 0
        %v7437 = vsel %vm7389, 1, 0
        %v7438 = vsel %vm7390, 1, 0
        %v7439 = vsel %vm7391, 1, 0
        %v7440 = vsel %vm7392, 1, 0
        %v7441 = vsel %vm7393, 1, 0
        %v7442 = vsel %vm7394, 1, 0
        %v7443 = vsel %vm7395, 1, 0
        %v7444 = vsel %vm7396, 1, 0
        %v7445 = vsel %vm7397, 1, 0
        %v7446 = vsel %vm7398, 1, 0
        %v7447 = vsel %vm7399, 1, 0
        %v7448 = vsel %vm7400, 1, 0
        %v7449 = vsel %vm7401, 1, 0
        %v7450 = vsel %vm7402, 1, 0
        %v7451 = vsel %vm7403, 1, 0
        %v7452 = vsel %vm7404, 1, 0
        %v7453 = vsel %vm7405, 1, 0
        %v7454 = vsel %vm7406, 1, 0
        %v7455 = vsel %vm7407, 1, 0
        %v7456 = vsel %vm7408, 1, 0
        %7457 = vset.pattern.permute.xlu0 0
        %7458 = vperm.xlu0 %7457, %v7409
        %v7459 = vpop.permute.xlu0 %7458
        %7460 = vset.pattern.permute.xlu0 0
        %7461 = vperm.xlu0 %7460, %v7410
        %v7462 = vpop.permute.xlu0 %7461
        %7463 = vset.pattern.permute.xlu0 0
        %7464 = vperm.xlu0 %7463, %v7411
        %v7465 = vpop.permute.xlu0 %7464
        %7466 = vset.pattern.permute.xlu0 0
        %7467 = vperm.xlu0 %7466, %v7412
        %v7468 = vpop.permute.xlu0 %7467
        %7469 = vset.pattern.permute.xlu0 0
        %7470 = vperm.xlu0 %7469, %v7413
        %v7471 = vpop.permute.xlu0 %7470
        %7472 = vset.pattern.permute.xlu0 0
        %7473 = vperm.xlu0 %7472, %v7414
        %v7474 = vpop.permute.xlu0 %7473
        %7475 = vset.pattern.permute.xlu0 0
        %7476 = vperm.xlu0 %7475, %v7415
        %v7477 = vpop.permute.xlu0 %7476
        %7478 = vset.pattern.permute.xlu0 0
        %7479 = vperm.xlu0 %7478, %v7416
        %v7480 = vpop.permute.xlu0 %7479
        %7481 = vset.pattern.permute.xlu0 0
        %7482 = vperm.xlu0 %7481, %v7417
        %v7483 = vpop.permute.xlu0 %7482
        %7484 = vset.pattern.permute.xlu0 0
        %7485 = vperm.xlu0 %7484, %v7418
        %v7486 = vpop.permute.xlu0 %7485
        %7487 = vset.pattern.permute.xlu0 0
        %7488 = vperm.xlu0 %7487, %v7419
        %v7489 = vpop.permute.xlu0 %7488
        %7490 = vset.pattern.permute.xlu0 0
        %7491 = vperm.xlu0 %7490, %v7420
        %v7492 = vpop.permute.xlu0 %7491
        %7493 = vset.pattern.permute.xlu0 0
        %7494 = vperm.xlu0 %7493, %v7421
        %v7495 = vpop.permute.xlu0 %7494
        %7496 = vset.pattern.permute.xlu0 0
        %7497 = vperm.xlu0 %7496, %v7422
        %v7498 = vpop.permute.xlu0 %7497
        %7499 = vset.pattern.permute.xlu0 0
        %7500 = vperm.xlu0 %7499, %v7423
        %v7501 = vpop.permute.xlu0 %7500
        %7502 = vset.pattern.permute.xlu0 0
        %7503 = vperm.xlu0 %7502, %v7424
        %v7504 = vpop.permute.xlu0 %7503
        %7505 = vset.pattern.permute.xlu0 0
        %7506 = vperm.xlu0 %7505, %v7425
        %v7507 = vpop.permute.xlu0 %7506
        %7508 = vset.pattern.permute.xlu0 0
        %7509 = vperm.xlu0 %7508, %v7426
        %v7510 = vpop.permute.xlu0 %7509
        %7511 = vset.pattern.permute.xlu0 0
        %7512 = vperm.xlu0 %7511, %v7427
        %v7513 = vpop.permute.xlu0 %7512
        %7514 = vset.pattern.permute.xlu0 0
        %7515 = vperm.xlu0 %7514, %v7428
        %v7516 = vpop.permute.xlu0 %7515
        %7517 = vset.pattern.permute.xlu0 0
        %7518 = vperm.xlu0 %7517, %v7429
        %v7519 = vpop.permute.xlu0 %7518
        %7520 = vset.pattern.permute.xlu0 0
        %7521 = vperm.xlu0 %7520, %v7430
        %v7522 = vpop.permute.xlu0 %7521
        %7523 = vset.pattern.permute.xlu0 0
        %7524 = vperm.xlu0 %7523, %v7431
        %v7525 = vpop.permute.xlu0 %7524
        %7526 = vset.pattern.permute.xlu0 0
        %7527 = vperm.xlu0 %7526, %v7432
        %v7528 = vpop.permute.xlu0 %7527
        %7529 = vset.pattern.permute.xlu0 0
        %7530 = vperm.xlu0 %7529, %v7433
        %v7531 = vpop.permute.xlu0 %7530
        %7532 = vset.pattern.permute.xlu0 0
        %7533 = vperm.xlu0 %7532, %v7434
        %v7534 = vpop.permute.xlu0 %7533
        %7535 = vset.pattern.permute.xlu0 0
        %7536 = vperm.xlu0 %7535, %v7435
        %v7537 = vpop.permute.xlu0 %7536
        %7538 = vset.pattern.permute.xlu0 0
        %7539 = vperm.xlu0 %7538, %v7436
        %v7540 = vpop.permute.xlu0 %7539
        %7541 = vset.pattern.permute.xlu0 0
        %7542 = vperm.xlu0 %7541, %v7437
        %v7543 = vpop.permute.xlu0 %7542
        %7544 = vset.pattern.permute.xlu0 0
        %7545 = vperm.xlu0 %7544, %v7438
        %v7546 = vpop.permute.xlu0 %7545
        %7547 = vset.pattern.permute.xlu0 0
        %7548 = vperm.xlu0 %7547, %v7439
        %v7549 = vpop.permute.xlu0 %7548
        %7550 = vset.pattern.permute.xlu0 0
        %7551 = vperm.xlu0 %7550, %v7440
        %v7552 = vpop.permute.xlu0 %7551
        %7553 = vset.pattern.permute.xlu0 0
        %7554 = vperm.xlu0 %7553, %v7441
        %v7555 = vpop.permute.xlu0 %7554
        %7556 = vset.pattern.permute.xlu0 0
        %7557 = vperm.xlu0 %7556, %v7442
        %v7558 = vpop.permute.xlu0 %7557
        %7559 = vset.pattern.permute.xlu0 0
        %7560 = vperm.xlu0 %7559, %v7443
        %v7561 = vpop.permute.xlu0 %7560
        %7562 = vset.pattern.permute.xlu0 0
        %7563 = vperm.xlu0 %7562, %v7444
        %v7564 = vpop.permute.xlu0 %7563
        %7565 = vset.pattern.permute.xlu0 0
        %7566 = vperm.xlu0 %7565, %v7445
        %v7567 = vpop.permute.xlu0 %7566
        %7568 = vset.pattern.permute.xlu0 0
        %7569 = vperm.xlu0 %7568, %v7446
        %v7570 = vpop.permute.xlu0 %7569
        %7571 = vset.pattern.permute.xlu0 0
        %7572 = vperm.xlu0 %7571, %v7447
        %v7573 = vpop.permute.xlu0 %7572
        %7574 = vset.pattern.permute.xlu0 0
        %7575 = vperm.xlu0 %7574, %v7448
        %v7576 = vpop.permute.xlu0 %7575
        %7577 = vset.pattern.permute.xlu0 0
        %7578 = vperm.xlu0 %7577, %v7449
        %v7579 = vpop.permute.xlu0 %7578
        %7580 = vset.pattern.permute.xlu0 0
        %7581 = vperm.xlu0 %7580, %v7450
        %v7582 = vpop.permute.xlu0 %7581
        %7583 = vset.pattern.permute.xlu0 0
        %7584 = vperm.xlu0 %7583, %v7451
        %v7585 = vpop.permute.xlu0 %7584
        %7586 = vset.pattern.permute.xlu0 0
        %7587 = vperm.xlu0 %7586, %v7452
        %v7588 = vpop.permute.xlu0 %7587
        %7589 = vset.pattern.permute.xlu0 0
        %7590 = vperm.xlu0 %7589, %v7453
        %v7591 = vpop.permute.xlu0 %7590
        %7592 = vset.pattern.permute.xlu0 0
        %7593 = vperm.xlu0 %7592, %v7454
        %v7594 = vpop.permute.xlu0 %7593
        %7595 = vset.pattern.permute.xlu0 0
        %7596 = vperm.xlu0 %7595, %v7455
        %v7597 = vpop.permute.xlu0 %7596
        %7598 = vset.pattern.permute.xlu0 0
        %7599 = vperm.xlu0 %7598, %v7456
        %v7600 = vpop.permute.xlu0 %7599
        %vm7601 = vcmp.eq.s32.totalorder %v7459, 1
        %vm7602 = vcmp.eq.s32.totalorder %v7462, 1
        %vm7603 = vcmp.eq.s32.totalorder %v7465, 1
        %vm7604 = vcmp.eq.s32.totalorder %v7468, 1
        %vm7605 = vcmp.eq.s32.totalorder %v7471, 1
        %vm7606 = vcmp.eq.s32.totalorder %v7474, 1
        %vm7607 = vcmp.eq.s32.totalorder %v7477, 1
        %vm7608 = vcmp.eq.s32.totalorder %v7480, 1
        %vm7609 = vcmp.eq.s32.totalorder %v7483, 1
        %vm7610 = vcmp.eq.s32.totalorder %v7486, 1
        %vm7611 = vcmp.eq.s32.totalorder %v7489, 1
        %vm7612 = vcmp.eq.s32.totalorder %v7492, 1
        %vm7613 = vcmp.eq.s32.totalorder %v7495, 1
        %vm7614 = vcmp.eq.s32.totalorder %v7498, 1
        %vm7615 = vcmp.eq.s32.totalorder %v7501, 1
        %vm7616 = vcmp.eq.s32.totalorder %v7504, 1
        %vm7617 = vcmp.eq.s32.totalorder %v7507, 1
        %vm7618 = vcmp.eq.s32.totalorder %v7510, 1
        %vm7619 = vcmp.eq.s32.totalorder %v7513, 1
        %vm7620 = vcmp.eq.s32.totalorder %v7516, 1
        %vm7621 = vcmp.eq.s32.totalorder %v7519, 1
        %vm7622 = vcmp.eq.s32.totalorder %v7522, 1
        %vm7623 = vcmp.eq.s32.totalorder %v7525, 1
        %vm7624 = vcmp.eq.s32.totalorder %v7528, 1
        %vm7625 = vcmp.eq.s32.totalorder %v7531, 1
        %vm7626 = vcmp.eq.s32.totalorder %v7534, 1
        %vm7627 = vcmp.eq.s32.totalorder %v7537, 1
        %vm7628 = vcmp.eq.s32.totalorder %v7540, 1
        %vm7629 = vcmp.eq.s32.totalorder %v7543, 1
        %vm7630 = vcmp.eq.s32.totalorder %v7546, 1
        %vm7631 = vcmp.eq.s32.totalorder %v7549, 1
        %vm7632 = vcmp.eq.s32.totalorder %v7552, 1
        %vm7633 = vcmp.eq.s32.totalorder %v7555, 1
        %vm7634 = vcmp.eq.s32.totalorder %v7558, 1
        %vm7635 = vcmp.eq.s32.totalorder %v7561, 1
        %vm7636 = vcmp.eq.s32.totalorder %v7564, 1
        %vm7637 = vcmp.eq.s32.totalorder %v7567, 1
        %vm7638 = vcmp.eq.s32.totalorder %v7570, 1
        %vm7639 = vcmp.eq.s32.totalorder %v7573, 1
        %vm7640 = vcmp.eq.s32.totalorder %v7576, 1
        %vm7641 = vcmp.eq.s32.totalorder %v7579, 1
        %vm7642 = vcmp.eq.s32.totalorder %v7582, 1
        %vm7643 = vcmp.eq.s32.totalorder %v7585, 1
        %vm7644 = vcmp.eq.s32.totalorder %v7588, 1
        %vm7645 = vcmp.eq.s32.totalorder %v7591, 1
        %vm7646 = vcmp.eq.s32.totalorder %v7594, 1
        %vm7647 = vcmp.eq.s32.totalorder %v7597, 1
        %vm7648 = vcmp.eq.s32.totalorder %v7600, 1
        %v7649 = vsel %vm7601, %v7163, -inf
        %v7650 = vsel %vm7602, %v7164, -inf
        %v7651 = vsel %vm7603, %v7165, -inf
        %v7652 = vsel %vm7604, %v7166, -inf
        %v7653 = vsel %vm7605, %v7167, -inf
        %v7654 = vsel %vm7606, %v7168, -inf
        %v7655 = vsel %vm7607, %v7169, -inf
        %v7656 = vsel %vm7608, %v7170, -inf
        %v7657 = vsel %vm7609, %v7171, -inf
        %v7658 = vsel %vm7610, %v7172, -inf
        %v7659 = vsel %vm7611, %v7173, -inf
        %v7660 = vsel %vm7612, %v7174, -inf
        %v7661 = vsel %vm7613, %v7175, -inf
        %v7662 = vsel %vm7614, %v7176, -inf
        %v7663 = vsel %vm7615, %v7177, -inf
        %v7664 = vsel %vm7616, %v7178, -inf
        %v7665 = vsel %vm7617, %v7179, -inf
        %v7666 = vsel %vm7618, %v7180, -inf
        %v7667 = vsel %vm7619, %v7181, -inf
        %v7668 = vsel %vm7620, %v7182, -inf
        %v7669 = vsel %vm7621, %v7183, -inf
        %v7670 = vsel %vm7622, %v7184, -inf
        %v7671 = vsel %vm7623, %v7185, -inf
        %v7672 = vsel %vm7624, %v7186, -inf
        %v7673 = vsel %vm7625, %v7187, -inf
        %v7674 = vsel %vm7626, %v7188, -inf
        %v7675 = vsel %vm7627, %v7189, -inf
        %v7676 = vsel %vm7628, %v7190, -inf
        %v7677 = vsel %vm7629, %v7191, -inf
        %v7678 = vsel %vm7630, %v7192, -inf
        %v7679 = vsel %vm7631, %v7193, -inf
        %v7680 = vsel %vm7632, %v7194, -inf
        %v7681 = vsel %vm7633, %v7195, -inf
        %v7682 = vsel %vm7634, %v7196, -inf
        %v7683 = vsel %vm7635, %v7197, -inf
        %v7684 = vsel %vm7636, %v7198, -inf
        %v7685 = vsel %vm7637, %v7199, -inf
        %v7686 = vsel %vm7638, %v7200, -inf
        %v7687 = vsel %vm7639, %v7201, -inf
        %v7688 = vsel %vm7640, %v7202, -inf
        %v7689 = vsel %vm7641, %v7203, -inf
        %v7690 = vsel %vm7642, %v7204, -inf
        %v7691 = vsel %vm7643, %v7205, -inf
        %v7692 = vsel %vm7644, %v7206, -inf
        %v7693 = vsel %vm7645, %v7207, -inf
        %v7694 = vsel %vm7646, %v7208, -inf
        %v7695 = vsel %vm7647, %v7209, -inf
        %v7696 = vsel %vm7648, %v7210, -inf
        %v7697 = vsel %vm2027, %v7649, -inf
        %v7698 = vsel %vm2027, %v7650, -inf
        %v7699 = vsel %vm2027, %v7651, -inf
        %v7700 = vsel %vm2027, %v7652, -inf
        %v7701 = vsel %vm2027, %v7653, -inf
        %v7702 = vmax.f32 %v7697, %v7701
        %v7703 = vsel %vm2027, %v7654, -inf
        %v7704 = vmax.f32 %v7698, %v7703
        %v7705 = vsel %vm2027, %v7655, -inf
        %v7706 = vmax.f32 %v7699, %v7705
        %v7707 = vsel %vm2027, %v7656, -inf
        %v7708 = vmax.f32 %v7700, %v7707
        %v7709 = vsel %vm2027, %v7657, -inf
        %v7710 = vmax.f32 %v7702, %v7709
        %v7711 = vsel %vm2027, %v7658, -inf
        %v7712 = vmax.f32 %v7704, %v7711
        %v7713 = vsel %vm2027, %v7659, -inf
        %v7714 = vmax.f32 %v7706, %v7713
        %v7715 = vsel %vm2027, %v7660, -inf
        %v7716 = vmax.f32 %v7708, %v7715
        %v7717 = vsel %vm2027, %v7661, -inf
        %v7718 = vmax.f32 %v7710, %v7717
        %v7719 = vsel %vm2027, %v7662, -inf
        %v7720 = vmax.f32 %v7712, %v7719
        %v7721 = vsel %vm2027, %v7663, -inf
        %v7722 = vmax.f32 %v7714, %v7721
        %v7723 = vsel %vm2027, %v7664, -inf
        %v7724 = vmax.f32 %v7716, %v7723
        %v7725 = vsel %vm2027, %v7665, -inf
        %v7726 = vmax.f32 %v7718, %v7725
        %v7727 = vsel %vm2027, %v7666, -inf
        %v7728 = vmax.f32 %v7720, %v7727
        %v7729 = vsel %vm2027, %v7667, -inf
        %v7730 = vmax.f32 %v7722, %v7729
        %v7731 = vsel %vm2027, %v7668, -inf
        %v7732 = vmax.f32 %v7724, %v7731
        %v7733 = vsel %vm2027, %v7669, -inf
        %v7734 = vmax.f32 %v7726, %v7733
        %v7735 = vsel %vm2027, %v7670, -inf
        %v7736 = vmax.f32 %v7728, %v7735
        %v7737 = vsel %vm2027, %v7671, -inf
        %v7738 = vmax.f32 %v7730, %v7737
        %v7739 = vsel %vm2027, %v7672, -inf
        %v7740 = vmax.f32 %v7732, %v7739
        %v7741 = vsel %vm2027, %v7673, -inf
        %v7742 = vmax.f32 %v7734, %v7741
        %v7743 = vsel %vm2027, %v7674, -inf
        %v7744 = vmax.f32 %v7736, %v7743
        %v7745 = vsel %vm2027, %v7675, -inf
        %v7746 = vmax.f32 %v7738, %v7745
        %v7747 = vsel %vm2027, %v7676, -inf
        %v7748 = vmax.f32 %v7740, %v7747
        %v7749 = vsel %vm2027, %v7677, -inf
        %v7750 = vmax.f32 %v7742, %v7749
        %v7751 = vsel %vm2027, %v7678, -inf
        %v7752 = vmax.f32 %v7744, %v7751
        %v7753 = vsel %vm2027, %v7679, -inf
        %v7754 = vmax.f32 %v7746, %v7753
        %v7755 = vsel %vm2027, %v7680, -inf
        %v7756 = vmax.f32 %v7748, %v7755
        %v7757 = vsel %vm2027, %v7681, -inf
        %v7758 = vmax.f32 %v7750, %v7757
        %v7759 = vsel %vm2027, %v7682, -inf
        %v7760 = vmax.f32 %v7752, %v7759
        %v7761 = vsel %vm2027, %v7683, -inf
        %v7762 = vmax.f32 %v7754, %v7761
        %v7763 = vsel %vm2027, %v7684, -inf
        %v7764 = vmax.f32 %v7756, %v7763
        %v7765 = vsel %vm2027, %v7685, -inf
        %v7766 = vmax.f32 %v7758, %v7765
        %v7767 = vsel %vm2027, %v7686, -inf
        %v7768 = vmax.f32 %v7760, %v7767
        %v7769 = vsel %vm2027, %v7687, -inf
        %v7770 = vmax.f32 %v7762, %v7769
        %v7771 = vsel %vm2027, %v7688, -inf
        %v7772 = vmax.f32 %v7764, %v7771
        %v7773 = vsel %vm2027, %v7689, -inf
        %v7774 = vmax.f32 %v7766, %v7773
        %v7775 = vsel %vm2027, %v7690, -inf
        %v7776 = vmax.f32 %v7768, %v7775
        %v7777 = vsel %vm2027, %v7691, -inf
        %v7778 = vmax.f32 %v7770, %v7777
        %v7779 = vsel %vm2027, %v7692, -inf
        %v7780 = vmax.f32 %v7772, %v7779
        %v7781 = vsel %vm2027, %v7693, -inf
        %v7782 = vmax.f32 %v7774, %v7781
        %v7783 = vsel %vm2027, %v7694, -inf
        %v7784 = vmax.f32 %v7776, %v7783
        %v7785 = vsel %vm2027, %v7695, -inf
        %v7786 = vmax.f32 %v7778, %v7785
        %v7787 = vsel %vm2027, %v7696, -inf
        %v7788 = vmax.f32 %v7780, %v7787
        %v7789 = vmax.f32 %v7782, %v7784
        %v7790 = vmax.f32 %v7786, %v7788
        %v7791 = vmax.f32 %v7789, %v7790
        %v7792 = vrot.slane %v7791, 4
        %v7793 = vmax.f32 %v7791, %v7792
        %v7794 = vrot.slane %v7793, 2
        %v7795 = vmax.f32 %v7793, %v7794
        %v7796 = vrot.slane %v7795, 1
        %v7797 = vmax.f32 %v7795, %v7796
        %v7798 = vld [vmem:[%s6] sm:$0x3]
        %v7799 = vmul.f32 %v7360, %v7798
        %vm7800 = vcmask 254976
        %v7801 = vsel %vm7800, %v7799, 0.0
        %7802 = vadd.xlane.f32.xlu0 %v7801
        %v7803 = vpop.xlane.xlu0 %7802
        %v7804 = vld [vmem:[%s7] sm:$0x3]
        %v7805 = vadd.f32 %v7803, %v7804
        %v7806 = vmax.f32 %v7805, 0.0
        %v7807 = vld [vmem:[%s8] sm:$0x3]
        %7809 = vset.pattern.permute.xlu0 0
        %7810 = vperm.xlu0 %7809, %v7806
        %v7811 = vpop.permute.xlu0 %7810
        %v7813 = vmul.f32 %v7811, %v7807
        %v7814 = vsel %vm7800, %v7813, 0.0
        %v7815 = vrot.slane %v7814, 4
        %v7816 = vadd.f32 %v7814, %v7815
        %v7817 = vrot.slane %v7816, 2
        %v7818 = vadd.f32 %v7816, %v7817
        %v7819 = vrot.slane %v7818, 1
        %v7820 = vadd.f32 %v7818, %v7819
        %v7821 = vld [vmem:[%s9] sm:$0x1]
        %v7822 = vadd.f32 %v7820, %v7821
        %v7823 = vmul.f32 %v7797, %v7798
        %v7824 = vsel %vm7800, %v7823, 0.0
        %7825 = vadd.xlane.f32.xlu0 %v7824
        %v7826 = vpop.xlane.xlu0 %7825
        %v7827 = vadd.f32 %v7826, %v7804
        %v7828 = vmax.f32 %v7827, 0.0
        %7830 = vset.pattern.permute.xlu0 0
        %7831 = vperm.xlu0 %7830, %v7828
        %v7832 = vpop.permute.xlu0 %7831
        %v7834 = vmul.f32 %v7832, %v7807
        %v7835 = vsel %vm7800, %v7834, 0.0
        %v7836 = vrot.slane %v7835, 4
        %v7837 = vadd.f32 %v7835, %v7836
        %v7838 = vrot.slane %v7837, 2
        %v7839 = vadd.f32 %v7837, %v7838
        %v7840 = vrot.slane %v7839, 1
        %v7841 = vadd.f32 %v7839, %v7840
        %v7842 = vadd.f32 %v7841, %v7821
        %v7843 = vadd.f32 %v7822, %v7842
        %v7844 = vxor.u32 %v7843, 2147483648
        %v7845 = vmul.f32 %v7844, 1.442695
        %v7846 = vpow.pop %v7845
        %v7847 = vadd.f32 %v7846, 1.0
        %v7848 = vrcp.pop %v7847
        %v7849 = vmul.f32 1.0, %v7848
        %v7850 = vlaneseq
        %v7851 = vshrl.u32 %v7850, 7
        %v7852 = vsub.s32 0, %v7851
        %v7853 = vrot.slane %v7849, %v7852
        %v7854 = vmul.f32 %v7163, %v7853
        %v7855 = vmul.f32 %v7164, %v7853
        %v7856 = vmul.f32 %v7165, %v7853
        %v7857 = vmul.f32 %v7166, %v7853
        %v7858 = vmul.f32 %v7167, %v7853
        %v7859 = vmul.f32 %v7168, %v7853
        %v7860 = vmul.f32 %v7169, %v7853
        %v7861 = vmul.f32 %v7170, %v7853
        %v7862 = vmul.f32 %v7171, %v7853
        %v7863 = vmul.f32 %v7172, %v7853
        %v7864 = vmul.f32 %v7173, %v7853
        %v7865 = vmul.f32 %v7174, %v7853
        %v7866 = vmul.f32 %v7175, %v7853
        %v7867 = vmul.f32 %v7176, %v7853
        %v7868 = vmul.f32 %v7177, %v7853
        %v7869 = vmul.f32 %v7178, %v7853
        %v7870 = vmul.f32 %v7179, %v7853
        %v7871 = vmul.f32 %v7180, %v7853
        %v7872 = vmul.f32 %v7181, %v7853
        %v7873 = vmul.f32 %v7182, %v7853
        %v7874 = vmul.f32 %v7183, %v7853
        %v7875 = vmul.f32 %v7184, %v7853
        %v7876 = vmul.f32 %v7185, %v7853
        %v7877 = vmul.f32 %v7186, %v7853
        %v7878 = vmul.f32 %v7187, %v7853
        %v7879 = vmul.f32 %v7188, %v7853
        %v7880 = vmul.f32 %v7189, %v7853
        %v7881 = vmul.f32 %v7190, %v7853
        %v7882 = vmul.f32 %v7191, %v7853
        %v7883 = vmul.f32 %v7192, %v7853
        %v7884 = vmul.f32 %v7193, %v7853
        %v7885 = vmul.f32 %v7194, %v7853
        %v7886 = vmul.f32 %v7195, %v7853
        %v7887 = vmul.f32 %v7196, %v7853
        %v7888 = vmul.f32 %v7197, %v7853
        %v7889 = vmul.f32 %v7198, %v7853
        %v7890 = vmul.f32 %v7199, %v7853
        %v7891 = vmul.f32 %v7200, %v7853
        %v7892 = vmul.f32 %v7201, %v7853
        %v7893 = vmul.f32 %v7202, %v7853
        %v7894 = vmul.f32 %v7203, %v7853
        %v7895 = vmul.f32 %v7204, %v7853
        %v7896 = vmul.f32 %v7205, %v7853
        %v7897 = vmul.f32 %v7206, %v7853
        %v7898 = vmul.f32 %v7207, %v7853
        %v7899 = vmul.f32 %v7208, %v7853
        %v7900 = vmul.f32 %v7209, %v7853
        %v7901 = vmul.f32 %v7210, %v7853
        %7902 = vxpose.xlu0.b32.start [1/16] %v7854, 128
        %7903 = vxpose.xlu0.b32.cont [2/16] %v7855, 128
        %7904 = vxpose.xlu0.b32.cont [3/16] %v7856, 128
        %7905 = vxpose.xlu0.b32.cont [4/16] %v7857, 128
        %7906 = vxpose.xlu0.b32.cont [5/16] %v7858, 128
        %7907 = vxpose.xlu0.b32.cont [6/16] %v7859, 128
        %7908 = vxpose.xlu0.b32.cont [7/16] %v7860, 128
        %7909 = vxpose.xlu0.b32.cont [8/16] %v7861, 128
        %7910 = vxpose.xlu0.b32.cont [9/16] %v7862, 128
        %7911 = vxpose.xlu0.b32.cont [10/16] %v7863, 128
        %7912 = vxpose.xlu0.b32.cont [11/16] %v7864, 128
        %7913 = vxpose.xlu0.b32.cont [12/16] %v7865, 128
        %7914 = vxpose.xlu0.b32.cont [13/16] %v7866, 128
        %7915 = vxpose.xlu0.b32.cont [14/16] %v7867, 128
        %7916 = vxpose.xlu0.b32.cont [15/16] %v7868, 128
        %7917 = vxpose.xlu0.b32.end [16/16] %v7869, 128
        %v7918 = vpop.trf.xlu0
        %v7919 = vpop.trf.xlu0
        %v7920 = vpop.trf.xlu0
        %v7921 = vpop.trf.xlu0
        %v7922 = vpop.trf.xlu0
        %v7923 = vpop.trf.xlu0
        %v7924 = vpop.trf.xlu0
        %v7925 = vpop.trf.xlu0
        %v7926 = vpop.trf.xlu0
        %v7927 = vpop.trf.xlu0
        %v7928 = vpop.trf.xlu0
        %v7929 = vpop.trf.xlu0
        %v7930 = vpop.trf.xlu0
        %v7931 = vpop.trf.xlu0
        %v7932 = vpop.trf.xlu0
        %v7933 = vpop.trf.xlu0
        %7934 = vxpose.xlu0.b32.start [1/16] %v7870, 128
        %7935 = vxpose.xlu0.b32.cont [2/16] %v7871, 128
        %7936 = vxpose.xlu0.b32.cont [3/16] %v7872, 128
        %7937 = vxpose.xlu0.b32.cont [4/16] %v7873, 128
        %7938 = vxpose.xlu0.b32.cont [5/16] %v7874, 128
        %7939 = vxpose.xlu0.b32.cont [6/16] %v7875, 128
        %7940 = vxpose.xlu0.b32.cont [7/16] %v7876, 128
        %7941 = vxpose.xlu0.b32.cont [8/16] %v7877, 128
        %7942 = vxpose.xlu0.b32.cont [9/16] %v7878, 128
        %7943 = vxpose.xlu0.b32.cont [10/16] %v7879, 128
        %7944 = vxpose.xlu0.b32.cont [11/16] %v7880, 128
        %7945 = vxpose.xlu0.b32.cont [12/16] %v7881, 128
        %7946 = vxpose.xlu0.b32.cont [13/16] %v7882, 128
        %7947 = vxpose.xlu0.b32.cont [14/16] %v7883, 128
        %7948 = vxpose.xlu0.b32.cont [15/16] %v7884, 128
        %7949 = vxpose.xlu0.b32.end [16/16] %v7885, 128
        %v7950 = vpop.trf.xlu0
        %v7951 = vpop.trf.xlu0
        %v7952 = vpop.trf.xlu0
        %v7953 = vpop.trf.xlu0
        %v7954 = vpop.trf.xlu0
        %v7955 = vpop.trf.xlu0
        %v7956 = vpop.trf.xlu0
        %v7957 = vpop.trf.xlu0
        %v7958 = vpop.trf.xlu0
        %v7959 = vpop.trf.xlu0
        %v7960 = vpop.trf.xlu0
        %v7961 = vpop.trf.xlu0
        %v7962 = vpop.trf.xlu0
        %v7963 = vpop.trf.xlu0
        %v7964 = vpop.trf.xlu0
        %v7965 = vpop.trf.xlu0
        %7966 = vxpose.xlu0.b32.start [1/16] %v7886, 128
        %7967 = vxpose.xlu0.b32.cont [2/16] %v7887, 128
        %7968 = vxpose.xlu0.b32.cont [3/16] %v7888, 128
        %7969 = vxpose.xlu0.b32.cont [4/16] %v7889, 128
        %7970 = vxpose.xlu0.b32.cont [5/16] %v7890, 128
        %7971 = vxpose.xlu0.b32.cont [6/16] %v7891, 128
        %7972 = vxpose.xlu0.b32.cont [7/16] %v7892, 128
        %7973 = vxpose.xlu0.b32.cont [8/16] %v7893, 128
        %7974 = vxpose.xlu0.b32.cont [9/16] %v7894, 128
        %7975 = vxpose.xlu0.b32.cont [10/16] %v7895, 128
        %7976 = vxpose.xlu0.b32.cont [11/16] %v7896, 128
        %7977 = vxpose.xlu0.b32.cont [12/16] %v7897, 128
        %7978 = vxpose.xlu0.b32.cont [13/16] %v7898, 128
        %7979 = vxpose.xlu0.b32.cont [14/16] %v7899, 128
        %7980 = vxpose.xlu0.b32.cont [15/16] %v7900, 128
        %7981 = vxpose.xlu0.b32.end [16/16] %v7901, 128
        %v7982 = vpop.trf.xlu0
        %v7983 = vpop.trf.xlu0
        %v7984 = vpop.trf.xlu0
        %v7985 = vpop.trf.xlu0
        %v7986 = vpop.trf.xlu0
        %v7987 = vpop.trf.xlu0
        %v7988 = vpop.trf.xlu0
        %v7989 = vpop.trf.xlu0
        %v7990 = vpop.trf.xlu0
        %v7991 = vpop.trf.xlu0
        %v7992 = vpop.trf.xlu0
        %v7993 = vpop.trf.xlu0
        %v7994 = vpop.trf.xlu0
        %v7995 = vpop.trf.xlu0
        %v7996 = vpop.trf.xlu0
        %v7997 = vpop.trf.xlu0
        %v7998 = vadd.f32 %v7918, %v7919
        %v7999 = vadd.f32 %v7998, %v7920
        %v8000 = vadd.f32 %v7999, %v7921
        %v8001 = vrot.slane %v8000, 4
        %v8002 = vadd.f32 %v8000, %v8001
        %v8003 = vrot.slane %v8002, 2
        %v8004 = vadd.f32 %v8002, %v8003
        %v8005 = vrot.slane %v8004, 1
        %v8006 = vadd.f32 %v8004, %v8005
        %v8007 = vadd.f32 %v7950, %v7951
        %v8008 = vadd.f32 %v8007, %v7952
        %v8009 = vadd.f32 %v8008, %v7953
        %v8010 = vrot.slane %v8009, 4
        %v8011 = vadd.f32 %v8009, %v8010
        %v8012 = vrot.slane %v8011, 2
        %v8013 = vadd.f32 %v8011, %v8012
        %v8014 = vrot.slane %v8013, 1
        %v8015 = vadd.f32 %v8013, %v8014
        %v8016 = vadd.f32 %v7982, %v7983
        %v8017 = vadd.f32 %v8016, %v7984
        %v8018 = vadd.f32 %v8017, %v7985
        %v8019 = vrot.slane %v8018, 4
        %v8020 = vadd.f32 %v8018, %v8019
        %v8021 = vrot.slane %v8020, 2
        %v8022 = vadd.f32 %v8020, %v8021
        %v8023 = vrot.slane %v8022, 1
        %v8024 = vadd.f32 %v8022, %v8023
        %v8025 = vrcp.pop 32.0
        %v8026 = vmul.f32 %v8006, %v8025
        %v8027 = vmul.f32 %v8015, %v8025
        %v8028 = vmul.f32 %v8024, %v8025
        %v8029 = vmax.f32 %v7918, %v7920
        %v8030 = vmax.f32 %v7919, %v7921
        %v8031 = vmax.f32 %v8029, %v8030
        %v8032 = vrot.slane %v8031, 4
        %v8033 = vmax.f32 %v8031, %v8032
        %v8034 = vrot.slane %v8033, 2
        %v8035 = vmax.f32 %v8033, %v8034
        %v8036 = vrot.slane %v8035, 1
        %v8037 = vmax.f32 %v8035, %v8036
        %v8038 = vmax.f32 %v7950, %v7952
        %v8039 = vmax.f32 %v7951, %v7953
        %v8040 = vmax.f32 %v8038, %v8039
        %v8041 = vrot.slane %v8040, 4
        %v8042 = vmax.f32 %v8040, %v8041
        %v8043 = vrot.slane %v8042, 2
        %v8044 = vmax.f32 %v8042, %v8043
        %v8045 = vrot.slane %v8044, 1
        %v8046 = vmax.f32 %v8044, %v8045
        %v8047 = vmax.f32 %v7982, %v7984
        %v8048 = vmax.f32 %v7983, %v7985
        %v8049 = vmax.f32 %v8047, %v8048
        %v8050 = vrot.slane %v8049, 4
        %v8051 = vmax.f32 %v8049, %v8050
        %v8052 = vrot.slane %v8051, 2
        %v8053 = vmax.f32 %v8051, %v8052
        %v8054 = vrot.slane %v8053, 1
        %v8055 = vmax.f32 %v8053, %v8054
        %vm8056 = vcmask 195584
        %8057 = vst.msk [vmem:[#allocation6] sm:$0xff] %vm8056, 0.0
        %8058 = vst.msk [vmem:[#allocation6 + $0x8] sm:$0xff] %vm8056, 0.0
        %vm8059 = vcmask 193536
        %8060 = vst.msk [vmem:[#allocation6 + $0x10] sm:$0x3f] %vm8059, 0.0
        %8061 = vst.msk [vmem:[#allocation7] sm:$0xff] %vm8056, 0.0
        %8062 = vst.msk [vmem:[#allocation7 + $0x8] sm:$0xff] %vm8056, 0.0
        %8063 = vst.msk [vmem:[#allocation7 + $0x10] sm:$0x3f] %vm8059, 0.0
        %8065 = vrot.lane.b32.xlu0 %v8026, 3
        %v8066 = vpop.permute.xlu0 %8065
        %vm8068 = vcmask 147480
        %8069 = vst.msk [vmem:[#allocation6 + $0x3] sm:$0x1] %vm8068, %v8066
        %8071 = vrot.lane.b32.xlu0 %v8037, 3
        %v8072 = vpop.permute.xlu0 %8071
        %8074 = vst.msk [vmem:[#allocation7 + $0x3] sm:$0x1] %vm8068, %v8072
        %8075 = vrot.lane.b32.xlu0 %v8026, 107
        %v8076 = vpop.permute.xlu0 %8075
        %8078 = vst.msk [vmem:[#allocation6 + $0x4] sm:$0x1] %vm8068, %v8076
        %8079 = vrot.lane.b32.xlu0 %v8037, 107
        %v8080 = vpop.permute.xlu0 %8079
        %8082 = vst.msk [vmem:[#allocation7 + $0x4] sm:$0x1] %vm8068, %v8080
        %8083 = vrot.lane.b32.xlu0 %v8026, 83
        %v8084 = vpop.permute.xlu0 %8083
        %8086 = vst.msk [vmem:[#allocation6 + $0x5] sm:$0x1] %vm8068, %v8084
        %8087 = vrot.lane.b32.xlu0 %v8037, 83
        %v8088 = vpop.permute.xlu0 %8087
        %8090 = vst.msk [vmem:[#allocation7 + $0x5] sm:$0x1] %vm8068, %v8088
        %8091 = vrot.lane.b32.xlu0 %v8026, 59
        %v8092 = vpop.permute.xlu0 %8091
        %8094 = vst.msk [vmem:[#allocation6 + $0x6] sm:$0x1] %vm8068, %v8092
        %8095 = vrot.lane.b32.xlu0 %v8037, 59
        %v8096 = vpop.permute.xlu0 %8095
        %8098 = vst.msk [vmem:[#allocation7 + $0x6] sm:$0x1] %vm8068, %v8096
        %8099 = vrot.lane.b32.xlu0 %v8026, 35
        %v8100 = vpop.permute.xlu0 %8099
        %8102 = vst.msk [vmem:[#allocation6 + $0x7] sm:$0x1] %vm8068, %v8100
        %8103 = vrot.lane.b32.xlu0 %v8037, 35
        %v8104 = vpop.permute.xlu0 %8103
        %8106 = vst.msk [vmem:[#allocation7 + $0x7] sm:$0x1] %vm8068, %v8104
        %8108 = vrot.lane.b32.xlu0 %v8026, 11
        %v8109 = vpop.permute.xlu0 %8108
        %8110 = vrot.lane.b32.xlu0 %v8027, 11
        %v8111 = vpop.permute.xlu0 %8110
        %vm8112 = vcmask 89088
        %v8113 = vsel %vm8112, %v8109, %v8111
        %8115 = vst.msk [vmem:[#allocation6 + $0x8] sm:$0x1] %vm8068, %v8113
        %8117 = vrot.lane.b32.xlu0 %v8037, 11
        %v8118 = vpop.permute.xlu0 %8117
        %8119 = vrot.lane.b32.xlu0 %v8046, 11
        %v8120 = vpop.permute.xlu0 %8119
        %v8121 = vsel %vm8112, %v8118, %v8120
        %8123 = vst.msk [vmem:[#allocation7 + $0x8] sm:$0x1] %vm8068, %v8121
        %8124 = vrot.lane.b32.xlu0 %v8027, 115
        %v8125 = vpop.permute.xlu0 %8124
        %8127 = vst.msk [vmem:[#allocation6 + $0x9] sm:$0x1] %vm8068, %v8125
        %8128 = vrot.lane.b32.xlu0 %v8046, 115
        %v8129 = vpop.permute.xlu0 %8128
        %8131 = vst.msk [vmem:[#allocation7 + $0x9] sm:$0x1] %vm8068, %v8129
        %8132 = vrot.lane.b32.xlu0 %v8027, 91
        %v8133 = vpop.permute.xlu0 %8132
        %8135 = vst.msk [vmem:[#allocation6 + $0xa] sm:$0x1] %vm8068, %v8133
        %8136 = vrot.lane.b32.xlu0 %v8046, 91
        %v8137 = vpop.permute.xlu0 %8136
        %8139 = vst.msk [vmem:[#allocation7 + $0xa] sm:$0x1] %vm8068, %v8137
        %8140 = vrot.lane.b32.xlu0 %v8027, 67
        %v8141 = vpop.permute.xlu0 %8140
        %8143 = vst.msk [vmem:[#allocation6 + $0xb] sm:$0x1] %vm8068, %v8141
        %8144 = vrot.lane.b32.xlu0 %v8046, 67
        %v8145 = vpop.permute.xlu0 %8144
        %8147 = vst.msk [vmem:[#allocation7 + $0xb] sm:$0x1] %vm8068, %v8145
        %8148 = vrot.lane.b32.xlu0 %v8027, 43
        %v8149 = vpop.permute.xlu0 %8148
        %8151 = vst.msk [vmem:[#allocation6 + $0xc] sm:$0x1] %vm8068, %v8149
        %8152 = vrot.lane.b32.xlu0 %v8046, 43
        %v8153 = vpop.permute.xlu0 %8152
        %8155 = vst.msk [vmem:[#allocation7 + $0xc] sm:$0x1] %vm8068, %v8153
        %8156 = vrot.lane.b32.xlu0 %v8027, 19
        %v8157 = vpop.permute.xlu0 %8156
        %8159 = vst.msk [vmem:[#allocation6 + $0xd] sm:$0x1] %vm8068, %v8157
        %8160 = vrot.lane.b32.xlu0 %v8046, 19
        %v8161 = vpop.permute.xlu0 %8160
        %8163 = vst.msk [vmem:[#allocation7 + $0xd] sm:$0x1] %vm8068, %v8161
        %8165 = vrot.lane.b32.xlu0 %v8028, 123
        %v8166 = vpop.permute.xlu0 %8165
        %8168 = vst.msk [vmem:[#allocation6 + $0xe] sm:$0x1] %vm8068, %v8166
        %8170 = vrot.lane.b32.xlu0 %v8055, 123
        %v8171 = vpop.permute.xlu0 %8170
        %8173 = vst.msk [vmem:[#allocation7 + $0xe] sm:$0x1] %vm8068, %v8171
        %8174 = vrot.lane.b32.xlu0 %v8028, 99
        %v8175 = vpop.permute.xlu0 %8174
        %8177 = vst.msk [vmem:[#allocation6 + $0xf] sm:$0x1] %vm8068, %v8175
        %8178 = vrot.lane.b32.xlu0 %v8055, 99
        %v8179 = vpop.permute.xlu0 %8178
        %8181 = vst.msk [vmem:[#allocation7 + $0xf] sm:$0x1] %vm8068, %v8179
        %8182 = vrot.lane.b32.xlu0 %v8028, 75
        %v8183 = vpop.permute.xlu0 %8182
        %8185 = vst.msk [vmem:[#allocation6 + $0x10] sm:$0x1] %vm8068, %v8183
        %8186 = vrot.lane.b32.xlu0 %v8055, 75
        %v8187 = vpop.permute.xlu0 %8186
        %8189 = vst.msk [vmem:[#allocation7 + $0x10] sm:$0x1] %vm8068, %v8187
        %8190 = vrot.lane.b32.xlu0 %v8028, 51
        %v8191 = vpop.permute.xlu0 %8190
        %8193 = vst.msk [vmem:[#allocation6 + $0x11] sm:$0x1] %vm8068, %v8191
        %8194 = vrot.lane.b32.xlu0 %v8055, 51
        %v8195 = vpop.permute.xlu0 %8194
        %8197 = vst.msk [vmem:[#allocation7 + $0x11] sm:$0x1] %vm8068, %v8195
        %8198 = vrot.lane.b32.xlu0 %v8028, 27
        %v8199 = vpop.permute.xlu0 %8198
        %8201 = vst.msk [vmem:[#allocation6 + $0x12] sm:$0x1] %vm8068, %v8199
        %8202 = vrot.lane.b32.xlu0 %v8055, 27
        %v8203 = vpop.permute.xlu0 %8202
        %8205 = vst.msk [vmem:[#allocation7 + $0x12] sm:$0x1] %vm8068, %v8203
        %v8206 = vld [vmem:[#allocation6] sm:$0xff]
        %v8207 = vld [vmem:[#allocation6 + $0x8] sm:$0xff]
        %v8208 = vld [vmem:[#allocation6 + $0x10] sm:$0x3f]
        %v8209 = vld [vmem:[#allocation7] sm:$0xff]
        %v8210 = vld [vmem:[#allocation7 + $0x8] sm:$0xff]
        %v8211 = vld [vmem:[#allocation7 + $0x10] sm:$0x3f]
        %s8212 = sld [smem:[#allocation9 + $0x62]]
        %v8213 = vstv %s8212
        %v8214 = vadd.f32 %v8213, 0.0
        %s8215 = sld [smem:[#allocation9]]
        %v8216 = vstv %s8215
        %v8217 = vmul.f32 %v8206, %v8216
        %v8218 = vmul.f32 %v8207, %v8216
        %v8219 = vadd.f32 %v8214, %v8217
        %v8220 = vadd.f32 %v8214, %v8218
        %s8221 = sld [smem:[#allocation9 + $0x31]]
        %v8222 = vstv %s8221
        %v8223 = vmul.f32 %v8209, %v8222
        %v8224 = vmul.f32 %v8210, %v8222
        %v8225 = vadd.f32 %v8219, %v8223
        %v8226 = vadd.f32 %v8220, %v8224
        %s8227 = sld [smem:[#allocation9 + $0x1]]
        %v8228 = vstv %s8227
        %v8229 = vmul.f32 %v8206, %v8228
        %v8230 = vmul.f32 %v8207, %v8228
        %8233 = vrot.lane.b32.xlu0 %v8229, 127
        %v8234 = vpop.permute.xlu0 %8233
        %8235 = vrot.lane.b32.xlu0 %v8230, 127
        %v8236 = vpop.permute.xlu0 %8235
        %v8239 = vadd.f32 %v8225, %v8234
        %v8240 = vadd.f32 %v8226, %v8236
        %s8241 = sld [smem:[#allocation9 + $0x32]]
        %v8242 = vstv %s8241
        %v8243 = vmul.f32 %v8209, %v8242
        %v8244 = vmul.f32 %v8210, %v8242
        %8247 = vrot.lane.b32.xlu0 %v8243, 127
        %v8248 = vpop.permute.xlu0 %8247
        %8249 = vrot.lane.b32.xlu0 %v8244, 127
        %v8250 = vpop.permute.xlu0 %8249
        %v8253 = vadd.f32 %v8239, %v8248
        %v8254 = vadd.f32 %v8240, %v8250
        %s8255 = sld [smem:[#allocation9 + $0x2]]
        %v8256 = vstv %s8255
        %v8257 = vmul.f32 %v8206, %v8256
        %v8258 = vmul.f32 %v8207, %v8256
        %8261 = vrot.lane.b32.xlu0 %v8257, 126
        %v8262 = vpop.permute.xlu0 %8261
        %8263 = vrot.lane.b32.xlu0 %v8258, 126
        %v8264 = vpop.permute.xlu0 %8263
        %v8267 = vadd.f32 %v8253, %v8262
        %v8268 = vadd.f32 %v8254, %v8264
        %s8269 = sld [smem:[#allocation9 + $0x33]]
        %v8270 = vstv %s8269
        %v8271 = vmul.f32 %v8209, %v8270
        %v8272 = vmul.f32 %v8210, %v8270
        %8275 = vrot.lane.b32.xlu0 %v8271, 126
        %v8276 = vpop.permute.xlu0 %8275
        %8277 = vrot.lane.b32.xlu0 %v8272, 126
        %v8278 = vpop.permute.xlu0 %8277
        %v8281 = vadd.f32 %v8267, %v8276
        %v8282 = vadd.f32 %v8268, %v8278
        %s8283 = sld [smem:[#allocation9 + $0x3]]
        %v8284 = vstv %s8283
        %v8285 = vmul.f32 %v8206, %v8284
        %v8286 = vmul.f32 %v8207, %v8284
        %8289 = vrot.lane.b32.xlu0 %v8285, 125
        %v8290 = vpop.permute.xlu0 %8289
        %8291 = vrot.lane.b32.xlu0 %v8286, 125
        %v8292 = vpop.permute.xlu0 %8291
        %v8295 = vadd.f32 %v8281, %v8290
        %v8296 = vadd.f32 %v8282, %v8292
        %s8297 = sld [smem:[#allocation9 + $0x34]]
        %v8298 = vstv %s8297
        %v8299 = vmul.f32 %v8209, %v8298
        %v8300 = vmul.f32 %v8210, %v8298
        %8303 = vrot.lane.b32.xlu0 %v8299, 125
        %v8304 = vpop.permute.xlu0 %8303
        %8305 = vrot.lane.b32.xlu0 %v8300, 125
        %v8306 = vpop.permute.xlu0 %8305
        %v8309 = vadd.f32 %v8295, %v8304
        %v8310 = vadd.f32 %v8296, %v8306
        %s8311 = sld [smem:[#allocation9 + $0x4]]
        %v8312 = vstv %s8311
        %v8313 = vmul.f32 %v8206, %v8312
        %v8314 = vmul.f32 %v8207, %v8312
        %8317 = vrot.lane.b32.xlu0 %v8313, 124
        %v8318 = vpop.permute.xlu0 %8317
        %8319 = vrot.lane.b32.xlu0 %v8314, 124
        %v8320 = vpop.permute.xlu0 %8319
        %v8323 = vadd.f32 %v8309, %v8318
        %v8324 = vadd.f32 %v8310, %v8320
        %s8325 = sld [smem:[#allocation9 + $0x35]]
        %v8326 = vstv %s8325
        %v8327 = vmul.f32 %v8209, %v8326
        %v8328 = vmul.f32 %v8210, %v8326
        %8331 = vrot.lane.b32.xlu0 %v8327, 124
        %v8332 = vpop.permute.xlu0 %8331
        %8333 = vrot.lane.b32.xlu0 %v8328, 124
        %v8334 = vpop.permute.xlu0 %8333
        %v8337 = vadd.f32 %v8323, %v8332
        %v8338 = vadd.f32 %v8324, %v8334
        %s8339 = sld [smem:[#allocation9 + $0x5]]
        %v8340 = vstv %s8339
        %v8341 = vmul.f32 %v8206, %v8340
        %v8342 = vmul.f32 %v8207, %v8340
        %8345 = vrot.lane.b32.xlu0 %v8341, 123
        %v8346 = vpop.permute.xlu0 %8345
        %8347 = vrot.lane.b32.xlu0 %v8342, 123
        %v8348 = vpop.permute.xlu0 %8347
        %v8351 = vadd.f32 %v8337, %v8346
        %v8352 = vadd.f32 %v8338, %v8348
        %s8353 = sld [smem:[#allocation9 + $0x36]]
        %v8354 = vstv %s8353
        %v8355 = vmul.f32 %v8209, %v8354
        %v8356 = vmul.f32 %v8210, %v8354
        %8359 = vrot.lane.b32.xlu0 %v8355, 123
        %v8360 = vpop.permute.xlu0 %8359
        %8361 = vrot.lane.b32.xlu0 %v8356, 123
        %v8362 = vpop.permute.xlu0 %8361
        %v8365 = vadd.f32 %v8351, %v8360
        %v8366 = vadd.f32 %v8352, %v8362
        %s8367 = sld [smem:[#allocation9 + $0x6]]
        %v8368 = vstv %s8367
        %v8369 = vmul.f32 %v8206, %v8368
        %v8370 = vmul.f32 %v8207, %v8368
        %8373 = vrot.lane.b32.xlu0 %v8369, 122
        %v8374 = vpop.permute.xlu0 %8373
        %8375 = vrot.lane.b32.xlu0 %v8370, 122
        %v8376 = vpop.permute.xlu0 %8375
        %v8379 = vadd.f32 %v8365, %v8374
        %v8380 = vadd.f32 %v8366, %v8376
        %s8381 = sld [smem:[#allocation9 + $0x37]]
        %v8382 = vstv %s8381
        %v8383 = vmul.f32 %v8209, %v8382
        %v8384 = vmul.f32 %v8210, %v8382
        %8387 = vrot.lane.b32.xlu0 %v8383, 122
        %v8388 = vpop.permute.xlu0 %8387
        %8389 = vrot.lane.b32.xlu0 %v8384, 122
        %v8390 = vpop.permute.xlu0 %8389
        %v8393 = vadd.f32 %v8379, %v8388
        %v8394 = vadd.f32 %v8380, %v8390
        %s8395 = sld [smem:[#allocation9 + $0x7]]
        %v8396 = vstv %s8395
        %v8397 = vmul.f32 %v8206, %v8396
        %v8398 = vmul.f32 %v8207, %v8396
        %v8399 = vmul.f32 %v8208, %v8396
        %vm8403 = vcmask 1046528
        %v8404 = vrot.slane %v8397, 1
        %v8405 = vrot.slane %v8398, 1
        %v8406 = vsel %vm8403, %v8404, %v8405
        %v8407 = vrot.slane %v8399, 1
        %v8408 = vsel %vm8403, %v8405, %v8407
        %v8411 = vadd.f32 %v8393, %v8406
        %v8412 = vadd.f32 %v8394, %v8408
        %s8413 = sld [smem:[#allocation9 + $0x38]]
        %v8414 = vstv %s8413
        %v8415 = vmul.f32 %v8209, %v8414
        %v8416 = vmul.f32 %v8210, %v8414
        %v8417 = vmul.f32 %v8211, %v8414
        %v8421 = vrot.slane %v8415, 1
        %v8422 = vrot.slane %v8416, 1
        %v8423 = vsel %vm8403, %v8421, %v8422
        %v8424 = vrot.slane %v8417, 1
        %v8425 = vsel %vm8403, %v8422, %v8424
        %v8428 = vadd.f32 %v8411, %v8423
        %v8429 = vadd.f32 %v8412, %v8425
        %s8430 = sld [smem:[#allocation9 + $0x8]]
        %v8431 = vstv %s8430
        %v8432 = vmul.f32 %v8206, %v8431
        %v8433 = vmul.f32 %v8207, %v8431
        %v8434 = vmul.f32 %v8208, %v8431
        %v8438 = vrot.slane %v8432, 1
        %v8439 = vrot.slane %v8433, 1
        %v8440 = vsel %vm8403, %v8438, %v8439
        %v8441 = vrot.slane %v8434, 1
        %v8442 = vsel %vm8403, %v8439, %v8441
        %8443 = vrot.lane.b32.xlu0 %v8440, 127
        %v8444 = vpop.permute.xlu0 %8443
        %8445 = vrot.lane.b32.xlu0 %v8442, 127
        %v8446 = vpop.permute.xlu0 %8445
        %v8449 = vadd.f32 %v8428, %v8444
        %v8450 = vadd.f32 %v8429, %v8446
        %s8451 = sld [smem:[#allocation9 + $0x39]]
        %v8452 = vstv %s8451
        %v8453 = vmul.f32 %v8209, %v8452
        %v8454 = vmul.f32 %v8210, %v8452
        %v8455 = vmul.f32 %v8211, %v8452
        %v8459 = vrot.slane %v8453, 1
        %v8460 = vrot.slane %v8454, 1
        %v8461 = vsel %vm8403, %v8459, %v8460
        %v8462 = vrot.slane %v8455, 1
        %v8463 = vsel %vm8403, %v8460, %v8462
        %8464 = vrot.lane.b32.xlu0 %v8461, 127
        %v8465 = vpop.permute.xlu0 %8464
        %8466 = vrot.lane.b32.xlu0 %v8463, 127
        %v8467 = vpop.permute.xlu0 %8466
        %v8470 = vadd.f32 %v8449, %v8465
        %v8471 = vadd.f32 %v8450, %v8467
        %s8472 = sld [smem:[#allocation9 + $0x9]]
        %v8473 = vstv %s8472
        %v8474 = vmul.f32 %v8206, %v8473
        %v8475 = vmul.f32 %v8207, %v8473
        %v8476 = vmul.f32 %v8208, %v8473
        %v8480 = vrot.slane %v8474, 1
        %v8481 = vrot.slane %v8475, 1
        %v8482 = vsel %vm8403, %v8480, %v8481
        %v8483 = vrot.slane %v8476, 1
        %v8484 = vsel %vm8403, %v8481, %v8483
        %8485 = vrot.lane.b32.xlu0 %v8482, 126
        %v8486 = vpop.permute.xlu0 %8485
        %8487 = vrot.lane.b32.xlu0 %v8484, 126
        %v8488 = vpop.permute.xlu0 %8487
        %v8491 = vadd.f32 %v8470, %v8486
        %v8492 = vadd.f32 %v8471, %v8488
        %s8493 = sld [smem:[#allocation9 + $0x3a]]
        %v8494 = vstv %s8493
        %v8495 = vmul.f32 %v8209, %v8494
        %v8496 = vmul.f32 %v8210, %v8494
        %v8497 = vmul.f32 %v8211, %v8494
        %v8501 = vrot.slane %v8495, 1
        %v8502 = vrot.slane %v8496, 1
        %v8503 = vsel %vm8403, %v8501, %v8502
        %v8504 = vrot.slane %v8497, 1
        %v8505 = vsel %vm8403, %v8502, %v8504
        %8506 = vrot.lane.b32.xlu0 %v8503, 126
        %v8507 = vpop.permute.xlu0 %8506
        %8508 = vrot.lane.b32.xlu0 %v8505, 126
        %v8509 = vpop.permute.xlu0 %8508
        %v8512 = vadd.f32 %v8491, %v8507
        %v8513 = vadd.f32 %v8492, %v8509
        %s8514 = sld [smem:[#allocation9 + $0xa]]
        %v8515 = vstv %s8514
        %v8516 = vmul.f32 %v8206, %v8515
        %v8517 = vmul.f32 %v8207, %v8515
        %v8518 = vmul.f32 %v8208, %v8515
        %v8522 = vrot.slane %v8516, 1
        %v8523 = vrot.slane %v8517, 1
        %v8524 = vsel %vm8403, %v8522, %v8523
        %v8525 = vrot.slane %v8518, 1
        %v8526 = vsel %vm8403, %v8523, %v8525
        %8527 = vrot.lane.b32.xlu0 %v8524, 125
        %v8528 = vpop.permute.xlu0 %8527
        %8529 = vrot.lane.b32.xlu0 %v8526, 125
        %v8530 = vpop.permute.xlu0 %8529
        %v8533 = vadd.f32 %v8512, %v8528
        %v8534 = vadd.f32 %v8513, %v8530
        %s8535 = sld [smem:[#allocation9 + $0x3b]]
        %v8536 = vstv %s8535
        %v8537 = vmul.f32 %v8209, %v8536
        %v8538 = vmul.f32 %v8210, %v8536
        %v8539 = vmul.f32 %v8211, %v8536
        %v8543 = vrot.slane %v8537, 1
        %v8544 = vrot.slane %v8538, 1
        %v8545 = vsel %vm8403, %v8543, %v8544
        %v8546 = vrot.slane %v8539, 1
        %v8547 = vsel %vm8403, %v8544, %v8546
        %8548 = vrot.lane.b32.xlu0 %v8545, 125
        %v8549 = vpop.permute.xlu0 %8548
        %8550 = vrot.lane.b32.xlu0 %v8547, 125
        %v8551 = vpop.permute.xlu0 %8550
        %v8554 = vadd.f32 %v8533, %v8549
        %v8555 = vadd.f32 %v8534, %v8551
        %s8556 = sld [smem:[#allocation9 + $0xb]]
        %v8557 = vstv %s8556
        %v8558 = vmul.f32 %v8206, %v8557
        %v8559 = vmul.f32 %v8207, %v8557
        %v8560 = vmul.f32 %v8208, %v8557
        %v8564 = vrot.slane %v8558, 1
        %v8565 = vrot.slane %v8559, 1
        %v8566 = vsel %vm8403, %v8564, %v8565
        %v8567 = vrot.slane %v8560, 1
        %v8568 = vsel %vm8403, %v8565, %v8567
        %8569 = vrot.lane.b32.xlu0 %v8566, 124
        %v8570 = vpop.permute.xlu0 %8569
        %8571 = vrot.lane.b32.xlu0 %v8568, 124
        %v8572 = vpop.permute.xlu0 %8571
        %v8575 = vadd.f32 %v8554, %v8570
        %v8576 = vadd.f32 %v8555, %v8572
        %s8577 = sld [smem:[#allocation9 + $0x3c]]
        %v8578 = vstv %s8577
        %v8579 = vmul.f32 %v8209, %v8578
        %v8580 = vmul.f32 %v8210, %v8578
        %v8581 = vmul.f32 %v8211, %v8578
        %v8585 = vrot.slane %v8579, 1
        %v8586 = vrot.slane %v8580, 1
        %v8587 = vsel %vm8403, %v8585, %v8586
        %v8588 = vrot.slane %v8581, 1
        %v8589 = vsel %vm8403, %v8586, %v8588
        %8590 = vrot.lane.b32.xlu0 %v8587, 124
        %v8591 = vpop.permute.xlu0 %8590
        %8592 = vrot.lane.b32.xlu0 %v8589, 124
        %v8593 = vpop.permute.xlu0 %8592
        %v8596 = vadd.f32 %v8575, %v8591
        %v8597 = vadd.f32 %v8576, %v8593
        %s8598 = sld [smem:[#allocation9 + $0xc]]
        %v8599 = vstv %s8598
        %v8600 = vmul.f32 %v8206, %v8599
        %v8601 = vmul.f32 %v8207, %v8599
        %v8602 = vmul.f32 %v8208, %v8599
        %v8606 = vrot.slane %v8600, 1
        %v8607 = vrot.slane %v8601, 1
        %v8608 = vsel %vm8403, %v8606, %v8607
        %v8609 = vrot.slane %v8602, 1
        %v8610 = vsel %vm8403, %v8607, %v8609
        %8611 = vrot.lane.b32.xlu0 %v8608, 123
        %v8612 = vpop.permute.xlu0 %8611
        %8613 = vrot.lane.b32.xlu0 %v8610, 123
        %v8614 = vpop.permute.xlu0 %8613
        %v8617 = vadd.f32 %v8596, %v8612
        %v8618 = vadd.f32 %v8597, %v8614
        %s8619 = sld [smem:[#allocation9 + $0x3d]]
        %v8620 = vstv %s8619
        %v8621 = vmul.f32 %v8209, %v8620
        %v8622 = vmul.f32 %v8210, %v8620
        %v8623 = vmul.f32 %v8211, %v8620
        %v8627 = vrot.slane %v8621, 1
        %v8628 = vrot.slane %v8622, 1
        %v8629 = vsel %vm8403, %v8627, %v8628
        %v8630 = vrot.slane %v8623, 1
        %v8631 = vsel %vm8403, %v8628, %v8630
        %8632 = vrot.lane.b32.xlu0 %v8629, 123
        %v8633 = vpop.permute.xlu0 %8632
        %8634 = vrot.lane.b32.xlu0 %v8631, 123
        %v8635 = vpop.permute.xlu0 %8634
        %v8638 = vadd.f32 %v8617, %v8633
        %v8639 = vadd.f32 %v8618, %v8635
        %s8640 = sld [smem:[#allocation9 + $0xd]]
        %v8641 = vstv %s8640
        %v8642 = vmul.f32 %v8206, %v8641
        %v8643 = vmul.f32 %v8207, %v8641
        %v8644 = vmul.f32 %v8208, %v8641
        %v8648 = vrot.slane %v8642, 1
        %v8649 = vrot.slane %v8643, 1
        %v8650 = vsel %vm8403, %v8648, %v8649
        %v8651 = vrot.slane %v8644, 1
        %v8652 = vsel %vm8403, %v8649, %v8651
        %8653 = vrot.lane.b32.xlu0 %v8650, 122
        %v8654 = vpop.permute.xlu0 %8653
        %8655 = vrot.lane.b32.xlu0 %v8652, 122
        %v8656 = vpop.permute.xlu0 %8655
        %v8659 = vadd.f32 %v8638, %v8654
        %v8660 = vadd.f32 %v8639, %v8656
        %s8661 = sld [smem:[#allocation9 + $0x3e]]
        %v8662 = vstv %s8661
        %v8663 = vmul.f32 %v8209, %v8662
        %v8664 = vmul.f32 %v8210, %v8662
        %v8665 = vmul.f32 %v8211, %v8662
        %v8669 = vrot.slane %v8663, 1
        %v8670 = vrot.slane %v8664, 1
        %v8671 = vsel %vm8403, %v8669, %v8670
        %v8672 = vrot.slane %v8665, 1
        %v8673 = vsel %vm8403, %v8670, %v8672
        %8674 = vrot.lane.b32.xlu0 %v8671, 122
        %v8675 = vpop.permute.xlu0 %8674
        %8676 = vrot.lane.b32.xlu0 %v8673, 122
        %v8677 = vpop.permute.xlu0 %8676
        %v8680 = vadd.f32 %v8659, %v8675
        %v8681 = vadd.f32 %v8660, %v8677
        %s8682 = sld [smem:[#allocation9 + $0xe]]
        %v8683 = vstv %s8682
        %v8684 = vmul.f32 %v8206, %v8683
        %v8685 = vmul.f32 %v8207, %v8683
        %v8686 = vmul.f32 %v8208, %v8683
        %vm8690 = vcmask 1045504
        %v8691 = vrot.slane %v8684, 2
        %v8692 = vrot.slane %v8685, 2
        %v8693 = vsel %vm8690, %v8691, %v8692
        %v8694 = vrot.slane %v8686, 2
        %v8695 = vsel %vm8690, %v8692, %v8694
        %v8698 = vadd.f32 %v8680, %v8693
        %v8699 = vadd.f32 %v8681, %v8695
        %s8700 = sld [smem:[#allocation9 + $0x3f]]
        %v8701 = vstv %s8700
        %v8702 = vmul.f32 %v8209, %v8701
        %v8703 = vmul.f32 %v8210, %v8701
        %v8704 = vmul.f32 %v8211, %v8701
        %v8708 = vrot.slane %v8702, 2
        %v8709 = vrot.slane %v8703, 2
        %v8710 = vsel %vm8690, %v8708, %v8709
        %v8711 = vrot.slane %v8704, 2
        %v8712 = vsel %vm8690, %v8709, %v8711
        %v8715 = vadd.f32 %v8698, %v8710
        %v8716 = vadd.f32 %v8699, %v8712
        %s8717 = sld [smem:[#allocation9 + $0xf]]
        %v8718 = vstv %s8717
        %v8719 = vmul.f32 %v8206, %v8718
        %v8720 = vmul.f32 %v8207, %v8718
        %v8721 = vmul.f32 %v8208, %v8718
        %v8725 = vrot.slane %v8719, 2
        %v8726 = vrot.slane %v8720, 2
        %v8727 = vsel %vm8690, %v8725, %v8726
        %v8728 = vrot.slane %v8721, 2
        %v8729 = vsel %vm8690, %v8726, %v8728
        %8730 = vrot.lane.b32.xlu0 %v8727, 127
        %v8731 = vpop.permute.xlu0 %8730
        %8732 = vrot.lane.b32.xlu0 %v8729, 127
        %v8733 = vpop.permute.xlu0 %8732
        %v8736 = vadd.f32 %v8715, %v8731
        %v8737 = vadd.f32 %v8716, %v8733
        %s8738 = sld [smem:[#allocation9 + $0x40]]
        %v8739 = vstv %s8738
        %v8740 = vmul.f32 %v8209, %v8739
        %v8741 = vmul.f32 %v8210, %v8739
        %v8742 = vmul.f32 %v8211, %v8739
        %v8746 = vrot.slane %v8740, 2
        %v8747 = vrot.slane %v8741, 2
        %v8748 = vsel %vm8690, %v8746, %v8747
        %v8749 = vrot.slane %v8742, 2
        %v8750 = vsel %vm8690, %v8747, %v8749
        %8751 = vrot.lane.b32.xlu0 %v8748, 127
        %v8752 = vpop.permute.xlu0 %8751
        %8753 = vrot.lane.b32.xlu0 %v8750, 127
        %v8754 = vpop.permute.xlu0 %8753
        %v8757 = vadd.f32 %v8736, %v8752
        %v8758 = vadd.f32 %v8737, %v8754
        %s8759 = sld [smem:[#allocation9 + $0x10]]
        %v8760 = vstv %s8759
        %v8761 = vmul.f32 %v8206, %v8760
        %v8762 = vmul.f32 %v8207, %v8760
        %v8763 = vmul.f32 %v8208, %v8760
        %v8767 = vrot.slane %v8761, 2
        %v8768 = vrot.slane %v8762, 2
        %v8769 = vsel %vm8690, %v8767, %v8768
        %v8770 = vrot.slane %v8763, 2
        %v8771 = vsel %vm8690, %v8768, %v8770
        %8772 = vrot.lane.b32.xlu0 %v8769, 126
        %v8773 = vpop.permute.xlu0 %8772
        %8774 = vrot.lane.b32.xlu0 %v8771, 126
        %v8775 = vpop.permute.xlu0 %8774
        %v8778 = vadd.f32 %v8757, %v8773
        %v8779 = vadd.f32 %v8758, %v8775
        %s8780 = sld [smem:[#allocation9 + $0x41]]
        %v8781 = vstv %s8780
        %v8782 = vmul.f32 %v8209, %v8781
        %v8783 = vmul.f32 %v8210, %v8781
        %v8784 = vmul.f32 %v8211, %v8781
        %v8788 = vrot.slane %v8782, 2
        %v8789 = vrot.slane %v8783, 2
        %v8790 = vsel %vm8690, %v8788, %v8789
        %v8791 = vrot.slane %v8784, 2
        %v8792 = vsel %vm8690, %v8789, %v8791
        %8793 = vrot.lane.b32.xlu0 %v8790, 126
        %v8794 = vpop.permute.xlu0 %8793
        %8795 = vrot.lane.b32.xlu0 %v8792, 126
        %v8796 = vpop.permute.xlu0 %8795
        %v8799 = vadd.f32 %v8778, %v8794
        %v8800 = vadd.f32 %v8779, %v8796
        %s8801 = sld [smem:[#allocation9 + $0x11]]
        %v8802 = vstv %s8801
        %v8803 = vmul.f32 %v8206, %v8802
        %v8804 = vmul.f32 %v8207, %v8802
        %v8805 = vmul.f32 %v8208, %v8802
        %v8809 = vrot.slane %v8803, 2
        %v8810 = vrot.slane %v8804, 2
        %v8811 = vsel %vm8690, %v8809, %v8810
        %v8812 = vrot.slane %v8805, 2
        %v8813 = vsel %vm8690, %v8810, %v8812
        %8814 = vrot.lane.b32.xlu0 %v8811, 125
        %v8815 = vpop.permute.xlu0 %8814
        %8816 = vrot.lane.b32.xlu0 %v8813, 125
        %v8817 = vpop.permute.xlu0 %8816
        %v8820 = vadd.f32 %v8799, %v8815
        %v8821 = vadd.f32 %v8800, %v8817
        %s8822 = sld [smem:[#allocation9 + $0x42]]
        %v8823 = vstv %s8822
        %v8824 = vmul.f32 %v8209, %v8823
        %v8825 = vmul.f32 %v8210, %v8823
        %v8826 = vmul.f32 %v8211, %v8823
        %v8830 = vrot.slane %v8824, 2
        %v8831 = vrot.slane %v8825, 2
        %v8832 = vsel %vm8690, %v8830, %v8831
        %v8833 = vrot.slane %v8826, 2
        %v8834 = vsel %vm8690, %v8831, %v8833
        %8835 = vrot.lane.b32.xlu0 %v8832, 125
        %v8836 = vpop.permute.xlu0 %8835
        %8837 = vrot.lane.b32.xlu0 %v8834, 125
        %v8838 = vpop.permute.xlu0 %8837
        %v8841 = vadd.f32 %v8820, %v8836
        %v8842 = vadd.f32 %v8821, %v8838
        %s8843 = sld [smem:[#allocation9 + $0x12]]
        %v8844 = vstv %s8843
        %v8845 = vmul.f32 %v8206, %v8844
        %v8846 = vmul.f32 %v8207, %v8844
        %v8847 = vmul.f32 %v8208, %v8844
        %v8851 = vrot.slane %v8845, 2
        %v8852 = vrot.slane %v8846, 2
        %v8853 = vsel %vm8690, %v8851, %v8852
        %v8854 = vrot.slane %v8847, 2
        %v8855 = vsel %vm8690, %v8852, %v8854
        %8856 = vrot.lane.b32.xlu0 %v8853, 124
        %v8857 = vpop.permute.xlu0 %8856
        %8858 = vrot.lane.b32.xlu0 %v8855, 124
        %v8859 = vpop.permute.xlu0 %8858
        %v8862 = vadd.f32 %v8841, %v8857
        %v8863 = vadd.f32 %v8842, %v8859
        %s8864 = sld [smem:[#allocation9 + $0x43]]
        %v8865 = vstv %s8864
        %v8866 = vmul.f32 %v8209, %v8865
        %v8867 = vmul.f32 %v8210, %v8865
        %v8868 = vmul.f32 %v8211, %v8865
        %v8872 = vrot.slane %v8866, 2
        %v8873 = vrot.slane %v8867, 2
        %v8874 = vsel %vm8690, %v8872, %v8873
        %v8875 = vrot.slane %v8868, 2
        %v8876 = vsel %vm8690, %v8873, %v8875
        %8877 = vrot.lane.b32.xlu0 %v8874, 124
        %v8878 = vpop.permute.xlu0 %8877
        %8879 = vrot.lane.b32.xlu0 %v8876, 124
        %v8880 = vpop.permute.xlu0 %8879
        %v8883 = vadd.f32 %v8862, %v8878
        %v8884 = vadd.f32 %v8863, %v8880
        %s8885 = sld [smem:[#allocation9 + $0x13]]
        %v8886 = vstv %s8885
        %v8887 = vmul.f32 %v8206, %v8886
        %v8888 = vmul.f32 %v8207, %v8886
        %v8889 = vmul.f32 %v8208, %v8886
        %v8893 = vrot.slane %v8887, 2
        %v8894 = vrot.slane %v8888, 2
        %v8895 = vsel %vm8690, %v8893, %v8894
        %v8896 = vrot.slane %v8889, 2
        %v8897 = vsel %vm8690, %v8894, %v8896
        %8898 = vrot.lane.b32.xlu0 %v8895, 123
        %v8899 = vpop.permute.xlu0 %8898
        %8900 = vrot.lane.b32.xlu0 %v8897, 123
        %v8901 = vpop.permute.xlu0 %8900
        %v8904 = vadd.f32 %v8883, %v8899
        %v8905 = vadd.f32 %v8884, %v8901
        %s8906 = sld [smem:[#allocation9 + $0x44]]
        %v8907 = vstv %s8906
        %v8908 = vmul.f32 %v8209, %v8907
        %v8909 = vmul.f32 %v8210, %v8907
        %v8910 = vmul.f32 %v8211, %v8907
        %v8914 = vrot.slane %v8908, 2
        %v8915 = vrot.slane %v8909, 2
        %v8916 = vsel %vm8690, %v8914, %v8915
        %v8917 = vrot.slane %v8910, 2
        %v8918 = vsel %vm8690, %v8915, %v8917
        %8919 = vrot.lane.b32.xlu0 %v8916, 123
        %v8920 = vpop.permute.xlu0 %8919
        %8921 = vrot.lane.b32.xlu0 %v8918, 123
        %v8922 = vpop.permute.xlu0 %8921
        %v8925 = vadd.f32 %v8904, %v8920
        %v8926 = vadd.f32 %v8905, %v8922
        %s8927 = sld [smem:[#allocation9 + $0x14]]
        %v8928 = vstv %s8927
        %v8929 = vmul.f32 %v8206, %v8928
        %v8930 = vmul.f32 %v8207, %v8928
        %v8931 = vmul.f32 %v8208, %v8928
        %v8935 = vrot.slane %v8929, 2
        %v8936 = vrot.slane %v8930, 2
        %v8937 = vsel %vm8690, %v8935, %v8936
        %v8938 = vrot.slane %v8931, 2
        %v8939 = vsel %vm8690, %v8936, %v8938
        %8940 = vrot.lane.b32.xlu0 %v8937, 122
        %v8941 = vpop.permute.xlu0 %8940
        %8942 = vrot.lane.b32.xlu0 %v8939, 122
        %v8943 = vpop.permute.xlu0 %8942
        %v8946 = vadd.f32 %v8925, %v8941
        %v8947 = vadd.f32 %v8926, %v8943
        %s8948 = sld [smem:[#allocation9 + $0x45]]
        %v8949 = vstv %s8948
        %v8950 = vmul.f32 %v8209, %v8949
        %v8951 = vmul.f32 %v8210, %v8949
        %v8952 = vmul.f32 %v8211, %v8949
        %v8956 = vrot.slane %v8950, 2
        %v8957 = vrot.slane %v8951, 2
        %v8958 = vsel %vm8690, %v8956, %v8957
        %v8959 = vrot.slane %v8952, 2
        %v8960 = vsel %vm8690, %v8957, %v8959
        %8961 = vrot.lane.b32.xlu0 %v8958, 122
        %v8962 = vpop.permute.xlu0 %8961
        %8963 = vrot.lane.b32.xlu0 %v8960, 122
        %v8964 = vpop.permute.xlu0 %8963
        %v8967 = vadd.f32 %v8946, %v8962
        %v8968 = vadd.f32 %v8947, %v8964
        %s8969 = sld [smem:[#allocation9 + $0x15]]
        %v8970 = vstv %s8969
        %v8971 = vmul.f32 %v8206, %v8970
        %v8972 = vmul.f32 %v8207, %v8970
        %v8973 = vmul.f32 %v8208, %v8970
        %vm8977 = vcmask 1044480
        %v8978 = vrot.slane %v8971, 3
        %v8979 = vrot.slane %v8972, 3
        %v8980 = vsel %vm8977, %v8978, %v8979
        %v8981 = vrot.slane %v8973, 3
        %v8982 = vsel %vm8977, %v8979, %v8981
        %v8985 = vadd.f32 %v8967, %v8980
        %v8986 = vadd.f32 %v8968, %v8982
        %s8987 = sld [smem:[#allocation9 + $0x46]]
        %v8988 = vstv %s8987
        %v8989 = vmul.f32 %v8209, %v8988
        %v8990 = vmul.f32 %v8210, %v8988
        %v8991 = vmul.f32 %v8211, %v8988
        %v8995 = vrot.slane %v8989, 3
        %v8996 = vrot.slane %v8990, 3
        %v8997 = vsel %vm8977, %v8995, %v8996
        %v8998 = vrot.slane %v8991, 3
        %v8999 = vsel %vm8977, %v8996, %v8998
        %v9002 = vadd.f32 %v8985, %v8997
        %v9003 = vadd.f32 %v8986, %v8999
        %s9004 = sld [smem:[#allocation9 + $0x16]]
        %v9005 = vstv %s9004
        %v9006 = vmul.f32 %v8206, %v9005
        %v9007 = vmul.f32 %v8207, %v9005
        %v9008 = vmul.f32 %v8208, %v9005
        %v9012 = vrot.slane %v9006, 3
        %v9013 = vrot.slane %v9007, 3
        %v9014 = vsel %vm8977, %v9012, %v9013
        %v9015 = vrot.slane %v9008, 3
        %v9016 = vsel %vm8977, %v9013, %v9015
        %9017 = vrot.lane.b32.xlu0 %v9014, 127
        %v9018 = vpop.permute.xlu0 %9017
        %9019 = vrot.lane.b32.xlu0 %v9016, 127
        %v9020 = vpop.permute.xlu0 %9019
        %v9023 = vadd.f32 %v9002, %v9018
        %v9024 = vadd.f32 %v9003, %v9020
        %s9025 = sld [smem:[#allocation9 + $0x47]]
        %v9026 = vstv %s9025
        %v9027 = vmul.f32 %v8209, %v9026
        %v9028 = vmul.f32 %v8210, %v9026
        %v9029 = vmul.f32 %v8211, %v9026
        %v9033 = vrot.slane %v9027, 3
        %v9034 = vrot.slane %v9028, 3
        %v9035 = vsel %vm8977, %v9033, %v9034
        %v9036 = vrot.slane %v9029, 3
        %v9037 = vsel %vm8977, %v9034, %v9036
        %9038 = vrot.lane.b32.xlu0 %v9035, 127
        %v9039 = vpop.permute.xlu0 %9038
        %9040 = vrot.lane.b32.xlu0 %v9037, 127
        %v9041 = vpop.permute.xlu0 %9040
        %v9044 = vadd.f32 %v9023, %v9039
        %v9045 = vadd.f32 %v9024, %v9041
        %s9046 = sld [smem:[#allocation9 + $0x17]]
        %v9047 = vstv %s9046
        %v9048 = vmul.f32 %v8206, %v9047
        %v9049 = vmul.f32 %v8207, %v9047
        %v9050 = vmul.f32 %v8208, %v9047
        %v9054 = vrot.slane %v9048, 3
        %v9055 = vrot.slane %v9049, 3
        %v9056 = vsel %vm8977, %v9054, %v9055
        %v9057 = vrot.slane %v9050, 3
        %v9058 = vsel %vm8977, %v9055, %v9057
        %9059 = vrot.lane.b32.xlu0 %v9056, 126
        %v9060 = vpop.permute.xlu0 %9059
        %9061 = vrot.lane.b32.xlu0 %v9058, 126
        %v9062 = vpop.permute.xlu0 %9061
        %v9065 = vadd.f32 %v9044, %v9060
        %v9066 = vadd.f32 %v9045, %v9062
        %s9067 = sld [smem:[#allocation9 + $0x48]]
        %v9068 = vstv %s9067
        %v9069 = vmul.f32 %v8209, %v9068
        %v9070 = vmul.f32 %v8210, %v9068
        %v9071 = vmul.f32 %v8211, %v9068
        %v9075 = vrot.slane %v9069, 3
        %v9076 = vrot.slane %v9070, 3
        %v9077 = vsel %vm8977, %v9075, %v9076
        %v9078 = vrot.slane %v9071, 3
        %v9079 = vsel %vm8977, %v9076, %v9078
        %9080 = vrot.lane.b32.xlu0 %v9077, 126
        %v9081 = vpop.permute.xlu0 %9080
        %9082 = vrot.lane.b32.xlu0 %v9079, 126
        %v9083 = vpop.permute.xlu0 %9082
        %v9086 = vadd.f32 %v9065, %v9081
        %v9087 = vadd.f32 %v9066, %v9083
        %s9088 = sld [smem:[#allocation9 + $0x18]]
        %v9089 = vstv %s9088
        %v9090 = vmul.f32 %v8206, %v9089
        %v9091 = vmul.f32 %v8207, %v9089
        %v9092 = vmul.f32 %v8208, %v9089
        %v9096 = vrot.slane %v9090, 3
        %v9097 = vrot.slane %v9091, 3
        %v9098 = vsel %vm8977, %v9096, %v9097
        %v9099 = vrot.slane %v9092, 3
        %v9100 = vsel %vm8977, %v9097, %v9099
        %9101 = vrot.lane.b32.xlu0 %v9098, 125
        %v9102 = vpop.permute.xlu0 %9101
        %9103 = vrot.lane.b32.xlu0 %v9100, 125
        %v9104 = vpop.permute.xlu0 %9103
        %v9107 = vadd.f32 %v9086, %v9102
        %v9108 = vadd.f32 %v9087, %v9104
        %s9109 = sld [smem:[#allocation9 + $0x49]]
        %v9110 = vstv %s9109
        %v9111 = vmul.f32 %v8209, %v9110
        %v9112 = vmul.f32 %v8210, %v9110
        %v9113 = vmul.f32 %v8211, %v9110
        %v9117 = vrot.slane %v9111, 3
        %v9118 = vrot.slane %v9112, 3
        %v9119 = vsel %vm8977, %v9117, %v9118
        %v9120 = vrot.slane %v9113, 3
        %v9121 = vsel %vm8977, %v9118, %v9120
        %9122 = vrot.lane.b32.xlu0 %v9119, 125
        %v9123 = vpop.permute.xlu0 %9122
        %9124 = vrot.lane.b32.xlu0 %v9121, 125
        %v9125 = vpop.permute.xlu0 %9124
        %v9128 = vadd.f32 %v9107, %v9123
        %v9129 = vadd.f32 %v9108, %v9125
        %s9130 = sld [smem:[#allocation9 + $0x19]]
        %v9131 = vstv %s9130
        %v9132 = vmul.f32 %v8206, %v9131
        %v9133 = vmul.f32 %v8207, %v9131
        %v9134 = vmul.f32 %v8208, %v9131
        %v9138 = vrot.slane %v9132, 3
        %v9139 = vrot.slane %v9133, 3
        %v9140 = vsel %vm8977, %v9138, %v9139
        %v9141 = vrot.slane %v9134, 3
        %v9142 = vsel %vm8977, %v9139, %v9141
        %9143 = vrot.lane.b32.xlu0 %v9140, 124
        %v9144 = vpop.permute.xlu0 %9143
        %9145 = vrot.lane.b32.xlu0 %v9142, 124
        %v9146 = vpop.permute.xlu0 %9145
        %v9149 = vadd.f32 %v9128, %v9144
        %v9150 = vadd.f32 %v9129, %v9146
        %s9151 = sld [smem:[#allocation9 + $0x4a]]
        %v9152 = vstv %s9151
        %v9153 = vmul.f32 %v8209, %v9152
        %v9154 = vmul.f32 %v8210, %v9152
        %v9155 = vmul.f32 %v8211, %v9152
        %v9159 = vrot.slane %v9153, 3
        %v9160 = vrot.slane %v9154, 3
        %v9161 = vsel %vm8977, %v9159, %v9160
        %v9162 = vrot.slane %v9155, 3
        %v9163 = vsel %vm8977, %v9160, %v9162
        %9164 = vrot.lane.b32.xlu0 %v9161, 124
        %v9165 = vpop.permute.xlu0 %9164
        %9166 = vrot.lane.b32.xlu0 %v9163, 124
        %v9167 = vpop.permute.xlu0 %9166
        %v9170 = vadd.f32 %v9149, %v9165
        %v9171 = vadd.f32 %v9150, %v9167
        %s9172 = sld [smem:[#allocation9 + $0x1a]]
        %v9173 = vstv %s9172
        %v9174 = vmul.f32 %v8206, %v9173
        %v9175 = vmul.f32 %v8207, %v9173
        %v9176 = vmul.f32 %v8208, %v9173
        %v9180 = vrot.slane %v9174, 3
        %v9181 = vrot.slane %v9175, 3
        %v9182 = vsel %vm8977, %v9180, %v9181
        %v9183 = vrot.slane %v9176, 3
        %v9184 = vsel %vm8977, %v9181, %v9183
        %9185 = vrot.lane.b32.xlu0 %v9182, 123
        %v9186 = vpop.permute.xlu0 %9185
        %9187 = vrot.lane.b32.xlu0 %v9184, 123
        %v9188 = vpop.permute.xlu0 %9187
        %v9191 = vadd.f32 %v9170, %v9186
        %v9192 = vadd.f32 %v9171, %v9188
        %s9193 = sld [smem:[#allocation9 + $0x4b]]
        %v9194 = vstv %s9193
        %v9195 = vmul.f32 %v8209, %v9194
        %v9196 = vmul.f32 %v8210, %v9194
        %v9197 = vmul.f32 %v8211, %v9194
        %v9201 = vrot.slane %v9195, 3
        %v9202 = vrot.slane %v9196, 3
        %v9203 = vsel %vm8977, %v9201, %v9202
        %v9204 = vrot.slane %v9197, 3
        %v9205 = vsel %vm8977, %v9202, %v9204
        %9206 = vrot.lane.b32.xlu0 %v9203, 123
        %v9207 = vpop.permute.xlu0 %9206
        %9208 = vrot.lane.b32.xlu0 %v9205, 123
        %v9209 = vpop.permute.xlu0 %9208
        %v9212 = vadd.f32 %v9191, %v9207
        %v9213 = vadd.f32 %v9192, %v9209
        %s9214 = sld [smem:[#allocation9 + $0x1b]]
        %v9215 = vstv %s9214
        %v9216 = vmul.f32 %v8206, %v9215
        %v9217 = vmul.f32 %v8207, %v9215
        %v9218 = vmul.f32 %v8208, %v9215
        %v9222 = vrot.slane %v9216, 3
        %v9223 = vrot.slane %v9217, 3
        %v9224 = vsel %vm8977, %v9222, %v9223
        %v9225 = vrot.slane %v9218, 3
        %v9226 = vsel %vm8977, %v9223, %v9225
        %9227 = vrot.lane.b32.xlu0 %v9224, 122
        %v9228 = vpop.permute.xlu0 %9227
        %9229 = vrot.lane.b32.xlu0 %v9226, 122
        %v9230 = vpop.permute.xlu0 %9229
        %v9233 = vadd.f32 %v9212, %v9228
        %v9234 = vadd.f32 %v9213, %v9230
        %s9235 = sld [smem:[#allocation9 + $0x4c]]
        %v9236 = vstv %s9235
        %v9237 = vmul.f32 %v8209, %v9236
        %v9238 = vmul.f32 %v8210, %v9236
        %v9239 = vmul.f32 %v8211, %v9236
        %v9243 = vrot.slane %v9237, 3
        %v9244 = vrot.slane %v9238, 3
        %v9245 = vsel %vm8977, %v9243, %v9244
        %v9246 = vrot.slane %v9239, 3
        %v9247 = vsel %vm8977, %v9244, %v9246
        %9248 = vrot.lane.b32.xlu0 %v9245, 122
        %v9249 = vpop.permute.xlu0 %9248
        %9250 = vrot.lane.b32.xlu0 %v9247, 122
        %v9251 = vpop.permute.xlu0 %9250
        %v9254 = vadd.f32 %v9233, %v9249
        %v9255 = vadd.f32 %v9234, %v9251
        %s9256 = sld [smem:[#allocation9 + $0x1c]]
        %v9257 = vstv %s9256
        %v9258 = vmul.f32 %v8206, %v9257
        %v9259 = vmul.f32 %v8207, %v9257
        %v9260 = vmul.f32 %v8208, %v9257
        %vm9264 = vcmask 1043456
        %v9265 = vrot.slane %v9258, 4
        %v9266 = vrot.slane %v9259, 4
        %v9267 = vsel %vm9264, %v9265, %v9266
        %v9268 = vrot.slane %v9260, 4
        %v9269 = vsel %vm9264, %v9266, %v9268
        %v9272 = vadd.f32 %v9254, %v9267
        %v9273 = vadd.f32 %v9255, %v9269
        %s9274 = sld [smem:[#allocation9 + $0x4d]]
        %v9275 = vstv %s9274
        %v9276 = vmul.f32 %v8209, %v9275
        %v9277 = vmul.f32 %v8210, %v9275
        %v9278 = vmul.f32 %v8211, %v9275
        %v9282 = vrot.slane %v9276, 4
        %v9283 = vrot.slane %v9277, 4
        %v9284 = vsel %vm9264, %v9282, %v9283
        %v9285 = vrot.slane %v9278, 4
        %v9286 = vsel %vm9264, %v9283, %v9285
        %v9289 = vadd.f32 %v9272, %v9284
        %v9290 = vadd.f32 %v9273, %v9286
        %s9291 = sld [smem:[#allocation9 + $0x1d]]
        %v9292 = vstv %s9291
        %v9293 = vmul.f32 %v8206, %v9292
        %v9294 = vmul.f32 %v8207, %v9292
        %v9295 = vmul.f32 %v8208, %v9292
        %v9299 = vrot.slane %v9293, 4
        %v9300 = vrot.slane %v9294, 4
        %v9301 = vsel %vm9264, %v9299, %v9300
        %v9302 = vrot.slane %v9295, 4
        %v9303 = vsel %vm9264, %v9300, %v9302
        %9304 = vrot.lane.b32.xlu0 %v9301, 127
        %v9305 = vpop.permute.xlu0 %9304
        %9306 = vrot.lane.b32.xlu0 %v9303, 127
        %v9307 = vpop.permute.xlu0 %9306
        %v9310 = vadd.f32 %v9289, %v9305
        %v9311 = vadd.f32 %v9290, %v9307
        %s9312 = sld [smem:[#allocation9 + $0x4e]]
        %v9313 = vstv %s9312
        %v9314 = vmul.f32 %v8209, %v9313
        %v9315 = vmul.f32 %v8210, %v9313
        %v9316 = vmul.f32 %v8211, %v9313
        %v9320 = vrot.slane %v9314, 4
        %v9321 = vrot.slane %v9315, 4
        %v9322 = vsel %vm9264, %v9320, %v9321
        %v9323 = vrot.slane %v9316, 4
        %v9324 = vsel %vm9264, %v9321, %v9323
        %9325 = vrot.lane.b32.xlu0 %v9322, 127
        %v9326 = vpop.permute.xlu0 %9325
        %9327 = vrot.lane.b32.xlu0 %v9324, 127
        %v9328 = vpop.permute.xlu0 %9327
        %v9331 = vadd.f32 %v9310, %v9326
        %v9332 = vadd.f32 %v9311, %v9328
        %s9333 = sld [smem:[#allocation9 + $0x1e]]
        %v9334 = vstv %s9333
        %v9335 = vmul.f32 %v8206, %v9334
        %v9336 = vmul.f32 %v8207, %v9334
        %v9337 = vmul.f32 %v8208, %v9334
        %v9341 = vrot.slane %v9335, 4
        %v9342 = vrot.slane %v9336, 4
        %v9343 = vsel %vm9264, %v9341, %v9342
        %v9344 = vrot.slane %v9337, 4
        %v9345 = vsel %vm9264, %v9342, %v9344
        %9346 = vrot.lane.b32.xlu0 %v9343, 126
        %v9347 = vpop.permute.xlu0 %9346
        %9348 = vrot.lane.b32.xlu0 %v9345, 126
        %v9349 = vpop.permute.xlu0 %9348
        %v9352 = vadd.f32 %v9331, %v9347
        %v9353 = vadd.f32 %v9332, %v9349
        %s9354 = sld [smem:[#allocation9 + $0x4f]]
        %v9355 = vstv %s9354
        %v9356 = vmul.f32 %v8209, %v9355
        %v9357 = vmul.f32 %v8210, %v9355
        %v9358 = vmul.f32 %v8211, %v9355
        %v9362 = vrot.slane %v9356, 4
        %v9363 = vrot.slane %v9357, 4
        %v9364 = vsel %vm9264, %v9362, %v9363
        %v9365 = vrot.slane %v9358, 4
        %v9366 = vsel %vm9264, %v9363, %v9365
        %9367 = vrot.lane.b32.xlu0 %v9364, 126
        %v9368 = vpop.permute.xlu0 %9367
        %9369 = vrot.lane.b32.xlu0 %v9366, 126
        %v9370 = vpop.permute.xlu0 %9369
        %v9373 = vadd.f32 %v9352, %v9368
        %v9374 = vadd.f32 %v9353, %v9370
        %s9375 = sld [smem:[#allocation9 + $0x1f]]
        %v9376 = vstv %s9375
        %v9377 = vmul.f32 %v8206, %v9376
        %v9378 = vmul.f32 %v8207, %v9376
        %v9379 = vmul.f32 %v8208, %v9376
        %v9383 = vrot.slane %v9377, 4
        %v9384 = vrot.slane %v9378, 4
        %v9385 = vsel %vm9264, %v9383, %v9384
        %v9386 = vrot.slane %v9379, 4
        %v9387 = vsel %vm9264, %v9384, %v9386
        %9388 = vrot.lane.b32.xlu0 %v9385, 125
        %v9389 = vpop.permute.xlu0 %9388
        %9390 = vrot.lane.b32.xlu0 %v9387, 125
        %v9391 = vpop.permute.xlu0 %9390
        %v9394 = vadd.f32 %v9373, %v9389
        %v9395 = vadd.f32 %v9374, %v9391
        %s9396 = sld [smem:[#allocation9 + $0x50]]
        %v9397 = vstv %s9396
        %v9398 = vmul.f32 %v8209, %v9397
        %v9399 = vmul.f32 %v8210, %v9397
        %v9400 = vmul.f32 %v8211, %v9397
        %v9404 = vrot.slane %v9398, 4
        %v9405 = vrot.slane %v9399, 4
        %v9406 = vsel %vm9264, %v9404, %v9405
        %v9407 = vrot.slane %v9400, 4
        %v9408 = vsel %vm9264, %v9405, %v9407
        %9409 = vrot.lane.b32.xlu0 %v9406, 125
        %v9410 = vpop.permute.xlu0 %9409
        %9411 = vrot.lane.b32.xlu0 %v9408, 125
        %v9412 = vpop.permute.xlu0 %9411
        %v9415 = vadd.f32 %v9394, %v9410
        %v9416 = vadd.f32 %v9395, %v9412
        %s9417 = sld [smem:[#allocation9 + $0x20]]
        %v9418 = vstv %s9417
        %v9419 = vmul.f32 %v8206, %v9418
        %v9420 = vmul.f32 %v8207, %v9418
        %v9421 = vmul.f32 %v8208, %v9418
        %v9425 = vrot.slane %v9419, 4
        %v9426 = vrot.slane %v9420, 4
        %v9427 = vsel %vm9264, %v9425, %v9426
        %v9428 = vrot.slane %v9421, 4
        %v9429 = vsel %vm9264, %v9426, %v9428
        %9430 = vrot.lane.b32.xlu0 %v9427, 124
        %v9431 = vpop.permute.xlu0 %9430
        %9432 = vrot.lane.b32.xlu0 %v9429, 124
        %v9433 = vpop.permute.xlu0 %9432
        %v9436 = vadd.f32 %v9415, %v9431
        %v9437 = vadd.f32 %v9416, %v9433
        %s9438 = sld [smem:[#allocation9 + $0x51]]
        %v9439 = vstv %s9438
        %v9440 = vmul.f32 %v8209, %v9439
        %v9441 = vmul.f32 %v8210, %v9439
        %v9442 = vmul.f32 %v8211, %v9439
        %v9446 = vrot.slane %v9440, 4
        %v9447 = vrot.slane %v9441, 4
        %v9448 = vsel %vm9264, %v9446, %v9447
        %v9449 = vrot.slane %v9442, 4
        %v9450 = vsel %vm9264, %v9447, %v9449
        %9451 = vrot.lane.b32.xlu0 %v9448, 124
        %v9452 = vpop.permute.xlu0 %9451
        %9453 = vrot.lane.b32.xlu0 %v9450, 124
        %v9454 = vpop.permute.xlu0 %9453
        %v9457 = vadd.f32 %v9436, %v9452
        %v9458 = vadd.f32 %v9437, %v9454
        %s9459 = sld [smem:[#allocation9 + $0x21]]
        %v9460 = vstv %s9459
        %v9461 = vmul.f32 %v8206, %v9460
        %v9462 = vmul.f32 %v8207, %v9460
        %v9463 = vmul.f32 %v8208, %v9460
        %v9467 = vrot.slane %v9461, 4
        %v9468 = vrot.slane %v9462, 4
        %v9469 = vsel %vm9264, %v9467, %v9468
        %v9470 = vrot.slane %v9463, 4
        %v9471 = vsel %vm9264, %v9468, %v9470
        %9472 = vrot.lane.b32.xlu0 %v9469, 123
        %v9473 = vpop.permute.xlu0 %9472
        %9474 = vrot.lane.b32.xlu0 %v9471, 123
        %v9475 = vpop.permute.xlu0 %9474
        %v9478 = vadd.f32 %v9457, %v9473
        %v9479 = vadd.f32 %v9458, %v9475
        %s9480 = sld [smem:[#allocation9 + $0x52]]
        %v9481 = vstv %s9480
        %v9482 = vmul.f32 %v8209, %v9481
        %v9483 = vmul.f32 %v8210, %v9481
        %v9484 = vmul.f32 %v8211, %v9481
        %v9488 = vrot.slane %v9482, 4
        %v9489 = vrot.slane %v9483, 4
        %v9490 = vsel %vm9264, %v9488, %v9489
        %v9491 = vrot.slane %v9484, 4
        %v9492 = vsel %vm9264, %v9489, %v9491
        %9493 = vrot.lane.b32.xlu0 %v9490, 123
        %v9494 = vpop.permute.xlu0 %9493
        %9495 = vrot.lane.b32.xlu0 %v9492, 123
        %v9496 = vpop.permute.xlu0 %9495
        %v9499 = vadd.f32 %v9478, %v9494
        %v9500 = vadd.f32 %v9479, %v9496
        %s9501 = sld [smem:[#allocation9 + $0x22]]
        %v9502 = vstv %s9501
        %v9503 = vmul.f32 %v8206, %v9502
        %v9504 = vmul.f32 %v8207, %v9502
        %v9505 = vmul.f32 %v8208, %v9502
        %v9509 = vrot.slane %v9503, 4
        %v9510 = vrot.slane %v9504, 4
        %v9511 = vsel %vm9264, %v9509, %v9510
        %v9512 = vrot.slane %v9505, 4
        %v9513 = vsel %vm9264, %v9510, %v9512
        %9514 = vrot.lane.b32.xlu0 %v9511, 122
        %v9515 = vpop.permute.xlu0 %9514
        %9516 = vrot.lane.b32.xlu0 %v9513, 122
        %v9517 = vpop.permute.xlu0 %9516
        %v9520 = vadd.f32 %v9499, %v9515
        %v9521 = vadd.f32 %v9500, %v9517
        %s9522 = sld [smem:[#allocation9 + $0x53]]
        %v9523 = vstv %s9522
        %v9524 = vmul.f32 %v8209, %v9523
        %v9525 = vmul.f32 %v8210, %v9523
        %v9526 = vmul.f32 %v8211, %v9523
        %v9530 = vrot.slane %v9524, 4
        %v9531 = vrot.slane %v9525, 4
        %v9532 = vsel %vm9264, %v9530, %v9531
        %v9533 = vrot.slane %v9526, 4
        %v9534 = vsel %vm9264, %v9531, %v9533
        %9535 = vrot.lane.b32.xlu0 %v9532, 122
        %v9536 = vpop.permute.xlu0 %9535
        %9537 = vrot.lane.b32.xlu0 %v9534, 122
        %v9538 = vpop.permute.xlu0 %9537
        %v9541 = vadd.f32 %v9520, %v9536
        %v9542 = vadd.f32 %v9521, %v9538
        %s9543 = sld [smem:[#allocation9 + $0x23]]
        %v9544 = vstv %s9543
        %v9545 = vmul.f32 %v8206, %v9544
        %v9546 = vmul.f32 %v8207, %v9544
        %v9547 = vmul.f32 %v8208, %v9544
        %vm9551 = vcmask 1042432
        %v9552 = vrot.slane %v9545, 5
        %v9553 = vrot.slane %v9546, 5
        %v9554 = vsel %vm9551, %v9552, %v9553
        %v9555 = vrot.slane %v9547, 5
        %v9556 = vsel %vm9551, %v9553, %v9555
        %v9559 = vadd.f32 %v9541, %v9554
        %v9560 = vadd.f32 %v9542, %v9556
        %s9561 = sld [smem:[#allocation9 + $0x54]]
        %v9562 = vstv %s9561
        %v9563 = vmul.f32 %v8209, %v9562
        %v9564 = vmul.f32 %v8210, %v9562
        %v9565 = vmul.f32 %v8211, %v9562
        %v9569 = vrot.slane %v9563, 5
        %v9570 = vrot.slane %v9564, 5
        %v9571 = vsel %vm9551, %v9569, %v9570
        %v9572 = vrot.slane %v9565, 5
        %v9573 = vsel %vm9551, %v9570, %v9572
        %v9576 = vadd.f32 %v9559, %v9571
        %v9577 = vadd.f32 %v9560, %v9573
        %s9578 = sld [smem:[#allocation9 + $0x24]]
        %v9579 = vstv %s9578
        %v9580 = vmul.f32 %v8206, %v9579
        %v9581 = vmul.f32 %v8207, %v9579
        %v9582 = vmul.f32 %v8208, %v9579
        %v9586 = vrot.slane %v9580, 5
        %v9587 = vrot.slane %v9581, 5
        %v9588 = vsel %vm9551, %v9586, %v9587
        %v9589 = vrot.slane %v9582, 5
        %v9590 = vsel %vm9551, %v9587, %v9589
        %9591 = vrot.lane.b32.xlu0 %v9588, 127
        %v9592 = vpop.permute.xlu0 %9591
        %9593 = vrot.lane.b32.xlu0 %v9590, 127
        %v9594 = vpop.permute.xlu0 %9593
        %v9597 = vadd.f32 %v9576, %v9592
        %v9598 = vadd.f32 %v9577, %v9594
        %s9599 = sld [smem:[#allocation9 + $0x55]]
        %v9600 = vstv %s9599
        %v9601 = vmul.f32 %v8209, %v9600
        %v9602 = vmul.f32 %v8210, %v9600
        %v9603 = vmul.f32 %v8211, %v9600
        %v9607 = vrot.slane %v9601, 5
        %v9608 = vrot.slane %v9602, 5
        %v9609 = vsel %vm9551, %v9607, %v9608
        %v9610 = vrot.slane %v9603, 5
        %v9611 = vsel %vm9551, %v9608, %v9610
        %9612 = vrot.lane.b32.xlu0 %v9609, 127
        %v9613 = vpop.permute.xlu0 %9612
        %9614 = vrot.lane.b32.xlu0 %v9611, 127
        %v9615 = vpop.permute.xlu0 %9614
        %v9618 = vadd.f32 %v9597, %v9613
        %v9619 = vadd.f32 %v9598, %v9615
        %s9620 = sld [smem:[#allocation9 + $0x25]]
        %v9621 = vstv %s9620
        %v9622 = vmul.f32 %v8206, %v9621
        %v9623 = vmul.f32 %v8207, %v9621
        %v9624 = vmul.f32 %v8208, %v9621
        %v9628 = vrot.slane %v9622, 5
        %v9629 = vrot.slane %v9623, 5
        %v9630 = vsel %vm9551, %v9628, %v9629
        %v9631 = vrot.slane %v9624, 5
        %v9632 = vsel %vm9551, %v9629, %v9631
        %9633 = vrot.lane.b32.xlu0 %v9630, 126
        %v9634 = vpop.permute.xlu0 %9633
        %9635 = vrot.lane.b32.xlu0 %v9632, 126
        %v9636 = vpop.permute.xlu0 %9635
        %v9639 = vadd.f32 %v9618, %v9634
        %v9640 = vadd.f32 %v9619, %v9636
        %s9641 = sld [smem:[#allocation9 + $0x56]]
        %v9642 = vstv %s9641
        %v9643 = vmul.f32 %v8209, %v9642
        %v9644 = vmul.f32 %v8210, %v9642
        %v9645 = vmul.f32 %v8211, %v9642
        %v9649 = vrot.slane %v9643, 5
        %v9650 = vrot.slane %v9644, 5
        %v9651 = vsel %vm9551, %v9649, %v9650
        %v9652 = vrot.slane %v9645, 5
        %v9653 = vsel %vm9551, %v9650, %v9652
        %9654 = vrot.lane.b32.xlu0 %v9651, 126
        %v9655 = vpop.permute.xlu0 %9654
        %9656 = vrot.lane.b32.xlu0 %v9653, 126
        %v9657 = vpop.permute.xlu0 %9656
        %v9660 = vadd.f32 %v9639, %v9655
        %v9661 = vadd.f32 %v9640, %v9657
        %s9662 = sld [smem:[#allocation9 + $0x26]]
        %v9663 = vstv %s9662
        %v9664 = vmul.f32 %v8206, %v9663
        %v9665 = vmul.f32 %v8207, %v9663
        %v9666 = vmul.f32 %v8208, %v9663
        %v9670 = vrot.slane %v9664, 5
        %v9671 = vrot.slane %v9665, 5
        %v9672 = vsel %vm9551, %v9670, %v9671
        %v9673 = vrot.slane %v9666, 5
        %v9674 = vsel %vm9551, %v9671, %v9673
        %9675 = vrot.lane.b32.xlu0 %v9672, 125
        %v9676 = vpop.permute.xlu0 %9675
        %9677 = vrot.lane.b32.xlu0 %v9674, 125
        %v9678 = vpop.permute.xlu0 %9677
        %v9681 = vadd.f32 %v9660, %v9676
        %v9682 = vadd.f32 %v9661, %v9678
        %s9683 = sld [smem:[#allocation9 + $0x57]]
        %v9684 = vstv %s9683
        %v9685 = vmul.f32 %v8209, %v9684
        %v9686 = vmul.f32 %v8210, %v9684
        %v9687 = vmul.f32 %v8211, %v9684
        %v9691 = vrot.slane %v9685, 5
        %v9692 = vrot.slane %v9686, 5
        %v9693 = vsel %vm9551, %v9691, %v9692
        %v9694 = vrot.slane %v9687, 5
        %v9695 = vsel %vm9551, %v9692, %v9694
        %9696 = vrot.lane.b32.xlu0 %v9693, 125
        %v9697 = vpop.permute.xlu0 %9696
        %9698 = vrot.lane.b32.xlu0 %v9695, 125
        %v9699 = vpop.permute.xlu0 %9698
        %v9702 = vadd.f32 %v9681, %v9697
        %v9703 = vadd.f32 %v9682, %v9699
        %s9704 = sld [smem:[#allocation9 + $0x27]]
        %v9705 = vstv %s9704
        %v9706 = vmul.f32 %v8206, %v9705
        %v9707 = vmul.f32 %v8207, %v9705
        %v9708 = vmul.f32 %v8208, %v9705
        %v9712 = vrot.slane %v9706, 5
        %v9713 = vrot.slane %v9707, 5
        %v9714 = vsel %vm9551, %v9712, %v9713
        %v9715 = vrot.slane %v9708, 5
        %v9716 = vsel %vm9551, %v9713, %v9715
        %9717 = vrot.lane.b32.xlu0 %v9714, 124
        %v9718 = vpop.permute.xlu0 %9717
        %9719 = vrot.lane.b32.xlu0 %v9716, 124
        %v9720 = vpop.permute.xlu0 %9719
        %v9723 = vadd.f32 %v9702, %v9718
        %v9724 = vadd.f32 %v9703, %v9720
        %s9725 = sld [smem:[#allocation9 + $0x58]]
        %v9726 = vstv %s9725
        %v9727 = vmul.f32 %v8209, %v9726
        %v9728 = vmul.f32 %v8210, %v9726
        %v9729 = vmul.f32 %v8211, %v9726
        %v9733 = vrot.slane %v9727, 5
        %v9734 = vrot.slane %v9728, 5
        %v9735 = vsel %vm9551, %v9733, %v9734
        %v9736 = vrot.slane %v9729, 5
        %v9737 = vsel %vm9551, %v9734, %v9736
        %9738 = vrot.lane.b32.xlu0 %v9735, 124
        %v9739 = vpop.permute.xlu0 %9738
        %9740 = vrot.lane.b32.xlu0 %v9737, 124
        %v9741 = vpop.permute.xlu0 %9740
        %v9744 = vadd.f32 %v9723, %v9739
        %v9745 = vadd.f32 %v9724, %v9741
        %s9746 = sld [smem:[#allocation9 + $0x28]]
        %v9747 = vstv %s9746
        %v9748 = vmul.f32 %v8206, %v9747
        %v9749 = vmul.f32 %v8207, %v9747
        %v9750 = vmul.f32 %v8208, %v9747
        %v9754 = vrot.slane %v9748, 5
        %v9755 = vrot.slane %v9749, 5
        %v9756 = vsel %vm9551, %v9754, %v9755
        %v9757 = vrot.slane %v9750, 5
        %v9758 = vsel %vm9551, %v9755, %v9757
        %9759 = vrot.lane.b32.xlu0 %v9756, 123
        %v9760 = vpop.permute.xlu0 %9759
        %9761 = vrot.lane.b32.xlu0 %v9758, 123
        %v9762 = vpop.permute.xlu0 %9761
        %v9765 = vadd.f32 %v9744, %v9760
        %v9766 = vadd.f32 %v9745, %v9762
        %s9767 = sld [smem:[#allocation9 + $0x59]]
        %v9768 = vstv %s9767
        %v9769 = vmul.f32 %v8209, %v9768
        %v9770 = vmul.f32 %v8210, %v9768
        %v9771 = vmul.f32 %v8211, %v9768
        %v9775 = vrot.slane %v9769, 5
        %v9776 = vrot.slane %v9770, 5
        %v9777 = vsel %vm9551, %v9775, %v9776
        %v9778 = vrot.slane %v9771, 5
        %v9779 = vsel %vm9551, %v9776, %v9778
        %9780 = vrot.lane.b32.xlu0 %v9777, 123
        %v9781 = vpop.permute.xlu0 %9780
        %9782 = vrot.lane.b32.xlu0 %v9779, 123
        %v9783 = vpop.permute.xlu0 %9782
        %v9786 = vadd.f32 %v9765, %v9781
        %v9787 = vadd.f32 %v9766, %v9783
        %s9788 = sld [smem:[#allocation9 + $0x29]]
        %v9789 = vstv %s9788
        %v9790 = vmul.f32 %v8206, %v9789
        %v9791 = vmul.f32 %v8207, %v9789
        %v9792 = vmul.f32 %v8208, %v9789
        %v9796 = vrot.slane %v9790, 5
        %v9797 = vrot.slane %v9791, 5
        %v9798 = vsel %vm9551, %v9796, %v9797
        %v9799 = vrot.slane %v9792, 5
        %v9800 = vsel %vm9551, %v9797, %v9799
        %9801 = vrot.lane.b32.xlu0 %v9798, 122
        %v9802 = vpop.permute.xlu0 %9801
        %9803 = vrot.lane.b32.xlu0 %v9800, 122
        %v9804 = vpop.permute.xlu0 %9803
        %v9807 = vadd.f32 %v9786, %v9802
        %v9808 = vadd.f32 %v9787, %v9804
        %s9809 = sld [smem:[#allocation9 + $0x5a]]
        %v9810 = vstv %s9809
        %v9811 = vmul.f32 %v8209, %v9810
        %v9812 = vmul.f32 %v8210, %v9810
        %v9813 = vmul.f32 %v8211, %v9810
        %v9817 = vrot.slane %v9811, 5
        %v9818 = vrot.slane %v9812, 5
        %v9819 = vsel %vm9551, %v9817, %v9818
        %v9820 = vrot.slane %v9813, 5
        %v9821 = vsel %vm9551, %v9818, %v9820
        %9822 = vrot.lane.b32.xlu0 %v9819, 122
        %v9823 = vpop.permute.xlu0 %9822
        %9824 = vrot.lane.b32.xlu0 %v9821, 122
        %v9825 = vpop.permute.xlu0 %9824
        %v9828 = vadd.f32 %v9807, %v9823
        %v9829 = vadd.f32 %v9808, %v9825
        %s9830 = sld [smem:[#allocation9 + $0x2a]]
        %v9831 = vstv %s9830
        %v9832 = vmul.f32 %v8206, %v9831
        %v9833 = vmul.f32 %v8207, %v9831
        %v9834 = vmul.f32 %v8208, %v9831
        %vm9838 = vcmask 1041408
        %v9839 = vrot.slane %v9832, 6
        %v9840 = vrot.slane %v9833, 6
        %v9841 = vsel %vm9838, %v9839, %v9840
        %v9842 = vrot.slane %v9834, 6
        %v9843 = vsel %vm9838, %v9840, %v9842
        %v9846 = vadd.f32 %v9828, %v9841
        %v9847 = vadd.f32 %v9829, %v9843
        %s9848 = sld [smem:[#allocation9 + $0x5b]]
        %v9849 = vstv %s9848
        %v9850 = vmul.f32 %v8209, %v9849
        %v9851 = vmul.f32 %v8210, %v9849
        %v9852 = vmul.f32 %v8211, %v9849
        %v9856 = vrot.slane %v9850, 6
        %v9857 = vrot.slane %v9851, 6
        %v9858 = vsel %vm9838, %v9856, %v9857
        %v9859 = vrot.slane %v9852, 6
        %v9860 = vsel %vm9838, %v9857, %v9859
        %v9863 = vadd.f32 %v9846, %v9858
        %v9864 = vadd.f32 %v9847, %v9860
        %s9865 = sld [smem:[#allocation9 + $0x2b]]
        %v9866 = vstv %s9865
        %v9867 = vmul.f32 %v8206, %v9866
        %v9868 = vmul.f32 %v8207, %v9866
        %v9869 = vmul.f32 %v8208, %v9866
        %v9873 = vrot.slane %v9867, 6
        %v9874 = vrot.slane %v9868, 6
        %v9875 = vsel %vm9838, %v9873, %v9874
        %v9876 = vrot.slane %v9869, 6
        %v9877 = vsel %vm9838, %v9874, %v9876
        %9878 = vrot.lane.b32.xlu0 %v9875, 127
        %v9879 = vpop.permute.xlu0 %9878
        %9880 = vrot.lane.b32.xlu0 %v9877, 127
        %v9881 = vpop.permute.xlu0 %9880
        %v9884 = vadd.f32 %v9863, %v9879
        %v9885 = vadd.f32 %v9864, %v9881
        %s9886 = sld [smem:[#allocation9 + $0x5c]]
        %v9887 = vstv %s9886
        %v9888 = vmul.f32 %v8209, %v9887
        %v9889 = vmul.f32 %v8210, %v9887
        %v9890 = vmul.f32 %v8211, %v9887
        %v9894 = vrot.slane %v9888, 6
        %v9895 = vrot.slane %v9889, 6
        %v9896 = vsel %vm9838, %v9894, %v9895
        %v9897 = vrot.slane %v9890, 6
        %v9898 = vsel %vm9838, %v9895, %v9897
        %9899 = vrot.lane.b32.xlu0 %v9896, 127
        %v9900 = vpop.permute.xlu0 %9899
        %9901 = vrot.lane.b32.xlu0 %v9898, 127
        %v9902 = vpop.permute.xlu0 %9901
        %v9905 = vadd.f32 %v9884, %v9900
        %v9906 = vadd.f32 %v9885, %v9902
        %s9907 = sld [smem:[#allocation9 + $0x2c]]
        %v9908 = vstv %s9907
        %v9909 = vmul.f32 %v8206, %v9908
        %v9910 = vmul.f32 %v8207, %v9908
        %v9911 = vmul.f32 %v8208, %v9908
        %v9915 = vrot.slane %v9909, 6
        %v9916 = vrot.slane %v9910, 6
        %v9917 = vsel %vm9838, %v9915, %v9916
        %v9918 = vrot.slane %v9911, 6
        %v9919 = vsel %vm9838, %v9916, %v9918
        %9920 = vrot.lane.b32.xlu0 %v9917, 126
        %v9921 = vpop.permute.xlu0 %9920
        %9922 = vrot.lane.b32.xlu0 %v9919, 126
        %v9923 = vpop.permute.xlu0 %9922
        %v9926 = vadd.f32 %v9905, %v9921
        %v9927 = vadd.f32 %v9906, %v9923
        %s9928 = sld [smem:[#allocation9 + $0x5d]]
        %v9929 = vstv %s9928
        %v9930 = vmul.f32 %v8209, %v9929
        %v9931 = vmul.f32 %v8210, %v9929
        %v9932 = vmul.f32 %v8211, %v9929
        %v9936 = vrot.slane %v9930, 6
        %v9937 = vrot.slane %v9931, 6
        %v9938 = vsel %vm9838, %v9936, %v9937
        %v9939 = vrot.slane %v9932, 6
        %v9940 = vsel %vm9838, %v9937, %v9939
        %9941 = vrot.lane.b32.xlu0 %v9938, 126
        %v9942 = vpop.permute.xlu0 %9941
        %9943 = vrot.lane.b32.xlu0 %v9940, 126
        %v9944 = vpop.permute.xlu0 %9943
        %v9947 = vadd.f32 %v9926, %v9942
        %v9948 = vadd.f32 %v9927, %v9944
        %s9949 = sld [smem:[#allocation9 + $0x2d]]
        %v9950 = vstv %s9949
        %v9951 = vmul.f32 %v8206, %v9950
        %v9952 = vmul.f32 %v8207, %v9950
        %v9953 = vmul.f32 %v8208, %v9950
        %v9957 = vrot.slane %v9951, 6
        %v9958 = vrot.slane %v9952, 6
        %v9959 = vsel %vm9838, %v9957, %v9958
        %v9960 = vrot.slane %v9953, 6
        %v9961 = vsel %vm9838, %v9958, %v9960
        %9962 = vrot.lane.b32.xlu0 %v9959, 125
        %v9963 = vpop.permute.xlu0 %9962
        %9964 = vrot.lane.b32.xlu0 %v9961, 125
        %v9965 = vpop.permute.xlu0 %9964
        %v9968 = vadd.f32 %v9947, %v9963
        %v9969 = vadd.f32 %v9948, %v9965
        %s9970 = sld [smem:[#allocation9 + $0x5e]]
        %v9971 = vstv %s9970
        %v9972 = vmul.f32 %v8209, %v9971
        %v9973 = vmul.f32 %v8210, %v9971
        %v9974 = vmul.f32 %v8211, %v9971
        %v9978 = vrot.slane %v9972, 6
        %v9979 = vrot.slane %v9973, 6
        %v9980 = vsel %vm9838, %v9978, %v9979
        %v9981 = vrot.slane %v9974, 6
        %v9982 = vsel %vm9838, %v9979, %v9981
        %9983 = vrot.lane.b32.xlu0 %v9980, 125
        %v9984 = vpop.permute.xlu0 %9983
        %9985 = vrot.lane.b32.xlu0 %v9982, 125
        %v9986 = vpop.permute.xlu0 %9985
        %v9989 = vadd.f32 %v9968, %v9984
        %v9990 = vadd.f32 %v9969, %v9986
        %s9991 = sld [smem:[#allocation9 + $0x2e]]
        %v9992 = vstv %s9991
        %v9993 = vmul.f32 %v8206, %v9992
        %v9994 = vmul.f32 %v8207, %v9992
        %v9995 = vmul.f32 %v8208, %v9992
        %v9999 = vrot.slane %v9993, 6
        %v10000 = vrot.slane %v9994, 6
        %v10001 = vsel %vm9838, %v9999, %v10000
        %v10002 = vrot.slane %v9995, 6
        %v10003 = vsel %vm9838, %v10000, %v10002
        %10004 = vrot.lane.b32.xlu0 %v10001, 124
        %v10005 = vpop.permute.xlu0 %10004
        %10006 = vrot.lane.b32.xlu0 %v10003, 124
        %v10007 = vpop.permute.xlu0 %10006
        %v10010 = vadd.f32 %v9989, %v10005
        %v10011 = vadd.f32 %v9990, %v10007
        %s10012 = sld [smem:[#allocation9 + $0x5f]]
        %v10013 = vstv %s10012
        %v10014 = vmul.f32 %v8209, %v10013
        %v10015 = vmul.f32 %v8210, %v10013
        %v10016 = vmul.f32 %v8211, %v10013
        %v10020 = vrot.slane %v10014, 6
        %v10021 = vrot.slane %v10015, 6
        %v10022 = vsel %vm9838, %v10020, %v10021
        %v10023 = vrot.slane %v10016, 6
        %v10024 = vsel %vm9838, %v10021, %v10023
        %10025 = vrot.lane.b32.xlu0 %v10022, 124
        %v10026 = vpop.permute.xlu0 %10025
        %10027 = vrot.lane.b32.xlu0 %v10024, 124
        %v10028 = vpop.permute.xlu0 %10027
        %v10031 = vadd.f32 %v10010, %v10026
        %v10032 = vadd.f32 %v10011, %v10028
        %s10033 = sld [smem:[#allocation9 + $0x2f]]
        %v10034 = vstv %s10033
        %v10035 = vmul.f32 %v8206, %v10034
        %v10036 = vmul.f32 %v8207, %v10034
        %v10037 = vmul.f32 %v8208, %v10034
        %v10041 = vrot.slane %v10035, 6
        %v10042 = vrot.slane %v10036, 6
        %v10043 = vsel %vm9838, %v10041, %v10042
        %v10044 = vrot.slane %v10037, 6
        %v10045 = vsel %vm9838, %v10042, %v10044
        %10046 = vrot.lane.b32.xlu0 %v10043, 123
        %v10047 = vpop.permute.xlu0 %10046
        %10048 = vrot.lane.b32.xlu0 %v10045, 123
        %v10049 = vpop.permute.xlu0 %10048
        %v10052 = vadd.f32 %v10031, %v10047
        %v10053 = vadd.f32 %v10032, %v10049
        %s10054 = sld [smem:[#allocation9 + $0x60]]
        %v10055 = vstv %s10054
        %v10056 = vmul.f32 %v8209, %v10055
        %v10057 = vmul.f32 %v8210, %v10055
        %v10058 = vmul.f32 %v8211, %v10055
        %v10062 = vrot.slane %v10056, 6
        %v10063 = vrot.slane %v10057, 6
        %v10064 = vsel %vm9838, %v10062, %v10063
        %v10065 = vrot.slane %v10058, 6
        %v10066 = vsel %vm9838, %v10063, %v10065
        %10067 = vrot.lane.b32.xlu0 %v10064, 123
        %v10068 = vpop.permute.xlu0 %10067
        %10069 = vrot.lane.b32.xlu0 %v10066, 123
        %v10070 = vpop.permute.xlu0 %10069
        %v10073 = vadd.f32 %v10052, %v10068
        %v10074 = vadd.f32 %v10053, %v10070
        %s10075 = sld [smem:[#allocation9 + $0x30]]
        %v10076 = vstv %s10075
        %v10077 = vmul.f32 %v8206, %v10076
        %v10078 = vmul.f32 %v8207, %v10076
        %v10079 = vmul.f32 %v8208, %v10076
        %v10083 = vrot.slane %v10077, 6
        %v10084 = vrot.slane %v10078, 6
        %v10085 = vsel %vm9838, %v10083, %v10084
        %v10086 = vrot.slane %v10079, 6
        %v10087 = vsel %vm9838, %v10084, %v10086
        %10088 = vrot.lane.b32.xlu0 %v10085, 122
        %v10089 = vpop.permute.xlu0 %10088
        %10090 = vrot.lane.b32.xlu0 %v10087, 122
        %v10091 = vpop.permute.xlu0 %10090
        %v10094 = vadd.f32 %v10073, %v10089
        %v10095 = vadd.f32 %v10074, %v10091
        %s10096 = sld [smem:[#allocation9 + $0x61]]
        %v10097 = vstv %s10096
        %v10098 = vmul.f32 %v8209, %v10097
        %v10099 = vmul.f32 %v8210, %v10097
        %v10100 = vmul.f32 %v8211, %v10097
        %v10104 = vrot.slane %v10098, 6
        %v10105 = vrot.slane %v10099, 6
        %v10106 = vsel %vm9838, %v10104, %v10105
        %v10107 = vrot.slane %v10100, 6
        %v10108 = vsel %vm9838, %v10105, %v10107
        %10109 = vrot.lane.b32.xlu0 %v10106, 122
        %v10110 = vpop.permute.xlu0 %10109
        %10111 = vrot.lane.b32.xlu0 %v10108, 122
        %v10112 = vpop.permute.xlu0 %10111
        %v10115 = vadd.f32 %v10094, %v10110
        %v10116 = vadd.f32 %v10095, %v10112
        %v10117 = vxor.u32 %v10115, 2147483648
        %v10118 = vxor.u32 %v10116, 2147483648
        %v10119 = vmul.f32 %v10117, 1.442695
        %v10120 = vpow.pop %v10119
        %v10121 = vmul.f32 %v10118, 1.442695
        %v10122 = vpow.pop %v10121
        %v10123 = vadd.f32 %v10120, 1.0
        %v10124 = vadd.f32 %v10122, 1.0
        %v10125 = vrcp.pop %v10123
        %v10126 = vmul.f32 1.0, %v10125
        %v10127 = vrcp.pop %v10124
        %v10128 = vmul.f32 1.0, %v10127
        %v10129 = vlaneseq
        %vm10130 = vcmp.ge.s32.totalorder %v10129, 0
        %vm10131 = vcmp.lt.s32.totalorder %v10129, 384
        %vm10132 = vmand %vm10130, %vm10131
        %10133 = vst.msk [vmem:[#allocation8] sm:$0x7] %vm10132, 0.0
        %vm10134 = vcmp.lt.s32.totalorder %v10129, 16
        %vm10135 = vmand %vm10130, %vm10134
        %10136 = vst.msk [vmem:[#allocation8] sm:$0x1] %vm10135, %v10126
        %v10139 = vunpack.c.l.s4 1966171168
        %v10140 = vunpack.c.0.s8 %v10139
        %v10141 = vlaneseq
        %v10142 = vshrl.u32 %v10141, 7
        %v10143 = vsub.s32 %v10140, %v10142
        %v10144 = vrot.slane %v10126, %v10143
        %v10145 = vcombine.high %v10144, %v10144
        %v10147 = vunpack.c.l.s4 1966171168
        %v10148 = vunpack.c.0.s8 %v10147
        %v10149 = vlaneseq
        %v10150 = vshrl.u32 %v10149, 7
        %v10151 = vsub.s32 %v10148, %v10150
        %v10152 = vrot.slane %v10144, %v10151
        %v10154 = vunpack.c.l.s4 1966171168
        %v10155 = vunpack.c.0.s8 %v10154
        %v10156 = vlaneseq
        %v10157 = vshrl.u32 %v10156, 7
        %v10158 = vsub.s32 %v10155, %v10157
        %v10159 = vrot.slane %v10145, %v10158
        %10160 = vrot.lane.b32.xlu0 %v10159, 24
        %v10161 = vpop.permute.xlu0 %10160
        %vm10163 = vcmp.ge.s32.totalorder %v10129, 24
        %vm10164 = vcmp.lt.s32.totalorder %v10129, 40
        %vm10165 = vmand %vm10163, %vm10164
        %10166 = vst.msk [vmem:[#allocation8] sm:$0x1] %vm10165, %v10161
        %v10167 = vcombine.high %v10152, %v10152
        %10168 = vrot.lane.b32.xlu0 %v10167, 48
        %v10169 = vpop.permute.xlu0 %10168
        %vm10171 = vcmp.ge.s32.totalorder %v10129, 48
        %vm10172 = vcmp.lt.s32.totalorder %v10129, 64
        %vm10173 = vmand %vm10171, %vm10172
        %10174 = vst.msk [vmem:[#allocation8] sm:$0x1] %vm10173, %v10169
        %v10175 = vcombine.high %v10159, %v10159
        %10176 = vrot.lane.b32.xlu0 %v10175, 72
        %v10177 = vpop.permute.xlu0 %10176
        %vm10179 = vcmp.ge.s32.totalorder %v10129, 72
        %vm10180 = vcmp.lt.s32.totalorder %v10129, 88
        %vm10181 = vmand %vm10179, %vm10180
        %10182 = vst.msk [vmem:[#allocation8] sm:$0x1] %vm10181, %v10177
        %v10183 = vcombine.high %v10126, %v10126
        %v10185 = vunpack.c.l.s4 1966171168
        %v10186 = vunpack.c.0.s8 %v10185
        %v10187 = vlaneseq
        %v10188 = vshrl.u32 %v10187, 7
        %v10189 = vsub.s32 %v10186, %v10188
        %v10190 = vrot.slane %v10183, %v10189
        %v10192 = vunpack.c.l.s4 1966171168
        %v10193 = vunpack.c.0.s8 %v10192
        %v10194 = vlaneseq
        %v10195 = vshrl.u32 %v10194, 7
        %v10196 = vsub.s32 %v10193, %v10195
        %v10197 = vrot.slane %v10190, %v10196
        %10198 = vrot.lane.b32.xlu0 %v10197, 96
        %v10199 = vpop.permute.xlu0 %10198
        %vm10201 = vcmp.ge.s32.totalorder %v10129, 96
        %vm10202 = vcmp.lt.s32.totalorder %v10129, 112
        %vm10203 = vmand %vm10201, %vm10202
        %10204 = vst.msk [vmem:[#allocation8] sm:$0x1] %vm10203, %v10199
        %v10205 = vcombine.high %v10190, %v10190
        %v10207 = vunpack.c.l.s4 1966171168
        %v10208 = vunpack.c.0.s8 %v10207
        %v10209 = vlaneseq
        %v10210 = vshrl.u32 %v10209, 7
        %v10211 = vsub.s32 %v10208, %v10210
        %v10212 = vrot.slane %v10205, %v10211
        %10213 = vrot.lane.b32.xlu0 %v10212, 120
        %v10214 = vpop.permute.xlu0 %10213
        %v10215 = vrot.slane %v10214, 7
        %vm10216 = vcmask 982016
        %v10217 = vsel %vm10216, %v10215, %v10214
        %vm10219 = vcmp.ge.s32.totalorder %v10129, 120
        %vm10220 = vcmp.lt.s32.totalorder %v10129, 136
        %vm10221 = vmand %vm10219, %vm10220
        %10222 = vst.msk [vmem:[#allocation8] sm:$0x3] %vm10221, %v10217
        %v10223 = vcombine.high %v10197, %v10197
        %10224 = vrot.lane.b32.xlu0 %v10223, 16
        %v10225 = vpop.permute.xlu0 %10224
        %vm10227 = vcmp.ge.s32.totalorder %v10129, 16
        %vm10228 = vcmp.lt.s32.totalorder %v10129, 32
        %vm10229 = vmand %vm10227, %vm10228
        %10230 = vst.msk [vmem:[#allocation8 + $0x1] sm:$0x1] %vm10229, %v10225
        %v10231 = vcombine.high %v10212, %v10212
        %10232 = vrot.lane.b32.xlu0 %v10231, 40
        %v10233 = vpop.permute.xlu0 %10232
        %vm10235 = vcmp.ge.s32.totalorder %v10129, 40
        %vm10236 = vcmp.lt.s32.totalorder %v10129, 56
        %vm10237 = vmand %vm10235, %vm10236
        %10238 = vst.msk [vmem:[#allocation8 + $0x1] sm:$0x1] %vm10237, %v10233
        %v10241 = vunpack.c.l.s4 1966171168
        %v10242 = vunpack.c.0.s8 %v10241
        %v10243 = vlaneseq
        %v10244 = vshrl.u32 %v10243, 7
        %v10245 = vsub.s32 %v10242, %v10244
        %v10246 = vrot.slane %v10128, %v10245
        %v10248 = vunpack.c.l.s4 1966171168
        %v10249 = vunpack.c.0.s8 %v10248
        %v10250 = vlaneseq
        %v10251 = vshrl.u32 %v10250, 7
        %v10252 = vsub.s32 %v10249, %v10251
        %v10253 = vrot.slane %v10246, %v10252
        %10254 = vrot.lane.b32.xlu0 %v10253, 64
        %v10255 = vpop.permute.xlu0 %10254
        %vm10257 = vcmp.ge.s32.totalorder %v10129, 64
        %vm10258 = vcmp.lt.s32.totalorder %v10129, 80
        %vm10259 = vmand %vm10257, %vm10258
        %10260 = vst.msk [vmem:[#allocation8 + $0x1] sm:$0x1] %vm10259, %v10255
        %v10261 = vcombine.high %v10246, %v10246
        %v10263 = vunpack.c.l.s4 1966171168
        %v10264 = vunpack.c.0.s8 %v10263
        %v10265 = vlaneseq
        %v10266 = vshrl.u32 %v10265, 7
        %v10267 = vsub.s32 %v10264, %v10266
        %v10268 = vrot.slane %v10261, %v10267
        %10269 = vrot.lane.b32.xlu0 %v10268, 88
        %v10270 = vpop.permute.xlu0 %10269
        %vm10272 = vcmp.ge.s32.totalorder %v10129, 88
        %vm10273 = vcmp.lt.s32.totalorder %v10129, 104
        %vm10274 = vmand %vm10272, %vm10273
        %10275 = vst.msk [vmem:[#allocation8 + $0x1] sm:$0x1] %vm10274, %v10270
        %v10276 = vcombine.high %v10253, %v10253
        %10277 = vrot.lane.b32.xlu0 %v10276, 112
        %v10278 = vpop.permute.xlu0 %10277
        %vm10280 = vcmp.ge.s32.totalorder %v10129, 112
        %vm10281 = vcmp.lt.s32.totalorder %v10129, 128
        %vm10282 = vmand %vm10280, %vm10281
        %10283 = vst.msk [vmem:[#allocation8 + $0x1] sm:$0x1] %vm10282, %v10278
        %v10284 = vcombine.high %v10268, %v10268
        %10285 = vrot.lane.b32.xlu0 %v10284, 8
        %v10286 = vpop.permute.xlu0 %10285
        %vm10288 = vcmp.ge.s32.totalorder %v10129, 8
        %vm10289 = vcmp.lt.s32.totalorder %v10129, 24
        %vm10290 = vmand %vm10288, %vm10289
        %10291 = vst.msk [vmem:[#allocation8 + $0x2] sm:$0x1] %vm10290, %v10286
        %v10292 = vcombine.high %v10128, %v10128
        %v10294 = vunpack.c.l.s4 1966171168
        %v10295 = vunpack.c.0.s8 %v10294
        %v10296 = vlaneseq
        %v10297 = vshrl.u32 %v10296, 7
        %v10298 = vsub.s32 %v10295, %v10297
        %v10299 = vrot.slane %v10292, %v10298
        %v10301 = vunpack.c.l.s4 1966171168
        %v10302 = vunpack.c.0.s8 %v10301
        %v10303 = vlaneseq
        %v10304 = vshrl.u32 %v10303, 7
        %v10305 = vsub.s32 %v10302, %v10304
        %v10306 = vrot.slane %v10299, %v10305
        %10307 = vrot.lane.b32.xlu0 %v10306, 32
        %v10308 = vpop.permute.xlu0 %10307
        %vm10310 = vcmp.ge.s32.totalorder %v10129, 32
        %vm10311 = vcmp.lt.s32.totalorder %v10129, 48
        %vm10312 = vmand %vm10310, %vm10311
        %10313 = vst.msk [vmem:[#allocation8 + $0x2] sm:$0x1] %vm10312, %v10308
        %v10314 = vcombine.high %v10299, %v10299
        %v10316 = vunpack.c.l.s4 1966171168
        %v10317 = vunpack.c.0.s8 %v10316
        %v10318 = vlaneseq
        %v10319 = vshrl.u32 %v10318, 7
        %v10320 = vsub.s32 %v10317, %v10319
        %v10321 = vrot.slane %v10314, %v10320
        %10322 = vrot.lane.b32.xlu0 %v10321, 56
        %v10323 = vpop.permute.xlu0 %10322
        %vm10325 = vcmp.ge.s32.totalorder %v10129, 56
        %vm10326 = vcmp.lt.s32.totalorder %v10129, 72
        %vm10327 = vmand %vm10325, %vm10326
        %10328 = vst.msk [vmem:[#allocation8 + $0x2] sm:$0x1] %vm10327, %v10323
        %v10329 = vcombine.high %v10306, %v10306
        %10330 = vrot.lane.b32.xlu0 %v10329, 80
        %v10331 = vpop.permute.xlu0 %10330
        %vm10333 = vcmp.ge.s32.totalorder %v10129, 80
        %vm10334 = vcmp.lt.s32.totalorder %v10129, 96
        %vm10335 = vmand %vm10333, %vm10334
        %10336 = vst.msk [vmem:[#allocation8 + $0x2] sm:$0x1] %vm10335, %v10331
        %v10337 = vcombine.high %v10321, %v10321
        %10338 = vrot.lane.b32.xlu0 %v10337, 104
        %v10339 = vpop.permute.xlu0 %10338
        %vm10341 = vcmp.ge.s32.totalorder %v10129, 104
        %vm10342 = vcmp.lt.s32.totalorder %v10129, 120
        %vm10343 = vmand %vm10341, %vm10342
        %10344 = vst.msk [vmem:[#allocation8 + $0x2] sm:$0x1] %vm10343, %v10339
        %v10345 = vld [vmem:[#allocation8] sm:$0x7]
        %v10347 = vlaneseq
        %v10348 = vshrl.u32 %v10347, 7
        %v10349 = vsub.s32 0, %v10348
        %v10350 = vrot.slane %v10345, %v10349
        %v10351 = vlaneseq
        %v10352 = vshrl.u32 %v10351, 7
        %v10353 = vsub.s32 1, %v10352
        %v10354 = vrot.slane %v10345, %v10353
        %v10355 = vlaneseq
        %v10356 = vshrl.u32 %v10355, 7
        %v10357 = vsub.s32 2, %v10356
        %v10358 = vrot.slane %v10345, %v10357
        %v10362 = vmul.f32 %v10350, %v7918
        %v10363 = vmul.f32 %v10354, %v7950
        %v10364 = vmul.f32 %v10358, %v7982
        %v10365 = vmul.f32 %v10350, %v7919
        %v10366 = vmul.f32 %v10354, %v7951
        %v10367 = vmul.f32 %v10358, %v7983
        %v10368 = vmul.f32 %v10350, %v7920
        %v10369 = vmul.f32 %v10354, %v7952
        %v10370 = vmul.f32 %v10358, %v7984
        %v10371 = vmul.f32 %v10350, %v7921
        %v10372 = vmul.f32 %v10354, %v7953
        %v10373 = vmul.f32 %v10358, %v7985
        %v10374 = vld [vmem:[#allocation4] sm:$0xff]
        %v10375 = vld [vmem:[#allocation4 + $0x8] sm:$0xff]
        %v10376 = vld [vmem:[#allocation4 + $0x10] sm:$0xff]
        %v10377 = vld [vmem:[#allocation4 + $0x18] sm:$0xff]
        %v10378 = vld [vmem:[#allocation4 + $0x20] sm:$0xff]
        %v10379 = vld [vmem:[#allocation4 + $0x28] sm:$0xff]
        %v10380 = vld [vmem:[#allocation4 + $0x30] sm:$0xff]
        %v10381 = vld [vmem:[#allocation4 + $0x38] sm:$0xff]
        %v10382 = vld [vmem:[#allocation4 + $0x40] sm:$0xff]
        %v10383 = vld [vmem:[#allocation4 + $0x48] sm:$0xff]
        %v10384 = vld [vmem:[#allocation4 + $0x50] sm:$0xff]
        %v10385 = vld [vmem:[#allocation4 + $0x58] sm:$0xff]
        %v10386 = vadd.f32 %v10362, %v10374
        %v10387 = vadd.f32 %v10363, %v10375
        %v10388 = vadd.f32 %v10364, %v10376
        %v10389 = vadd.f32 %v10365, %v10377
        %v10390 = vadd.f32 %v10366, %v10378
        %v10391 = vadd.f32 %v10367, %v10379
        %v10392 = vadd.f32 %v10368, %v10380
        %v10393 = vadd.f32 %v10369, %v10381
        %v10394 = vadd.f32 %v10370, %v10382
        %v10395 = vadd.f32 %v10371, %v10383
        %v10396 = vadd.f32 %v10372, %v10384
        %v10397 = vadd.f32 %v10373, %v10385
        %v10398 = vmax.f32 %v10386, 0.0
        %v10399 = vmax.f32 %v10387, 0.0
        %v10400 = vmax.f32 %v10388, 0.0
        %v10401 = vmax.f32 %v10389, 0.0
        %v10402 = vmax.f32 %v10390, 0.0
        %v10403 = vmax.f32 %v10391, 0.0
        %v10404 = vmax.f32 %v10392, 0.0
        %v10405 = vmax.f32 %v10393, 0.0
        %v10406 = vmax.f32 %v10394, 0.0
        %v10407 = vmax.f32 %v10395, 0.0
        %v10408 = vmax.f32 %v10396, 0.0
        %v10409 = vmax.f32 %v10397, 0.0
        %10410 = vst [vmem:[%s400] sm:$0xff] %v10398
        %10411 = vst [vmem:[%s400 + $0x8] sm:$0xff] %v10399
        %10412 = vst [vmem:[%s400 + $0x10] sm:$0xff] %v10400
        %10413 = vst [vmem:[%s400 + $0x18] sm:$0xff] %v10401
        %10414 = vst [vmem:[%s400 + $0x20] sm:$0xff] %v10402
        %10415 = vst [vmem:[%s400 + $0x28] sm:$0xff] %v10403
        %10416 = vst [vmem:[%s400 + $0x30] sm:$0xff] %v10404
        %10417 = vst [vmem:[%s400 + $0x38] sm:$0xff] %v10405
        %10418 = vst [vmem:[%s400 + $0x40] sm:$0xff] %v10406
        %10419 = vst [vmem:[%s400 + $0x48] sm:$0xff] %v10407
        %10420 = vst [vmem:[%s400 + $0x50] sm:$0xff] %v10408
        %10421 = vst [vmem:[%s400 + $0x58] sm:$0xff] %v10409
        %p10422 = scmp.lt.s32.totalorder %s23, 1
        %s10423 = scalar_select %p10422, %s23, 1
        %s10424 = smul.addr %s10423, 12
        %s10425 = smul.addr %s10424, 8
        %s10426 = scalar_lea.vmem %s11, %s10425
        // Predicated region
        $region69: #{residual_block_forward.1} parent=63 // pred_check
          %p10427 = pneg %p277
        $region70: #{residual_block_forward.1} parent=63 // pred_check_branch
          %10429 = sbr.rel (%p10427) target = $region72
        $region71: #{residual_block_forward.1} parent=63 // pred_region
          _
        $region72: #{residual_block_forward.1} parent=63 // pred_fallthru
          _
      $region64: #{residual_block_forward.1} parent=5 // pred_fallthru
        _
      %p10430 = scmp.le.s32.totalorder 2, %s18
      // Predicated region
      $region73: #{residual_block_forward.1} parent=5 // pred_check
        %p10431 = pneg %p10430
      $region74: #{residual_block_forward.1} parent=5 // pred_check_branch
        %10433 = sbr.rel (%p10431) target = $region76
      $region75: #{residual_block_forward.1} parent=5 // pred_region
        %s10434 = ssub.s32 %s18, 2
        // Predicated region
        $region77: #{residual_block_forward.1} parent=75 // pred_check
          %p10435 = pneg %p283
        $region78: #{residual_block_forward.1} parent=75 // pred_check_branch
          %10437 = sbr.rel (%p10435) target = $region80
        $region79: #{residual_block_forward.1} parent=75 // pred_region
          %p10438 = scmp.lt.s32.totalorder %s24, 1
          %s10439 = scalar_select %p10438, %s24, 1
          %s10440 = smul.addr %s10439, 12
          %s10441 = smul.addr %s10440, 8
          %s10442 = scalar_lea.vmem %s11, %s10441
        $region80: #{residual_block_forward.1} parent=75 // pred_fallthru
          _
      $region76: #{residual_block_forward.1} parent=5 // pred_fallthru
        _
    $region6: #{residual_block_forward.1} parent=1 // loop_footer
      %s22 = sadd.s32 1, %s18
    $region7: #{residual_block_forward.1} parent=1 // loop_footer_branch
      %17 = sbr.rel target = $region3
    $region8: #{residual_block_forward.1} parent=1 // loop_exit
      _
    %10443 = vsyncpa [#allocation10], 1
    %s10444 = scalar_lea.sflag [#allocation10], 1
    %10445 = vsyncpa %s10444, 1

</llo_original>
